<compile_context>
chip_gen: v7x
topology: tpu7x:2x2x1
jax: 0.10.0
libtpu: 0.0.40
codegen_flags: <defaults>
</compile_context>

<pallas_src>
import functools

import jax
import jax.numpy as jnp
from jax import lax
from jax.experimental import pallas as pl
from jax.experimental.pallas import tpu as pltpu

# ---- hyper-parameters (the reference script's globals) ---------------------
VOCAB_SIZE = 65          # len(sorted(set(text))) -- synthetic choice
BLOCK_SIZE = 32
N_EMBD = 32
N_HEAD = 4
N_LAYER = 4
HEAD_SIZE = N_EMBD // N_HEAD
LN_EPS = 1e-5
V_PAD = 128              # lm_head lane dim padded 65 -> 128 for lane-dense stores
NEG_BIG = -1e30          # additive causal-mask bias (safer than -inf)
# dropout = 0.0 in the reference -> identity, omitted.


def _layernorm(x, w, b):
    """PyTorch-style LayerNorm over last dim (biased variance, eps inside sqrt)."""
    mu = jnp.mean(x, axis=-1, keepdims=True)
    var = jnp.mean((x - mu) ** 2, axis=-1, keepdims=True)
    return (x - mu) * lax.rsqrt(var + LN_EPS) * w + b


# ---------------------------------------------------------------------------
# Fused Pallas kernel: 4 transformer blocks + ln_f + (padded) lm_head
# Runs on one batch tile of BB samples per grid step.
# ---------------------------------------------------------------------------
def fused_lm_kernel(x_ref,
                    ln1w_ref, ln1b_ref, wqkv_ref, wproj_ref, bproj_ref,
                    ln2w_ref, ln2b_ref, w1_ref, b1_ref, w2_ref, b2_ref,
                    lnfw_ref, lnfb_ref, wlm_ref, blm_ref,
                    o_ref, *, batch_tile, seq, compute_dtype):
    BB, T = batch_tile, seq
    BT = BB * T
    C, H, HS = N_EMBD, N_HEAD, HEAD_SIZE
    cdt = compute_dtype

    # Additive causal bias, hoisted above the layer loop.  exp(-1e30 - max)
    # underflows to exactly 0, and no row can ever be fully masked -> no NaNs.
    row = lax.broadcasted_iota(jnp.int32, (T, T), 0)
    col = lax.broadcasted_iota(jnp.int32, (T, T), 1)
    bias = jnp.where(col <= row, 0.0, NEG_BIG).astype(jnp.float32)
    bias = jnp.broadcast_to(bias[None], (BB, T, T))              # hoisted broadcast

    x = x_ref[...].reshape(BT, C).astype(jnp.float32)            # (BT, C)

    for l in range(N_LAYER):   # static unroll; weights already resident in VMEM
        # ----- multi-head causal self-attention on ln1(x) -----
        xn = _layernorm(x, ln1w_ref[l], ln1b_ref[l])             # (BT, C) f32
        qkv = jnp.dot(xn.astype(cdt), wqkv_ref[l],
                      preferred_element_type=jnp.float32)        # (BT, 3C); scale in Wq
        qkv = qkv.reshape(BB, T, 3 * C)

        outs = []
        for h in range(H):   # static; HS=8 lane slices out of the packed qkv
            q_h = qkv[:, :, h * HS:(h + 1) * HS].astype(cdt)             # (BB, T, HS)
            k_h = qkv[:, :, C + h * HS:C + (h + 1) * HS].astype(cdt)
            v_h = qkv[:, :, 2 * C + h * HS:2 * C + (h + 1) * HS].astype(cdt)
            s = jnp.einsum('btd,bsd->bts', q_h, k_h,
                           preferred_element_type=jnp.float32) + bias    # (BB, T, T)
            s = s - jnp.max(s, axis=-1, keepdims=True)
            p = jnp.exp(s)
            p = p * pl.reciprocal(jnp.sum(p, axis=-1, keepdims=True), approx=True)
            outs.append(jnp.einsum('bts,bsd->btd', p.astype(cdt), v_h,
                                   preferred_element_type=jnp.float32))  # (BB, T, HS)

        att = jnp.concatenate(outs, axis=-1).reshape(BT, C)      # heads back into lanes
        x = x + jnp.dot(att.astype(cdt), wproj_ref[l],
                        preferred_element_type=jnp.float32) + bproj_ref[l]

        # ----- feed-forward on ln2(x) -----
        xn2 = _layernorm(x, ln2w_ref[l], ln2b_ref[l])
        h1 = jnp.dot(xn2.astype(cdt), w1_ref[l],
                     preferred_element_type=jnp.float32) + b1_ref[l]
        h1 = jnp.maximum(h1, 0.0)                                 # ReLU
        x = x + jnp.dot(h1.astype(cdt), w2_ref[l],
                        preferred_element_type=jnp.float32) + b2_ref[l]

    # ----- final layer norm + lm_head (vocab padded to 128 lanes) -----
    xn = _layernorm(x, lnfw_ref[...], lnfb_ref[...])
    logits = jnp.dot(xn.astype(cdt), wlm_ref[...],
                     preferred_element_type=jnp.float32) + blm_ref[...]   # (BT, 128)
    o_ref[...] = logits.reshape(BB, T, V_PAD)


# ---------------------------------------------------------------------------
# Wrapper: param repacking (layout plumbing) + pallas_call plumbing
# ---------------------------------------------------------------------------
def pack_params(params, compute_dtype=jnp.float32):
    """Repack torch-layout params: Wq|Wk|Wv packed along output lanes (scale
    folded into Wq), layer-stacked, matmul weights cast to compute_dtype."""
    blocks = params["blocks"]
    C = N_EMBD
    scale = C ** (-0.5)    # reference scales scores by n_embd**-0.5
    cdt = compute_dtype

    ln1w = jnp.stack([b[0] for b in blocks])                                 # (L, 1, C)
    ln1b = jnp.stack([b[1] for b in blocks])
    wqkv = jnp.stack([jnp.concatenate([b[2] * scale, b[3], b[4]], axis=1)
                      for b in blocks]).astype(cdt)                          # (L, C, 3C)
    wproj = jnp.stack([b[5] for b in blocks]).astype(cdt)                    # (L, C, C)
    bproj = jnp.stack([b[6] for b in blocks])                                # (L, 1, C)
    ln2w = jnp.stack([b[7] for b in blocks])
    ln2b = jnp.stack([b[8] for b in blocks])
    w1 = jnp.stack([b[9] for b in blocks]).astype(cdt)                       # (L, C, 4C)
    b1 = jnp.stack([b[10] for b in blocks])                                  # (L, 1, 4C)
    w2 = jnp.stack([b[11] for b in blocks]).astype(cdt)                      # (L, 4C, C)
    b2 = jnp.stack([b[12] for b in blocks])                                  # (L, 1, C)

    lnfw, lnfb, wlm, blm = params["head"]
    wlm_p = jnp.zeros((C, V_PAD), jnp.float32).at[:, :VOCAB_SIZE].set(wlm).astype(cdt)
    blm_p = jnp.zeros((1, V_PAD), jnp.float32).at[:, :VOCAB_SIZE].set(blm)

    return (ln1w, ln1b, wqkv, wproj, bproj, ln2w, ln2b,
            w1, b1, w2, b2, lnfw, lnfb, wlm_p, blm_p)


def _pick_batch_tile(B, T):
    """Aim for ~128 rows (BB*T) per grid step; BB must divide B."""
    bb = min(B, max(1, 128 // T))
    while B % bb:
        bb -= 1
    return bb


def language_model_forward(idx, params, *, batch_tile=None,
                           compute_dtype=jnp.float32):
    """idx: (B, T) int32 token ids.  Returns logits (B, T, VOCAB_SIZE)."""
    B, T = idx.shape
    assert T <= BLOCK_SIZE
    # TODO(synk): embedding gather, the cross-entropy loss (targets) path and
    # torch.multinomial-style generate() sampling stay in host-side JAX; only
    # the forward logits hot path is implemented in Pallas.
    tok_emb = jnp.take(params["tok_table"], idx, axis=0)          # (B, T, C)
    pos_emb = params["pos_table"][:T]                             # (T, C)
    x = (tok_emb + pos_emb).astype(jnp.float32)                   # (B, T, C)

    BB = batch_tile if batch_tile is not None else _pick_batch_tile(B, T)
    assert B % BB == 0, "batch_tile must divide batch"

    packed = pack_params(params, compute_dtype)
    kernel = functools.partial(fused_lm_kernel, batch_tile=BB, seq=T,
                               compute_dtype=compute_dtype)

    vmem = pltpu.MemorySpace.VMEM
    in_specs = [pl.BlockSpec((BB, T, N_EMBD), lambda b: (b, 0, 0),
                             memory_space=vmem)]
    for w in packed:   # weights: full array, constant index_map -> VMEM-resident
        in_specs.append(pl.BlockSpec(w.shape, lambda b, _n=w.ndim: (0,) * _n,
                                     memory_space=vmem))
    out_specs = pl.BlockSpec((BB, T, V_PAD), lambda b: (b, 0, 0),
                             memory_space=vmem)

    C = N_EMBD
    weight_bytes = sum(int(w.size) * w.dtype.itemsize for w in packed)
    per_tok = (N_LAYER * (2 * C * 3 * C                      # qkv matmul
                          + N_HEAD * 4 * T * HEAD_SIZE       # qk^T + pv
                          + 2 * C * C                        # out proj
                          + 2 * (2 * C * 4 * C))             # ffwd (both matmuls)
               + 2 * C * V_PAD)                              # lm_head
    cost = pl.CostEstimate(
        flops=int(B * T * per_tok),
        transcendentals=int(N_LAYER * B * N_HEAD * T * T),   # softmax exp
        bytes_accessed=int(x.size * 4 + B * T * V_PAD * 4 + weight_bytes))

    logits_p = pl.pallas_call(
        kernel,
        grid=(B // BB,),
        in_specs=in_specs,
        out_specs=out_specs,
        out_shape=jax.ShapeDtypeStruct((B, T, V_PAD), jnp.float32),
        compiler_params=pltpu.CompilerParams(
            dimension_semantics=("parallel",),                # megacore on v7x
            vmem_limit_bytes=32 * 1024 * 1024),               # explicit VMEM budget
        cost_estimate=cost,
    )(x, *packed)

    return logits_p[:, :, :VOCAB_SIZE]


# ---------------------------------------------------------------------------
# Deterministic parameter construction + pure-JAX reference for sanity check
# ---------------------------------------------------------------------------
def init_params(key):
    keys = iter(jax.random.split(key, 8 + N_LAYER * 16))
    nrm = lambda shape, s=0.02: (s * jax.random.normal(next(keys), shape)).astype(jnp.float32)

    params = {
        "tok_table": nrm((VOCAB_SIZE, N_EMBD)),
        "pos_table": nrm((BLOCK_SIZE, N_EMBD)),
        "blocks": [],
    }
    for _ in range(N_LAYER):
        blk = (
            jnp.ones((1, N_EMBD), jnp.float32),    # ln1 weight
            jnp.zeros((1, N_EMBD), jnp.float32),   # ln1 bias
            nrm((N_EMBD, N_EMBD)),                 # Wq (heads concatenated along cols)
            nrm((N_EMBD, N_EMBD)),                 # Wk
            nrm((N_EMBD, N_EMBD)),                 # Wv
            nrm((N_EMBD, N_EMBD)),                 # Wproj
            jnp.zeros((1, N_EMBD), jnp.float32),   # bproj
            jnp.ones((1, N_EMBD), jnp.float32),    # ln2 weight
            jnp.zeros((1, N_EMBD), jnp.float32),   # ln2 bias
            nrm((N_EMBD, 4 * N_EMBD)),             # FF W1
            jnp.zeros((1, 4 * N_EMBD), jnp.float32),
            nrm((4 * N_EMBD, N_EMBD)),             # FF W2
            jnp.zeros((1, N_EMBD), jnp.float32),
        )
        params["blocks"].append(blk)
    params["head"] = (
        jnp.ones((1, N_EMBD), jnp.float32),        # ln_f weight
        jnp.zeros((1, N_EMBD), jnp.float32),       # ln_f bias
        nrm((N_EMBD, VOCAB_SIZE)),                 # lm_head W
        jnp.zeros((1, VOCAB_SIZE), jnp.float32),   # lm_head b
    )
    return params


def reference_forward(idx, params):
    """Pure-JAX reference reproducing the PyTorch semantics, for verification."""
    B, T = idx.shape
    x = jnp.take(params["tok_table"], idx, axis=0) + params["pos_table"][:T]
    row = jnp.arange(T)[:, None]
    col = jnp.arange(T)[None, :]
    causal = col <= row
    for (l1w, l1b, wq, wk, wv, wp, bp, l2w, l2b, w1, b1, w2, b2) in params["blocks"]:
        xn = _layernorm(x, l1w, l1b)
        q, k, v = xn @ wq, xn @ wk, xn @ wv
        outs = []
        for h in range(N_HEAD):
            sl = slice(h * HEAD_SIZE, (h + 1) * HEAD_SIZE)
            wei = jnp.einsum("btd,bsd->bts", q[..., sl], k[..., sl]) * (N_EMBD ** -0.5)
            wei = jnp.where(causal, wei, -jnp.inf)
            wei = jax.nn.softmax(wei, axis=-1)
            outs.append(jnp.einsum("bts,bsd->btd", wei, v[..., sl]))
        x = x + jnp.concatenate(outs, axis=-1) @ wp + bp
        xn2 = _layernorm(x, l2w, l2b)
        x = x + jnp.maximum(xn2 @ w1 + b1, 0.0) @ w2 + b2
    lfw, lfb, wlm, blm = params["head"]
    return _layernorm(x, lfw, lfb) @ wlm + blm


if __name__ == "__main__":
    key = jax.random.PRNGKey(0)
    pkey, ikey, ikey2 = jax.random.split(key, 3)
    params = init_params(pkey)

    # ---- small config: B=2, T=8 (single grid step) ----
    B, T = 2, 8
    idx = jax.random.randint(ikey, (B, T), 0, VOCAB_SIZE, dtype=jnp.int32)
    logits = jax.block_until_ready(language_model_forward(idx, params))
    assert logits.shape == (B, T, VOCAB_SIZE)
    ref = jax.block_until_ready(reference_forward(idx, params))
    assert jnp.allclose(logits, ref, rtol=2e-3, atol=2e-3), "mismatch vs JAX reference (small)"

    # ---- full block_size seq, multi-step parallel batch grid ----
    B2, T2 = 4, BLOCK_SIZE
    idx2 = jax.random.randint(ikey2, (B2, T2), 0, VOCAB_SIZE, dtype=jnp.int32)
    logits2 = jax.block_until_ready(
        language_model_forward(idx2, params, batch_tile=2))
    assert logits2.shape == (B2, T2, VOCAB_SIZE)
    ref2 = jax.block_until_ready(reference_forward(idx2, params))
    assert jnp.allclose(logits2, ref2, rtol=2e-3, atol=2e-3), "mismatch vs JAX reference (grid)"

    print("KERNEL_OK")
</pallas_src>

<mosaic_0001>
module attributes {stable_mosaic.version = 11 : i64} {
  func.func @fused_lm_kernel(%arg0: i32, %arg1: memref<2x8x32xf32, #tpu.memory_space<vmem>>, %arg2: memref<4x1x32xf32, #tpu.memory_space<vmem>>, %arg3: memref<4x1x32xf32, #tpu.memory_space<vmem>>, %arg4: memref<4x32x96xf32, #tpu.memory_space<vmem>>, %arg5: memref<4x32x32xf32, #tpu.memory_space<vmem>>, %arg6: memref<4x1x32xf32, #tpu.memory_space<vmem>>, %arg7: memref<4x1x32xf32, #tpu.memory_space<vmem>>, %arg8: memref<4x1x32xf32, #tpu.memory_space<vmem>>, %arg9: memref<4x32x128xf32, #tpu.memory_space<vmem>>, %arg10: memref<4x1x128xf32, #tpu.memory_space<vmem>>, %arg11: memref<4x128x32xf32, #tpu.memory_space<vmem>>, %arg12: memref<4x1x32xf32, #tpu.memory_space<vmem>>, %arg13: memref<1x32xf32, #tpu.memory_space<vmem>>, %arg14: memref<1x32xf32, #tpu.memory_space<vmem>>, %arg15: memref<32x128xf32, #tpu.memory_space<vmem>>, %arg16: memref<1x128xf32, #tpu.memory_space<vmem>>, %arg17: memref<2x8x128xf32, #tpu.memory_space<vmem>>) attributes {dimension_semantics = [#tpu.dimension_semantics<parallel>], iteration_bounds = array<i64: 1>, scalar_prefetch = 0 : i64, scratch_operands = 0 : i64, tpu.core_type = #tpu.core_type<tc>, window_params = [{transform_indices = @transform_0, window_bounds = array<i64: 2, 8, 32>}, {pipeline_mode = #tpu.pipeline_mode<synchronous>, transform_indices = @transform_1, window_bounds = array<i64: 4, 1, 32>}, {pipeline_mode = #tpu.pipeline_mode<synchronous>, transform_indices = @transform_2, window_bounds = array<i64: 4, 1, 32>}, {pipeline_mode = #tpu.pipeline_mode<synchronous>, transform_indices = @transform_3, window_bounds = array<i64: 4, 32, 96>}, {pipeline_mode = #tpu.pipeline_mode<synchronous>, transform_indices = @transform_4, window_bounds = array<i64: 4, 32, 32>}, {pipeline_mode = #tpu.pipeline_mode<synchronous>, transform_indices = @transform_5, window_bounds = array<i64: 4, 1, 32>}, {pipeline_mode = #tpu.pipeline_mode<synchronous>, transform_indices = @transform_6, window_bounds = array<i64: 4, 1, 32>}, {pipeline_mode = #tpu.pipeline_mode<synchronous>, transform_indices = @transform_7, window_bounds = array<i64: 4, 1, 32>}, {pipeline_mode = #tpu.pipeline_mode<synchronous>, transform_indices = @transform_8, window_bounds = array<i64: 4, 32, 128>}, {pipeline_mode = #tpu.pipeline_mode<synchronous>, transform_indices = @transform_9, window_bounds = array<i64: 4, 1, 128>}, {pipeline_mode = #tpu.pipeline_mode<synchronous>, transform_indices = @transform_10, window_bounds = array<i64: 4, 128, 32>}, {pipeline_mode = #tpu.pipeline_mode<synchronous>, transform_indices = @transform_11, window_bounds = array<i64: 4, 1, 32>}, {pipeline_mode = #tpu.pipeline_mode<synchronous>, transform_indices = @transform_12, window_bounds = array<i64: 1, 32>}, {pipeline_mode = #tpu.pipeline_mode<synchronous>, transform_indices = @transform_13, window_bounds = array<i64: 1, 32>}, {pipeline_mode = #tpu.pipeline_mode<synchronous>, transform_indices = @transform_14, window_bounds = array<i64: 32, 128>}, {pipeline_mode = #tpu.pipeline_mode<synchronous>, transform_indices = @transform_15, window_bounds = array<i64: 1, 128>}, {transform_indices = @transform_16, window_bounds = array<i64: 2, 8, 128>}]} {
    %0 = tpu.iota {dimensions = array<i32: 0>} : vector<8x8xi32>
    %1 = tpu.iota {dimensions = array<i32: 1>} : vector<8x8xi32>
    %2 = arith.cmpi sle, %1, %0 : vector<8x8xi32>
    %cst = arith.constant 0.000000e+00 : f32
    %cst_0 = arith.constant -1.000000e+30 : f32
    %3 = vector.broadcast %cst : f32 to vector<8x8xf32>
    %4 = vector.broadcast %cst_0 : f32 to vector<8x8xf32>
    %5 = arith.select %2, %3, %4 : vector<8x8xi1>, vector<8x8xf32>
    %6 = vector.shape_cast %5 : vector<8x8xf32> to vector<1x8x8xf32>
    %7 = vector.shape_cast %6 : vector<1x8x8xf32> to vector<1x8x8xf32>
    %8 = vector.broadcast %7 : vector<1x8x8xf32> to vector<2x8x8xf32>
    %c0 = arith.constant 0 : index
    %c0_1 = arith.constant 0 : index
    %c0_2 = arith.constant 0 : index
    %9 = vector.load %arg1[%c0, %c0_1, %c0_2] : memref<2x8x32xf32, #tpu.memory_space<vmem>>, vector<2x8x32xf32>
    %10 = vector.shape_cast %9 : vector<2x8x32xf32> to vector<16x32xf32>
    %c0_3 = arith.constant 0 : index
    %c0_4 = arith.constant 0 : index
    %c0_5 = arith.constant 0 : index
    %11 = vector.load %arg2[%c0_3, %c0_4, %c0_5] : memref<4x1x32xf32, #tpu.memory_space<vmem>>, vector<1x1x32xf32>
    %12 = vector.shape_cast %11 : vector<1x1x32xf32> to vector<1x32xf32>
    %c0_6 = arith.constant 0 : index
    %c0_7 = arith.constant 0 : index
    %c0_8 = arith.constant 0 : index
    %13 = vector.load %arg3[%c0_6, %c0_7, %c0_8] : memref<4x1x32xf32, #tpu.memory_space<vmem>>, vector<1x1x32xf32>
    %14 = vector.shape_cast %13 : vector<1x1x32xf32> to vector<1x32xf32>
    %cst_9 = arith.constant dense<0.000000e+00> : vector<16xf32>
    %15 = vector.multi_reduction <add>, %10, %cst_9 [1] : vector<16x32xf32> to vector<16xf32>
    %16 = vector.shape_cast %15 : vector<16xf32> to vector<16x1xf32>
    %cst_10 = arith.constant 3.200000e+01 : f32
    %17 = vector.broadcast %cst_10 : f32 to vector<16x1xf32>
    %18 = arith.divf %16, %17 : vector<16x1xf32>
    %19 = vector.broadcast %18 : vector<16x1xf32> to vector<16x32xf32>
    %20 = arith.subf %10, %19 : vector<16x32xf32>
    %21 = arith.mulf %20, %20 : vector<16x32xf32>
    %cst_11 = arith.constant dense<0.000000e+00> : vector<16xf32>
    %22 = vector.multi_reduction <add>, %21, %cst_11 [1] : vector<16x32xf32> to vector<16xf32>
    %23 = vector.shape_cast %22 : vector<16xf32> to vector<16x1xf32>
    %cst_12 = arith.constant 3.200000e+01 : f32
    %24 = vector.broadcast %cst_12 : f32 to vector<16x1xf32>
    %25 = arith.divf %23, %24 : vector<16x1xf32>
    %26 = vector.broadcast %18 : vector<16x1xf32> to vector<16x32xf32>
    %27 = arith.subf %10, %26 : vector<16x32xf32>
    %cst_13 = arith.constant 9.99999974E-6 : f32
    %28 = vector.broadcast %cst_13 : f32 to vector<16x1xf32>
    %29 = arith.addf %25, %28 : vector<16x1xf32>
    %30 = math.rsqrt %29 : vector<16x1xf32>
    %31 = vector.broadcast %30 : vector<16x1xf32> to vector<16x32xf32>
    %32 = arith.mulf %27, %31 : vector<16x32xf32>
    %33 = vector.broadcast %12 : vector<1x32xf32> to vector<16x32xf32>
    %34 = arith.mulf %32, %33 : vector<16x32xf32>
    %35 = vector.broadcast %14 : vector<1x32xf32> to vector<16x32xf32>
    %36 = arith.addf %34, %35 : vector<16x32xf32>
    %c0_14 = arith.constant 0 : index
    %c0_15 = arith.constant 0 : index
    %c0_16 = arith.constant 0 : index
    %37 = vector.load %arg4[%c0_14, %c0_15, %c0_16] : memref<4x32x96xf32, #tpu.memory_space<vmem>>, vector<1x32x96xf32>
    %38 = vector.shape_cast %37 : vector<1x32x96xf32> to vector<32x96xf32>
    %cst_17 = arith.constant dense<0.000000e+00> : vector<16x96xf32>
    %39 = tpu.matmul %36, %38, %cst_17 {dimension_numbers = #tpu.dot_dimension_numbers<[1], [0], [0], [1], [0, 0, 1, 1], [], []>} : vector<16x32xf32>, vector<32x96xf32>, vector<16x96xf32> -> vector<16x96xf32>
    %40 = vector.shape_cast %39 : vector<16x96xf32> to vector<2x8x96xf32>
    %41 = vector.extract_strided_slice %40 {offsets = [0, 0, 0], sizes = [2, 8, 8], strides = [1, 1, 1]} : vector<2x8x96xf32> to vector<2x8x8xf32>
    %42 = vector.extract_strided_slice %40 {offsets = [0, 0, 32], sizes = [2, 8, 8], strides = [1, 1, 1]} : vector<2x8x96xf32> to vector<2x8x8xf32>
    %43 = vector.extract_strided_slice %40 {offsets = [0, 0, 64], sizes = [2, 8, 8], strides = [1, 1, 1]} : vector<2x8x96xf32> to vector<2x8x8xf32>
    "tpu.trace_start"() <{level = 10 : i32, message = "btd,bsd->bts"}> : () -> ()
    %cst_18 = arith.constant dense<0.000000e+00> : vector<2x8x8xf32>
    %44 = tpu.matmul %41, %42, %cst_18 {dimension_numbers = #tpu.dot_dimension_numbers<[2], [2], [1], [1], [0, 0, 0, 1, 1, 1], [0], [0]>} : vector<2x8x8xf32>, vector<2x8x8xf32>, vector<2x8x8xf32> -> vector<2x8x8xf32>
    "tpu.trace_stop"() : () -> ()
    %45 = arith.addf %44, %8 : vector<2x8x8xf32>
    %cst_19 = arith.constant dense<0xFF800000> : vector<2x8xf32>
    %46 = vector.multi_reduction <maximumf>, %45, %cst_19 [2] : vector<2x8x8xf32> to vector<2x8xf32>
    %47 = vector.shape_cast %46 : vector<2x8xf32> to vector<2x8x1xf32>
    %48 = vector.broadcast %47 : vector<2x8x1xf32> to vector<2x8x8xf32>
    %49 = arith.subf %45, %48 : vector<2x8x8xf32>
    %50 = math.exp %49 : vector<2x8x8xf32>
    %cst_20 = arith.constant dense<0.000000e+00> : vector<2x8xf32>
    %51 = vector.multi_reduction <add>, %50, %cst_20 [2] : vector<2x8x8xf32> to vector<2x8xf32>
    %52 = vector.shape_cast %51 : vector<2x8xf32> to vector<2x8x1xf32>
    %53 = tpu.reciprocal %52 {approx = true} : vector<2x8x1xf32> -> vector<2x8x1xf32>
    %54 = vector.broadcast %53 : vector<2x8x1xf32> to vector<2x8x8xf32>
    %55 = arith.mulf %50, %54 : vector<2x8x8xf32>
    "tpu.trace_start"() <{level = 10 : i32, message = "bts,bsd->btd"}> : () -> ()
    %cst_21 = arith.constant dense<0.000000e+00> : vector<2x8x8xf32>
    %56 = tpu.matmul %55, %43, %cst_21 {dimension_numbers = #tpu.dot_dimension_numbers<[2], [1], [1], [2], [0, 0, 0, 1, 1, 2], [0], [0]>} : vector<2x8x8xf32>, vector<2x8x8xf32>, vector<2x8x8xf32> -> vector<2x8x8xf32>
    "tpu.trace_stop"() : () -> ()
    %57 = vector.extract_strided_slice %40 {offsets = [0, 0, 8], sizes = [2, 8, 8], strides = [1, 1, 1]} : vector<2x8x96xf32> to vector<2x8x8xf32>
    %58 = vector.extract_strided_slice %40 {offsets = [0, 0, 40], sizes = [2, 8, 8], strides = [1, 1, 1]} : vector<2x8x96xf32> to vector<2x8x8xf32>
    %59 = vector.extract_strided_slice %40 {offsets = [0, 0, 72], sizes = [2, 8, 8], strides = [1, 1, 1]} : vector<2x8x96xf32> to vector<2x8x8xf32>
    "tpu.trace_start"() <{level = 10 : i32, message = "btd,bsd->bts"}> : () -> ()
    %cst_22 = arith.constant dense<0.000000e+00> : vector<2x8x8xf32>
    %60 = tpu.matmul %57, %58, %cst_22 {dimension_numbers = #tpu.dot_dimension_numbers<[2], [2], [1], [1], [0, 0, 0, 1, 1, 1], [0], [0]>} : vector<2x8x8xf32>, vector<2x8x8xf32>, vector<2x8x8xf32> -> vector<2x8x8xf32>
    "tpu.trace_stop"() : () -> ()
    %61 = arith.addf %60, %8 : vector<2x8x8xf32>
    %cst_23 = arith.constant dense<0xFF800000> : vector<2x8xf32>
    %62 = vector.multi_reduction <maximumf>, %61, %cst_23 [2] : vector<2x8x8xf32> to vector<2x8xf32>
    %63 = vector.shape_cast %62 : vector<2x8xf32> to vector<2x8x1xf32>
    %64 = vector.broadcast %63 : vector<2x8x1xf32> to vector<2x8x8xf32>
    %65 = arith.subf %61, %64 : vector<2x8x8xf32>
    %66 = math.exp %65 : vector<2x8x8xf32>
    %cst_24 = arith.constant dense<0.000000e+00> : vector<2x8xf32>
    %67 = vector.multi_reduction <add>, %66, %cst_24 [2] : vector<2x8x8xf32> to vector<2x8xf32>
    %68 = vector.shape_cast %67 : vector<2x8xf32> to vector<2x8x1xf32>
    %69 = tpu.reciprocal %68 {approx = true} : vector<2x8x1xf32> -> vector<2x8x1xf32>
    %70 = vector.broadcast %69 : vector<2x8x1xf32> to vector<2x8x8xf32>
    %71 = arith.mulf %66, %70 : vector<2x8x8xf32>
    "tpu.trace_start"() <{level = 10 : i32, message = "bts,bsd->btd"}> : () -> ()
    %cst_25 = arith.constant dense<0.000000e+00> : vector<2x8x8xf32>
    %72 = tpu.matmul %71, %59, %cst_25 {dimension_numbers = #tpu.dot_dimension_numbers<[2], [1], [1], [2], [0, 0, 0, 1, 1, 2], [0], [0]>} : vector<2x8x8xf32>, vector<2x8x8xf32>, vector<2x8x8xf32> -> vector<2x8x8xf32>
    "tpu.trace_stop"() : () -> ()
    %73 = vector.extract_strided_slice %40 {offsets = [0, 0, 16], sizes = [2, 8, 8], strides = [1, 1, 1]} : vector<2x8x96xf32> to vector<2x8x8xf32>
    %74 = vector.extract_strided_slice %40 {offsets = [0, 0, 48], sizes = [2, 8, 8], strides = [1, 1, 1]} : vector<2x8x96xf32> to vector<2x8x8xf32>
    %75 = vector.extract_strided_slice %40 {offsets = [0, 0, 80], sizes = [2, 8, 8], strides = [1, 1, 1]} : vector<2x8x96xf32> to vector<2x8x8xf32>
    "tpu.trace_start"() <{level = 10 : i32, message = "btd,bsd->bts"}> : () -> ()
    %cst_26 = arith.constant dense<0.000000e+00> : vector<2x8x8xf32>
    %76 = tpu.matmul %73, %74, %cst_26 {dimension_numbers = #tpu.dot_dimension_numbers<[2], [2], [1], [1], [0, 0, 0, 1, 1, 1], [0], [0]>} : vector<2x8x8xf32>, vector<2x8x8xf32>, vector<2x8x8xf32> -> vector<2x8x8xf32>
    "tpu.trace_stop"() : () -> ()
    %77 = arith.addf %76, %8 : vector<2x8x8xf32>
    %cst_27 = arith.constant dense<0xFF800000> : vector<2x8xf32>
    %78 = vector.multi_reduction <maximumf>, %77, %cst_27 [2] : vector<2x8x8xf32> to vector<2x8xf32>
    %79 = vector.shape_cast %78 : vector<2x8xf32> to vector<2x8x1xf32>
    %80 = vector.broadcast %79 : vector<2x8x1xf32> to vector<2x8x8xf32>
    %81 = arith.subf %77, %80 : vector<2x8x8xf32>
    %82 = math.exp %81 : vector<2x8x8xf32>
    %cst_28 = arith.constant dense<0.000000e+00> : vector<2x8xf32>
    %83 = vector.multi_reduction <add>, %82, %cst_28 [2] : vector<2x8x8xf32> to vector<2x8xf32>
    %84 = vector.shape_cast %83 : vector<2x8xf32> to vector<2x8x1xf32>
    %85 = tpu.reciprocal %84 {approx = true} : vector<2x8x1xf32> -> vector<2x8x1xf32>
    %86 = vector.broadcast %85 : vector<2x8x1xf32> to vector<2x8x8xf32>
    %87 = arith.mulf %82, %86 : vector<2x8x8xf32>
    "tpu.trace_start"() <{level = 10 : i32, message = "bts,bsd->btd"}> : () -> ()
    %cst_29 = arith.constant dense<0.000000e+00> : vector<2x8x8xf32>
    %88 = tpu.matmul %87, %75, %cst_29 {dimension_numbers = #tpu.dot_dimension_numbers<[2], [1], [1], [2], [0, 0, 0, 1, 1, 2], [0], [0]>} : vector<2x8x8xf32>, vector<2x8x8xf32>, vector<2x8x8xf32> -> vector<2x8x8xf32>
    "tpu.trace_stop"() : () -> ()
    %89 = vector.extract_strided_slice %40 {offsets = [0, 0, 24], sizes = [2, 8, 8], strides = [1, 1, 1]} : vector<2x8x96xf32> to vector<2x8x8xf32>
    %90 = vector.extract_strided_slice %40 {offsets = [0, 0, 56], sizes = [2, 8, 8], strides = [1, 1, 1]} : vector<2x8x96xf32> to vector<2x8x8xf32>
    %91 = vector.extract_strided_slice %40 {offsets = [0, 0, 88], sizes = [2, 8, 8], strides = [1, 1, 1]} : vector<2x8x96xf32> to vector<2x8x8xf32>
    "tpu.trace_start"() <{level = 10 : i32, message = "btd,bsd->bts"}> : () -> ()
    %cst_30 = arith.constant dense<0.000000e+00> : vector<2x8x8xf32>
    %92 = tpu.matmul %89, %90, %cst_30 {dimension_numbers = #tpu.dot_dimension_numbers<[2], [2], [1], [1], [0, 0, 0, 1, 1, 1], [0], [0]>} : vector<2x8x8xf32>, vector<2x8x8xf32>, vector<2x8x8xf32> -> vector<2x8x8xf32>
    "tpu.trace_stop"() : () -> ()
    %93 = arith.addf %92, %8 : vector<2x8x8xf32>
    %cst_31 = arith.constant dense<0xFF800000> : vector<2x8xf32>
    %94 = vector.multi_reduction <maximumf>, %93, %cst_31 [2] : vector<2x8x8xf32> to vector<2x8xf32>
    %95 = vector.shape_cast %94 : vector<2x8xf32> to vector<2x8x1xf32>
    %96 = vector.broadcast %95 : vector<2x8x1xf32> to vector<2x8x8xf32>
    %97 = arith.subf %93, %96 : vector<2x8x8xf32>
    %98 = math.exp %97 : vector<2x8x8xf32>
    %cst_32 = arith.constant dense<0.000000e+00> : vector<2x8xf32>
    %99 = vector.multi_reduction <add>, %98, %cst_32 [2] : vector<2x8x8xf32> to vector<2x8xf32>
    %100 = vector.shape_cast %99 : vector<2x8xf32> to vector<2x8x1xf32>
    %101 = tpu.reciprocal %100 {approx = true} : vector<2x8x1xf32> -> vector<2x8x1xf32>
    %102 = vector.broadcast %101 : vector<2x8x1xf32> to vector<2x8x8xf32>
    %103 = arith.mulf %98, %102 : vector<2x8x8xf32>
    "tpu.trace_start"() <{level = 10 : i32, message = "bts,bsd->btd"}> : () -> ()
    %cst_33 = arith.constant dense<0.000000e+00> : vector<2x8x8xf32>
    %104 = tpu.matmul %103, %91, %cst_33 {dimension_numbers = #tpu.dot_dimension_numbers<[2], [1], [1], [2], [0, 0, 0, 1, 1, 2], [0], [0]>} : vector<2x8x8xf32>, vector<2x8x8xf32>, vector<2x8x8xf32> -> vector<2x8x8xf32>
    "tpu.trace_stop"() : () -> ()
    %105 = tpu.concatenate %56, %72, %88, %104 in 2 : vector<2x8x8xf32>, vector<2x8x8xf32>, vector<2x8x8xf32>, vector<2x8x8xf32> -> vector<2x8x32xf32>
    %106 = vector.shape_cast %105 : vector<2x8x32xf32> to vector<16x32xf32>
    %c0_34 = arith.constant 0 : index
    %c0_35 = arith.constant 0 : index
    %c0_36 = arith.constant 0 : index
    %107 = vector.load %arg5[%c0_34, %c0_35, %c0_36] : memref<4x32x32xf32, #tpu.memory_space<vmem>>, vector<1x32x32xf32>
    %108 = vector.shape_cast %107 : vector<1x32x32xf32> to vector<32x32xf32>
    %cst_37 = arith.constant dense<0.000000e+00> : vector<16x32xf32>
    %109 = tpu.matmul %106, %108, %cst_37 {dimension_numbers = #tpu.dot_dimension_numbers<[1], [0], [0], [1], [0, 0, 1, 1], [], []>} : vector<16x32xf32>, vector<32x32xf32>, vector<16x32xf32> -> vector<16x32xf32>
    %110 = arith.addf %10, %109 : vector<16x32xf32>
    %c0_38 = arith.constant 0 : index
    %c0_39 = arith.constant 0 : index
    %c0_40 = arith.constant 0 : index
    %111 = vector.load %arg6[%c0_38, %c0_39, %c0_40] : memref<4x1x32xf32, #tpu.memory_space<vmem>>, vector<1x1x32xf32>
    %112 = vector.shape_cast %111 : vector<1x1x32xf32> to vector<1x32xf32>
    %113 = vector.broadcast %112 : vector<1x32xf32> to vector<16x32xf32>
    %114 = arith.addf %110, %113 : vector<16x32xf32>
    %c0_41 = arith.constant 0 : index
    %c0_42 = arith.constant 0 : index
    %c0_43 = arith.constant 0 : index
    %115 = vector.load %arg7[%c0_41, %c0_42, %c0_43] : memref<4x1x32xf32, #tpu.memory_space<vmem>>, vector<1x1x32xf32>
    %116 = vector.shape_cast %115 : vector<1x1x32xf32> to vector<1x32xf32>
    %c0_44 = arith.constant 0 : index
    %c0_45 = arith.constant 0 : index
    %c0_46 = arith.constant 0 : index
    %117 = vector.load %arg8[%c0_44, %c0_45, %c0_46] : memref<4x1x32xf32, #tpu.memory_space<vmem>>, vector<1x1x32xf32>
    %118 = vector.shape_cast %117 : vector<1x1x32xf32> to vector<1x32xf32>
    %cst_47 = arith.constant dense<0.000000e+00> : vector<16xf32>
    %119 = vector.multi_reduction <add>, %114, %cst_47 [1] : vector<16x32xf32> to vector<16xf32>
    %120 = vector.shape_cast %119 : vector<16xf32> to vector<16x1xf32>
    %cst_48 = arith.constant 3.200000e+01 : f32
    %121 = vector.broadcast %cst_48 : f32 to vector<16x1xf32>
    %122 = arith.divf %120, %121 : vector<16x1xf32>
    %123 = vector.broadcast %122 : vector<16x1xf32> to vector<16x32xf32>
    %124 = arith.subf %114, %123 : vector<16x32xf32>
    %125 = arith.mulf %124, %124 : vector<16x32xf32>
    %cst_49 = arith.constant dense<0.000000e+00> : vector<16xf32>
    %126 = vector.multi_reduction <add>, %125, %cst_49 [1] : vector<16x32xf32> to vector<16xf32>
    %127 = vector.shape_cast %126 : vector<16xf32> to vector<16x1xf32>
    %cst_50 = arith.constant 3.200000e+01 : f32
    %128 = vector.broadcast %cst_50 : f32 to vector<16x1xf32>
    %129 = arith.divf %127, %128 : vector<16x1xf32>
    %130 = vector.broadcast %122 : vector<16x1xf32> to vector<16x32xf32>
    %131 = arith.subf %114, %130 : vector<16x32xf32>
    %cst_51 = arith.constant 9.99999974E-6 : f32
    %132 = vector.broadcast %cst_51 : f32 to vector<16x1xf32>
    %133 = arith.addf %129, %132 : vector<16x1xf32>
    %134 = math.rsqrt %133 : vector<16x1xf32>
    %135 = vector.broadcast %134 : vector<16x1xf32> to vector<16x32xf32>
    %136 = arith.mulf %131, %135 : vector<16x32xf32>
    %137 = vector.broadcast %116 : vector<1x32xf32> to vector<16x32xf32>
    %138 = arith.mulf %136, %137 : vector<16x32xf32>
    %139 = vector.broadcast %118 : vector<1x32xf32> to vector<16x32xf32>
    %140 = arith.addf %138, %139 : vector<16x32xf32>
    %c0_52 = arith.constant 0 : index
    %c0_53 = arith.constant 0 : index
    %c0_54 = arith.constant 0 : index
    %141 = vector.load %arg9[%c0_52, %c0_53, %c0_54] : memref<4x32x128xf32, #tpu.memory_space<vmem>>, vector<1x32x128xf32>
    %142 = vector.shape_cast %141 : vector<1x32x128xf32> to vector<32x128xf32>
    %cst_55 = arith.constant dense<0.000000e+00> : vector<16x128xf32>
    %143 = tpu.matmul %140, %142, %cst_55 {dimension_numbers = #tpu.dot_dimension_numbers<[1], [0], [0], [1], [0, 0, 1, 1], [], []>} : vector<16x32xf32>, vector<32x128xf32>, vector<16x128xf32> -> vector<16x128xf32>
    %c0_56 = arith.constant 0 : index
    %c0_57 = arith.constant 0 : index
    %c0_58 = arith.constant 0 : index
    %144 = vector.load %arg10[%c0_56, %c0_57, %c0_58] : memref<4x1x128xf32, #tpu.memory_space<vmem>>, vector<1x1x128xf32>
    %145 = vector.shape_cast %144 : vector<1x1x128xf32> to vector<1x128xf32>
    %146 = vector.broadcast %145 : vector<1x128xf32> to vector<16x128xf32>
    %147 = arith.addf %143, %146 : vector<16x128xf32>
    %cst_59 = arith.constant 0.000000e+00 : f32
    %148 = vector.broadcast %cst_59 : f32 to vector<16x128xf32>
    %149 = arith.maximumf %147, %148 : vector<16x128xf32>
    %c0_60 = arith.constant 0 : index
    %c0_61 = arith.constant 0 : index
    %c0_62 = arith.constant 0 : index
    %150 = vector.load %arg11[%c0_60, %c0_61, %c0_62] : memref<4x128x32xf32, #tpu.memory_space<vmem>>, vector<1x128x32xf32>
    %151 = vector.shape_cast %150 : vector<1x128x32xf32> to vector<128x32xf32>
    %cst_63 = arith.constant dense<0.000000e+00> : vector<16x32xf32>
    %152 = tpu.matmul %149, %151, %cst_63 {dimension_numbers = #tpu.dot_dimension_numbers<[1], [0], [0], [1], [0, 0, 1, 1], [], []>} : vector<16x128xf32>, vector<128x32xf32>, vector<16x32xf32> -> vector<16x32xf32>
    %153 = arith.addf %114, %152 : vector<16x32xf32>
    %c0_64 = arith.constant 0 : index
    %c0_65 = arith.constant 0 : index
    %c0_66 = arith.constant 0 : index
    %154 = vector.load %arg12[%c0_64, %c0_65, %c0_66] : memref<4x1x32xf32, #tpu.memory_space<vmem>>, vector<1x1x32xf32>
    %155 = vector.shape_cast %154 : vector<1x1x32xf32> to vector<1x32xf32>
    %156 = vector.broadcast %155 : vector<1x32xf32> to vector<16x32xf32>
    %157 = arith.addf %153, %156 : vector<16x32xf32>
    %c1 = arith.constant 1 : index
    %c0_67 = arith.constant 0 : index
    %c0_68 = arith.constant 0 : index
    %158 = vector.load %arg2[%c1, %c0_67, %c0_68] : memref<4x1x32xf32, #tpu.memory_space<vmem>>, vector<1x1x32xf32>
    %159 = vector.shape_cast %158 : vector<1x1x32xf32> to vector<1x32xf32>
    %c1_69 = arith.constant 1 : index
    %c0_70 = arith.constant 0 : index
    %c0_71 = arith.constant 0 : index
    %160 = vector.load %arg3[%c1_69, %c0_70, %c0_71] : memref<4x1x32xf32, #tpu.memory_space<vmem>>, vector<1x1x32xf32>
    %161 = vector.shape_cast %160 : vector<1x1x32xf32> to vector<1x32xf32>
    %cst_72 = arith.constant dense<0.000000e+00> : vector<16xf32>
    %162 = vector.multi_reduction <add>, %157, %cst_72 [1] : vector<16x32xf32> to vector<16xf32>
    %163 = vector.shape_cast %162 : vector<16xf32> to vector<16x1xf32>
    %cst_73 = arith.constant 3.200000e+01 : f32
    %164 = vector.broadcast %cst_73 : f32 to vector<16x1xf32>
    %165 = arith.divf %163, %164 : vector<16x1xf32>
    %166 = vector.broadcast %165 : vector<16x1xf32> to vector<16x32xf32>
    %167 = arith.subf %157, %166 : vector<16x32xf32>
    %168 = arith.mulf %167, %167 : vector<16x32xf32>
    %cst_74 = arith.constant dense<0.000000e+00> : vector<16xf32>
    %169 = vector.multi_reduction <add>, %168, %cst_74 [1] : vector<16x32xf32> to vector<16xf32>
    %170 = vector.shape_cast %169 : vector<16xf32> to vector<16x1xf32>
    %cst_75 = arith.constant 3.200000e+01 : f32
    %171 = vector.broadcast %cst_75 : f32 to vector<16x1xf32>
    %172 = arith.divf %170, %171 : vector<16x1xf32>
    %173 = vector.broadcast %165 : vector<16x1xf32> to vector<16x32xf32>
    %174 = arith.subf %157, %173 : vector<16x32xf32>
    %cst_76 = arith.constant 9.99999974E-6 : f32
    %175 = vector.broadcast %cst_76 : f32 to vector<16x1xf32>
    %176 = arith.addf %172, %175 : vector<16x1xf32>
    %177 = math.rsqrt %176 : vector<16x1xf32>
    %178 = vector.broadcast %177 : vector<16x1xf32> to vector<16x32xf32>
    %179 = arith.mulf %174, %178 : vector<16x32xf32>
    %180 = vector.broadcast %159 : vector<1x32xf32> to vector<16x32xf32>
    %181 = arith.mulf %179, %180 : vector<16x32xf32>
    %182 = vector.broadcast %161 : vector<1x32xf32> to vector<16x32xf32>
    %183 = arith.addf %181, %182 : vector<16x32xf32>
    %c1_77 = arith.constant 1 : index
    %c0_78 = arith.constant 0 : index
    %c0_79 = arith.constant 0 : index
    %184 = vector.load %arg4[%c1_77, %c0_78, %c0_79] : memref<4x32x96xf32, #tpu.memory_space<vmem>>, vector<1x32x96xf32>
    %185 = vector.shape_cast %184 : vector<1x32x96xf32> to vector<32x96xf32>
    %cst_80 = arith.constant dense<0.000000e+00> : vector<16x96xf32>
    %186 = tpu.matmul %183, %185, %cst_80 {dimension_numbers = #tpu.dot_dimension_numbers<[1], [0], [0], [1], [0, 0, 1, 1], [], []>} : vector<16x32xf32>, vector<32x96xf32>, vector<16x96xf32> -> vector<16x96xf32>
    %187 = vector.shape_cast %186 : vector<16x96xf32> to vector<2x8x96xf32>
    %188 = vector.extract_strided_slice %187 {offsets = [0, 0, 0], sizes = [2, 8, 8], strides = [1, 1, 1]} : vector<2x8x96xf32> to vector<2x8x8xf32>
    %189 = vector.extract_strided_slice %187 {offsets = [0, 0, 32], sizes = [2, 8, 8], strides = [1, 1, 1]} : vector<2x8x96xf32> to vector<2x8x8xf32>
    %190 = vector.extract_strided_slice %187 {offsets = [0, 0, 64], sizes = [2, 8, 8], strides = [1, 1, 1]} : vector<2x8x96xf32> to vector<2x8x8xf32>
    "tpu.trace_start"() <{level = 10 : i32, message = "btd,bsd->bts"}> : () -> ()
    %cst_81 = arith.constant dense<0.000000e+00> : vector<2x8x8xf32>
    %191 = tpu.matmul %188, %189, %cst_81 {dimension_numbers = #tpu.dot_dimension_numbers<[2], [2], [1], [1], [0, 0, 0, 1, 1, 1], [0], [0]>} : vector<2x8x8xf32>, vector<2x8x8xf32>, vector<2x8x8xf32> -> vector<2x8x8xf32>
    "tpu.trace_stop"() : () -> ()
    %192 = arith.addf %191, %8 : vector<2x8x8xf32>
    %cst_82 = arith.constant dense<0xFF800000> : vector<2x8xf32>
    %193 = vector.multi_reduction <maximumf>, %192, %cst_82 [2] : vector<2x8x8xf32> to vector<2x8xf32>
    %194 = vector.shape_cast %193 : vector<2x8xf32> to vector<2x8x1xf32>
    %195 = vector.broadcast %194 : vector<2x8x1xf32> to vector<2x8x8xf32>
    %196 = arith.subf %192, %195 : vector<2x8x8xf32>
    %197 = math.exp %196 : vector<2x8x8xf32>
    %cst_83 = arith.constant dense<0.000000e+00> : vector<2x8xf32>
    %198 = vector.multi_reduction <add>, %197, %cst_83 [2] : vector<2x8x8xf32> to vector<2x8xf32>
    %199 = vector.shape_cast %198 : vector<2x8xf32> to vector<2x8x1xf32>
    %200 = tpu.reciprocal %199 {approx = true} : vector<2x8x1xf32> -> vector<2x8x1xf32>
    %201 = vector.broadcast %200 : vector<2x8x1xf32> to vector<2x8x8xf32>
    %202 = arith.mulf %197, %201 : vector<2x8x8xf32>
    "tpu.trace_start"() <{level = 10 : i32, message = "bts,bsd->btd"}> : () -> ()
    %cst_84 = arith.constant dense<0.000000e+00> : vector<2x8x8xf32>
    %203 = tpu.matmul %202, %190, %cst_84 {dimension_numbers = #tpu.dot_dimension_numbers<[2], [1], [1], [2], [0, 0, 0, 1, 1, 2], [0], [0]>} : vector<2x8x8xf32>, vector<2x8x8xf32>, vector<2x8x8xf32> -> vector<2x8x8xf32>
    "tpu.trace_stop"() : () -> ()
    %204 = vector.extract_strided_slice %187 {offsets = [0, 0, 8], sizes = [2, 8, 8], strides = [1, 1, 1]} : vector<2x8x96xf32> to vector<2x8x8xf32>
    %205 = vector.extract_strided_slice %187 {offsets = [0, 0, 40], sizes = [2, 8, 8], strides = [1, 1, 1]} : vector<2x8x96xf32> to vector<2x8x8xf32>
    %206 = vector.extract_strided_slice %187 {offsets = [0, 0, 72], sizes = [2, 8, 8], strides = [1, 1, 1]} : vector<2x8x96xf32> to vector<2x8x8xf32>
    "tpu.trace_start"() <{level = 10 : i32, message = "btd,bsd->bts"}> : () -> ()
    %cst_85 = arith.constant dense<0.000000e+00> : vector<2x8x8xf32>
    %207 = tpu.matmul %204, %205, %cst_85 {dimension_numbers = #tpu.dot_dimension_numbers<[2], [2], [1], [1], [0, 0, 0, 1, 1, 1], [0], [0]>} : vector<2x8x8xf32>, vector<2x8x8xf32>, vector<2x8x8xf32> -> vector<2x8x8xf32>
    "tpu.trace_stop"() : () -> ()
    %208 = arith.addf %207, %8 : vector<2x8x8xf32>
    %cst_86 = arith.constant dense<0xFF800000> : vector<2x8xf32>
    %209 = vector.multi_reduction <maximumf>, %208, %cst_86 [2] : vector<2x8x8xf32> to vector<2x8xf32>
    %210 = vector.shape_cast %209 : vector<2x8xf32> to vector<2x8x1xf32>
    %211 = vector.broadcast %210 : vector<2x8x1xf32> to vector<2x8x8xf32>
    %212 = arith.subf %208, %211 : vector<2x8x8xf32>
    %213 = math.exp %212 : vector<2x8x8xf32>
    %cst_87 = arith.constant dense<0.000000e+00> : vector<2x8xf32>
    %214 = vector.multi_reduction <add>, %213, %cst_87 [2] : vector<2x8x8xf32> to vector<2x8xf32>
    %215 = vector.shape_cast %214 : vector<2x8xf32> to vector<2x8x1xf32>
    %216 = tpu.reciprocal %215 {approx = true} : vector<2x8x1xf32> -> vector<2x8x1xf32>
    %217 = vector.broadcast %216 : vector<2x8x1xf32> to vector<2x8x8xf32>
    %218 = arith.mulf %213, %217 : vector<2x8x8xf32>
    "tpu.trace_start"() <{level = 10 : i32, message = "bts,bsd->btd"}> : () -> ()
    %cst_88 = arith.constant dense<0.000000e+00> : vector<2x8x8xf32>
    %219 = tpu.matmul %218, %206, %cst_88 {dimension_numbers = #tpu.dot_dimension_numbers<[2], [1], [1], [2], [0, 0, 0, 1, 1, 2], [0], [0]>} : vector<2x8x8xf32>, vector<2x8x8xf32>, vector<2x8x8xf32> -> vector<2x8x8xf32>
    "tpu.trace_stop"() : () -> ()
    %220 = vector.extract_strided_slice %187 {offsets = [0, 0, 16], sizes = [2, 8, 8], strides = [1, 1, 1]} : vector<2x8x96xf32> to vector<2x8x8xf32>
    %221 = vector.extract_strided_slice %187 {offsets = [0, 0, 48], sizes = [2, 8, 8], strides = [1, 1, 1]} : vector<2x8x96xf32> to vector<2x8x8xf32>
    %222 = vector.extract_strided_slice %187 {offsets = [0, 0, 80], sizes = [2, 8, 8], strides = [1, 1, 1]} : vector<2x8x96xf32> to vector<2x8x8xf32>
    "tpu.trace_start"() <{level = 10 : i32, message = "btd,bsd->bts"}> : () -> ()
    %cst_89 = arith.constant dense<0.000000e+00> : vector<2x8x8xf32>
    %223 = tpu.matmul %220, %221, %cst_89 {dimension_numbers = #tpu.dot_dimension_numbers<[2], [2], [1], [1], [0, 0, 0, 1, 1, 1], [0], [0]>} : vector<2x8x8xf32>, vector<2x8x8xf32>, vector<2x8x8xf32> -> vector<2x8x8xf32>
    "tpu.trace_stop"() : () -> ()
    %224 = arith.addf %223, %8 : vector<2x8x8xf32>
    %cst_90 = arith.constant dense<0xFF800000> : vector<2x8xf32>
    %225 = vector.multi_reduction <maximumf>, %224, %cst_90 [2] : vector<2x8x8xf32> to vector<2x8xf32>
    %226 = vector.shape_cast %225 : vector<2x8xf32> to vector<2x8x1xf32>
    %227 = vector.broadcast %226 : vector<2x8x1xf32> to vector<2x8x8xf32>
    %228 = arith.subf %224, %227 : vector<2x8x8xf32>
    %229 = math.exp %228 : vector<2x8x8xf32>
    %cst_91 = arith.constant dense<0.000000e+00> : vector<2x8xf32>
    %230 = vector.multi_reduction <add>, %229, %cst_91 [2] : vector<2x8x8xf32> to vector<2x8xf32>
    %231 = vector.shape_cast %230 : vector<2x8xf32> to vector<2x8x1xf32>
    %232 = tpu.reciprocal %231 {approx = true} : vector<2x8x1xf32> -> vector<2x8x1xf32>
    %233 = vector.broadcast %232 : vector<2x8x1xf32> to vector<2x8x8xf32>
    %234 = arith.mulf %229, %233 : vector<2x8x8xf32>
    "tpu.trace_start"() <{level = 10 : i32, message = "bts,bsd->btd"}> : () -> ()
    %cst_92 = arith.constant dense<0.000000e+00> : vector<2x8x8xf32>
    %235 = tpu.matmul %234, %222, %cst_92 {dimension_numbers = #tpu.dot_dimension_numbers<[2], [1], [1], [2], [0, 0, 0, 1, 1, 2], [0], [0]>} : vector<2x8x8xf32>, vector<2x8x8xf32>, vector<2x8x8xf32> -> vector<2x8x8xf32>
    "tpu.trace_stop"() : () -> ()
    %236 = vector.extract_strided_slice %187 {offsets = [0, 0, 24], sizes = [2, 8, 8], strides = [1, 1, 1]} : vector<2x8x96xf32> to vector<2x8x8xf32>
    %237 = vector.extract_strided_slice %187 {offsets = [0, 0, 56], sizes = [2, 8, 8], strides = [1, 1, 1]} : vector<2x8x96xf32> to vector<2x8x8xf32>
    %238 = vector.extract_strided_slice %187 {offsets = [0, 0, 88], sizes = [2, 8, 8], strides = [1, 1, 1]} : vector<2x8x96xf32> to vector<2x8x8xf32>
    "tpu.trace_start"() <{level = 10 : i32, message = "btd,bsd->bts"}> : () -> ()
    %cst_93 = arith.constant dense<0.000000e+00> : vector<2x8x8xf32>
    %239 = tpu.matmul %236, %237, %cst_93 {dimension_numbers = #tpu.dot_dimension_numbers<[2], [2], [1], [1], [0, 0, 0, 1, 1, 1], [0], [0]>} : vector<2x8x8xf32>, vector<2x8x8xf32>, vector<2x8x8xf32> -> vector<2x8x8xf32>
    "tpu.trace_stop"() : () -> ()
    %240 = arith.addf %239, %8 : vector<2x8x8xf32>
    %cst_94 = arith.constant dense<0xFF800000> : vector<2x8xf32>
    %241 = vector.multi_reduction <maximumf>, %240, %cst_94 [2] : vector<2x8x8xf32> to vector<2x8xf32>
    %242 = vector.shape_cast %241 : vector<2x8xf32> to vector<2x8x1xf32>
    %243 = vector.broadcast %242 : vector<2x8x1xf32> to vector<2x8x8xf32>
    %244 = arith.subf %240, %243 : vector<2x8x8xf32>
    %245 = math.exp %244 : vector<2x8x8xf32>
    %cst_95 = arith.constant dense<0.000000e+00> : vector<2x8xf32>
    %246 = vector.multi_reduction <add>, %245, %cst_95 [2] : vector<2x8x8xf32> to vector<2x8xf32>
    %247 = vector.shape_cast %246 : vector<2x8xf32> to vector<2x8x1xf32>
    %248 = tpu.reciprocal %247 {approx = true} : vector<2x8x1xf32> -> vector<2x8x1xf32>
    %249 = vector.broadcast %248 : vector<2x8x1xf32> to vector<2x8x8xf32>
    %250 = arith.mulf %245, %249 : vector<2x8x8xf32>
    "tpu.trace_start"() <{level = 10 : i32, message = "bts,bsd->btd"}> : () -> ()
    %cst_96 = arith.constant dense<0.000000e+00> : vector<2x8x8xf32>
    %251 = tpu.matmul %250, %238, %cst_96 {dimension_numbers = #tpu.dot_dimension_numbers<[2], [1], [1], [2], [0, 0, 0, 1, 1, 2], [0], [0]>} : vector<2x8x8xf32>, vector<2x8x8xf32>, vector<2x8x8xf32> -> vector<2x8x8xf32>
    "tpu.trace_stop"() : () -> ()
    %252 = tpu.concatenate %203, %219, %235, %251 in 2 : vector<2x8x8xf32>, vector<2x8x8xf32>, vector<2x8x8xf32>, vector<2x8x8xf32> -> vector<2x8x32xf32>
    %253 = vector.shape_cast %252 : vector<2x8x32xf32> to vector<16x32xf32>
    %c1_97 = arith.constant 1 : index
    %c0_98 = arith.constant 0 : index
    %c0_99 = arith.constant 0 : index
    %254 = vector.load %arg5[%c1_97, %c0_98, %c0_99] : memref<4x32x32xf32, #tpu.memory_space<vmem>>, vector<1x32x32xf32>
    %255 = vector.shape_cast %254 : vector<1x32x32xf32> to vector<32x32xf32>
    %cst_100 = arith.constant dense<0.000000e+00> : vector<16x32xf32>
    %256 = tpu.matmul %253, %255, %cst_100 {dimension_numbers = #tpu.dot_dimension_numbers<[1], [0], [0], [1], [0, 0, 1, 1], [], []>} : vector<16x32xf32>, vector<32x32xf32>, vector<16x32xf32> -> vector<16x32xf32>
    %257 = arith.addf %157, %256 : vector<16x32xf32>
    %c1_101 = arith.constant 1 : index
    %c0_102 = arith.constant 0 : index
    %c0_103 = arith.constant 0 : index
    %258 = vector.load %arg6[%c1_101, %c0_102, %c0_103] : memref<4x1x32xf32, #tpu.memory_space<vmem>>, vector<1x1x32xf32>
    %259 = vector.shape_cast %258 : vector<1x1x32xf32> to vector<1x32xf32>
    %260 = vector.broadcast %259 : vector<1x32xf32> to vector<16x32xf32>
    %261 = arith.addf %257, %260 : vector<16x32xf32>
    %c1_104 = arith.constant 1 : index
    %c0_105 = arith.constant 0 : index
    %c0_106 = arith.constant 0 : index
    %262 = vector.load %arg7[%c1_104, %c0_105, %c0_106] : memref<4x1x32xf32, #tpu.memory_space<vmem>>, vector<1x1x32xf32>
    %263 = vector.shape_cast %262 : vector<1x1x32xf32> to vector<1x32xf32>
    %c1_107 = arith.constant 1 : index
    %c0_108 = arith.constant 0 : index
    %c0_109 = arith.constant 0 : index
    %264 = vector.load %arg8[%c1_107, %c0_108, %c0_109] : memref<4x1x32xf32, #tpu.memory_space<vmem>>, vector<1x1x32xf32>
    %265 = vector.shape_cast %264 : vector<1x1x32xf32> to vector<1x32xf32>
    %cst_110 = arith.constant dense<0.000000e+00> : vector<16xf32>
    %266 = vector.multi_reduction <add>, %261, %cst_110 [1] : vector<16x32xf32> to vector<16xf32>
    %267 = vector.shape_cast %266 : vector<16xf32> to vector<16x1xf32>
    %cst_111 = arith.constant 3.200000e+01 : f32
    %268 = vector.broadcast %cst_111 : f32 to vector<16x1xf32>
    %269 = arith.divf %267, %268 : vector<16x1xf32>
    %270 = vector.broadcast %269 : vector<16x1xf32> to vector<16x32xf32>
    %271 = arith.subf %261, %270 : vector<16x32xf32>
    %272 = arith.mulf %271, %271 : vector<16x32xf32>
    %cst_112 = arith.constant dense<0.000000e+00> : vector<16xf32>
    %273 = vector.multi_reduction <add>, %272, %cst_112 [1] : vector<16x32xf32> to vector<16xf32>
    %274 = vector.shape_cast %273 : vector<16xf32> to vector<16x1xf32>
    %cst_113 = arith.constant 3.200000e+01 : f32
    %275 = vector.broadcast %cst_113 : f32 to vector<16x1xf32>
    %276 = arith.divf %274, %275 : vector<16x1xf32>
    %277 = vector.broadcast %269 : vector<16x1xf32> to vector<16x32xf32>
    %278 = arith.subf %261, %277 : vector<16x32xf32>
    %cst_114 = arith.constant 9.99999974E-6 : f32
    %279 = vector.broadcast %cst_114 : f32 to vector<16x1xf32>
    %280 = arith.addf %276, %279 : vector<16x1xf32>
    %281 = math.rsqrt %280 : vector<16x1xf32>
    %282 = vector.broadcast %281 : vector<16x1xf32> to vector<16x32xf32>
    %283 = arith.mulf %278, %282 : vector<16x32xf32>
    %284 = vector.broadcast %263 : vector<1x32xf32> to vector<16x32xf32>
    %285 = arith.mulf %283, %284 : vector<16x32xf32>
    %286 = vector.broadcast %265 : vector<1x32xf32> to vector<16x32xf32>
    %287 = arith.addf %285, %286 : vector<16x32xf32>
    %c1_115 = arith.constant 1 : index
    %c0_116 = arith.constant 0 : index
    %c0_117 = arith.constant 0 : index
    %288 = vector.load %arg9[%c1_115, %c0_116, %c0_117] : memref<4x32x128xf32, #tpu.memory_space<vmem>>, vector<1x32x128xf32>
    %289 = vector.shape_cast %288 : vector<1x32x128xf32> to vector<32x128xf32>
    %cst_118 = arith.constant dense<0.000000e+00> : vector<16x128xf32>
    %290 = tpu.matmul %287, %289, %cst_118 {dimension_numbers = #tpu.dot_dimension_numbers<[1], [0], [0], [1], [0, 0, 1, 1], [], []>} : vector<16x32xf32>, vector<32x128xf32>, vector<16x128xf32> -> vector<16x128xf32>
    %c1_119 = arith.constant 1 : index
    %c0_120 = arith.constant 0 : index
    %c0_121 = arith.constant 0 : index
    %291 = vector.load %arg10[%c1_119, %c0_120, %c0_121] : memref<4x1x128xf32, #tpu.memory_space<vmem>>, vector<1x1x128xf32>
    %292 = vector.shape_cast %291 : vector<1x1x128xf32> to vector<1x128xf32>
    %293 = vector.broadcast %292 : vector<1x128xf32> to vector<16x128xf32>
    %294 = arith.addf %290, %293 : vector<16x128xf32>
    %cst_122 = arith.constant 0.000000e+00 : f32
    %295 = vector.broadcast %cst_122 : f32 to vector<16x128xf32>
    %296 = arith.maximumf %294, %295 : vector<16x128xf32>
    %c1_123 = arith.constant 1 : index
    %c0_124 = arith.constant 0 : index
    %c0_125 = arith.constant 0 : index
    %297 = vector.load %arg11[%c1_123, %c0_124, %c0_125] : memref<4x128x32xf32, #tpu.memory_space<vmem>>, vector<1x128x32xf32>
    %298 = vector.shape_cast %297 : vector<1x128x32xf32> to vector<128x32xf32>
    %cst_126 = arith.constant dense<0.000000e+00> : vector<16x32xf32>
    %299 = tpu.matmul %296, %298, %cst_126 {dimension_numbers = #tpu.dot_dimension_numbers<[1], [0], [0], [1], [0, 0, 1, 1], [], []>} : vector<16x128xf32>, vector<128x32xf32>, vector<16x32xf32> -> vector<16x32xf32>
    %300 = arith.addf %261, %299 : vector<16x32xf32>
    %c1_127 = arith.constant 1 : index
    %c0_128 = arith.constant 0 : index
    %c0_129 = arith.constant 0 : index
    %301 = vector.load %arg12[%c1_127, %c0_128, %c0_129] : memref<4x1x32xf32, #tpu.memory_space<vmem>>, vector<1x1x32xf32>
    %302 = vector.shape_cast %301 : vector<1x1x32xf32> to vector<1x32xf32>
    %303 = vector.broadcast %302 : vector<1x32xf32> to vector<16x32xf32>
    %304 = arith.addf %300, %303 : vector<16x32xf32>
    %c2 = arith.constant 2 : index
    %c0_130 = arith.constant 0 : index
    %c0_131 = arith.constant 0 : index
    %305 = vector.load %arg2[%c2, %c0_130, %c0_131] : memref<4x1x32xf32, #tpu.memory_space<vmem>>, vector<1x1x32xf32>
    %306 = vector.shape_cast %305 : vector<1x1x32xf32> to vector<1x32xf32>
    %c2_132 = arith.constant 2 : index
    %c0_133 = arith.constant 0 : index
    %c0_134 = arith.constant 0 : index
    %307 = vector.load %arg3[%c2_132, %c0_133, %c0_134] : memref<4x1x32xf32, #tpu.memory_space<vmem>>, vector<1x1x32xf32>
    %308 = vector.shape_cast %307 : vector<1x1x32xf32> to vector<1x32xf32>
    %cst_135 = arith.constant dense<0.000000e+00> : vector<16xf32>
    %309 = vector.multi_reduction <add>, %304, %cst_135 [1] : vector<16x32xf32> to vector<16xf32>
    %310 = vector.shape_cast %309 : vector<16xf32> to vector<16x1xf32>
    %cst_136 = arith.constant 3.200000e+01 : f32
    %311 = vector.broadcast %cst_136 : f32 to vector<16x1xf32>
    %312 = arith.divf %310, %311 : vector<16x1xf32>
    %313 = vector.broadcast %312 : vector<16x1xf32> to vector<16x32xf32>
    %314 = arith.subf %304, %313 : vector<16x32xf32>
    %315 = arith.mulf %314, %314 : vector<16x32xf32>
    %cst_137 = arith.constant dense<0.000000e+00> : vector<16xf32>
    %316 = vector.multi_reduction <add>, %315, %cst_137 [1] : vector<16x32xf32> to vector<16xf32>
    %317 = vector.shape_cast %316 : vector<16xf32> to vector<16x1xf32>
    %cst_138 = arith.constant 3.200000e+01 : f32
    %318 = vector.broadcast %cst_138 : f32 to vector<16x1xf32>
    %319 = arith.divf %317, %318 : vector<16x1xf32>
    %320 = vector.broadcast %312 : vector<16x1xf32> to vector<16x32xf32>
    %321 = arith.subf %304, %320 : vector<16x32xf32>
    %cst_139 = arith.constant 9.99999974E-6 : f32
    %322 = vector.broadcast %cst_139 : f32 to vector<16x1xf32>
    %323 = arith.addf %319, %322 : vector<16x1xf32>
    %324 = math.rsqrt %323 : vector<16x1xf32>
    %325 = vector.broadcast %324 : vector<16x1xf32> to vector<16x32xf32>
    %326 = arith.mulf %321, %325 : vector<16x32xf32>
    %327 = vector.broadcast %306 : vector<1x32xf32> to vector<16x32xf32>
    %328 = arith.mulf %326, %327 : vector<16x32xf32>
    %329 = vector.broadcast %308 : vector<1x32xf32> to vector<16x32xf32>
    %330 = arith.addf %328, %329 : vector<16x32xf32>
    %c2_140 = arith.constant 2 : index
    %c0_141 = arith.constant 0 : index
    %c0_142 = arith.constant 0 : index
    %331 = vector.load %arg4[%c2_140, %c0_141, %c0_142] : memref<4x32x96xf32, #tpu.memory_space<vmem>>, vector<1x32x96xf32>
    %332 = vector.shape_cast %331 : vector<1x32x96xf32> to vector<32x96xf32>
    %cst_143 = arith.constant dense<0.000000e+00> : vector<16x96xf32>
    %333 = tpu.matmul %330, %332, %cst_143 {dimension_numbers = #tpu.dot_dimension_numbers<[1], [0], [0], [1], [0, 0, 1, 1], [], []>} : vector<16x32xf32>, vector<32x96xf32>, vector<16x96xf32> -> vector<16x96xf32>
    %334 = vector.shape_cast %333 : vector<16x96xf32> to vector<2x8x96xf32>
    %335 = vector.extract_strided_slice %334 {offsets = [0, 0, 0], sizes = [2, 8, 8], strides = [1, 1, 1]} : vector<2x8x96xf32> to vector<2x8x8xf32>
    %336 = vector.extract_strided_slice %334 {offsets = [0, 0, 32], sizes = [2, 8, 8], strides = [1, 1, 1]} : vector<2x8x96xf32> to vector<2x8x8xf32>
    %337 = vector.extract_strided_slice %334 {offsets = [0, 0, 64], sizes = [2, 8, 8], strides = [1, 1, 1]} : vector<2x8x96xf32> to vector<2x8x8xf32>
    "tpu.trace_start"() <{level = 10 : i32, message = "btd,bsd->bts"}> : () -> ()
    %cst_144 = arith.constant dense<0.000000e+00> : vector<2x8x8xf32>
    %338 = tpu.matmul %335, %336, %cst_144 {dimension_numbers = #tpu.dot_dimension_numbers<[2], [2], [1], [1], [0, 0, 0, 1, 1, 1], [0], [0]>} : vector<2x8x8xf32>, vector<2x8x8xf32>, vector<2x8x8xf32> -> vector<2x8x8xf32>
    "tpu.trace_stop"() : () -> ()
    %339 = arith.addf %338, %8 : vector<2x8x8xf32>
    %cst_145 = arith.constant dense<0xFF800000> : vector<2x8xf32>
    %340 = vector.multi_reduction <maximumf>, %339, %cst_145 [2] : vector<2x8x8xf32> to vector<2x8xf32>
    %341 = vector.shape_cast %340 : vector<2x8xf32> to vector<2x8x1xf32>
    %342 = vector.broadcast %341 : vector<2x8x1xf32> to vector<2x8x8xf32>
    %343 = arith.subf %339, %342 : vector<2x8x8xf32>
    %344 = math.exp %343 : vector<2x8x8xf32>
    %cst_146 = arith.constant dense<0.000000e+00> : vector<2x8xf32>
    %345 = vector.multi_reduction <add>, %344, %cst_146 [2] : vector<2x8x8xf32> to vector<2x8xf32>
    %346 = vector.shape_cast %345 : vector<2x8xf32> to vector<2x8x1xf32>
    %347 = tpu.reciprocal %346 {approx = true} : vector<2x8x1xf32> -> vector<2x8x1xf32>
    %348 = vector.broadcast %347 : vector<2x8x1xf32> to vector<2x8x8xf32>
    %349 = arith.mulf %344, %348 : vector<2x8x8xf32>
    "tpu.trace_start"() <{level = 10 : i32, message = "bts,bsd->btd"}> : () -> ()
    %cst_147 = arith.constant dense<0.000000e+00> : vector<2x8x8xf32>
    %350 = tpu.matmul %349, %337, %cst_147 {dimension_numbers = #tpu.dot_dimension_numbers<[2], [1], [1], [2], [0, 0, 0, 1, 1, 2], [0], [0]>} : vector<2x8x8xf32>, vector<2x8x8xf32>, vector<2x8x8xf32> -> vector<2x8x8xf32>
    "tpu.trace_stop"() : () -> ()
    %351 = vector.extract_strided_slice %334 {offsets = [0, 0, 8], sizes = [2, 8, 8], strides = [1, 1, 1]} : vector<2x8x96xf32> to vector<2x8x8xf32>
    %352 = vector.extract_strided_slice %334 {offsets = [0, 0, 40], sizes = [2, 8, 8], strides = [1, 1, 1]} : vector<2x8x96xf32> to vector<2x8x8xf32>
    %353 = vector.extract_strided_slice %334 {offsets = [0, 0, 72], sizes = [2, 8, 8], strides = [1, 1, 1]} : vector<2x8x96xf32> to vector<2x8x8xf32>
    "tpu.trace_start"() <{level = 10 : i32, message = "btd,bsd->bts"}> : () -> ()
    %cst_148 = arith.constant dense<0.000000e+00> : vector<2x8x8xf32>
    %354 = tpu.matmul %351, %352, %cst_148 {dimension_numbers = #tpu.dot_dimension_numbers<[2], [2], [1], [1], [0, 0, 0, 1, 1, 1], [0], [0]>} : vector<2x8x8xf32>, vector<2x8x8xf32>, vector<2x8x8xf32> -> vector<2x8x8xf32>
    "tpu.trace_stop"() : () -> ()
    %355 = arith.addf %354, %8 : vector<2x8x8xf32>
    %cst_149 = arith.constant dense<0xFF800000> : vector<2x8xf32>
    %356 = vector.multi_reduction <maximumf>, %355, %cst_149 [2] : vector<2x8x8xf32> to vector<2x8xf32>
    %357 = vector.shape_cast %356 : vector<2x8xf32> to vector<2x8x1xf32>
    %358 = vector.broadcast %357 : vector<2x8x1xf32> to vector<2x8x8xf32>
    %359 = arith.subf %355, %358 : vector<2x8x8xf32>
    %360 = math.exp %359 : vector<2x8x8xf32>
    %cst_150 = arith.constant dense<0.000000e+00> : vector<2x8xf32>
    %361 = vector.multi_reduction <add>, %360, %cst_150 [2] : vector<2x8x8xf32> to vector<2x8xf32>
    %362 = vector.shape_cast %361 : vector<2x8xf32> to vector<2x8x1xf32>
    %363 = tpu.reciprocal %362 {approx = true} : vector<2x8x1xf32> -> vector<2x8x1xf32>
    %364 = vector.broadcast %363 : vector<2x8x1xf32> to vector<2x8x8xf32>
    %365 = arith.mulf %360, %364 : vector<2x8x8xf32>
    "tpu.trace_start"() <{level = 10 : i32, message = "bts,bsd->btd"}> : () -> ()
    %cst_151 = arith.constant dense<0.000000e+00> : vector<2x8x8xf32>
    %366 = tpu.matmul %365, %353, %cst_151 {dimension_numbers = #tpu.dot_dimension_numbers<[2], [1], [1], [2], [0, 0, 0, 1, 1, 2], [0], [0]>} : vector<2x8x8xf32>, vector<2x8x8xf32>, vector<2x8x8xf32> -> vector<2x8x8xf32>
    "tpu.trace_stop"() : () -> ()
    %367 = vector.extract_strided_slice %334 {offsets = [0, 0, 16], sizes = [2, 8, 8], strides = [1, 1, 1]} : vector<2x8x96xf32> to vector<2x8x8xf32>
    %368 = vector.extract_strided_slice %334 {offsets = [0, 0, 48], sizes = [2, 8, 8], strides = [1, 1, 1]} : vector<2x8x96xf32> to vector<2x8x8xf32>
    %369 = vector.extract_strided_slice %334 {offsets = [0, 0, 80], sizes = [2, 8, 8], strides = [1, 1, 1]} : vector<2x8x96xf32> to vector<2x8x8xf32>
    "tpu.trace_start"() <{level = 10 : i32, message = "btd,bsd->bts"}> : () -> ()
    %cst_152 = arith.constant dense<0.000000e+00> : vector<2x8x8xf32>
    %370 = tpu.matmul %367, %368, %cst_152 {dimension_numbers = #tpu.dot_dimension_numbers<[2], [2], [1], [1], [0, 0, 0, 1, 1, 1], [0], [0]>} : vector<2x8x8xf32>, vector<2x8x8xf32>, vector<2x8x8xf32> -> vector<2x8x8xf32>
    "tpu.trace_stop"() : () -> ()
    %371 = arith.addf %370, %8 : vector<2x8x8xf32>
    %cst_153 = arith.constant dense<0xFF800000> : vector<2x8xf32>
    %372 = vector.multi_reduction <maximumf>, %371, %cst_153 [2] : vector<2x8x8xf32> to vector<2x8xf32>
    %373 = vector.shape_cast %372 : vector<2x8xf32> to vector<2x8x1xf32>
    %374 = vector.broadcast %373 : vector<2x8x1xf32> to vector<2x8x8xf32>
    %375 = arith.subf %371, %374 : vector<2x8x8xf32>
    %376 = math.exp %375 : vector<2x8x8xf32>
    %cst_154 = arith.constant dense<0.000000e+00> : vector<2x8xf32>
    %377 = vector.multi_reduction <add>, %376, %cst_154 [2] : vector<2x8x8xf32> to vector<2x8xf32>
    %378 = vector.shape_cast %377 : vector<2x8xf32> to vector<2x8x1xf32>
    %379 = tpu.reciprocal %378 {approx = true} : vector<2x8x1xf32> -> vector<2x8x1xf32>
    %380 = vector.broadcast %379 : vector<2x8x1xf32> to vector<2x8x8xf32>
    %381 = arith.mulf %376, %380 : vector<2x8x8xf32>
    "tpu.trace_start"() <{level = 10 : i32, message = "bts,bsd->btd"}> : () -> ()
    %cst_155 = arith.constant dense<0.000000e+00> : vector<2x8x8xf32>
    %382 = tpu.matmul %381, %369, %cst_155 {dimension_numbers = #tpu.dot_dimension_numbers<[2], [1], [1], [2], [0, 0, 0, 1, 1, 2], [0], [0]>} : vector<2x8x8xf32>, vector<2x8x8xf32>, vector<2x8x8xf32> -> vector<2x8x8xf32>
    "tpu.trace_stop"() : () -> ()
    %383 = vector.extract_strided_slice %334 {offsets = [0, 0, 24], sizes = [2, 8, 8], strides = [1, 1, 1]} : vector<2x8x96xf32> to vector<2x8x8xf32>
    %384 = vector.extract_strided_slice %334 {offsets = [0, 0, 56], sizes = [2, 8, 8], strides = [1, 1, 1]} : vector<2x8x96xf32> to vector<2x8x8xf32>
    %385 = vector.extract_strided_slice %334 {offsets = [0, 0, 88], sizes = [2, 8, 8], strides = [1, 1, 1]} : vector<2x8x96xf32> to vector<2x8x8xf32>
    "tpu.trace_start"() <{level = 10 : i32, message = "btd,bsd->bts"}> : () -> ()
    %cst_156 = arith.constant dense<0.000000e+00> : vector<2x8x8xf32>
    %386 = tpu.matmul %383, %384, %cst_156 {dimension_numbers = #tpu.dot_dimension_numbers<[2], [2], [1], [1], [0, 0, 0, 1, 1, 1], [0], [0]>} : vector<2x8x8xf32>, vector<2x8x8xf32>, vector<2x8x8xf32> -> vector<2x8x8xf32>
    "tpu.trace_stop"() : () -> ()
    %387 = arith.addf %386, %8 : vector<2x8x8xf32>
    %cst_157 = arith.constant dense<0xFF800000> : vector<2x8xf32>
    %388 = vector.multi_reduction <maximumf>, %387, %cst_157 [2] : vector<2x8x8xf32> to vector<2x8xf32>
    %389 = vector.shape_cast %388 : vector<2x8xf32> to vector<2x8x1xf32>
    %390 = vector.broadcast %389 : vector<2x8x1xf32> to vector<2x8x8xf32>
    %391 = arith.subf %387, %390 : vector<2x8x8xf32>
    %392 = math.exp %391 : vector<2x8x8xf32>
    %cst_158 = arith.constant dense<0.000000e+00> : vector<2x8xf32>
    %393 = vector.multi_reduction <add>, %392, %cst_158 [2] : vector<2x8x8xf32> to vector<2x8xf32>
    %394 = vector.shape_cast %393 : vector<2x8xf32> to vector<2x8x1xf32>
    %395 = tpu.reciprocal %394 {approx = true} : vector<2x8x1xf32> -> vector<2x8x1xf32>
    %396 = vector.broadcast %395 : vector<2x8x1xf32> to vector<2x8x8xf32>
    %397 = arith.mulf %392, %396 : vector<2x8x8xf32>
    "tpu.trace_start"() <{level = 10 : i32, message = "bts,bsd->btd"}> : () -> ()
    %cst_159 = arith.constant dense<0.000000e+00> : vector<2x8x8xf32>
    %398 = tpu.matmul %397, %385, %cst_159 {dimension_numbers = #tpu.dot_dimension_numbers<[2], [1], [1], [2], [0, 0, 0, 1, 1, 2], [0], [0]>} : vector<2x8x8xf32>, vector<2x8x8xf32>, vector<2x8x8xf32> -> vector<2x8x8xf32>
    "tpu.trace_stop"() : () -> ()
    %399 = tpu.concatenate %350, %366, %382, %398 in 2 : vector<2x8x8xf32>, vector<2x8x8xf32>, vector<2x8x8xf32>, vector<2x8x8xf32> -> vector<2x8x32xf32>
    %400 = vector.shape_cast %399 : vector<2x8x32xf32> to vector<16x32xf32>
    %c2_160 = arith.constant 2 : index
    %c0_161 = arith.constant 0 : index
    %c0_162 = arith.constant 0 : index
    %401 = vector.load %arg5[%c2_160, %c0_161, %c0_162] : memref<4x32x32xf32, #tpu.memory_space<vmem>>, vector<1x32x32xf32>
    %402 = vector.shape_cast %401 : vector<1x32x32xf32> to vector<32x32xf32>
    %cst_163 = arith.constant dense<0.000000e+00> : vector<16x32xf32>
    %403 = tpu.matmul %400, %402, %cst_163 {dimension_numbers = #tpu.dot_dimension_numbers<[1], [0], [0], [1], [0, 0, 1, 1], [], []>} : vector<16x32xf32>, vector<32x32xf32>, vector<16x32xf32> -> vector<16x32xf32>
    %404 = arith.addf %304, %403 : vector<16x32xf32>
    %c2_164 = arith.constant 2 : index
    %c0_165 = arith.constant 0 : index
    %c0_166 = arith.constant 0 : index
    %405 = vector.load %arg6[%c2_164, %c0_165, %c0_166] : memref<4x1x32xf32, #tpu.memory_space<vmem>>, vector<1x1x32xf32>
    %406 = vector.shape_cast %405 : vector<1x1x32xf32> to vector<1x32xf32>
    %407 = vector.broadcast %406 : vector<1x32xf32> to vector<16x32xf32>
    %408 = arith.addf %404, %407 : vector<16x32xf32>
    %c2_167 = arith.constant 2 : index
    %c0_168 = arith.constant 0 : index
    %c0_169 = arith.constant 0 : index
    %409 = vector.load %arg7[%c2_167, %c0_168, %c0_169] : memref<4x1x32xf32, #tpu.memory_space<vmem>>, vector<1x1x32xf32>
    %410 = vector.shape_cast %409 : vector<1x1x32xf32> to vector<1x32xf32>
    %c2_170 = arith.constant 2 : index
    %c0_171 = arith.constant 0 : index
    %c0_172 = arith.constant 0 : index
    %411 = vector.load %arg8[%c2_170, %c0_171, %c0_172] : memref<4x1x32xf32, #tpu.memory_space<vmem>>, vector<1x1x32xf32>
    %412 = vector.shape_cast %411 : vector<1x1x32xf32> to vector<1x32xf32>
    %cst_173 = arith.constant dense<0.000000e+00> : vector<16xf32>
    %413 = vector.multi_reduction <add>, %408, %cst_173 [1] : vector<16x32xf32> to vector<16xf32>
    %414 = vector.shape_cast %413 : vector<16xf32> to vector<16x1xf32>
    %cst_174 = arith.constant 3.200000e+01 : f32
    %415 = vector.broadcast %cst_174 : f32 to vector<16x1xf32>
    %416 = arith.divf %414, %415 : vector<16x1xf32>
    %417 = vector.broadcast %416 : vector<16x1xf32> to vector<16x32xf32>
    %418 = arith.subf %408, %417 : vector<16x32xf32>
    %419 = arith.mulf %418, %418 : vector<16x32xf32>
    %cst_175 = arith.constant dense<0.000000e+00> : vector<16xf32>
    %420 = vector.multi_reduction <add>, %419, %cst_175 [1] : vector<16x32xf32> to vector<16xf32>
    %421 = vector.shape_cast %420 : vector<16xf32> to vector<16x1xf32>
    %cst_176 = arith.constant 3.200000e+01 : f32
    %422 = vector.broadcast %cst_176 : f32 to vector<16x1xf32>
    %423 = arith.divf %421, %422 : vector<16x1xf32>
    %424 = vector.broadcast %416 : vector<16x1xf32> to vector<16x32xf32>
    %425 = arith.subf %408, %424 : vector<16x32xf32>
    %cst_177 = arith.constant 9.99999974E-6 : f32
    %426 = vector.broadcast %cst_177 : f32 to vector<16x1xf32>
    %427 = arith.addf %423, %426 : vector<16x1xf32>
    %428 = math.rsqrt %427 : vector<16x1xf32>
    %429 = vector.broadcast %428 : vector<16x1xf32> to vector<16x32xf32>
    %430 = arith.mulf %425, %429 : vector<16x32xf32>
    %431 = vector.broadcast %410 : vector<1x32xf32> to vector<16x32xf32>
    %432 = arith.mulf %430, %431 : vector<16x32xf32>
    %433 = vector.broadcast %412 : vector<1x32xf32> to vector<16x32xf32>
    %434 = arith.addf %432, %433 : vector<16x32xf32>
    %c2_178 = arith.constant 2 : index
    %c0_179 = arith.constant 0 : index
    %c0_180 = arith.constant 0 : index
    %435 = vector.load %arg9[%c2_178, %c0_179, %c0_180] : memref<4x32x128xf32, #tpu.memory_space<vmem>>, vector<1x32x128xf32>
    %436 = vector.shape_cast %435 : vector<1x32x128xf32> to vector<32x128xf32>
    %cst_181 = arith.constant dense<0.000000e+00> : vector<16x128xf32>
    %437 = tpu.matmul %434, %436, %cst_181 {dimension_numbers = #tpu.dot_dimension_numbers<[1], [0], [0], [1], [0, 0, 1, 1], [], []>} : vector<16x32xf32>, vector<32x128xf32>, vector<16x128xf32> -> vector<16x128xf32>
    %c2_182 = arith.constant 2 : index
    %c0_183 = arith.constant 0 : index
    %c0_184 = arith.constant 0 : index
    %438 = vector.load %arg10[%c2_182, %c0_183, %c0_184] : memref<4x1x128xf32, #tpu.memory_space<vmem>>, vector<1x1x128xf32>
    %439 = vector.shape_cast %438 : vector<1x1x128xf32> to vector<1x128xf32>
    %440 = vector.broadcast %439 : vector<1x128xf32> to vector<16x128xf32>
    %441 = arith.addf %437, %440 : vector<16x128xf32>
    %cst_185 = arith.constant 0.000000e+00 : f32
    %442 = vector.broadcast %cst_185 : f32 to vector<16x128xf32>
    %443 = arith.maximumf %441, %442 : vector<16x128xf32>
    %c2_186 = arith.constant 2 : index
    %c0_187 = arith.constant 0 : index
    %c0_188 = arith.constant 0 : index
    %444 = vector.load %arg11[%c2_186, %c0_187, %c0_188] : memref<4x128x32xf32, #tpu.memory_space<vmem>>, vector<1x128x32xf32>
    %445 = vector.shape_cast %444 : vector<1x128x32xf32> to vector<128x32xf32>
    %cst_189 = arith.constant dense<0.000000e+00> : vector<16x32xf32>
    %446 = tpu.matmul %443, %445, %cst_189 {dimension_numbers = #tpu.dot_dimension_numbers<[1], [0], [0], [1], [0, 0, 1, 1], [], []>} : vector<16x128xf32>, vector<128x32xf32>, vector<16x32xf32> -> vector<16x32xf32>
    %447 = arith.addf %408, %446 : vector<16x32xf32>
    %c2_190 = arith.constant 2 : index
    %c0_191 = arith.constant 0 : index
    %c0_192 = arith.constant 0 : index
    %448 = vector.load %arg12[%c2_190, %c0_191, %c0_192] : memref<4x1x32xf32, #tpu.memory_space<vmem>>, vector<1x1x32xf32>
    %449 = vector.shape_cast %448 : vector<1x1x32xf32> to vector<1x32xf32>
    %450 = vector.broadcast %449 : vector<1x32xf32> to vector<16x32xf32>
    %451 = arith.addf %447, %450 : vector<16x32xf32>
    %c3 = arith.constant 3 : index
    %c0_193 = arith.constant 0 : index
    %c0_194 = arith.constant 0 : index
    %452 = vector.load %arg2[%c3, %c0_193, %c0_194] : memref<4x1x32xf32, #tpu.memory_space<vmem>>, vector<1x1x32xf32>
    %453 = vector.shape_cast %452 : vector<1x1x32xf32> to vector<1x32xf32>
    %c3_195 = arith.constant 3 : index
    %c0_196 = arith.constant 0 : index
    %c0_197 = arith.constant 0 : index
    %454 = vector.load %arg3[%c3_195, %c0_196, %c0_197] : memref<4x1x32xf32, #tpu.memory_space<vmem>>, vector<1x1x32xf32>
    %455 = vector.shape_cast %454 : vector<1x1x32xf32> to vector<1x32xf32>
    %cst_198 = arith.constant dense<0.000000e+00> : vector<16xf32>
    %456 = vector.multi_reduction <add>, %451, %cst_198 [1] : vector<16x32xf32> to vector<16xf32>
    %457 = vector.shape_cast %456 : vector<16xf32> to vector<16x1xf32>
    %cst_199 = arith.constant 3.200000e+01 : f32
    %458 = vector.broadcast %cst_199 : f32 to vector<16x1xf32>
    %459 = arith.divf %457, %458 : vector<16x1xf32>
    %460 = vector.broadcast %459 : vector<16x1xf32> to vector<16x32xf32>
    %461 = arith.subf %451, %460 : vector<16x32xf32>
    %462 = arith.mulf %461, %461 : vector<16x32xf32>
    %cst_200 = arith.constant dense<0.000000e+00> : vector<16xf32>
    %463 = vector.multi_reduction <add>, %462, %cst_200 [1] : vector<16x32xf32> to vector<16xf32>
    %464 = vector.shape_cast %463 : vector<16xf32> to vector<16x1xf32>
    %cst_201 = arith.constant 3.200000e+01 : f32
    %465 = vector.broadcast %cst_201 : f32 to vector<16x1xf32>
    %466 = arith.divf %464, %465 : vector<16x1xf32>
    %467 = vector.broadcast %459 : vector<16x1xf32> to vector<16x32xf32>
    %468 = arith.subf %451, %467 : vector<16x32xf32>
    %cst_202 = arith.constant 9.99999974E-6 : f32
    %469 = vector.broadcast %cst_202 : f32 to vector<16x1xf32>
    %470 = arith.addf %466, %469 : vector<16x1xf32>
    %471 = math.rsqrt %470 : vector<16x1xf32>
    %472 = vector.broadcast %471 : vector<16x1xf32> to vector<16x32xf32>
    %473 = arith.mulf %468, %472 : vector<16x32xf32>
    %474 = vector.broadcast %453 : vector<1x32xf32> to vector<16x32xf32>
    %475 = arith.mulf %473, %474 : vector<16x32xf32>
    %476 = vector.broadcast %455 : vector<1x32xf32> to vector<16x32xf32>
    %477 = arith.addf %475, %476 : vector<16x32xf32>
    %c3_203 = arith.constant 3 : index
    %c0_204 = arith.constant 0 : index
    %c0_205 = arith.constant 0 : index
    %478 = vector.load %arg4[%c3_203, %c0_204, %c0_205] : memref<4x32x96xf32, #tpu.memory_space<vmem>>, vector<1x32x96xf32>
    %479 = vector.shape_cast %478 : vector<1x32x96xf32> to vector<32x96xf32>
    %cst_206 = arith.constant dense<0.000000e+00> : vector<16x96xf32>
    %480 = tpu.matmul %477, %479, %cst_206 {dimension_numbers = #tpu.dot_dimension_numbers<[1], [0], [0], [1], [0, 0, 1, 1], [], []>} : vector<16x32xf32>, vector<32x96xf32>, vector<16x96xf32> -> vector<16x96xf32>
    %481 = vector.shape_cast %480 : vector<16x96xf32> to vector<2x8x96xf32>
    %482 = vector.extract_strided_slice %481 {offsets = [0, 0, 0], sizes = [2, 8, 8], strides = [1, 1, 1]} : vector<2x8x96xf32> to vector<2x8x8xf32>
    %483 = vector.extract_strided_slice %481 {offsets = [0, 0, 32], sizes = [2, 8, 8], strides = [1, 1, 1]} : vector<2x8x96xf32> to vector<2x8x8xf32>
    %484 = vector.extract_strided_slice %481 {offsets = [0, 0, 64], sizes = [2, 8, 8], strides = [1, 1, 1]} : vector<2x8x96xf32> to vector<2x8x8xf32>
    "tpu.trace_start"() <{level = 10 : i32, message = "btd,bsd->bts"}> : () -> ()
    %cst_207 = arith.constant dense<0.000000e+00> : vector<2x8x8xf32>
    %485 = tpu.matmul %482, %483, %cst_207 {dimension_numbers = #tpu.dot_dimension_numbers<[2], [2], [1], [1], [0, 0, 0, 1, 1, 1], [0], [0]>} : vector<2x8x8xf32>, vector<2x8x8xf32>, vector<2x8x8xf32> -> vector<2x8x8xf32>
    "tpu.trace_stop"() : () -> ()
    %486 = arith.addf %485, %8 : vector<2x8x8xf32>
    %cst_208 = arith.constant dense<0xFF800000> : vector<2x8xf32>
    %487 = vector.multi_reduction <maximumf>, %486, %cst_208 [2] : vector<2x8x8xf32> to vector<2x8xf32>
    %488 = vector.shape_cast %487 : vector<2x8xf32> to vector<2x8x1xf32>
    %489 = vector.broadcast %488 : vector<2x8x1xf32> to vector<2x8x8xf32>
    %490 = arith.subf %486, %489 : vector<2x8x8xf32>
    %491 = math.exp %490 : vector<2x8x8xf32>
    %cst_209 = arith.constant dense<0.000000e+00> : vector<2x8xf32>
    %492 = vector.multi_reduction <add>, %491, %cst_209 [2] : vector<2x8x8xf32> to vector<2x8xf32>
    %493 = vector.shape_cast %492 : vector<2x8xf32> to vector<2x8x1xf32>
    %494 = tpu.reciprocal %493 {approx = true} : vector<2x8x1xf32> -> vector<2x8x1xf32>
    %495 = vector.broadcast %494 : vector<2x8x1xf32> to vector<2x8x8xf32>
    %496 = arith.mulf %491, %495 : vector<2x8x8xf32>
    "tpu.trace_start"() <{level = 10 : i32, message = "bts,bsd->btd"}> : () -> ()
    %cst_210 = arith.constant dense<0.000000e+00> : vector<2x8x8xf32>
    %497 = tpu.matmul %496, %484, %cst_210 {dimension_numbers = #tpu.dot_dimension_numbers<[2], [1], [1], [2], [0, 0, 0, 1, 1, 2], [0], [0]>} : vector<2x8x8xf32>, vector<2x8x8xf32>, vector<2x8x8xf32> -> vector<2x8x8xf32>
    "tpu.trace_stop"() : () -> ()
    %498 = vector.extract_strided_slice %481 {offsets = [0, 0, 8], sizes = [2, 8, 8], strides = [1, 1, 1]} : vector<2x8x96xf32> to vector<2x8x8xf32>
    %499 = vector.extract_strided_slice %481 {offsets = [0, 0, 40], sizes = [2, 8, 8], strides = [1, 1, 1]} : vector<2x8x96xf32> to vector<2x8x8xf32>
    %500 = vector.extract_strided_slice %481 {offsets = [0, 0, 72], sizes = [2, 8, 8], strides = [1, 1, 1]} : vector<2x8x96xf32> to vector<2x8x8xf32>
    "tpu.trace_start"() <{level = 10 : i32, message = "btd,bsd->bts"}> : () -> ()
    %cst_211 = arith.constant dense<0.000000e+00> : vector<2x8x8xf32>
    %501 = tpu.matmul %498, %499, %cst_211 {dimension_numbers = #tpu.dot_dimension_numbers<[2], [2], [1], [1], [0, 0, 0, 1, 1, 1], [0], [0]>} : vector<2x8x8xf32>, vector<2x8x8xf32>, vector<2x8x8xf32> -> vector<2x8x8xf32>
    "tpu.trace_stop"() : () -> ()
    %502 = arith.addf %501, %8 : vector<2x8x8xf32>
    %cst_212 = arith.constant dense<0xFF800000> : vector<2x8xf32>
    %503 = vector.multi_reduction <maximumf>, %502, %cst_212 [2] : vector<2x8x8xf32> to vector<2x8xf32>
    %504 = vector.shape_cast %503 : vector<2x8xf32> to vector<2x8x1xf32>
    %505 = vector.broadcast %504 : vector<2x8x1xf32> to vector<2x8x8xf32>
    %506 = arith.subf %502, %505 : vector<2x8x8xf32>
    %507 = math.exp %506 : vector<2x8x8xf32>
    %cst_213 = arith.constant dense<0.000000e+00> : vector<2x8xf32>
    %508 = vector.multi_reduction <add>, %507, %cst_213 [2] : vector<2x8x8xf32> to vector<2x8xf32>
    %509 = vector.shape_cast %508 : vector<2x8xf32> to vector<2x8x1xf32>
    %510 = tpu.reciprocal %509 {approx = true} : vector<2x8x1xf32> -> vector<2x8x1xf32>
    %511 = vector.broadcast %510 : vector<2x8x1xf32> to vector<2x8x8xf32>
    %512 = arith.mulf %507, %511 : vector<2x8x8xf32>
    "tpu.trace_start"() <{level = 10 : i32, message = "bts,bsd->btd"}> : () -> ()
    %cst_214 = arith.constant dense<0.000000e+00> : vector<2x8x8xf32>
    %513 = tpu.matmul %512, %500, %cst_214 {dimension_numbers = #tpu.dot_dimension_numbers<[2], [1], [1], [2], [0, 0, 0, 1, 1, 2], [0], [0]>} : vector<2x8x8xf32>, vector<2x8x8xf32>, vector<2x8x8xf32> -> vector<2x8x8xf32>
    "tpu.trace_stop"() : () -> ()
    %514 = vector.extract_strided_slice %481 {offsets = [0, 0, 16], sizes = [2, 8, 8], strides = [1, 1, 1]} : vector<2x8x96xf32> to vector<2x8x8xf32>
    %515 = vector.extract_strided_slice %481 {offsets = [0, 0, 48], sizes = [2, 8, 8], strides = [1, 1, 1]} : vector<2x8x96xf32> to vector<2x8x8xf32>
    %516 = vector.extract_strided_slice %481 {offsets = [0, 0, 80], sizes = [2, 8, 8], strides = [1, 1, 1]} : vector<2x8x96xf32> to vector<2x8x8xf32>
    "tpu.trace_start"() <{level = 10 : i32, message = "btd,bsd->bts"}> : () -> ()
    %cst_215 = arith.constant dense<0.000000e+00> : vector<2x8x8xf32>
    %517 = tpu.matmul %514, %515, %cst_215 {dimension_numbers = #tpu.dot_dimension_numbers<[2], [2], [1], [1], [0, 0, 0, 1, 1, 1], [0], [0]>} : vector<2x8x8xf32>, vector<2x8x8xf32>, vector<2x8x8xf32> -> vector<2x8x8xf32>
    "tpu.trace_stop"() : () -> ()
    %518 = arith.addf %517, %8 : vector<2x8x8xf32>
    %cst_216 = arith.constant dense<0xFF800000> : vector<2x8xf32>
    %519 = vector.multi_reduction <maximumf>, %518, %cst_216 [2] : vector<2x8x8xf32> to vector<2x8xf32>
    %520 = vector.shape_cast %519 : vector<2x8xf32> to vector<2x8x1xf32>
    %521 = vector.broadcast %520 : vector<2x8x1xf32> to vector<2x8x8xf32>
    %522 = arith.subf %518, %521 : vector<2x8x8xf32>
    %523 = math.exp %522 : vector<2x8x8xf32>
    %cst_217 = arith.constant dense<0.000000e+00> : vector<2x8xf32>
    %524 = vector.multi_reduction <add>, %523, %cst_217 [2] : vector<2x8x8xf32> to vector<2x8xf32>
    %525 = vector.shape_cast %524 : vector<2x8xf32> to vector<2x8x1xf32>
    %526 = tpu.reciprocal %525 {approx = true} : vector<2x8x1xf32> -> vector<2x8x1xf32>
    %527 = vector.broadcast %526 : vector<2x8x1xf32> to vector<2x8x8xf32>
    %528 = arith.mulf %523, %527 : vector<2x8x8xf32>
    "tpu.trace_start"() <{level = 10 : i32, message = "bts,bsd->btd"}> : () -> ()
    %cst_218 = arith.constant dense<0.000000e+00> : vector<2x8x8xf32>
    %529 = tpu.matmul %528, %516, %cst_218 {dimension_numbers = #tpu.dot_dimension_numbers<[2], [1], [1], [2], [0, 0, 0, 1, 1, 2], [0], [0]>} : vector<2x8x8xf32>, vector<2x8x8xf32>, vector<2x8x8xf32> -> vector<2x8x8xf32>
    "tpu.trace_stop"() : () -> ()
    %530 = vector.extract_strided_slice %481 {offsets = [0, 0, 24], sizes = [2, 8, 8], strides = [1, 1, 1]} : vector<2x8x96xf32> to vector<2x8x8xf32>
    %531 = vector.extract_strided_slice %481 {offsets = [0, 0, 56], sizes = [2, 8, 8], strides = [1, 1, 1]} : vector<2x8x96xf32> to vector<2x8x8xf32>
    %532 = vector.extract_strided_slice %481 {offsets = [0, 0, 88], sizes = [2, 8, 8], strides = [1, 1, 1]} : vector<2x8x96xf32> to vector<2x8x8xf32>
    "tpu.trace_start"() <{level = 10 : i32, message = "btd,bsd->bts"}> : () -> ()
    %cst_219 = arith.constant dense<0.000000e+00> : vector<2x8x8xf32>
    %533 = tpu.matmul %530, %531, %cst_219 {dimension_numbers = #tpu.dot_dimension_numbers<[2], [2], [1], [1], [0, 0, 0, 1, 1, 1], [0], [0]>} : vector<2x8x8xf32>, vector<2x8x8xf32>, vector<2x8x8xf32> -> vector<2x8x8xf32>
    "tpu.trace_stop"() : () -> ()
    %534 = arith.addf %533, %8 : vector<2x8x8xf32>
    %cst_220 = arith.constant dense<0xFF800000> : vector<2x8xf32>
    %535 = vector.multi_reduction <maximumf>, %534, %cst_220 [2] : vector<2x8x8xf32> to vector<2x8xf32>
    %536 = vector.shape_cast %535 : vector<2x8xf32> to vector<2x8x1xf32>
    %537 = vector.broadcast %536 : vector<2x8x1xf32> to vector<2x8x8xf32>
    %538 = arith.subf %534, %537 : vector<2x8x8xf32>
    %539 = math.exp %538 : vector<2x8x8xf32>
    %cst_221 = arith.constant dense<0.000000e+00> : vector<2x8xf32>
    %540 = vector.multi_reduction <add>, %539, %cst_221 [2] : vector<2x8x8xf32> to vector<2x8xf32>
    %541 = vector.shape_cast %540 : vector<2x8xf32> to vector<2x8x1xf32>
    %542 = tpu.reciprocal %541 {approx = true} : vector<2x8x1xf32> -> vector<2x8x1xf32>
    %543 = vector.broadcast %542 : vector<2x8x1xf32> to vector<2x8x8xf32>
    %544 = arith.mulf %539, %543 : vector<2x8x8xf32>
    "tpu.trace_start"() <{level = 10 : i32, message = "bts,bsd->btd"}> : () -> ()
    %cst_222 = arith.constant dense<0.000000e+00> : vector<2x8x8xf32>
    %545 = tpu.matmul %544, %532, %cst_222 {dimension_numbers = #tpu.dot_dimension_numbers<[2], [1], [1], [2], [0, 0, 0, 1, 1, 2], [0], [0]>} : vector<2x8x8xf32>, vector<2x8x8xf32>, vector<2x8x8xf32> -> vector<2x8x8xf32>
    "tpu.trace_stop"() : () -> ()
    %546 = tpu.concatenate %497, %513, %529, %545 in 2 : vector<2x8x8xf32>, vector<2x8x8xf32>, vector<2x8x8xf32>, vector<2x8x8xf32> -> vector<2x8x32xf32>
    %547 = vector.shape_cast %546 : vector<2x8x32xf32> to vector<16x32xf32>
    %c3_223 = arith.constant 3 : index
    %c0_224 = arith.constant 0 : index
    %c0_225 = arith.constant 0 : index
    %548 = vector.load %arg5[%c3_223, %c0_224, %c0_225] : memref<4x32x32xf32, #tpu.memory_space<vmem>>, vector<1x32x32xf32>
    %549 = vector.shape_cast %548 : vector<1x32x32xf32> to vector<32x32xf32>
    %cst_226 = arith.constant dense<0.000000e+00> : vector<16x32xf32>
    %550 = tpu.matmul %547, %549, %cst_226 {dimension_numbers = #tpu.dot_dimension_numbers<[1], [0], [0], [1], [0, 0, 1, 1], [], []>} : vector<16x32xf32>, vector<32x32xf32>, vector<16x32xf32> -> vector<16x32xf32>
    %551 = arith.addf %451, %550 : vector<16x32xf32>
    %c3_227 = arith.constant 3 : index
    %c0_228 = arith.constant 0 : index
    %c0_229 = arith.constant 0 : index
    %552 = vector.load %arg6[%c3_227, %c0_228, %c0_229] : memref<4x1x32xf32, #tpu.memory_space<vmem>>, vector<1x1x32xf32>
    %553 = vector.shape_cast %552 : vector<1x1x32xf32> to vector<1x32xf32>
    %554 = vector.broadcast %553 : vector<1x32xf32> to vector<16x32xf32>
    %555 = arith.addf %551, %554 : vector<16x32xf32>
    %c3_230 = arith.constant 3 : index
    %c0_231 = arith.constant 0 : index
    %c0_232 = arith.constant 0 : index
    %556 = vector.load %arg7[%c3_230, %c0_231, %c0_232] : memref<4x1x32xf32, #tpu.memory_space<vmem>>, vector<1x1x32xf32>
    %557 = vector.shape_cast %556 : vector<1x1x32xf32> to vector<1x32xf32>
    %c3_233 = arith.constant 3 : index
    %c0_234 = arith.constant 0 : index
    %c0_235 = arith.constant 0 : index
    %558 = vector.load %arg8[%c3_233, %c0_234, %c0_235] : memref<4x1x32xf32, #tpu.memory_space<vmem>>, vector<1x1x32xf32>
    %559 = vector.shape_cast %558 : vector<1x1x32xf32> to vector<1x32xf32>
    %cst_236 = arith.constant dense<0.000000e+00> : vector<16xf32>
    %560 = vector.multi_reduction <add>, %555, %cst_236 [1] : vector<16x32xf32> to vector<16xf32>
    %561 = vector.shape_cast %560 : vector<16xf32> to vector<16x1xf32>
    %cst_237 = arith.constant 3.200000e+01 : f32
    %562 = vector.broadcast %cst_237 : f32 to vector<16x1xf32>
    %563 = arith.divf %561, %562 : vector<16x1xf32>
    %564 = vector.broadcast %563 : vector<16x1xf32> to vector<16x32xf32>
    %565 = arith.subf %555, %564 : vector<16x32xf32>
    %566 = arith.mulf %565, %565 : vector<16x32xf32>
    %cst_238 = arith.constant dense<0.000000e+00> : vector<16xf32>
    %567 = vector.multi_reduction <add>, %566, %cst_238 [1] : vector<16x32xf32> to vector<16xf32>
    %568 = vector.shape_cast %567 : vector<16xf32> to vector<16x1xf32>
    %cst_239 = arith.constant 3.200000e+01 : f32
    %569 = vector.broadcast %cst_239 : f32 to vector<16x1xf32>
    %570 = arith.divf %568, %569 : vector<16x1xf32>
    %571 = vector.broadcast %563 : vector<16x1xf32> to vector<16x32xf32>
    %572 = arith.subf %555, %571 : vector<16x32xf32>
    %cst_240 = arith.constant 9.99999974E-6 : f32
    %573 = vector.broadcast %cst_240 : f32 to vector<16x1xf32>
    %574 = arith.addf %570, %573 : vector<16x1xf32>
    %575 = math.rsqrt %574 : vector<16x1xf32>
    %576 = vector.broadcast %575 : vector<16x1xf32> to vector<16x32xf32>
    %577 = arith.mulf %572, %576 : vector<16x32xf32>
    %578 = vector.broadcast %557 : vector<1x32xf32> to vector<16x32xf32>
    %579 = arith.mulf %577, %578 : vector<16x32xf32>
    %580 = vector.broadcast %559 : vector<1x32xf32> to vector<16x32xf32>
    %581 = arith.addf %579, %580 : vector<16x32xf32>
    %c3_241 = arith.constant 3 : index
    %c0_242 = arith.constant 0 : index
    %c0_243 = arith.constant 0 : index
    %582 = vector.load %arg9[%c3_241, %c0_242, %c0_243] : memref<4x32x128xf32, #tpu.memory_space<vmem>>, vector<1x32x128xf32>
    %583 = vector.shape_cast %582 : vector<1x32x128xf32> to vector<32x128xf32>
    %cst_244 = arith.constant dense<0.000000e+00> : vector<16x128xf32>
    %584 = tpu.matmul %581, %583, %cst_244 {dimension_numbers = #tpu.dot_dimension_numbers<[1], [0], [0], [1], [0, 0, 1, 1], [], []>} : vector<16x32xf32>, vector<32x128xf32>, vector<16x128xf32> -> vector<16x128xf32>
    %c3_245 = arith.constant 3 : index
    %c0_246 = arith.constant 0 : index
    %c0_247 = arith.constant 0 : index
    %585 = vector.load %arg10[%c3_245, %c0_246, %c0_247] : memref<4x1x128xf32, #tpu.memory_space<vmem>>, vector<1x1x128xf32>
    %586 = vector.shape_cast %585 : vector<1x1x128xf32> to vector<1x128xf32>
    %587 = vector.broadcast %586 : vector<1x128xf32> to vector<16x128xf32>
    %588 = arith.addf %584, %587 : vector<16x128xf32>
    %cst_248 = arith.constant 0.000000e+00 : f32
    %589 = vector.broadcast %cst_248 : f32 to vector<16x128xf32>
    %590 = arith.maximumf %588, %589 : vector<16x128xf32>
    %c3_249 = arith.constant 3 : index
    %c0_250 = arith.constant 0 : index
    %c0_251 = arith.constant 0 : index
    %591 = vector.load %arg11[%c3_249, %c0_250, %c0_251] : memref<4x128x32xf32, #tpu.memory_space<vmem>>, vector<1x128x32xf32>
    %592 = vector.shape_cast %591 : vector<1x128x32xf32> to vector<128x32xf32>
    %cst_252 = arith.constant dense<0.000000e+00> : vector<16x32xf32>
    %593 = tpu.matmul %590, %592, %cst_252 {dimension_numbers = #tpu.dot_dimension_numbers<[1], [0], [0], [1], [0, 0, 1, 1], [], []>} : vector<16x128xf32>, vector<128x32xf32>, vector<16x32xf32> -> vector<16x32xf32>
    %594 = arith.addf %555, %593 : vector<16x32xf32>
    %c3_253 = arith.constant 3 : index
    %c0_254 = arith.constant 0 : index
    %c0_255 = arith.constant 0 : index
    %595 = vector.load %arg12[%c3_253, %c0_254, %c0_255] : memref<4x1x32xf32, #tpu.memory_space<vmem>>, vector<1x1x32xf32>
    %596 = vector.shape_cast %595 : vector<1x1x32xf32> to vector<1x32xf32>
    %597 = vector.broadcast %596 : vector<1x32xf32> to vector<16x32xf32>
    %598 = arith.addf %594, %597 : vector<16x32xf32>
    %c0_256 = arith.constant 0 : index
    %c0_257 = arith.constant 0 : index
    %599 = vector.load %arg13[%c0_256, %c0_257] : memref<1x32xf32, #tpu.memory_space<vmem>>, vector<1x32xf32>
    %c0_258 = arith.constant 0 : index
    %c0_259 = arith.constant 0 : index
    %600 = vector.load %arg14[%c0_258, %c0_259] : memref<1x32xf32, #tpu.memory_space<vmem>>, vector<1x32xf32>
    %cst_260 = arith.constant dense<0.000000e+00> : vector<16xf32>
    %601 = vector.multi_reduction <add>, %598, %cst_260 [1] : vector<16x32xf32> to vector<16xf32>
    %602 = vector.shape_cast %601 : vector<16xf32> to vector<16x1xf32>
    %cst_261 = arith.constant 3.200000e+01 : f32
    %603 = vector.broadcast %cst_261 : f32 to vector<16x1xf32>
    %604 = arith.divf %602, %603 : vector<16x1xf32>
    %605 = vector.broadcast %604 : vector<16x1xf32> to vector<16x32xf32>
    %606 = arith.subf %598, %605 : vector<16x32xf32>
    %607 = arith.mulf %606, %606 : vector<16x32xf32>
    %cst_262 = arith.constant dense<0.000000e+00> : vector<16xf32>
    %608 = vector.multi_reduction <add>, %607, %cst_262 [1] : vector<16x32xf32> to vector<16xf32>
    %609 = vector.shape_cast %608 : vector<16xf32> to vector<16x1xf32>
    %cst_263 = arith.constant 3.200000e+01 : f32
    %610 = vector.broadcast %cst_263 : f32 to vector<16x1xf32>
    %611 = arith.divf %609, %610 : vector<16x1xf32>
    %612 = vector.broadcast %604 : vector<16x1xf32> to vector<16x32xf32>
    %613 = arith.subf %598, %612 : vector<16x32xf32>
    %cst_264 = arith.constant 9.99999974E-6 : f32
    %614 = vector.broadcast %cst_264 : f32 to vector<16x1xf32>
    %615 = arith.addf %611, %614 : vector<16x1xf32>
    %616 = math.rsqrt %615 : vector<16x1xf32>
    %617 = vector.broadcast %616 : vector<16x1xf32> to vector<16x32xf32>
    %618 = arith.mulf %613, %617 : vector<16x32xf32>
    %619 = vector.broadcast %599 : vector<1x32xf32> to vector<16x32xf32>
    %620 = arith.mulf %618, %619 : vector<16x32xf32>
    %621 = vector.broadcast %600 : vector<1x32xf32> to vector<16x32xf32>
    %622 = arith.addf %620, %621 : vector<16x32xf32>
    %c0_265 = arith.constant 0 : index
    %c0_266 = arith.constant 0 : index
    %623 = vector.load %arg15[%c0_265, %c0_266] : memref<32x128xf32, #tpu.memory_space<vmem>>, vector<32x128xf32>
    %cst_267 = arith.constant dense<0.000000e+00> : vector<16x128xf32>
    %624 = tpu.matmul %622, %623, %cst_267 {dimension_numbers = #tpu.dot_dimension_numbers<[1], [0], [0], [1], [0, 0, 1, 1], [], []>} : vector<16x32xf32>, vector<32x128xf32>, vector<16x128xf32> -> vector<16x128xf32>
    %c0_268 = arith.constant 0 : index
    %c0_269 = arith.constant 0 : index
    %625 = vector.load %arg16[%c0_268, %c0_269] : memref<1x128xf32, #tpu.memory_space<vmem>>, vector<1x128xf32>
    %626 = vector.broadcast %625 : vector<1x128xf32> to vector<16x128xf32>
    %627 = arith.addf %624, %626 : vector<16x128xf32>
    %628 = vector.shape_cast %627 : vector<16x128xf32> to vector<2x8x128xf32>
    %c0_270 = arith.constant 0 : index
    %c0_271 = arith.constant 0 : index
    %c0_272 = arith.constant 0 : index
    %629 = vector.load %arg17[%c0_270, %c0_271, %c0_272] : memref<2x8x128xf32, #tpu.memory_space<vmem>>, vector<2x8x128xf32>
    tpu.vector_store %arg17[%c0_270, %c0_271, %c0_272], %628 {strides = array<i32>} : memref<2x8x128xf32, #tpu.memory_space<vmem>>, vector<2x8x128xf32>,
    return
  }
  func.func @transform_0(%arg0: i32) -> (i32, i32, i32) {
    %c0_i32 = arith.constant 0 : i32
    %c0_i32_0 = arith.constant 0 : i32
    %c0_i32_1 = arith.constant 0 : i32
    return %arg0, %c0_i32, %c0_i32_0 : i32, i32, i32
  }
  func.func @transform_1(%arg0: i32) -> (i32, i32, i32) {
    %c0_i32 = arith.constant 0 : i32
    %c0_i32_0 = arith.constant 0 : i32
    %c0_i32_1 = arith.constant 0 : i32
    %c0_i32_2 = arith.constant 0 : i32
    return %c0_i32, %c0_i32_0, %c0_i32_1 : i32, i32, i32
  }
  func.func @transform_2(%arg0: i32) -> (i32, i32, i32) {
    %c0_i32 = arith.constant 0 : i32
    %c0_i32_0 = arith.constant 0 : i32
    %c0_i32_1 = arith.constant 0 : i32
    %c0_i32_2 = arith.constant 0 : i32
    return %c0_i32, %c0_i32_0, %c0_i32_1 : i32, i32, i32
  }
  func.func @transform_3(%arg0: i32) -> (i32, i32, i32) {
    %c0_i32 = arith.constant 0 : i32
    %c0_i32_0 = arith.constant 0 : i32
    %c0_i32_1 = arith.constant 0 : i32
    %c0_i32_2 = arith.constant 0 : i32
    return %c0_i32, %c0_i32_0, %c0_i32_1 : i32, i32, i32
  }
  func.func @transform_4(%arg0: i32) -> (i32, i32, i32) {
    %c0_i32 = arith.constant 0 : i32
    %c0_i32_0 = arith.constant 0 : i32
    %c0_i32_1 = arith.constant 0 : i32
    %c0_i32_2 = arith.constant 0 : i32
    return %c0_i32, %c0_i32_0, %c0_i32_1 : i32, i32, i32
  }
  func.func @transform_5(%arg0: i32) -> (i32, i32, i32) {
    %c0_i32 = arith.constant 0 : i32
    %c0_i32_0 = arith.constant 0 : i32
    %c0_i32_1 = arith.constant 0 : i32
    %c0_i32_2 = arith.constant 0 : i32
    return %c0_i32, %c0_i32_0, %c0_i32_1 : i32, i32, i32
  }
  func.func @transform_6(%arg0: i32) -> (i32, i32, i32) {
    %c0_i32 = arith.constant 0 : i32
    %c0_i32_0 = arith.constant 0 : i32
    %c0_i32_1 = arith.constant 0 : i32
    %c0_i32_2 = arith.constant 0 : i32
    return %c0_i32, %c0_i32_0, %c0_i32_1 : i32, i32, i32
  }
  func.func @transform_7(%arg0: i32) -> (i32, i32, i32) {
    %c0_i32 = arith.constant 0 : i32
    %c0_i32_0 = arith.constant 0 : i32
    %c0_i32_1 = arith.constant 0 : i32
    %c0_i32_2 = arith.constant 0 : i32
    return %c0_i32, %c0_i32_0, %c0_i32_1 : i32, i32, i32
  }
  func.func @transform_8(%arg0: i32) -> (i32, i32, i32) {
    %c0_i32 = arith.constant 0 : i32
    %c0_i32_0 = arith.constant 0 : i32
    %c0_i32_1 = arith.constant 0 : i32
    %c0_i32_2 = arith.constant 0 : i32
    return %c0_i32, %c0_i32_0, %c0_i32_1 : i32, i32, i32
  }
  func.func @transform_9(%arg0: i32) -> (i32, i32, i32) {
    %c0_i32 = arith.constant 0 : i32
    %c0_i32_0 = arith.constant 0 : i32
    %c0_i32_1 = arith.constant 0 : i32
    %c0_i32_2 = arith.constant 0 : i32
    return %c0_i32, %c0_i32_0, %c0_i32_1 : i32, i32, i32
  }
  func.func @transform_10(%arg0: i32) -> (i32, i32, i32) {
    %c0_i32 = arith.constant 0 : i32
    %c0_i32_0 = arith.constant 0 : i32
    %c0_i32_1 = arith.constant 0 : i32
    %c0_i32_2 = arith.constant 0 : i32
    return %c0_i32, %c0_i32_0, %c0_i32_1 : i32, i32, i32
  }
  func.func @transform_11(%arg0: i32) -> (i32, i32, i32) {
    %c0_i32 = arith.constant 0 : i32
    %c0_i32_0 = arith.constant 0 : i32
    %c0_i32_1 = arith.constant 0 : i32
    %c0_i32_2 = arith.constant 0 : i32
    return %c0_i32, %c0_i32_0, %c0_i32_1 : i32, i32, i32
  }
  func.func @transform_12(%arg0: i32) -> (i32, i32) {
    %c0_i32 = arith.constant 0 : i32
    %c0_i32_0 = arith.constant 0 : i32
    %c0_i32_1 = arith.constant 0 : i32
    return %c0_i32, %c0_i32_0 : i32, i32
  }
  func.func @transform_13(%arg0: i32) -> (i32, i32) {
    %c0_i32 = arith.constant 0 : i32
    %c0_i32_0 = arith.constant 0 : i32
    %c0_i32_1 = arith.constant 0 : i32
    return %c0_i32, %c0_i32_0 : i32, i32
  }
  func.func @transform_14(%arg0: i32) -> (i32, i32) {
    %c0_i32 = arith.constant 0 : i32
    %c0_i32_0 = arith.constant 0 : i32
    %c0_i32_1 = arith.constant 0 : i32
    return %c0_i32, %c0_i32_0 : i32, i32
  }
  func.func @transform_15(%arg0: i32) -> (i32, i32) {
    %c0_i32 = arith.constant 0 : i32
    %c0_i32_0 = arith.constant 0 : i32
    %c0_i32_1 = arith.constant 0 : i32
    return %c0_i32, %c0_i32_0 : i32, i32
  }
  func.func @transform_16(%arg0: i32) -> (i32, i32, i32) {
    %c0_i32 = arith.constant 0 : i32
    %c0_i32_0 = arith.constant 0 : i32
    %c0_i32_1 = arith.constant 0 : i32
    return %arg0, %c0_i32, %c0_i32_0 : i32, i32, i32
  }
}

</mosaic_0001>

<llo_original>
// kernel: tpu_custom_call.1
$region0: #{tpu_custom_call.1}
  #allocation0 [shape = 'u32[]', space=smem, size = 0x4, offset = 0x4, fixed_abs, tag = 'smem constant byte address 0x4 - core index']
  #allocation1 [shape = 'u32[144,128]{1,0:T(1,128)}', space=vmem, size = 0x12000, scoped, tag = 'internal scratch']
  %s0 = inlined_call_operand.vmem [shape: f32[2,8,32], index: 0, kind: input, shape index: {}]
  %s1 = inlined_call_operand.vmem [shape: f32[4,1,32], index: 1, kind: input, shape index: {}]
  %s2 = inlined_call_operand.vmem [shape: f32[4,1,32], index: 2, kind: input, shape index: {}]
  %s3 = inlined_call_operand.vmem [shape: f32[4,32,96], index: 3, kind: input, shape index: {}]
  %s4 = inlined_call_operand.vmem [shape: f32[4,32,32], index: 4, kind: input, shape index: {}]
  %s5 = inlined_call_operand.vmem [shape: f32[4,1,32], index: 5, kind: input, shape index: {}]
  %s6 = inlined_call_operand.vmem [shape: f32[4,1,32], index: 6, kind: input, shape index: {}]
  %s7 = inlined_call_operand.vmem [shape: f32[4,1,32], index: 7, kind: input, shape index: {}]
  %s8 = inlined_call_operand.vmem [shape: f32[4,32,128], index: 8, kind: input, shape index: {}]
  %s9 = inlined_call_operand.vmem [shape: f32[4,1,128], index: 9, kind: input, shape index: {}]
  %s10 = inlined_call_operand.vmem [shape: f32[4,128,32], index: 10, kind: input, shape index: {}]
  %s11 = inlined_call_operand.vmem [shape: f32[4,1,32], index: 11, kind: input, shape index: {}]
  %s12 = inlined_call_operand.vmem [shape: f32[1,32], index: 12, kind: input, shape index: {}]
  %s13 = inlined_call_operand.vmem [shape: f32[1,32], index: 13, kind: input, shape index: {}]
  %s14 = inlined_call_operand.vmem [shape: f32[32,128], index: 14, kind: input, shape index: {}]
  %s15 = inlined_call_operand.vmem [shape: f32[1,128], index: 15, kind: input, shape index: {}]
  %s16 = inlined_call_operand.hbm [shape: f32[2,8,128], index: 16, kind: output, shape index: {}]
  %s17 = sld [smem:[#allocation0]]
  $region74: #{tpu_custom_call.1} parent=0
    _
  %s19 = ssub.s32 1, %s17
  %s20 = scalar_select 0, %s19, %s17
  $region1: #{tpu_custom_call.1} parent=0
    #allocation2 [shape = 'u8[8192]{0}', space=vmem, size = 0x2000, scoped, tag = 'output window, operand 0, single buffered']
    #allocation3 [shape = 's32[1]{0}', space=sflag, size = 0x4, scoped, tag = 'scoped memory for tpu_custom_call.1']
    %21 = vsyncpa [#allocation3], 0
    // Predicated region
    $region2: #{tpu_custom_call.1} parent=1 // pred_check
      _
    $region3: #{tpu_custom_call.1} parent=1 // pred_check_branch
      %23 = sbr.rel (0) target = $region5
    $region4: #{tpu_custom_call.1} parent=1 // pred_region
      _
    $region5: #{tpu_custom_call.1} parent=1 // pred_fallthru
      _
    // Predicated region
    $region6: #{tpu_custom_call.1} parent=1 // pred_check
      _
    $region7: #{tpu_custom_call.1} parent=1 // pred_check_branch
      %25 = sbr.rel (0) target = $region9
    $region8: #{tpu_custom_call.1} parent=1 // pred_region
      _
    $region9: #{tpu_custom_call.1} parent=1 // pred_fallthru
      _
    // Predicated region
    $region10: #{tpu_custom_call.1} parent=1 // pred_check
      _
    $region11: #{tpu_custom_call.1} parent=1 // pred_check_branch
      %27 = sbr.rel (0) target = $region13
    $region12: #{tpu_custom_call.1} parent=1 // pred_region
      _
    $region13: #{tpu_custom_call.1} parent=1 // pred_fallthru
      _
    // Predicated region
    $region14: #{tpu_custom_call.1} parent=1 // pred_check
      _
    $region15: #{tpu_custom_call.1} parent=1 // pred_check_branch
      %29 = sbr.rel (0) target = $region17
    $region16: #{tpu_custom_call.1} parent=1 // pred_region
      _
    $region17: #{tpu_custom_call.1} parent=1 // pred_fallthru
      _
    // Predicated region
    $region18: #{tpu_custom_call.1} parent=1 // pred_check
      _
    $region19: #{tpu_custom_call.1} parent=1 // pred_check_branch
      %31 = sbr.rel (0) target = $region21
    $region20: #{tpu_custom_call.1} parent=1 // pred_region
      _
    $region21: #{tpu_custom_call.1} parent=1 // pred_fallthru
      _
    // Predicated region
    $region22: #{tpu_custom_call.1} parent=1 // pred_check
      _
    $region23: #{tpu_custom_call.1} parent=1 // pred_check_branch
      %33 = sbr.rel (0) target = $region25
    $region24: #{tpu_custom_call.1} parent=1 // pred_region
      _
    $region25: #{tpu_custom_call.1} parent=1 // pred_fallthru
      _
    // Predicated region
    $region26: #{tpu_custom_call.1} parent=1 // pred_check
      _
    $region27: #{tpu_custom_call.1} parent=1 // pred_check_branch
      %35 = sbr.rel (0) target = $region29
    $region28: #{tpu_custom_call.1} parent=1 // pred_region
      _
    $region29: #{tpu_custom_call.1} parent=1 // pred_fallthru
      _
    // Predicated region
    $region30: #{tpu_custom_call.1} parent=1 // pred_check
      _
    $region31: #{tpu_custom_call.1} parent=1 // pred_check_branch
      %37 = sbr.rel (0) target = $region33
    $region32: #{tpu_custom_call.1} parent=1 // pred_region
      _
    $region33: #{tpu_custom_call.1} parent=1 // pred_fallthru
      _
    // Predicated region
    $region34: #{tpu_custom_call.1} parent=1 // pred_check
      _
    $region35: #{tpu_custom_call.1} parent=1 // pred_check_branch
      %39 = sbr.rel (0) target = $region37
    $region36: #{tpu_custom_call.1} parent=1 // pred_region
      _
    $region37: #{tpu_custom_call.1} parent=1 // pred_fallthru
      _
    // Predicated region
    $region38: #{tpu_custom_call.1} parent=1 // pred_check
      _
    $region39: #{tpu_custom_call.1} parent=1 // pred_check_branch
      %41 = sbr.rel (0) target = $region41
    $region40: #{tpu_custom_call.1} parent=1 // pred_region
      _
    $region41: #{tpu_custom_call.1} parent=1 // pred_fallthru
      _
    // Predicated region
    $region42: #{tpu_custom_call.1} parent=1 // pred_check
      _
    $region43: #{tpu_custom_call.1} parent=1 // pred_check_branch
      %43 = sbr.rel (0) target = $region45
    $region44: #{tpu_custom_call.1} parent=1 // pred_region
      _
    $region45: #{tpu_custom_call.1} parent=1 // pred_fallthru
      _
    // Predicated region
    $region46: #{tpu_custom_call.1} parent=1 // pred_check
      _
    $region47: #{tpu_custom_call.1} parent=1 // pred_check_branch
      %45 = sbr.rel (0) target = $region49
    $region48: #{tpu_custom_call.1} parent=1 // pred_region
      _
    $region49: #{tpu_custom_call.1} parent=1 // pred_fallthru
      _
    // Predicated region
    $region50: #{tpu_custom_call.1} parent=1 // pred_check
      _
    $region51: #{tpu_custom_call.1} parent=1 // pred_check_branch
      %47 = sbr.rel (0) target = $region53
    $region52: #{tpu_custom_call.1} parent=1 // pred_region
      _
    $region53: #{tpu_custom_call.1} parent=1 // pred_fallthru
      _
    // Predicated region
    $region54: #{tpu_custom_call.1} parent=1 // pred_check
      _
    $region55: #{tpu_custom_call.1} parent=1 // pred_check_branch
      %49 = sbr.rel (0) target = $region57
    $region56: #{tpu_custom_call.1} parent=1 // pred_region
      _
    $region57: #{tpu_custom_call.1} parent=1 // pred_fallthru
      _
    // Predicated region
    $region58: #{tpu_custom_call.1} parent=1 // pred_check
      _
    $region59: #{tpu_custom_call.1} parent=1 // pred_check_branch
      %51 = sbr.rel (0) target = $region61
    $region60: #{tpu_custom_call.1} parent=1 // pred_region
      _
    $region61: #{tpu_custom_call.1} parent=1 // pred_fallthru
      _
    // Predicated region
    $region62: #{tpu_custom_call.1} parent=1 // pred_check
      _
    $region63: #{tpu_custom_call.1} parent=1 // pred_check_branch
      %53 = sbr.rel (0) target = $region65
    $region64: #{tpu_custom_call.1} parent=1 // pred_region
      _
    $region65: #{tpu_custom_call.1} parent=1 // pred_fallthru
      _
    %v54 = vlaneseq
    %v55 = vshrl.u32 %v54, 7
    %v56 = vlaneseq
    %v57 = vand.u32 %v56, 127
    %vm58 = vcmp.le.s32.totalorder %v57, %v55
    %v59 = vsel %vm58, 0.0, -1e+30
    %v60 = vld [vmem:[%s0] sm:$0xff]
    %v61 = vld [vmem:[%s0 + $0x8] sm:$0xff]
    %v62 = vld [vmem:[%s1] sm:$0x1]
    %v63 = vld [vmem:[%s2] sm:$0x1]
    %vm64 = vcmask 261120
    %v65 = vsel %vm64, %v60, 0.0
    %66 = vadd.xlane.f32.xlu0 %v65
    %v67 = vpop.xlane.xlu0 %66
    %v68 = vsel %vm64, %v61, 0.0
    %69 = vadd.xlane.f32.xlu0 %v68
    %v70 = vpop.xlane.xlu0 %69
    %v71 = vrcp.pop 32.0
    %v72 = vmul.f32 %v67, %v71
    %v73 = vmul.f32 %v70, %v71
    %v74 = vsub.f32 %v60, %v72
    %v75 = vsub.f32 %v61, %v73
    %v76 = vmul.f32 %v74, %v74
    %v77 = vmul.f32 %v75, %v75
    %v78 = vsel %vm64, %v76, 0.0
    %79 = vadd.xlane.f32.xlu0 %v78
    %v80 = vpop.xlane.xlu0 %79
    %v81 = vsel %vm64, %v77, 0.0
    %82 = vadd.xlane.f32.xlu0 %v81
    %v83 = vpop.xlane.xlu0 %82
    %v84 = vmul.f32 %v80, %v71
    %v85 = vmul.f32 %v83, %v71
    %v86 = vadd.f32 %v84, 1e-05
    %v87 = vadd.f32 %v85, 1e-05
    %v88 = vrsqrt.pop %v86
    %v89 = vrsqrt.pop %v87
    %v90 = vmul.f32 %v74, %v88
    %v91 = vmul.f32 %v75, %v89
    %v93 = vlaneseq
    %v94 = vshrl.u32 %v93, 7
    %v95 = vsub.s32 0, %v94
    %v96 = vrot.slane %v62, %v95
    %v98 = vmul.f32 %v90, %v96
    %v99 = vmul.f32 %v91, %v96
    %v101 = vlaneseq
    %v102 = vshrl.u32 %v101, 7
    %v103 = vsub.s32 0, %v102
    %v104 = vrot.slane %v63, %v103
    %v106 = vadd.f32 %v98, %v104
    %v107 = vadd.f32 %v99, %v104
    %v108 = vld [vmem:[%s3] sm:$0xff]
    %v109 = vld [vmem:[%s3 + $0x8] sm:$0xff]
    %v110 = vld [vmem:[%s3 + $0x10] sm:$0xff]
    %v111 = vld [vmem:[%s3 + $0x18] sm:$0xff]
    %v113 = vsel %vm64, %v106, 0
    %v116 = vsel %vm64, %v107, 0
    %118 = vmatprep.subr.mxu0 0.0
    %119 = vmatpush1.msra.mxu0 %v108
    %120 = vmatprep.subr.mxu0 0.0
    %121 = vmatpush1.msra.mxu0 %v109
    %122 = vmatprep.subr.mxu0 0.0
    %123 = vmatpush1.msra.mxu0 %v110
    %124 = vmatprep.subr.mxu0 0.0
    %125 = vmatpush1.msra.mxu0 %v111
    %126 = vmatprep.subr.mxu0 0.0
    %127 = vmatpush1.msra.mxu0 0.0
    %128 = vmatprep.subr.mxu0 0.0
    %129 = vmatpush1.msra.mxu0 0.0
    %130 = vmatprep.subr.mxu0 0.0
    %131 = vmatpush1.msra.mxu0 0.0
    %132 = vmatprep.subr.mxu0 0.0
    %133 = vmatpush1.msra.mxu0 0.0
    %134 = vmatprep.subr.mxu0 0.0
    %135 = vmatpush1.msra.mxu0 0.0
    %136 = vmatprep.subr.mxu0 0.0
    %137 = vmatpush1.msra.mxu0 0.0
    %138 = vmatprep.subr.mxu0 0.0
    %139 = vmatpush1.msra.mxu0 0.0
    %140 = vmatprep.subr.mxu0 0.0
    %141 = vmatpush1.msra.mxu0 0.0
    %142 = vmatprep.subr.mxu0 0.0
    %143 = vmatpush1.msra.mxu0 0.0
    %144 = vmatprep.subr.mxu0 0.0
    %145 = vmatpush1.msra.mxu0 0.0
    %146 = vmatprep.subr.mxu0 0.0
    %147 = vmatpush1.msra.mxu0 0.0
    %148 = vmatprep.subr.mxu0 0.0
    %149 = vmatpush1.msra.mxu0 0.0
    %150 = vmatprep.subr.mxu0 0.0
    %151 = vmatpush1.msra.mxu0 0.0
    %152 = vmatprep.subr.mxu0 0.0
    %153 = vmatpush1.msra.mxu0 0.0
    %154 = vmatprep.subr.mxu0 0.0
    %155 = vmatpush1.msra.mxu0 0.0
    %156 = vmatprep.subr.mxu0 0.0
    %157 = vmatpush1.msra.mxu0 0.0
    %158 = vmatprep.subr.mxu0 0.0
    %159 = vmatpush1.msra.mxu0 0.0
    %160 = vmatprep.subr.mxu0 0.0
    %161 = vmatpush1.msra.mxu0 0.0
    %162 = vmatprep.subr.mxu0 0.0
    %163 = vmatpush1.msra.mxu0 0.0
    %164 = vmatprep.subr.mxu0 0.0
    %165 = vmatpush1.msra.mxu0 0.0
    %166 = vmatprep.subr.mxu0 0.0
    %167 = vmatpush1.msra.mxu0 0.0
    %168 = vmatprep.subr.mxu0 0.0
    %169 = vmatpush1.msra.mxu0 0.0
    %170 = vmatprep.subr.mxu0 0.0
    %171 = vmatpush1.msra.mxu0 0.0
    %172 = vmatprep.subr.mxu0 0.0
    %173 = vmatpush1.msra.mxu0 0.0
    %174 = vmatprep.subr.mxu0 0.0
    %175 = vmatpush1.msra.mxu0 0.0
    %176 = vmatprep.subr.mxu0 0.0
    %177 = vmatpush1.msra.mxu0 0.0
    %178 = vmatprep.subr.mxu0 0.0
    %179 = vmatpush1.msra.mxu0 0.0
    %180 = vmatprep.subr.mxu0 0.0
    %181 = vmatpush1.msra.mxu0 0.0
    %182 = vmatprep.mubr.f32.mxu0 0.0
    %183 = vmatmul.mubr.f32.gmra.mrb[0].mxu0 %v113
    %v184 = vpop.f32.mrb[0].mxu0
    %v185 = vadd.f32 0.0, %v184
    %v186 = vpop.f32.mrb[0].mxu0
    %187 = vmatprep.mubr.f32.mxu0 0.0
    %188 = vmatmul.mubr.f32.gmra.mrb[0].mxu0 %v116
    %v189 = vpop.f32.mrb[0].mxu0
    %v190 = vadd.f32 0.0, %v189
    %v191 = vpop.f32.mrb[0].mxu0
    %192 = vdwg.mxu0
    %194 = vrot.lane.b32.xlu0 %v185, 96
    %v195 = vpop.permute.xlu0 %194
    %vm196 = vcmask 64512
    %v197 = vsel %vm196, %v185, 0
    %v199 = vsel %vm196, %v195, 0
    %201 = vmatprep.subr.mxu0 0.0
    %202 = vmatpush1.xpose.msra.mxu0 %v199
    %203 = vmatprep.subr.mxu0 0.0
    %204 = vmatpush1.xpose.msra.mxu0 0.0
    %205 = vmatprep.subr.mxu0 0.0
    %206 = vmatpush1.xpose.msra.mxu0 0.0
    %207 = vmatprep.subr.mxu0 0.0
    %208 = vmatpush1.xpose.msra.mxu0 0.0
    %209 = vmatprep.subr.mxu0 0.0
    %210 = vmatpush1.xpose.msra.mxu0 0.0
    %211 = vmatprep.subr.mxu0 0.0
    %212 = vmatpush1.xpose.msra.mxu0 0.0
    %213 = vmatprep.subr.mxu0 0.0
    %214 = vmatpush1.xpose.msra.mxu0 0.0
    %215 = vmatprep.subr.mxu0 0.0
    %216 = vmatpush1.xpose.msra.mxu0 0.0
    %217 = vmatprep.subr.mxu0 0.0
    %218 = vmatpush1.xpose.msra.mxu0 0.0
    %219 = vmatprep.subr.mxu0 0.0
    %220 = vmatpush1.xpose.msra.mxu0 0.0
    %221 = vmatprep.subr.mxu0 0.0
    %222 = vmatpush1.xpose.msra.mxu0 0.0
    %223 = vmatprep.subr.mxu0 0.0
    %224 = vmatpush1.xpose.msra.mxu0 0.0
    %225 = vmatprep.subr.mxu0 0.0
    %226 = vmatpush1.xpose.msra.mxu0 0.0
    %227 = vmatprep.subr.mxu0 0.0
    %228 = vmatpush1.xpose.msra.mxu0 0.0
    %229 = vmatprep.subr.mxu0 0.0
    %230 = vmatpush1.xpose.msra.mxu0 0.0
    %231 = vmatprep.subr.mxu0 0.0
    %232 = vmatpush1.xpose.msra.mxu0 0.0
    %233 = vmatprep.subr.mxu0 0.0
    %234 = vmatpush1.xpose.msra.mxu0 0.0
    %235 = vmatprep.subr.mxu0 0.0
    %236 = vmatpush1.xpose.msra.mxu0 0.0
    %237 = vmatprep.subr.mxu0 0.0
    %238 = vmatpush1.xpose.msra.mxu0 0.0
    %239 = vmatprep.subr.mxu0 0.0
    %240 = vmatpush1.xpose.msra.mxu0 0.0
    %241 = vmatprep.subr.mxu0 0.0
    %242 = vmatpush1.xpose.msra.mxu0 0.0
    %243 = vmatprep.subr.mxu0 0.0
    %244 = vmatpush1.xpose.msra.mxu0 0.0
    %245 = vmatprep.subr.mxu0 0.0
    %246 = vmatpush1.xpose.msra.mxu0 0.0
    %247 = vmatprep.subr.mxu0 0.0
    %248 = vmatpush1.xpose.msra.mxu0 0.0
    %249 = vmatprep.subr.mxu0 0.0
    %250 = vmatpush1.xpose.msra.mxu0 0.0
    %251 = vmatprep.subr.mxu0 0.0
    %252 = vmatpush1.xpose.msra.mxu0 0.0
    %253 = vmatprep.subr.mxu0 0.0
    %254 = vmatpush1.xpose.msra.mxu0 0.0
    %255 = vmatprep.subr.mxu0 0.0
    %256 = vmatpush1.xpose.msra.mxu0 0.0
    %257 = vmatprep.subr.mxu0 0.0
    %258 = vmatpush1.xpose.msra.mxu0 0.0
    %259 = vmatprep.subr.mxu0 0.0
    %260 = vmatpush1.xpose.msra.mxu0 0.0
    %261 = vmatprep.subr.mxu0 0.0
    %262 = vmatpush1.xpose.msra.mxu0 0.0
    %263 = vmatprep.subr.mxu0 0.0
    %264 = vmatpush1.xpose.msra.mxu0 0.0
    %265 = vmatprep.mubr.f32.mxu0 0.0
    %266 = vmatmul.mubr.f32.gmra.mrb[0].mxu0 %v197
    %v267 = vpop.f32.mrb[0].mxu0
    %v268 = vadd.f32 %v59, %v267
    %v269 = vpop.f32.mrb[0].mxu0
    %270 = vdwg.mxu0
    %272 = vrot.lane.b32.xlu0 %v190, 96
    %v273 = vpop.permute.xlu0 %272
    %v274 = vsel %vm196, %v190, 0
    %v276 = vsel %vm196, %v273, 0
    %278 = vmatprep.subr.mxu0 0.0
    %279 = vmatpush1.xpose.msra.mxu0 %v276
    %280 = vmatprep.subr.mxu0 0.0
    %281 = vmatpush1.xpose.msra.mxu0 0.0
    %282 = vmatprep.subr.mxu0 0.0
    %283 = vmatpush1.xpose.msra.mxu0 0.0
    %284 = vmatprep.subr.mxu0 0.0
    %285 = vmatpush1.xpose.msra.mxu0 0.0
    %286 = vmatprep.subr.mxu0 0.0
    %287 = vmatpush1.xpose.msra.mxu0 0.0
    %288 = vmatprep.subr.mxu0 0.0
    %289 = vmatpush1.xpose.msra.mxu0 0.0
    %290 = vmatprep.subr.mxu0 0.0
    %291 = vmatpush1.xpose.msra.mxu0 0.0
    %292 = vmatprep.subr.mxu0 0.0
    %293 = vmatpush1.xpose.msra.mxu0 0.0
    %294 = vmatprep.subr.mxu0 0.0
    %295 = vmatpush1.xpose.msra.mxu0 0.0
    %296 = vmatprep.subr.mxu0 0.0
    %297 = vmatpush1.xpose.msra.mxu0 0.0
    %298 = vmatprep.subr.mxu0 0.0
    %299 = vmatpush1.xpose.msra.mxu0 0.0
    %300 = vmatprep.subr.mxu0 0.0
    %301 = vmatpush1.xpose.msra.mxu0 0.0
    %302 = vmatprep.subr.mxu0 0.0
    %303 = vmatpush1.xpose.msra.mxu0 0.0
    %304 = vmatprep.subr.mxu0 0.0
    %305 = vmatpush1.xpose.msra.mxu0 0.0
    %306 = vmatprep.subr.mxu0 0.0
    %307 = vmatpush1.xpose.msra.mxu0 0.0
    %308 = vmatprep.subr.mxu0 0.0
    %309 = vmatpush1.xpose.msra.mxu0 0.0
    %310 = vmatprep.subr.mxu0 0.0
    %311 = vmatpush1.xpose.msra.mxu0 0.0
    %312 = vmatprep.subr.mxu0 0.0
    %313 = vmatpush1.xpose.msra.mxu0 0.0
    %314 = vmatprep.subr.mxu0 0.0
    %315 = vmatpush1.xpose.msra.mxu0 0.0
    %316 = vmatprep.subr.mxu0 0.0
    %317 = vmatpush1.xpose.msra.mxu0 0.0
    %318 = vmatprep.subr.mxu0 0.0
    %319 = vmatpush1.xpose.msra.mxu0 0.0
    %320 = vmatprep.subr.mxu0 0.0
    %321 = vmatpush1.xpose.msra.mxu0 0.0
    %322 = vmatprep.subr.mxu0 0.0
    %323 = vmatpush1.xpose.msra.mxu0 0.0
    %324 = vmatprep.subr.mxu0 0.0
    %325 = vmatpush1.xpose.msra.mxu0 0.0
    %326 = vmatprep.subr.mxu0 0.0
    %327 = vmatpush1.xpose.msra.mxu0 0.0
    %328 = vmatprep.subr.mxu0 0.0
    %329 = vmatpush1.xpose.msra.mxu0 0.0
    %330 = vmatprep.subr.mxu0 0.0
    %331 = vmatpush1.xpose.msra.mxu0 0.0
    %332 = vmatprep.subr.mxu0 0.0
    %333 = vmatpush1.xpose.msra.mxu0 0.0
    %334 = vmatprep.subr.mxu0 0.0
    %335 = vmatpush1.xpose.msra.mxu0 0.0
    %336 = vmatprep.subr.mxu0 0.0
    %337 = vmatpush1.xpose.msra.mxu0 0.0
    %338 = vmatprep.subr.mxu0 0.0
    %339 = vmatpush1.xpose.msra.mxu0 0.0
    %340 = vmatprep.subr.mxu0 0.0
    %341 = vmatpush1.xpose.msra.mxu0 0.0
    %342 = vmatprep.mubr.f32.mxu0 0.0
    %343 = vmatmul.mubr.f32.gmra.mrb[0].mxu0 %v274
    %v344 = vpop.f32.mrb[0].mxu0
    %v345 = vadd.f32 %v59, %v344
    %v346 = vpop.f32.mrb[0].mxu0
    %347 = vdwg.mxu0
    %v348 = vsel %vm196, %v268, -inf
    %349 = vmax.xlane.f32.xlu0 %v348
    %v350 = vpop.xlane.xlu0 %349
    %v351 = vsel %vm196, %v345, -inf
    %352 = vmax.xlane.f32.xlu0 %v351
    %v353 = vpop.xlane.xlu0 %352
    %v354 = vsub.f32 %v268, %v350
    %v355 = vsub.f32 %v345, %v353
    %v356 = vmul.f32 %v354, 1.442695
    %v357 = vpow.pop %v356
    %v358 = vmul.f32 %v355, 1.442695
    %v359 = vpow.pop %v358
    %v360 = vsel %vm196, %v357, 0.0
    %361 = vadd.xlane.f32.xlu0 %v360
    %v362 = vpop.xlane.xlu0 %361
    %v363 = vsel %vm196, %v359, 0.0
    %364 = vadd.xlane.f32.xlu0 %v363
    %v365 = vpop.xlane.xlu0 %364
    %v366 = vrcp.pop %v362
    %v367 = vrcp.pop %v365
    %v368 = vmul.f32 %v357, %v366
    %v369 = vmul.f32 %v359, %v367
    %370 = vrot.lane.b32.xlu0 %v185, 64
    %v371 = vpop.permute.xlu0 %370
    %v374 = vsel %vm196, %v368, 0
    %376 = vmatprep.subr.mxu0 0.0
    %377 = vmatpush1.msra.mxu0 %v371
    %378 = vmatprep.subr.mxu0 0.0
    %379 = vmatpush1.msra.mxu0 0.0
    %380 = vmatprep.subr.mxu0 0.0
    %381 = vmatpush1.msra.mxu0 0.0
    %382 = vmatprep.subr.mxu0 0.0
    %383 = vmatpush1.msra.mxu0 0.0
    %384 = vmatprep.subr.mxu0 0.0
    %385 = vmatpush1.msra.mxu0 0.0
    %386 = vmatprep.subr.mxu0 0.0
    %387 = vmatpush1.msra.mxu0 0.0
    %388 = vmatprep.subr.mxu0 0.0
    %389 = vmatpush1.msra.mxu0 0.0
    %390 = vmatprep.subr.mxu0 0.0
    %391 = vmatpush1.msra.mxu0 0.0
    %392 = vmatprep.subr.mxu0 0.0
    %393 = vmatpush1.msra.mxu0 0.0
    %394 = vmatprep.subr.mxu0 0.0
    %395 = vmatpush1.msra.mxu0 0.0
    %396 = vmatprep.subr.mxu0 0.0
    %397 = vmatpush1.msra.mxu0 0.0
    %398 = vmatprep.subr.mxu0 0.0
    %399 = vmatpush1.msra.mxu0 0.0
    %400 = vmatprep.subr.mxu0 0.0
    %401 = vmatpush1.msra.mxu0 0.0
    %402 = vmatprep.subr.mxu0 0.0
    %403 = vmatpush1.msra.mxu0 0.0
    %404 = vmatprep.subr.mxu0 0.0
    %405 = vmatpush1.msra.mxu0 0.0
    %406 = vmatprep.subr.mxu0 0.0
    %407 = vmatpush1.msra.mxu0 0.0
    %408 = vmatprep.subr.mxu0 0.0
    %409 = vmatpush1.msra.mxu0 0.0
    %410 = vmatprep.subr.mxu0 0.0
    %411 = vmatpush1.msra.mxu0 0.0
    %412 = vmatprep.subr.mxu0 0.0
    %413 = vmatpush1.msra.mxu0 0.0
    %414 = vmatprep.subr.mxu0 0.0
    %415 = vmatpush1.msra.mxu0 0.0
    %416 = vmatprep.subr.mxu0 0.0
    %417 = vmatpush1.msra.mxu0 0.0
    %418 = vmatprep.subr.mxu0 0.0
    %419 = vmatpush1.msra.mxu0 0.0
    %420 = vmatprep.subr.mxu0 0.0
    %421 = vmatpush1.msra.mxu0 0.0
    %422 = vmatprep.subr.mxu0 0.0
    %423 = vmatpush1.msra.mxu0 0.0
    %424 = vmatprep.subr.mxu0 0.0
    %425 = vmatpush1.msra.mxu0 0.0
    %426 = vmatprep.subr.mxu0 0.0
    %427 = vmatpush1.msra.mxu0 0.0
    %428 = vmatprep.subr.mxu0 0.0
    %429 = vmatpush1.msra.mxu0 0.0
    %430 = vmatprep.subr.mxu0 0.0
    %431 = vmatpush1.msra.mxu0 0.0
    %432 = vmatprep.subr.mxu0 0.0
    %433 = vmatpush1.msra.mxu0 0.0
    %434 = vmatprep.subr.mxu0 0.0
    %435 = vmatpush1.msra.mxu0 0.0
    %436 = vmatprep.subr.mxu0 0.0
    %437 = vmatpush1.msra.mxu0 0.0
    %438 = vmatprep.subr.mxu0 0.0
    %439 = vmatpush1.msra.mxu0 0.0
    %440 = vmatprep.mubr.f32.mxu0 0.0
    %441 = vmatmul.mubr.f32.gmra.mrb[0].mxu0 %v374
    %v442 = vpop.f32.mrb[0].mxu0
    %v443 = vadd.f32 0.0, %v442
    %v444 = vpop.f32.mrb[0].mxu0
    %445 = vdwg.mxu0
    %446 = vrot.lane.b32.xlu0 %v190, 64
    %v447 = vpop.permute.xlu0 %446
    %v450 = vsel %vm196, %v369, 0
    %452 = vmatprep.subr.mxu0 0.0
    %453 = vmatpush1.msra.mxu0 %v447
    %454 = vmatprep.subr.mxu0 0.0
    %455 = vmatpush1.msra.mxu0 0.0
    %456 = vmatprep.subr.mxu0 0.0
    %457 = vmatpush1.msra.mxu0 0.0
    %458 = vmatprep.subr.mxu0 0.0
    %459 = vmatpush1.msra.mxu0 0.0
    %460 = vmatprep.subr.mxu0 0.0
    %461 = vmatpush1.msra.mxu0 0.0
    %462 = vmatprep.subr.mxu0 0.0
    %463 = vmatpush1.msra.mxu0 0.0
    %464 = vmatprep.subr.mxu0 0.0
    %465 = vmatpush1.msra.mxu0 0.0
    %466 = vmatprep.subr.mxu0 0.0
    %467 = vmatpush1.msra.mxu0 0.0
    %468 = vmatprep.subr.mxu0 0.0
    %469 = vmatpush1.msra.mxu0 0.0
    %470 = vmatprep.subr.mxu0 0.0
    %471 = vmatpush1.msra.mxu0 0.0
    %472 = vmatprep.subr.mxu0 0.0
    %473 = vmatpush1.msra.mxu0 0.0
    %474 = vmatprep.subr.mxu0 0.0
    %475 = vmatpush1.msra.mxu0 0.0
    %476 = vmatprep.subr.mxu0 0.0
    %477 = vmatpush1.msra.mxu0 0.0
    %478 = vmatprep.subr.mxu0 0.0
    %479 = vmatpush1.msra.mxu0 0.0
    %480 = vmatprep.subr.mxu0 0.0
    %481 = vmatpush1.msra.mxu0 0.0
    %482 = vmatprep.subr.mxu0 0.0
    %483 = vmatpush1.msra.mxu0 0.0
    %484 = vmatprep.subr.mxu0 0.0
    %485 = vmatpush1.msra.mxu0 0.0
    %486 = vmatprep.subr.mxu0 0.0
    %487 = vmatpush1.msra.mxu0 0.0
    %488 = vmatprep.subr.mxu0 0.0
    %489 = vmatpush1.msra.mxu0 0.0
    %490 = vmatprep.subr.mxu0 0.0
    %491 = vmatpush1.msra.mxu0 0.0
    %492 = vmatprep.subr.mxu0 0.0
    %493 = vmatpush1.msra.mxu0 0.0
    %494 = vmatprep.subr.mxu0 0.0
    %495 = vmatpush1.msra.mxu0 0.0
    %496 = vmatprep.subr.mxu0 0.0
    %497 = vmatpush1.msra.mxu0 0.0
    %498 = vmatprep.subr.mxu0 0.0
    %499 = vmatpush1.msra.mxu0 0.0
    %500 = vmatprep.subr.mxu0 0.0
    %501 = vmatpush1.msra.mxu0 0.0
    %502 = vmatprep.subr.mxu0 0.0
    %503 = vmatpush1.msra.mxu0 0.0
    %504 = vmatprep.subr.mxu0 0.0
    %505 = vmatpush1.msra.mxu0 0.0
    %506 = vmatprep.subr.mxu0 0.0
    %507 = vmatpush1.msra.mxu0 0.0
    %508 = vmatprep.subr.mxu0 0.0
    %509 = vmatpush1.msra.mxu0 0.0
    %510 = vmatprep.subr.mxu0 0.0
    %511 = vmatpush1.msra.mxu0 0.0
    %512 = vmatprep.subr.mxu0 0.0
    %513 = vmatpush1.msra.mxu0 0.0
    %514 = vmatprep.subr.mxu0 0.0
    %515 = vmatpush1.msra.mxu0 0.0
    %516 = vmatprep.mubr.f32.mxu0 0.0
    %517 = vmatmul.mubr.f32.gmra.mrb[0].mxu0 %v450
    %v518 = vpop.f32.mrb[0].mxu0
    %v519 = vadd.f32 0.0, %v518
    %v520 = vpop.f32.mrb[0].mxu0
    %521 = vdwg.mxu0
    %522 = vrot.lane.b32.xlu0 %v185, 120
    %v523 = vpop.permute.xlu0 %522
    %524 = vrot.lane.b32.xlu0 %v185, 88
    %v525 = vpop.permute.xlu0 %524
    %v526 = vsel %vm196, %v523, 0
    %v528 = vsel %vm196, %v525, 0
    %530 = vmatprep.subr.mxu0 0.0
    %531 = vmatpush1.xpose.msra.mxu0 %v528
    %532 = vmatprep.subr.mxu0 0.0
    %533 = vmatpush1.xpose.msra.mxu0 0.0
    %534 = vmatprep.subr.mxu0 0.0
    %535 = vmatpush1.xpose.msra.mxu0 0.0
    %536 = vmatprep.subr.mxu0 0.0
    %537 = vmatpush1.xpose.msra.mxu0 0.0
    %538 = vmatprep.subr.mxu0 0.0
    %539 = vmatpush1.xpose.msra.mxu0 0.0
    %540 = vmatprep.subr.mxu0 0.0
    %541 = vmatpush1.xpose.msra.mxu0 0.0
    %542 = vmatprep.subr.mxu0 0.0
    %543 = vmatpush1.xpose.msra.mxu0 0.0
    %544 = vmatprep.subr.mxu0 0.0
    %545 = vmatpush1.xpose.msra.mxu0 0.0
    %546 = vmatprep.subr.mxu0 0.0
    %547 = vmatpush1.xpose.msra.mxu0 0.0
    %548 = vmatprep.subr.mxu0 0.0
    %549 = vmatpush1.xpose.msra.mxu0 0.0
    %550 = vmatprep.subr.mxu0 0.0
    %551 = vmatpush1.xpose.msra.mxu0 0.0
    %552 = vmatprep.subr.mxu0 0.0
    %553 = vmatpush1.xpose.msra.mxu0 0.0
    %554 = vmatprep.subr.mxu0 0.0
    %555 = vmatpush1.xpose.msra.mxu0 0.0
    %556 = vmatprep.subr.mxu0 0.0
    %557 = vmatpush1.xpose.msra.mxu0 0.0
    %558 = vmatprep.subr.mxu0 0.0
    %559 = vmatpush1.xpose.msra.mxu0 0.0
    %560 = vmatprep.subr.mxu0 0.0
    %561 = vmatpush1.xpose.msra.mxu0 0.0
    %562 = vmatprep.subr.mxu0 0.0
    %563 = vmatpush1.xpose.msra.mxu0 0.0
    %564 = vmatprep.subr.mxu0 0.0
    %565 = vmatpush1.xpose.msra.mxu0 0.0
    %566 = vmatprep.subr.mxu0 0.0
    %567 = vmatpush1.xpose.msra.mxu0 0.0
    %568 = vmatprep.subr.mxu0 0.0
    %569 = vmatpush1.xpose.msra.mxu0 0.0
    %570 = vmatprep.subr.mxu0 0.0
    %571 = vmatpush1.xpose.msra.mxu0 0.0
    %572 = vmatprep.subr.mxu0 0.0
    %573 = vmatpush1.xpose.msra.mxu0 0.0
    %574 = vmatprep.subr.mxu0 0.0
    %575 = vmatpush1.xpose.msra.mxu0 0.0
    %576 = vmatprep.subr.mxu0 0.0
    %577 = vmatpush1.xpose.msra.mxu0 0.0
    %578 = vmatprep.subr.mxu0 0.0
    %579 = vmatpush1.xpose.msra.mxu0 0.0
    %580 = vmatprep.subr.mxu0 0.0
    %581 = vmatpush1.xpose.msra.mxu0 0.0
    %582 = vmatprep.subr.mxu0 0.0
    %583 = vmatpush1.xpose.msra.mxu0 0.0
    %584 = vmatprep.subr.mxu0 0.0
    %585 = vmatpush1.xpose.msra.mxu0 0.0
    %586 = vmatprep.subr.mxu0 0.0
    %587 = vmatpush1.xpose.msra.mxu0 0.0
    %588 = vmatprep.subr.mxu0 0.0
    %589 = vmatpush1.xpose.msra.mxu0 0.0
    %590 = vmatprep.subr.mxu0 0.0
    %591 = vmatpush1.xpose.msra.mxu0 0.0
    %592 = vmatprep.subr.mxu0 0.0
    %593 = vmatpush1.xpose.msra.mxu0 0.0
    %594 = vmatprep.mubr.f32.mxu0 0.0
    %595 = vmatmul.mubr.f32.gmra.mrb[0].mxu0 %v526
    %v596 = vpop.f32.mrb[0].mxu0
    %v597 = vadd.f32 %v59, %v596
    %v598 = vpop.f32.mrb[0].mxu0
    %599 = vdwg.mxu0
    %600 = vrot.lane.b32.xlu0 %v190, 120
    %v601 = vpop.permute.xlu0 %600
    %602 = vrot.lane.b32.xlu0 %v190, 88
    %v603 = vpop.permute.xlu0 %602
    %v604 = vsel %vm196, %v601, 0
    %v606 = vsel %vm196, %v603, 0
    %608 = vmatprep.subr.mxu0 0.0
    %609 = vmatpush1.xpose.msra.mxu0 %v606
    %610 = vmatprep.subr.mxu0 0.0
    %611 = vmatpush1.xpose.msra.mxu0 0.0
    %612 = vmatprep.subr.mxu0 0.0
    %613 = vmatpush1.xpose.msra.mxu0 0.0
    %614 = vmatprep.subr.mxu0 0.0
    %615 = vmatpush1.xpose.msra.mxu0 0.0
    %616 = vmatprep.subr.mxu0 0.0
    %617 = vmatpush1.xpose.msra.mxu0 0.0
    %618 = vmatprep.subr.mxu0 0.0
    %619 = vmatpush1.xpose.msra.mxu0 0.0
    %620 = vmatprep.subr.mxu0 0.0
    %621 = vmatpush1.xpose.msra.mxu0 0.0
    %622 = vmatprep.subr.mxu0 0.0
    %623 = vmatpush1.xpose.msra.mxu0 0.0
    %624 = vmatprep.subr.mxu0 0.0
    %625 = vmatpush1.xpose.msra.mxu0 0.0
    %626 = vmatprep.subr.mxu0 0.0
    %627 = vmatpush1.xpose.msra.mxu0 0.0
    %628 = vmatprep.subr.mxu0 0.0
    %629 = vmatpush1.xpose.msra.mxu0 0.0
    %630 = vmatprep.subr.mxu0 0.0
    %631 = vmatpush1.xpose.msra.mxu0 0.0
    %632 = vmatprep.subr.mxu0 0.0
    %633 = vmatpush1.xpose.msra.mxu0 0.0
    %634 = vmatprep.subr.mxu0 0.0
    %635 = vmatpush1.xpose.msra.mxu0 0.0
    %636 = vmatprep.subr.mxu0 0.0
    %637 = vmatpush1.xpose.msra.mxu0 0.0
    %638 = vmatprep.subr.mxu0 0.0
    %639 = vmatpush1.xpose.msra.mxu0 0.0
    %640 = vmatprep.subr.mxu0 0.0
    %641 = vmatpush1.xpose.msra.mxu0 0.0
    %642 = vmatprep.subr.mxu0 0.0
    %643 = vmatpush1.xpose.msra.mxu0 0.0
    %644 = vmatprep.subr.mxu0 0.0
    %645 = vmatpush1.xpose.msra.mxu0 0.0
    %646 = vmatprep.subr.mxu0 0.0
    %647 = vmatpush1.xpose.msra.mxu0 0.0
    %648 = vmatprep.subr.mxu0 0.0
    %649 = vmatpush1.xpose.msra.mxu0 0.0
    %650 = vmatprep.subr.mxu0 0.0
    %651 = vmatpush1.xpose.msra.mxu0 0.0
    %652 = vmatprep.subr.mxu0 0.0
    %653 = vmatpush1.xpose.msra.mxu0 0.0
    %654 = vmatprep.subr.mxu0 0.0
    %655 = vmatpush1.xpose.msra.mxu0 0.0
    %656 = vmatprep.subr.mxu0 0.0
    %657 = vmatpush1.xpose.msra.mxu0 0.0
    %658 = vmatprep.subr.mxu0 0.0
    %659 = vmatpush1.xpose.msra.mxu0 0.0
    %660 = vmatprep.subr.mxu0 0.0
    %661 = vmatpush1.xpose.msra.mxu0 0.0
    %662 = vmatprep.subr.mxu0 0.0
    %663 = vmatpush1.xpose.msra.mxu0 0.0
    %664 = vmatprep.subr.mxu0 0.0
    %665 = vmatpush1.xpose.msra.mxu0 0.0
    %666 = vmatprep.subr.mxu0 0.0
    %667 = vmatpush1.xpose.msra.mxu0 0.0
    %668 = vmatprep.subr.mxu0 0.0
    %669 = vmatpush1.xpose.msra.mxu0 0.0
    %670 = vmatprep.subr.mxu0 0.0
    %671 = vmatpush1.xpose.msra.mxu0 0.0
    %672 = vmatprep.mubr.f32.mxu0 0.0
    %673 = vmatmul.mubr.f32.gmra.mrb[0].mxu0 %v604
    %v674 = vpop.f32.mrb[0].mxu0
    %v675 = vadd.f32 %v59, %v674
    %v676 = vpop.f32.mrb[0].mxu0
    %677 = vdwg.mxu0
    %v678 = vsel %vm196, %v597, -inf
    %679 = vmax.xlane.f32.xlu0 %v678
    %v680 = vpop.xlane.xlu0 %679
    %v681 = vsel %vm196, %v675, -inf
    %682 = vmax.xlane.f32.xlu0 %v681
    %v683 = vpop.xlane.xlu0 %682
    %v684 = vsub.f32 %v597, %v680
    %v685 = vsub.f32 %v675, %v683
    %v686 = vmul.f32 %v684, 1.442695
    %v687 = vpow.pop %v686
    %v688 = vmul.f32 %v685, 1.442695
    %v689 = vpow.pop %v688
    %v690 = vsel %vm196, %v687, 0.0
    %691 = vadd.xlane.f32.xlu0 %v690
    %v692 = vpop.xlane.xlu0 %691
    %v693 = vsel %vm196, %v689, 0.0
    %694 = vadd.xlane.f32.xlu0 %v693
    %v695 = vpop.xlane.xlu0 %694
    %v696 = vrcp.pop %v692
    %v697 = vrcp.pop %v695
    %v698 = vmul.f32 %v687, %v696
    %v699 = vmul.f32 %v689, %v697
    %700 = vrot.lane.b32.xlu0 %v185, 56
    %v701 = vpop.permute.xlu0 %700
    %v704 = vsel %vm196, %v698, 0
    %706 = vmatprep.subr.mxu0 0.0
    %707 = vmatpush1.msra.mxu0 %v701
    %708 = vmatprep.subr.mxu0 0.0
    %709 = vmatpush1.msra.mxu0 0.0
    %710 = vmatprep.subr.mxu0 0.0
    %711 = vmatpush1.msra.mxu0 0.0
    %712 = vmatprep.subr.mxu0 0.0
    %713 = vmatpush1.msra.mxu0 0.0
    %714 = vmatprep.subr.mxu0 0.0
    %715 = vmatpush1.msra.mxu0 0.0
    %716 = vmatprep.subr.mxu0 0.0
    %717 = vmatpush1.msra.mxu0 0.0
    %718 = vmatprep.subr.mxu0 0.0
    %719 = vmatpush1.msra.mxu0 0.0
    %720 = vmatprep.subr.mxu0 0.0
    %721 = vmatpush1.msra.mxu0 0.0
    %722 = vmatprep.subr.mxu0 0.0
    %723 = vmatpush1.msra.mxu0 0.0
    %724 = vmatprep.subr.mxu0 0.0
    %725 = vmatpush1.msra.mxu0 0.0
    %726 = vmatprep.subr.mxu0 0.0
    %727 = vmatpush1.msra.mxu0 0.0
    %728 = vmatprep.subr.mxu0 0.0
    %729 = vmatpush1.msra.mxu0 0.0
    %730 = vmatprep.subr.mxu0 0.0
    %731 = vmatpush1.msra.mxu0 0.0
    %732 = vmatprep.subr.mxu0 0.0
    %733 = vmatpush1.msra.mxu0 0.0
    %734 = vmatprep.subr.mxu0 0.0
    %735 = vmatpush1.msra.mxu0 0.0
    %736 = vmatprep.subr.mxu0 0.0
    %737 = vmatpush1.msra.mxu0 0.0
    %738 = vmatprep.subr.mxu0 0.0
    %739 = vmatpush1.msra.mxu0 0.0
    %740 = vmatprep.subr.mxu0 0.0
    %741 = vmatpush1.msra.mxu0 0.0
    %742 = vmatprep.subr.mxu0 0.0
    %743 = vmatpush1.msra.mxu0 0.0
    %744 = vmatprep.subr.mxu0 0.0
    %745 = vmatpush1.msra.mxu0 0.0
    %746 = vmatprep.subr.mxu0 0.0
    %747 = vmatpush1.msra.mxu0 0.0
    %748 = vmatprep.subr.mxu0 0.0
    %749 = vmatpush1.msra.mxu0 0.0
    %750 = vmatprep.subr.mxu0 0.0
    %751 = vmatpush1.msra.mxu0 0.0
    %752 = vmatprep.subr.mxu0 0.0
    %753 = vmatpush1.msra.mxu0 0.0
    %754 = vmatprep.subr.mxu0 0.0
    %755 = vmatpush1.msra.mxu0 0.0
    %756 = vmatprep.subr.mxu0 0.0
    %757 = vmatpush1.msra.mxu0 0.0
    %758 = vmatprep.subr.mxu0 0.0
    %759 = vmatpush1.msra.mxu0 0.0
    %760 = vmatprep.subr.mxu0 0.0
    %761 = vmatpush1.msra.mxu0 0.0
    %762 = vmatprep.subr.mxu0 0.0
    %763 = vmatpush1.msra.mxu0 0.0
    %764 = vmatprep.subr.mxu0 0.0
    %765 = vmatpush1.msra.mxu0 0.0
    %766 = vmatprep.subr.mxu0 0.0
    %767 = vmatpush1.msra.mxu0 0.0
    %768 = vmatprep.subr.mxu0 0.0
    %769 = vmatpush1.msra.mxu0 0.0
    %770 = vmatprep.mubr.f32.mxu0 0.0
    %771 = vmatmul.mubr.f32.gmra.mrb[0].mxu0 %v704
    %v772 = vpop.f32.mrb[0].mxu0
    %v773 = vadd.f32 0.0, %v772
    %v774 = vpop.f32.mrb[0].mxu0
    %775 = vdwg.mxu0
    %776 = vrot.lane.b32.xlu0 %v190, 56
    %v777 = vpop.permute.xlu0 %776
    %v780 = vsel %vm196, %v699, 0
    %782 = vmatprep.subr.mxu0 0.0
    %783 = vmatpush1.msra.mxu0 %v777
    %784 = vmatprep.subr.mxu0 0.0
    %785 = vmatpush1.msra.mxu0 0.0
    %786 = vmatprep.subr.mxu0 0.0
    %787 = vmatpush1.msra.mxu0 0.0
    %788 = vmatprep.subr.mxu0 0.0
    %789 = vmatpush1.msra.mxu0 0.0
    %790 = vmatprep.subr.mxu0 0.0
    %791 = vmatpush1.msra.mxu0 0.0
    %792 = vmatprep.subr.mxu0 0.0
    %793 = vmatpush1.msra.mxu0 0.0
    %794 = vmatprep.subr.mxu0 0.0
    %795 = vmatpush1.msra.mxu0 0.0
    %796 = vmatprep.subr.mxu0 0.0
    %797 = vmatpush1.msra.mxu0 0.0
    %798 = vmatprep.subr.mxu0 0.0
    %799 = vmatpush1.msra.mxu0 0.0
    %800 = vmatprep.subr.mxu0 0.0
    %801 = vmatpush1.msra.mxu0 0.0
    %802 = vmatprep.subr.mxu0 0.0
    %803 = vmatpush1.msra.mxu0 0.0
    %804 = vmatprep.subr.mxu0 0.0
    %805 = vmatpush1.msra.mxu0 0.0
    %806 = vmatprep.subr.mxu0 0.0
    %807 = vmatpush1.msra.mxu0 0.0
    %808 = vmatprep.subr.mxu0 0.0
    %809 = vmatpush1.msra.mxu0 0.0
    %810 = vmatprep.subr.mxu0 0.0
    %811 = vmatpush1.msra.mxu0 0.0
    %812 = vmatprep.subr.mxu0 0.0
    %813 = vmatpush1.msra.mxu0 0.0
    %814 = vmatprep.subr.mxu0 0.0
    %815 = vmatpush1.msra.mxu0 0.0
    %816 = vmatprep.subr.mxu0 0.0
    %817 = vmatpush1.msra.mxu0 0.0
    %818 = vmatprep.subr.mxu0 0.0
    %819 = vmatpush1.msra.mxu0 0.0
    %820 = vmatprep.subr.mxu0 0.0
    %821 = vmatpush1.msra.mxu0 0.0
    %822 = vmatprep.subr.mxu0 0.0
    %823 = vmatpush1.msra.mxu0 0.0
    %824 = vmatprep.subr.mxu0 0.0
    %825 = vmatpush1.msra.mxu0 0.0
    %826 = vmatprep.subr.mxu0 0.0
    %827 = vmatpush1.msra.mxu0 0.0
    %828 = vmatprep.subr.mxu0 0.0
    %829 = vmatpush1.msra.mxu0 0.0
    %830 = vmatprep.subr.mxu0 0.0
    %831 = vmatpush1.msra.mxu0 0.0
    %832 = vmatprep.subr.mxu0 0.0
    %833 = vmatpush1.msra.mxu0 0.0
    %834 = vmatprep.subr.mxu0 0.0
    %835 = vmatpush1.msra.mxu0 0.0
    %836 = vmatprep.subr.mxu0 0.0
    %837 = vmatpush1.msra.mxu0 0.0
    %838 = vmatprep.subr.mxu0 0.0
    %839 = vmatpush1.msra.mxu0 0.0
    %840 = vmatprep.subr.mxu0 0.0
    %841 = vmatpush1.msra.mxu0 0.0
    %842 = vmatprep.subr.mxu0 0.0
    %843 = vmatpush1.msra.mxu0 0.0
    %844 = vmatprep.subr.mxu0 0.0
    %845 = vmatpush1.msra.mxu0 0.0
    %846 = vmatprep.mubr.f32.mxu0 0.0
    %847 = vmatmul.mubr.f32.gmra.mrb[0].mxu0 %v780
    %v848 = vpop.f32.mrb[0].mxu0
    %v849 = vadd.f32 0.0, %v848
    %v850 = vpop.f32.mrb[0].mxu0
    %851 = vdwg.mxu0
    %852 = vrot.lane.b32.xlu0 %v185, 112
    %v853 = vpop.permute.xlu0 %852
    %854 = vrot.lane.b32.xlu0 %v185, 80
    %v855 = vpop.permute.xlu0 %854
    %v856 = vsel %vm196, %v853, 0
    %v858 = vsel %vm196, %v855, 0
    %860 = vmatprep.subr.mxu0 0.0
    %861 = vmatpush1.xpose.msra.mxu0 %v858
    %862 = vmatprep.subr.mxu0 0.0
    %863 = vmatpush1.xpose.msra.mxu0 0.0
    %864 = vmatprep.subr.mxu0 0.0
    %865 = vmatpush1.xpose.msra.mxu0 0.0
    %866 = vmatprep.subr.mxu0 0.0
    %867 = vmatpush1.xpose.msra.mxu0 0.0
    %868 = vmatprep.subr.mxu0 0.0
    %869 = vmatpush1.xpose.msra.mxu0 0.0
    %870 = vmatprep.subr.mxu0 0.0
    %871 = vmatpush1.xpose.msra.mxu0 0.0
    %872 = vmatprep.subr.mxu0 0.0
    %873 = vmatpush1.xpose.msra.mxu0 0.0
    %874 = vmatprep.subr.mxu0 0.0
    %875 = vmatpush1.xpose.msra.mxu0 0.0
    %876 = vmatprep.subr.mxu0 0.0
    %877 = vmatpush1.xpose.msra.mxu0 0.0
    %878 = vmatprep.subr.mxu0 0.0
    %879 = vmatpush1.xpose.msra.mxu0 0.0
    %880 = vmatprep.subr.mxu0 0.0
    %881 = vmatpush1.xpose.msra.mxu0 0.0
    %882 = vmatprep.subr.mxu0 0.0
    %883 = vmatpush1.xpose.msra.mxu0 0.0
    %884 = vmatprep.subr.mxu0 0.0
    %885 = vmatpush1.xpose.msra.mxu0 0.0
    %886 = vmatprep.subr.mxu0 0.0
    %887 = vmatpush1.xpose.msra.mxu0 0.0
    %888 = vmatprep.subr.mxu0 0.0
    %889 = vmatpush1.xpose.msra.mxu0 0.0
    %890 = vmatprep.subr.mxu0 0.0
    %891 = vmatpush1.xpose.msra.mxu0 0.0
    %892 = vmatprep.subr.mxu0 0.0
    %893 = vmatpush1.xpose.msra.mxu0 0.0
    %894 = vmatprep.subr.mxu0 0.0
    %895 = vmatpush1.xpose.msra.mxu0 0.0
    %896 = vmatprep.subr.mxu0 0.0
    %897 = vmatpush1.xpose.msra.mxu0 0.0
    %898 = vmatprep.subr.mxu0 0.0
    %899 = vmatpush1.xpose.msra.mxu0 0.0
    %900 = vmatprep.subr.mxu0 0.0
    %901 = vmatpush1.xpose.msra.mxu0 0.0
    %902 = vmatprep.subr.mxu0 0.0
    %903 = vmatpush1.xpose.msra.mxu0 0.0
    %904 = vmatprep.subr.mxu0 0.0
    %905 = vmatpush1.xpose.msra.mxu0 0.0
    %906 = vmatprep.subr.mxu0 0.0
    %907 = vmatpush1.xpose.msra.mxu0 0.0
    %908 = vmatprep.subr.mxu0 0.0
    %909 = vmatpush1.xpose.msra.mxu0 0.0
    %910 = vmatprep.subr.mxu0 0.0
    %911 = vmatpush1.xpose.msra.mxu0 0.0
    %912 = vmatprep.subr.mxu0 0.0
    %913 = vmatpush1.xpose.msra.mxu0 0.0
    %914 = vmatprep.subr.mxu0 0.0
    %915 = vmatpush1.xpose.msra.mxu0 0.0
    %916 = vmatprep.subr.mxu0 0.0
    %917 = vmatpush1.xpose.msra.mxu0 0.0
    %918 = vmatprep.subr.mxu0 0.0
    %919 = vmatpush1.xpose.msra.mxu0 0.0
    %920 = vmatprep.subr.mxu0 0.0
    %921 = vmatpush1.xpose.msra.mxu0 0.0
    %922 = vmatprep.subr.mxu0 0.0
    %923 = vmatpush1.xpose.msra.mxu0 0.0
    %924 = vmatprep.mubr.f32.mxu0 0.0
    %925 = vmatmul.mubr.f32.gmra.mrb[0].mxu0 %v856
    %v926 = vpop.f32.mrb[0].mxu0
    %v927 = vadd.f32 %v59, %v926
    %v928 = vpop.f32.mrb[0].mxu0
    %929 = vdwg.mxu0
    %930 = vrot.lane.b32.xlu0 %v190, 112
    %v931 = vpop.permute.xlu0 %930
    %932 = vrot.lane.b32.xlu0 %v190, 80
    %v933 = vpop.permute.xlu0 %932
    %v934 = vsel %vm196, %v931, 0
    %v936 = vsel %vm196, %v933, 0
    %938 = vmatprep.subr.mxu0 0.0
    %939 = vmatpush1.xpose.msra.mxu0 %v936
    %940 = vmatprep.subr.mxu0 0.0
    %941 = vmatpush1.xpose.msra.mxu0 0.0
    %942 = vmatprep.subr.mxu0 0.0
    %943 = vmatpush1.xpose.msra.mxu0 0.0
    %944 = vmatprep.subr.mxu0 0.0
    %945 = vmatpush1.xpose.msra.mxu0 0.0
    %946 = vmatprep.subr.mxu0 0.0
    %947 = vmatpush1.xpose.msra.mxu0 0.0
    %948 = vmatprep.subr.mxu0 0.0
    %949 = vmatpush1.xpose.msra.mxu0 0.0
    %950 = vmatprep.subr.mxu0 0.0
    %951 = vmatpush1.xpose.msra.mxu0 0.0
    %952 = vmatprep.subr.mxu0 0.0
    %953 = vmatpush1.xpose.msra.mxu0 0.0
    %954 = vmatprep.subr.mxu0 0.0
    %955 = vmatpush1.xpose.msra.mxu0 0.0
    %956 = vmatprep.subr.mxu0 0.0
    %957 = vmatpush1.xpose.msra.mxu0 0.0
    %958 = vmatprep.subr.mxu0 0.0
    %959 = vmatpush1.xpose.msra.mxu0 0.0
    %960 = vmatprep.subr.mxu0 0.0
    %961 = vmatpush1.xpose.msra.mxu0 0.0
    %962 = vmatprep.subr.mxu0 0.0
    %963 = vmatpush1.xpose.msra.mxu0 0.0
    %964 = vmatprep.subr.mxu0 0.0
    %965 = vmatpush1.xpose.msra.mxu0 0.0
    %966 = vmatprep.subr.mxu0 0.0
    %967 = vmatpush1.xpose.msra.mxu0 0.0
    %968 = vmatprep.subr.mxu0 0.0
    %969 = vmatpush1.xpose.msra.mxu0 0.0
    %970 = vmatprep.subr.mxu0 0.0
    %971 = vmatpush1.xpose.msra.mxu0 0.0
    %972 = vmatprep.subr.mxu0 0.0
    %973 = vmatpush1.xpose.msra.mxu0 0.0
    %974 = vmatprep.subr.mxu0 0.0
    %975 = vmatpush1.xpose.msra.mxu0 0.0
    %976 = vmatprep.subr.mxu0 0.0
    %977 = vmatpush1.xpose.msra.mxu0 0.0
    %978 = vmatprep.subr.mxu0 0.0
    %979 = vmatpush1.xpose.msra.mxu0 0.0
    %980 = vmatprep.subr.mxu0 0.0
    %981 = vmatpush1.xpose.msra.mxu0 0.0
    %982 = vmatprep.subr.mxu0 0.0
    %983 = vmatpush1.xpose.msra.mxu0 0.0
    %984 = vmatprep.subr.mxu0 0.0
    %985 = vmatpush1.xpose.msra.mxu0 0.0
    %986 = vmatprep.subr.mxu0 0.0
    %987 = vmatpush1.xpose.msra.mxu0 0.0
    %988 = vmatprep.subr.mxu0 0.0
    %989 = vmatpush1.xpose.msra.mxu0 0.0
    %990 = vmatprep.subr.mxu0 0.0
    %991 = vmatpush1.xpose.msra.mxu0 0.0
    %992 = vmatprep.subr.mxu0 0.0
    %993 = vmatpush1.xpose.msra.mxu0 0.0
    %994 = vmatprep.subr.mxu0 0.0
    %995 = vmatpush1.xpose.msra.mxu0 0.0
    %996 = vmatprep.subr.mxu0 0.0
    %997 = vmatpush1.xpose.msra.mxu0 0.0
    %998 = vmatprep.subr.mxu0 0.0
    %999 = vmatpush1.xpose.msra.mxu0 0.0
    %1000 = vmatprep.subr.mxu0 0.0
    %1001 = vmatpush1.xpose.msra.mxu0 0.0
    %1002 = vmatprep.mubr.f32.mxu0 0.0
    %1003 = vmatmul.mubr.f32.gmra.mrb[0].mxu0 %v934
    %v1004 = vpop.f32.mrb[0].mxu0
    %v1005 = vadd.f32 %v59, %v1004
    %v1006 = vpop.f32.mrb[0].mxu0
    %1007 = vdwg.mxu0
    %v1008 = vsel %vm196, %v927, -inf
    %1009 = vmax.xlane.f32.xlu0 %v1008
    %v1010 = vpop.xlane.xlu0 %1009
    %v1011 = vsel %vm196, %v1005, -inf
    %1012 = vmax.xlane.f32.xlu0 %v1011
    %v1013 = vpop.xlane.xlu0 %1012
    %v1014 = vsub.f32 %v927, %v1010
    %v1015 = vsub.f32 %v1005, %v1013
    %v1016 = vmul.f32 %v1014, 1.442695
    %v1017 = vpow.pop %v1016
    %v1018 = vmul.f32 %v1015, 1.442695
    %v1019 = vpow.pop %v1018
    %v1020 = vsel %vm196, %v1017, 0.0
    %1021 = vadd.xlane.f32.xlu0 %v1020
    %v1022 = vpop.xlane.xlu0 %1021
    %v1023 = vsel %vm196, %v1019, 0.0
    %1024 = vadd.xlane.f32.xlu0 %v1023
    %v1025 = vpop.xlane.xlu0 %1024
    %v1026 = vrcp.pop %v1022
    %v1027 = vrcp.pop %v1025
    %v1028 = vmul.f32 %v1017, %v1026
    %v1029 = vmul.f32 %v1019, %v1027
    %1030 = vrot.lane.b32.xlu0 %v185, 48
    %v1031 = vpop.permute.xlu0 %1030
    %v1034 = vsel %vm196, %v1028, 0
    %1036 = vmatprep.subr.mxu0 0.0
    %1037 = vmatpush1.msra.mxu0 %v1031
    %1038 = vmatprep.subr.mxu0 0.0
    %1039 = vmatpush1.msra.mxu0 0.0
    %1040 = vmatprep.subr.mxu0 0.0
    %1041 = vmatpush1.msra.mxu0 0.0
    %1042 = vmatprep.subr.mxu0 0.0
    %1043 = vmatpush1.msra.mxu0 0.0
    %1044 = vmatprep.subr.mxu0 0.0
    %1045 = vmatpush1.msra.mxu0 0.0
    %1046 = vmatprep.subr.mxu0 0.0
    %1047 = vmatpush1.msra.mxu0 0.0
    %1048 = vmatprep.subr.mxu0 0.0
    %1049 = vmatpush1.msra.mxu0 0.0
    %1050 = vmatprep.subr.mxu0 0.0
    %1051 = vmatpush1.msra.mxu0 0.0
    %1052 = vmatprep.subr.mxu0 0.0
    %1053 = vmatpush1.msra.mxu0 0.0
    %1054 = vmatprep.subr.mxu0 0.0
    %1055 = vmatpush1.msra.mxu0 0.0
    %1056 = vmatprep.subr.mxu0 0.0
    %1057 = vmatpush1.msra.mxu0 0.0
    %1058 = vmatprep.subr.mxu0 0.0
    %1059 = vmatpush1.msra.mxu0 0.0
    %1060 = vmatprep.subr.mxu0 0.0
    %1061 = vmatpush1.msra.mxu0 0.0
    %1062 = vmatprep.subr.mxu0 0.0
    %1063 = vmatpush1.msra.mxu0 0.0
    %1064 = vmatprep.subr.mxu0 0.0
    %1065 = vmatpush1.msra.mxu0 0.0
    %1066 = vmatprep.subr.mxu0 0.0
    %1067 = vmatpush1.msra.mxu0 0.0
    %1068 = vmatprep.subr.mxu0 0.0
    %1069 = vmatpush1.msra.mxu0 0.0
    %1070 = vmatprep.subr.mxu0 0.0
    %1071 = vmatpush1.msra.mxu0 0.0
    %1072 = vmatprep.subr.mxu0 0.0
    %1073 = vmatpush1.msra.mxu0 0.0
    %1074 = vmatprep.subr.mxu0 0.0
    %1075 = vmatpush1.msra.mxu0 0.0
    %1076 = vmatprep.subr.mxu0 0.0
    %1077 = vmatpush1.msra.mxu0 0.0
    %1078 = vmatprep.subr.mxu0 0.0
    %1079 = vmatpush1.msra.mxu0 0.0
    %1080 = vmatprep.subr.mxu0 0.0
    %1081 = vmatpush1.msra.mxu0 0.0
    %1082 = vmatprep.subr.mxu0 0.0
    %1083 = vmatpush1.msra.mxu0 0.0
    %1084 = vmatprep.subr.mxu0 0.0
    %1085 = vmatpush1.msra.mxu0 0.0
    %1086 = vmatprep.subr.mxu0 0.0
    %1087 = vmatpush1.msra.mxu0 0.0
    %1088 = vmatprep.subr.mxu0 0.0
    %1089 = vmatpush1.msra.mxu0 0.0
    %1090 = vmatprep.subr.mxu0 0.0
    %1091 = vmatpush1.msra.mxu0 0.0
    %1092 = vmatprep.subr.mxu0 0.0
    %1093 = vmatpush1.msra.mxu0 0.0
    %1094 = vmatprep.subr.mxu0 0.0
    %1095 = vmatpush1.msra.mxu0 0.0
    %1096 = vmatprep.subr.mxu0 0.0
    %1097 = vmatpush1.msra.mxu0 0.0
    %1098 = vmatprep.subr.mxu0 0.0
    %1099 = vmatpush1.msra.mxu0 0.0
    %1100 = vmatprep.mubr.f32.mxu0 0.0
    %1101 = vmatmul.mubr.f32.gmra.mrb[0].mxu0 %v1034
    %v1102 = vpop.f32.mrb[0].mxu0
    %v1103 = vadd.f32 0.0, %v1102
    %v1104 = vpop.f32.mrb[0].mxu0
    %1105 = vdwg.mxu0
    %1106 = vrot.lane.b32.xlu0 %v190, 48
    %v1107 = vpop.permute.xlu0 %1106
    %v1110 = vsel %vm196, %v1029, 0
    %1112 = vmatprep.subr.mxu0 0.0
    %1113 = vmatpush1.msra.mxu0 %v1107
    %1114 = vmatprep.subr.mxu0 0.0
    %1115 = vmatpush1.msra.mxu0 0.0
    %1116 = vmatprep.subr.mxu0 0.0
    %1117 = vmatpush1.msra.mxu0 0.0
    %1118 = vmatprep.subr.mxu0 0.0
    %1119 = vmatpush1.msra.mxu0 0.0
    %1120 = vmatprep.subr.mxu0 0.0
    %1121 = vmatpush1.msra.mxu0 0.0
    %1122 = vmatprep.subr.mxu0 0.0
    %1123 = vmatpush1.msra.mxu0 0.0
    %1124 = vmatprep.subr.mxu0 0.0
    %1125 = vmatpush1.msra.mxu0 0.0
    %1126 = vmatprep.subr.mxu0 0.0
    %1127 = vmatpush1.msra.mxu0 0.0
    %1128 = vmatprep.subr.mxu0 0.0
    %1129 = vmatpush1.msra.mxu0 0.0
    %1130 = vmatprep.subr.mxu0 0.0
    %1131 = vmatpush1.msra.mxu0 0.0
    %1132 = vmatprep.subr.mxu0 0.0
    %1133 = vmatpush1.msra.mxu0 0.0
    %1134 = vmatprep.subr.mxu0 0.0
    %1135 = vmatpush1.msra.mxu0 0.0
    %1136 = vmatprep.subr.mxu0 0.0
    %1137 = vmatpush1.msra.mxu0 0.0
    %1138 = vmatprep.subr.mxu0 0.0
    %1139 = vmatpush1.msra.mxu0 0.0
    %1140 = vmatprep.subr.mxu0 0.0
    %1141 = vmatpush1.msra.mxu0 0.0
    %1142 = vmatprep.subr.mxu0 0.0
    %1143 = vmatpush1.msra.mxu0 0.0
    %1144 = vmatprep.subr.mxu0 0.0
    %1145 = vmatpush1.msra.mxu0 0.0
    %1146 = vmatprep.subr.mxu0 0.0
    %1147 = vmatpush1.msra.mxu0 0.0
    %1148 = vmatprep.subr.mxu0 0.0
    %1149 = vmatpush1.msra.mxu0 0.0
    %1150 = vmatprep.subr.mxu0 0.0
    %1151 = vmatpush1.msra.mxu0 0.0
    %1152 = vmatprep.subr.mxu0 0.0
    %1153 = vmatpush1.msra.mxu0 0.0
    %1154 = vmatprep.subr.mxu0 0.0
    %1155 = vmatpush1.msra.mxu0 0.0
    %1156 = vmatprep.subr.mxu0 0.0
    %1157 = vmatpush1.msra.mxu0 0.0
    %1158 = vmatprep.subr.mxu0 0.0
    %1159 = vmatpush1.msra.mxu0 0.0
    %1160 = vmatprep.subr.mxu0 0.0
    %1161 = vmatpush1.msra.mxu0 0.0
    %1162 = vmatprep.subr.mxu0 0.0
    %1163 = vmatpush1.msra.mxu0 0.0
    %1164 = vmatprep.subr.mxu0 0.0
    %1165 = vmatpush1.msra.mxu0 0.0
    %1166 = vmatprep.subr.mxu0 0.0
    %1167 = vmatpush1.msra.mxu0 0.0
    %1168 = vmatprep.subr.mxu0 0.0
    %1169 = vmatpush1.msra.mxu0 0.0
    %1170 = vmatprep.subr.mxu0 0.0
    %1171 = vmatpush1.msra.mxu0 0.0
    %1172 = vmatprep.subr.mxu0 0.0
    %1173 = vmatpush1.msra.mxu0 0.0
    %1174 = vmatprep.subr.mxu0 0.0
    %1175 = vmatpush1.msra.mxu0 0.0
    %1176 = vmatprep.mubr.f32.mxu0 0.0
    %1177 = vmatmul.mubr.f32.gmra.mrb[0].mxu0 %v1110
    %v1178 = vpop.f32.mrb[0].mxu0
    %v1179 = vadd.f32 0.0, %v1178
    %v1180 = vpop.f32.mrb[0].mxu0
    %1181 = vdwg.mxu0
    %1182 = vrot.lane.b32.xlu0 %v185, 104
    %v1183 = vpop.permute.xlu0 %1182
    %1184 = vrot.lane.b32.xlu0 %v185, 72
    %v1185 = vpop.permute.xlu0 %1184
    %v1186 = vsel %vm196, %v1183, 0
    %v1188 = vsel %vm196, %v1185, 0
    %1190 = vmatprep.subr.mxu0 0.0
    %1191 = vmatpush1.xpose.msra.mxu0 %v1188
    %1192 = vmatprep.subr.mxu0 0.0
    %1193 = vmatpush1.xpose.msra.mxu0 0.0
    %1194 = vmatprep.subr.mxu0 0.0
    %1195 = vmatpush1.xpose.msra.mxu0 0.0
    %1196 = vmatprep.subr.mxu0 0.0
    %1197 = vmatpush1.xpose.msra.mxu0 0.0
    %1198 = vmatprep.subr.mxu0 0.0
    %1199 = vmatpush1.xpose.msra.mxu0 0.0
    %1200 = vmatprep.subr.mxu0 0.0
    %1201 = vmatpush1.xpose.msra.mxu0 0.0
    %1202 = vmatprep.subr.mxu0 0.0
    %1203 = vmatpush1.xpose.msra.mxu0 0.0
    %1204 = vmatprep.subr.mxu0 0.0
    %1205 = vmatpush1.xpose.msra.mxu0 0.0
    %1206 = vmatprep.subr.mxu0 0.0
    %1207 = vmatpush1.xpose.msra.mxu0 0.0
    %1208 = vmatprep.subr.mxu0 0.0
    %1209 = vmatpush1.xpose.msra.mxu0 0.0
    %1210 = vmatprep.subr.mxu0 0.0
    %1211 = vmatpush1.xpose.msra.mxu0 0.0
    %1212 = vmatprep.subr.mxu0 0.0
    %1213 = vmatpush1.xpose.msra.mxu0 0.0
    %1214 = vmatprep.subr.mxu0 0.0
    %1215 = vmatpush1.xpose.msra.mxu0 0.0
    %1216 = vmatprep.subr.mxu0 0.0
    %1217 = vmatpush1.xpose.msra.mxu0 0.0
    %1218 = vmatprep.subr.mxu0 0.0
    %1219 = vmatpush1.xpose.msra.mxu0 0.0
    %1220 = vmatprep.subr.mxu0 0.0
    %1221 = vmatpush1.xpose.msra.mxu0 0.0
    %1222 = vmatprep.subr.mxu0 0.0
    %1223 = vmatpush1.xpose.msra.mxu0 0.0
    %1224 = vmatprep.subr.mxu0 0.0
    %1225 = vmatpush1.xpose.msra.mxu0 0.0
    %1226 = vmatprep.subr.mxu0 0.0
    %1227 = vmatpush1.xpose.msra.mxu0 0.0
    %1228 = vmatprep.subr.mxu0 0.0
    %1229 = vmatpush1.xpose.msra.mxu0 0.0
    %1230 = vmatprep.subr.mxu0 0.0
    %1231 = vmatpush1.xpose.msra.mxu0 0.0
    %1232 = vmatprep.subr.mxu0 0.0
    %1233 = vmatpush1.xpose.msra.mxu0 0.0
    %1234 = vmatprep.subr.mxu0 0.0
    %1235 = vmatpush1.xpose.msra.mxu0 0.0
    %1236 = vmatprep.subr.mxu0 0.0
    %1237 = vmatpush1.xpose.msra.mxu0 0.0
    %1238 = vmatprep.subr.mxu0 0.0
    %1239 = vmatpush1.xpose.msra.mxu0 0.0
    %1240 = vmatprep.subr.mxu0 0.0
    %1241 = vmatpush1.xpose.msra.mxu0 0.0
    %1242 = vmatprep.subr.mxu0 0.0
    %1243 = vmatpush1.xpose.msra.mxu0 0.0
    %1244 = vmatprep.subr.mxu0 0.0
    %1245 = vmatpush1.xpose.msra.mxu0 0.0
    %1246 = vmatprep.subr.mxu0 0.0
    %1247 = vmatpush1.xpose.msra.mxu0 0.0
    %1248 = vmatprep.subr.mxu0 0.0
    %1249 = vmatpush1.xpose.msra.mxu0 0.0
    %1250 = vmatprep.subr.mxu0 0.0
    %1251 = vmatpush1.xpose.msra.mxu0 0.0
    %1252 = vmatprep.subr.mxu0 0.0
    %1253 = vmatpush1.xpose.msra.mxu0 0.0
    %1254 = vmatprep.mubr.f32.mxu0 0.0
    %1255 = vmatmul.mubr.f32.gmra.mrb[0].mxu0 %v1186
    %v1256 = vpop.f32.mrb[0].mxu0
    %v1257 = vadd.f32 %v59, %v1256
    %v1258 = vpop.f32.mrb[0].mxu0
    %1259 = vdwg.mxu0
    %1260 = vrot.lane.b32.xlu0 %v190, 104
    %v1261 = vpop.permute.xlu0 %1260
    %1262 = vrot.lane.b32.xlu0 %v190, 72
    %v1263 = vpop.permute.xlu0 %1262
    %v1264 = vsel %vm196, %v1261, 0
    %v1266 = vsel %vm196, %v1263, 0
    %1268 = vmatprep.subr.mxu0 0.0
    %1269 = vmatpush1.xpose.msra.mxu0 %v1266
    %1270 = vmatprep.subr.mxu0 0.0
    %1271 = vmatpush1.xpose.msra.mxu0 0.0
    %1272 = vmatprep.subr.mxu0 0.0
    %1273 = vmatpush1.xpose.msra.mxu0 0.0
    %1274 = vmatprep.subr.mxu0 0.0
    %1275 = vmatpush1.xpose.msra.mxu0 0.0
    %1276 = vmatprep.subr.mxu0 0.0
    %1277 = vmatpush1.xpose.msra.mxu0 0.0
    %1278 = vmatprep.subr.mxu0 0.0
    %1279 = vmatpush1.xpose.msra.mxu0 0.0
    %1280 = vmatprep.subr.mxu0 0.0
    %1281 = vmatpush1.xpose.msra.mxu0 0.0
    %1282 = vmatprep.subr.mxu0 0.0
    %1283 = vmatpush1.xpose.msra.mxu0 0.0
    %1284 = vmatprep.subr.mxu0 0.0
    %1285 = vmatpush1.xpose.msra.mxu0 0.0
    %1286 = vmatprep.subr.mxu0 0.0
    %1287 = vmatpush1.xpose.msra.mxu0 0.0
    %1288 = vmatprep.subr.mxu0 0.0
    %1289 = vmatpush1.xpose.msra.mxu0 0.0
    %1290 = vmatprep.subr.mxu0 0.0
    %1291 = vmatpush1.xpose.msra.mxu0 0.0
    %1292 = vmatprep.subr.mxu0 0.0
    %1293 = vmatpush1.xpose.msra.mxu0 0.0
    %1294 = vmatprep.subr.mxu0 0.0
    %1295 = vmatpush1.xpose.msra.mxu0 0.0
    %1296 = vmatprep.subr.mxu0 0.0
    %1297 = vmatpush1.xpose.msra.mxu0 0.0
    %1298 = vmatprep.subr.mxu0 0.0
    %1299 = vmatpush1.xpose.msra.mxu0 0.0
    %1300 = vmatprep.subr.mxu0 0.0
    %1301 = vmatpush1.xpose.msra.mxu0 0.0
    %1302 = vmatprep.subr.mxu0 0.0
    %1303 = vmatpush1.xpose.msra.mxu0 0.0
    %1304 = vmatprep.subr.mxu0 0.0
    %1305 = vmatpush1.xpose.msra.mxu0 0.0
    %1306 = vmatprep.subr.mxu0 0.0
    %1307 = vmatpush1.xpose.msra.mxu0 0.0
    %1308 = vmatprep.subr.mxu0 0.0
    %1309 = vmatpush1.xpose.msra.mxu0 0.0
    %1310 = vmatprep.subr.mxu0 0.0
    %1311 = vmatpush1.xpose.msra.mxu0 0.0
    %1312 = vmatprep.subr.mxu0 0.0
    %1313 = vmatpush1.xpose.msra.mxu0 0.0
    %1314 = vmatprep.subr.mxu0 0.0
    %1315 = vmatpush1.xpose.msra.mxu0 0.0
    %1316 = vmatprep.subr.mxu0 0.0
    %1317 = vmatpush1.xpose.msra.mxu0 0.0
    %1318 = vmatprep.subr.mxu0 0.0
    %1319 = vmatpush1.xpose.msra.mxu0 0.0
    %1320 = vmatprep.subr.mxu0 0.0
    %1321 = vmatpush1.xpose.msra.mxu0 0.0
    %1322 = vmatprep.subr.mxu0 0.0
    %1323 = vmatpush1.xpose.msra.mxu0 0.0
    %1324 = vmatprep.subr.mxu0 0.0
    %1325 = vmatpush1.xpose.msra.mxu0 0.0
    %1326 = vmatprep.subr.mxu0 0.0
    %1327 = vmatpush1.xpose.msra.mxu0 0.0
    %1328 = vmatprep.subr.mxu0 0.0
    %1329 = vmatpush1.xpose.msra.mxu0 0.0
    %1330 = vmatprep.subr.mxu0 0.0
    %1331 = vmatpush1.xpose.msra.mxu0 0.0
    %1332 = vmatprep.mubr.f32.mxu0 0.0
    %1333 = vmatmul.mubr.f32.gmra.mrb[0].mxu0 %v1264
    %v1334 = vpop.f32.mrb[0].mxu0
    %v1335 = vadd.f32 %v59, %v1334
    %v1336 = vpop.f32.mrb[0].mxu0
    %1337 = vdwg.mxu0
    %v1338 = vsel %vm196, %v1257, -inf
    %1339 = vmax.xlane.f32.xlu0 %v1338
    %v1340 = vpop.xlane.xlu0 %1339
    %v1341 = vsel %vm196, %v1335, -inf
    %1342 = vmax.xlane.f32.xlu0 %v1341
    %v1343 = vpop.xlane.xlu0 %1342
    %v1344 = vsub.f32 %v1257, %v1340
    %v1345 = vsub.f32 %v1335, %v1343
    %v1346 = vmul.f32 %v1344, 1.442695
    %v1347 = vpow.pop %v1346
    %v1348 = vmul.f32 %v1345, 1.442695
    %v1349 = vpow.pop %v1348
    %v1350 = vsel %vm196, %v1347, 0.0
    %1351 = vadd.xlane.f32.xlu0 %v1350
    %v1352 = vpop.xlane.xlu0 %1351
    %v1353 = vsel %vm196, %v1349, 0.0
    %1354 = vadd.xlane.f32.xlu0 %v1353
    %v1355 = vpop.xlane.xlu0 %1354
    %v1356 = vrcp.pop %v1352
    %v1357 = vrcp.pop %v1355
    %v1358 = vmul.f32 %v1347, %v1356
    %v1359 = vmul.f32 %v1349, %v1357
    %1360 = vrot.lane.b32.xlu0 %v185, 40
    %v1361 = vpop.permute.xlu0 %1360
    %v1364 = vsel %vm196, %v1358, 0
    %1366 = vmatprep.subr.mxu0 0.0
    %1367 = vmatpush1.msra.mxu0 %v1361
    %1368 = vmatprep.subr.mxu0 0.0
    %1369 = vmatpush1.msra.mxu0 0.0
    %1370 = vmatprep.subr.mxu0 0.0
    %1371 = vmatpush1.msra.mxu0 0.0
    %1372 = vmatprep.subr.mxu0 0.0
    %1373 = vmatpush1.msra.mxu0 0.0
    %1374 = vmatprep.subr.mxu0 0.0
    %1375 = vmatpush1.msra.mxu0 0.0
    %1376 = vmatprep.subr.mxu0 0.0
    %1377 = vmatpush1.msra.mxu0 0.0
    %1378 = vmatprep.subr.mxu0 0.0
    %1379 = vmatpush1.msra.mxu0 0.0
    %1380 = vmatprep.subr.mxu0 0.0
    %1381 = vmatpush1.msra.mxu0 0.0
    %1382 = vmatprep.subr.mxu0 0.0
    %1383 = vmatpush1.msra.mxu0 0.0
    %1384 = vmatprep.subr.mxu0 0.0
    %1385 = vmatpush1.msra.mxu0 0.0
    %1386 = vmatprep.subr.mxu0 0.0
    %1387 = vmatpush1.msra.mxu0 0.0
    %1388 = vmatprep.subr.mxu0 0.0
    %1389 = vmatpush1.msra.mxu0 0.0
    %1390 = vmatprep.subr.mxu0 0.0
    %1391 = vmatpush1.msra.mxu0 0.0
    %1392 = vmatprep.subr.mxu0 0.0
    %1393 = vmatpush1.msra.mxu0 0.0
    %1394 = vmatprep.subr.mxu0 0.0
    %1395 = vmatpush1.msra.mxu0 0.0
    %1396 = vmatprep.subr.mxu0 0.0
    %1397 = vmatpush1.msra.mxu0 0.0
    %1398 = vmatprep.subr.mxu0 0.0
    %1399 = vmatpush1.msra.mxu0 0.0
    %1400 = vmatprep.subr.mxu0 0.0
    %1401 = vmatpush1.msra.mxu0 0.0
    %1402 = vmatprep.subr.mxu0 0.0
    %1403 = vmatpush1.msra.mxu0 0.0
    %1404 = vmatprep.subr.mxu0 0.0
    %1405 = vmatpush1.msra.mxu0 0.0
    %1406 = vmatprep.subr.mxu0 0.0
    %1407 = vmatpush1.msra.mxu0 0.0
    %1408 = vmatprep.subr.mxu0 0.0
    %1409 = vmatpush1.msra.mxu0 0.0
    %1410 = vmatprep.subr.mxu0 0.0
    %1411 = vmatpush1.msra.mxu0 0.0
    %1412 = vmatprep.subr.mxu0 0.0
    %1413 = vmatpush1.msra.mxu0 0.0
    %1414 = vmatprep.subr.mxu0 0.0
    %1415 = vmatpush1.msra.mxu0 0.0
    %1416 = vmatprep.subr.mxu0 0.0
    %1417 = vmatpush1.msra.mxu0 0.0
    %1418 = vmatprep.subr.mxu0 0.0
    %1419 = vmatpush1.msra.mxu0 0.0
    %1420 = vmatprep.subr.mxu0 0.0
    %1421 = vmatpush1.msra.mxu0 0.0
    %1422 = vmatprep.subr.mxu0 0.0
    %1423 = vmatpush1.msra.mxu0 0.0
    %1424 = vmatprep.subr.mxu0 0.0
    %1425 = vmatpush1.msra.mxu0 0.0
    %1426 = vmatprep.subr.mxu0 0.0
    %1427 = vmatpush1.msra.mxu0 0.0
    %1428 = vmatprep.subr.mxu0 0.0
    %1429 = vmatpush1.msra.mxu0 0.0
    %1430 = vmatprep.mubr.f32.mxu0 0.0
    %1431 = vmatmul.mubr.f32.gmra.mrb[0].mxu0 %v1364
    %v1432 = vpop.f32.mrb[0].mxu0
    %v1433 = vadd.f32 0.0, %v1432
    %v1434 = vpop.f32.mrb[0].mxu0
    %1435 = vdwg.mxu0
    %1436 = vrot.lane.b32.xlu0 %v190, 40
    %v1437 = vpop.permute.xlu0 %1436
    %v1440 = vsel %vm196, %v1359, 0
    %1442 = vmatprep.subr.mxu0 0.0
    %1443 = vmatpush1.msra.mxu0 %v1437
    %1444 = vmatprep.subr.mxu0 0.0
    %1445 = vmatpush1.msra.mxu0 0.0
    %1446 = vmatprep.subr.mxu0 0.0
    %1447 = vmatpush1.msra.mxu0 0.0
    %1448 = vmatprep.subr.mxu0 0.0
    %1449 = vmatpush1.msra.mxu0 0.0
    %1450 = vmatprep.subr.mxu0 0.0
    %1451 = vmatpush1.msra.mxu0 0.0
    %1452 = vmatprep.subr.mxu0 0.0
    %1453 = vmatpush1.msra.mxu0 0.0
    %1454 = vmatprep.subr.mxu0 0.0
    %1455 = vmatpush1.msra.mxu0 0.0
    %1456 = vmatprep.subr.mxu0 0.0
    %1457 = vmatpush1.msra.mxu0 0.0
    %1458 = vmatprep.subr.mxu0 0.0
    %1459 = vmatpush1.msra.mxu0 0.0
    %1460 = vmatprep.subr.mxu0 0.0
    %1461 = vmatpush1.msra.mxu0 0.0
    %1462 = vmatprep.subr.mxu0 0.0
    %1463 = vmatpush1.msra.mxu0 0.0
    %1464 = vmatprep.subr.mxu0 0.0
    %1465 = vmatpush1.msra.mxu0 0.0
    %1466 = vmatprep.subr.mxu0 0.0
    %1467 = vmatpush1.msra.mxu0 0.0
    %1468 = vmatprep.subr.mxu0 0.0
    %1469 = vmatpush1.msra.mxu0 0.0
    %1470 = vmatprep.subr.mxu0 0.0
    %1471 = vmatpush1.msra.mxu0 0.0
    %1472 = vmatprep.subr.mxu0 0.0
    %1473 = vmatpush1.msra.mxu0 0.0
    %1474 = vmatprep.subr.mxu0 0.0
    %1475 = vmatpush1.msra.mxu0 0.0
    %1476 = vmatprep.subr.mxu0 0.0
    %1477 = vmatpush1.msra.mxu0 0.0
    %1478 = vmatprep.subr.mxu0 0.0
    %1479 = vmatpush1.msra.mxu0 0.0
    %1480 = vmatprep.subr.mxu0 0.0
    %1481 = vmatpush1.msra.mxu0 0.0
    %1482 = vmatprep.subr.mxu0 0.0
    %1483 = vmatpush1.msra.mxu0 0.0
    %1484 = vmatprep.subr.mxu0 0.0
    %1485 = vmatpush1.msra.mxu0 0.0
    %1486 = vmatprep.subr.mxu0 0.0
    %1487 = vmatpush1.msra.mxu0 0.0
    %1488 = vmatprep.subr.mxu0 0.0
    %1489 = vmatpush1.msra.mxu0 0.0
    %1490 = vmatprep.subr.mxu0 0.0
    %1491 = vmatpush1.msra.mxu0 0.0
    %1492 = vmatprep.subr.mxu0 0.0
    %1493 = vmatpush1.msra.mxu0 0.0
    %1494 = vmatprep.subr.mxu0 0.0
    %1495 = vmatpush1.msra.mxu0 0.0
    %1496 = vmatprep.subr.mxu0 0.0
    %1497 = vmatpush1.msra.mxu0 0.0
    %1498 = vmatprep.subr.mxu0 0.0
    %1499 = vmatpush1.msra.mxu0 0.0
    %1500 = vmatprep.subr.mxu0 0.0
    %1501 = vmatpush1.msra.mxu0 0.0
    %1502 = vmatprep.subr.mxu0 0.0
    %1503 = vmatpush1.msra.mxu0 0.0
    %1504 = vmatprep.subr.mxu0 0.0
    %1505 = vmatpush1.msra.mxu0 0.0
    %1506 = vmatprep.mubr.f32.mxu0 0.0
    %1507 = vmatmul.mubr.f32.gmra.mrb[0].mxu0 %v1440
    %v1508 = vpop.f32.mrb[0].mxu0
    %v1509 = vadd.f32 0.0, %v1508
    %v1510 = vpop.f32.mrb[0].mxu0
    %1511 = vdwg.mxu0
    %1514 = vrot.lane.b32.xlu0 %v773, 8
    %v1515 = vpop.permute.xlu0 %1514
    %1516 = vrot.lane.b32.xlu0 %v849, 8
    %v1517 = vpop.permute.xlu0 %1516
    %1522 = vrot.lane.b32.xlu0 %v1103, 16
    %v1523 = vpop.permute.xlu0 %1522
    %1524 = vrot.lane.b32.xlu0 %v1179, 16
    %v1525 = vpop.permute.xlu0 %1524
    %1530 = vrot.lane.b32.xlu0 %v1433, 24
    %v1531 = vpop.permute.xlu0 %1530
    %1532 = vrot.lane.b32.xlu0 %v1509, 24
    %v1533 = vpop.permute.xlu0 %1532
    %v1536 = vsel %vm196, %v443, %v1515
    %v1537 = vsel %vm196, %v519, %v1517
    %vm1538 = vcmask 130048
    %v1539 = vsel %vm1538, %v1536, %v1523
    %v1540 = vsel %vm1538, %v1537, %v1525
    %vm1541 = vcmask 195584
    %v1542 = vsel %vm1541, %v1539, %v1531
    %v1543 = vsel %vm1541, %v1540, %v1533
    %v1544 = vld [vmem:[%s4] sm:$0xff]
    %v1545 = vld [vmem:[%s4 + $0x8] sm:$0xff]
    %v1546 = vld [vmem:[%s4 + $0x10] sm:$0xff]
    %v1547 = vld [vmem:[%s4 + $0x18] sm:$0xff]
    %v1549 = vsel %vm64, %v1542, 0
    %v1552 = vsel %vm64, %v1543, 0
    %1554 = vmatprep.subr.mxu0 0.0
    %1555 = vmatpush1.msra.mxu0 %v1544
    %1556 = vmatprep.subr.mxu0 0.0
    %1557 = vmatpush1.msra.mxu0 %v1545
    %1558 = vmatprep.subr.mxu0 0.0
    %1559 = vmatpush1.msra.mxu0 %v1546
    %1560 = vmatprep.subr.mxu0 0.0
    %1561 = vmatpush1.msra.mxu0 %v1547
    %1562 = vmatprep.subr.mxu0 0.0
    %1563 = vmatpush1.msra.mxu0 0.0
    %1564 = vmatprep.subr.mxu0 0.0
    %1565 = vmatpush1.msra.mxu0 0.0
    %1566 = vmatprep.subr.mxu0 0.0
    %1567 = vmatpush1.msra.mxu0 0.0
    %1568 = vmatprep.subr.mxu0 0.0
    %1569 = vmatpush1.msra.mxu0 0.0
    %1570 = vmatprep.subr.mxu0 0.0
    %1571 = vmatpush1.msra.mxu0 0.0
    %1572 = vmatprep.subr.mxu0 0.0
    %1573 = vmatpush1.msra.mxu0 0.0
    %1574 = vmatprep.subr.mxu0 0.0
    %1575 = vmatpush1.msra.mxu0 0.0
    %1576 = vmatprep.subr.mxu0 0.0
    %1577 = vmatpush1.msra.mxu0 0.0
    %1578 = vmatprep.subr.mxu0 0.0
    %1579 = vmatpush1.msra.mxu0 0.0
    %1580 = vmatprep.subr.mxu0 0.0
    %1581 = vmatpush1.msra.mxu0 0.0
    %1582 = vmatprep.subr.mxu0 0.0
    %1583 = vmatpush1.msra.mxu0 0.0
    %1584 = vmatprep.subr.mxu0 0.0
    %1585 = vmatpush1.msra.mxu0 0.0
    %1586 = vmatprep.subr.mxu0 0.0
    %1587 = vmatpush1.msra.mxu0 0.0
    %1588 = vmatprep.subr.mxu0 0.0
    %1589 = vmatpush1.msra.mxu0 0.0
    %1590 = vmatprep.subr.mxu0 0.0
    %1591 = vmatpush1.msra.mxu0 0.0
    %1592 = vmatprep.subr.mxu0 0.0
    %1593 = vmatpush1.msra.mxu0 0.0
    %1594 = vmatprep.subr.mxu0 0.0
    %1595 = vmatpush1.msra.mxu0 0.0
    %1596 = vmatprep.subr.mxu0 0.0
    %1597 = vmatpush1.msra.mxu0 0.0
    %1598 = vmatprep.subr.mxu0 0.0
    %1599 = vmatpush1.msra.mxu0 0.0
    %1600 = vmatprep.subr.mxu0 0.0
    %1601 = vmatpush1.msra.mxu0 0.0
    %1602 = vmatprep.subr.mxu0 0.0
    %1603 = vmatpush1.msra.mxu0 0.0
    %1604 = vmatprep.subr.mxu0 0.0
    %1605 = vmatpush1.msra.mxu0 0.0
    %1606 = vmatprep.subr.mxu0 0.0
    %1607 = vmatpush1.msra.mxu0 0.0
    %1608 = vmatprep.subr.mxu0 0.0
    %1609 = vmatpush1.msra.mxu0 0.0
    %1610 = vmatprep.subr.mxu0 0.0
    %1611 = vmatpush1.msra.mxu0 0.0
    %1612 = vmatprep.subr.mxu0 0.0
    %1613 = vmatpush1.msra.mxu0 0.0
    %1614 = vmatprep.subr.mxu0 0.0
    %1615 = vmatpush1.msra.mxu0 0.0
    %1616 = vmatprep.subr.mxu0 0.0
    %1617 = vmatpush1.msra.mxu0 0.0
    %1618 = vmatprep.mubr.f32.mxu0 0.0
    %1619 = vmatmul.mubr.f32.gmra.mrb[0].mxu0 %v1549
    %v1620 = vpop.f32.mrb[0].mxu0
    %v1621 = vadd.f32 0.0, %v1620
    %v1622 = vpop.f32.mrb[0].mxu0
    %1623 = vmatprep.mubr.f32.mxu0 0.0
    %1624 = vmatmul.mubr.f32.gmra.mrb[0].mxu0 %v1552
    %v1625 = vpop.f32.mrb[0].mxu0
    %v1626 = vadd.f32 0.0, %v1625
    %v1627 = vpop.f32.mrb[0].mxu0
    %1628 = vdwg.mxu0
    %v1629 = vadd.f32 %v60, %v1621
    %v1630 = vadd.f32 %v61, %v1626
    %v1631 = vld [vmem:[%s5] sm:$0x1]
    %v1633 = vlaneseq
    %v1634 = vshrl.u32 %v1633, 7
    %v1635 = vsub.s32 0, %v1634
    %v1636 = vrot.slane %v1631, %v1635
    %v1638 = vadd.f32 %v1629, %v1636
    %v1639 = vadd.f32 %v1630, %v1636
    %v1640 = vld [vmem:[%s6] sm:$0x1]
    %v1641 = vld [vmem:[%s7] sm:$0x1]
    %v1642 = vsel %vm64, %v1638, 0.0
    %1643 = vadd.xlane.f32.xlu0 %v1642
    %v1644 = vpop.xlane.xlu0 %1643
    %v1645 = vsel %vm64, %v1639, 0.0
    %1646 = vadd.xlane.f32.xlu0 %v1645
    %v1647 = vpop.xlane.xlu0 %1646
    %v1648 = vmul.f32 %v1644, %v71
    %v1649 = vmul.f32 %v1647, %v71
    %v1650 = vsub.f32 %v1638, %v1648
    %v1651 = vsub.f32 %v1639, %v1649
    %v1652 = vmul.f32 %v1650, %v1650
    %v1653 = vmul.f32 %v1651, %v1651
    %v1654 = vsel %vm64, %v1652, 0.0
    %1655 = vadd.xlane.f32.xlu0 %v1654
    %v1656 = vpop.xlane.xlu0 %1655
    %v1657 = vsel %vm64, %v1653, 0.0
    %1658 = vadd.xlane.f32.xlu0 %v1657
    %v1659 = vpop.xlane.xlu0 %1658
    %v1660 = vmul.f32 %v1656, %v71
    %v1661 = vmul.f32 %v1659, %v71
    %v1662 = vadd.f32 %v1660, 1e-05
    %v1663 = vadd.f32 %v1661, 1e-05
    %v1664 = vrsqrt.pop %v1662
    %v1665 = vrsqrt.pop %v1663
    %v1666 = vmul.f32 %v1650, %v1664
    %v1667 = vmul.f32 %v1651, %v1665
    %v1669 = vlaneseq
    %v1670 = vshrl.u32 %v1669, 7
    %v1671 = vsub.s32 0, %v1670
    %v1672 = vrot.slane %v1640, %v1671
    %v1674 = vmul.f32 %v1666, %v1672
    %v1675 = vmul.f32 %v1667, %v1672
    %v1677 = vlaneseq
    %v1678 = vshrl.u32 %v1677, 7
    %v1679 = vsub.s32 0, %v1678
    %v1680 = vrot.slane %v1641, %v1679
    %v1682 = vadd.f32 %v1674, %v1680
    %v1683 = vadd.f32 %v1675, %v1680
    %v1684 = vld [vmem:[%s8] sm:$0xff]
    %v1685 = vld [vmem:[%s8 + $0x8] sm:$0xff]
    %v1686 = vld [vmem:[%s8 + $0x10] sm:$0xff]
    %v1687 = vld [vmem:[%s8 + $0x18] sm:$0xff]
    %v1688 = vld [vmem:[%s9] sm:$0x1]
    %v1690 = vlaneseq
    %v1691 = vshrl.u32 %v1690, 7
    %v1692 = vsub.s32 0, %v1691
    %v1693 = vrot.slane %v1688, %v1692
    %v1696 = vsel %vm64, %v1682, 0
    %v1699 = vsel %vm64, %v1683, 0
    %1701 = vmatprep.subr.mxu0 0.0
    %1702 = vmatpush1.msra.mxu0 %v1684
    %1703 = vmatprep.subr.mxu0 0.0
    %1704 = vmatpush1.msra.mxu0 %v1685
    %1705 = vmatprep.subr.mxu0 0.0
    %1706 = vmatpush1.msra.mxu0 %v1686
    %1707 = vmatprep.subr.mxu0 0.0
    %1708 = vmatpush1.msra.mxu0 %v1687
    %1709 = vmatprep.subr.mxu0 0.0
    %1710 = vmatpush1.msra.mxu0 0.0
    %1711 = vmatprep.subr.mxu0 0.0
    %1712 = vmatpush1.msra.mxu0 0.0
    %1713 = vmatprep.subr.mxu0 0.0
    %1714 = vmatpush1.msra.mxu0 0.0
    %1715 = vmatprep.subr.mxu0 0.0
    %1716 = vmatpush1.msra.mxu0 0.0
    %1717 = vmatprep.subr.mxu0 0.0
    %1718 = vmatpush1.msra.mxu0 0.0
    %1719 = vmatprep.subr.mxu0 0.0
    %1720 = vmatpush1.msra.mxu0 0.0
    %1721 = vmatprep.subr.mxu0 0.0
    %1722 = vmatpush1.msra.mxu0 0.0
    %1723 = vmatprep.subr.mxu0 0.0
    %1724 = vmatpush1.msra.mxu0 0.0
    %1725 = vmatprep.subr.mxu0 0.0
    %1726 = vmatpush1.msra.mxu0 0.0
    %1727 = vmatprep.subr.mxu0 0.0
    %1728 = vmatpush1.msra.mxu0 0.0
    %1729 = vmatprep.subr.mxu0 0.0
    %1730 = vmatpush1.msra.mxu0 0.0
    %1731 = vmatprep.subr.mxu0 0.0
    %1732 = vmatpush1.msra.mxu0 0.0
    %1733 = vmatprep.subr.mxu0 0.0
    %1734 = vmatpush1.msra.mxu0 0.0
    %1735 = vmatprep.subr.mxu0 0.0
    %1736 = vmatpush1.msra.mxu0 0.0
    %1737 = vmatprep.subr.mxu0 0.0
    %1738 = vmatpush1.msra.mxu0 0.0
    %1739 = vmatprep.subr.mxu0 0.0
    %1740 = vmatpush1.msra.mxu0 0.0
    %1741 = vmatprep.subr.mxu0 0.0
    %1742 = vmatpush1.msra.mxu0 0.0
    %1743 = vmatprep.subr.mxu0 0.0
    %1744 = vmatpush1.msra.mxu0 0.0
    %1745 = vmatprep.subr.mxu0 0.0
    %1746 = vmatpush1.msra.mxu0 0.0
    %1747 = vmatprep.subr.mxu0 0.0
    %1748 = vmatpush1.msra.mxu0 0.0
    %1749 = vmatprep.subr.mxu0 0.0
    %1750 = vmatpush1.msra.mxu0 0.0
    %1751 = vmatprep.subr.mxu0 0.0
    %1752 = vmatpush1.msra.mxu0 0.0
    %1753 = vmatprep.subr.mxu0 0.0
    %1754 = vmatpush1.msra.mxu0 0.0
    %1755 = vmatprep.subr.mxu0 0.0
    %1756 = vmatpush1.msra.mxu0 0.0
    %1757 = vmatprep.subr.mxu0 0.0
    %1758 = vmatpush1.msra.mxu0 0.0
    %1759 = vmatprep.subr.mxu0 0.0
    %1760 = vmatpush1.msra.mxu0 0.0
    %1761 = vmatprep.subr.mxu0 0.0
    %1762 = vmatpush1.msra.mxu0 0.0
    %1763 = vmatprep.subr.mxu0 0.0
    %1764 = vmatpush1.msra.mxu0 0.0
    %1765 = vmatprep.mubr.f32.mxu0 0.0
    %1766 = vmatmul.mubr.f32.gmra.mrb[0].mxu0 %v1696
    %v1767 = vpop.f32.mrb[0].mxu0
    %v1768 = vadd.f32 %v1693, %v1767
    %v1769 = vpop.f32.mrb[0].mxu0
    %1770 = vmatprep.mubr.f32.mxu0 0.0
    %1771 = vmatmul.mubr.f32.gmra.mrb[0].mxu0 %v1699
    %v1772 = vpop.f32.mrb[0].mxu0
    %v1773 = vadd.f32 %v1693, %v1772
    %v1774 = vpop.f32.mrb[0].mxu0
    %1775 = vdwg.mxu0
    %v1776 = vmax.f32 %v1768, 0.0
    %v1777 = vmax.f32 %v1773, 0.0
    %v1778 = vld [vmem:[%s10] sm:$0xff]
    %v1779 = vld [vmem:[%s10 + $0x8] sm:$0xff]
    %v1780 = vld [vmem:[%s10 + $0x10] sm:$0xff]
    %v1781 = vld [vmem:[%s10 + $0x18] sm:$0xff]
    %v1782 = vld [vmem:[%s10 + $0x20] sm:$0xff]
    %v1783 = vld [vmem:[%s10 + $0x28] sm:$0xff]
    %v1784 = vld [vmem:[%s10 + $0x30] sm:$0xff]
    %v1785 = vld [vmem:[%s10 + $0x38] sm:$0xff]
    %v1786 = vld [vmem:[%s10 + $0x40] sm:$0xff]
    %v1787 = vld [vmem:[%s10 + $0x48] sm:$0xff]
    %v1788 = vld [vmem:[%s10 + $0x50] sm:$0xff]
    %v1789 = vld [vmem:[%s10 + $0x58] sm:$0xff]
    %v1790 = vld [vmem:[%s10 + $0x60] sm:$0xff]
    %v1791 = vld [vmem:[%s10 + $0x68] sm:$0xff]
    %v1792 = vld [vmem:[%s10 + $0x70] sm:$0xff]
    %v1793 = vld [vmem:[%s10 + $0x78] sm:$0xff]
    %1794 = vmatprep.subr.mxu0 0.0
    %1795 = vmatpush1.msra.mxu0 %v1778
    %1796 = vmatprep.subr.mxu0 0.0
    %1797 = vmatpush1.msra.mxu0 %v1779
    %1798 = vmatprep.subr.mxu0 0.0
    %1799 = vmatpush1.msra.mxu0 %v1780
    %1800 = vmatprep.subr.mxu0 0.0
    %1801 = vmatpush1.msra.mxu0 %v1781
    %1802 = vmatprep.subr.mxu0 0.0
    %1803 = vmatpush1.msra.mxu0 %v1782
    %1804 = vmatprep.subr.mxu0 0.0
    %1805 = vmatpush1.msra.mxu0 %v1783
    %1806 = vmatprep.subr.mxu0 0.0
    %1807 = vmatpush1.msra.mxu0 %v1784
    %1808 = vmatprep.subr.mxu0 0.0
    %1809 = vmatpush1.msra.mxu0 %v1785
    %1810 = vmatprep.subr.mxu0 0.0
    %1811 = vmatpush1.msra.mxu0 %v1786
    %1812 = vmatprep.subr.mxu0 0.0
    %1813 = vmatpush1.msra.mxu0 %v1787
    %1814 = vmatprep.subr.mxu0 0.0
    %1815 = vmatpush1.msra.mxu0 %v1788
    %1816 = vmatprep.subr.mxu0 0.0
    %1817 = vmatpush1.msra.mxu0 %v1789
    %1818 = vmatprep.subr.mxu0 0.0
    %1819 = vmatpush1.msra.mxu0 %v1790
    %1820 = vmatprep.subr.mxu0 0.0
    %1821 = vmatpush1.msra.mxu0 %v1791
    %1822 = vmatprep.subr.mxu0 0.0
    %1823 = vmatpush1.msra.mxu0 %v1792
    %1824 = vmatprep.subr.mxu0 0.0
    %1825 = vmatpush1.msra.mxu0 %v1793
    %1826 = vmatprep.subr.mxu0 0.0
    %1827 = vmatpush1.msra.mxu0 0.0
    %1828 = vmatprep.subr.mxu0 0.0
    %1829 = vmatpush1.msra.mxu0 0.0
    %1830 = vmatprep.subr.mxu0 0.0
    %1831 = vmatpush1.msra.mxu0 0.0
    %1832 = vmatprep.subr.mxu0 0.0
    %1833 = vmatpush1.msra.mxu0 0.0
    %1834 = vmatprep.subr.mxu0 0.0
    %1835 = vmatpush1.msra.mxu0 0.0
    %1836 = vmatprep.subr.mxu0 0.0
    %1837 = vmatpush1.msra.mxu0 0.0
    %1838 = vmatprep.subr.mxu0 0.0
    %1839 = vmatpush1.msra.mxu0 0.0
    %1840 = vmatprep.subr.mxu0 0.0
    %1841 = vmatpush1.msra.mxu0 0.0
    %1842 = vmatprep.subr.mxu0 0.0
    %1843 = vmatpush1.msra.mxu0 0.0
    %1844 = vmatprep.subr.mxu0 0.0
    %1845 = vmatpush1.msra.mxu0 0.0
    %1846 = vmatprep.subr.mxu0 0.0
    %1847 = vmatpush1.msra.mxu0 0.0
    %1848 = vmatprep.subr.mxu0 0.0
    %1849 = vmatpush1.msra.mxu0 0.0
    %1850 = vmatprep.subr.mxu0 0.0
    %1851 = vmatpush1.msra.mxu0 0.0
    %1852 = vmatprep.subr.mxu0 0.0
    %1853 = vmatpush1.msra.mxu0 0.0
    %1854 = vmatprep.subr.mxu0 0.0
    %1855 = vmatpush1.msra.mxu0 0.0
    %1856 = vmatprep.subr.mxu0 0.0
    %1857 = vmatpush1.msra.mxu0 0.0
    %1858 = vmatprep.mubr.f32.mxu0 0.0
    %1859 = vmatmul.mubr.f32.gmra.mrb[0].mxu0 %v1776
    %v1860 = vpop.f32.mrb[0].mxu0
    %v1861 = vadd.f32 0.0, %v1860
    %v1862 = vpop.f32.mrb[0].mxu0
    %1863 = vmatprep.mubr.f32.mxu0 0.0
    %1864 = vmatmul.mubr.f32.gmra.mrb[0].mxu0 %v1777
    %v1865 = vpop.f32.mrb[0].mxu0
    %v1866 = vadd.f32 0.0, %v1865
    %v1867 = vpop.f32.mrb[0].mxu0
    %1868 = vdwg.mxu0
    %v1869 = vadd.f32 %v1638, %v1861
    %v1870 = vadd.f32 %v1639, %v1866
    %v1871 = vld [vmem:[%s11] sm:$0x1]
    %v1873 = vlaneseq
    %v1874 = vshrl.u32 %v1873, 7
    %v1875 = vsub.s32 0, %v1874
    %v1876 = vrot.slane %v1871, %v1875
    %v1878 = vadd.f32 %v1869, %v1876
    %v1879 = vadd.f32 %v1870, %v1876
    %s1880 = scalar_lea.vmem %s1, 1
    %v1881 = vld [vmem:[%s1880] sm:$0x1]
    %s1882 = scalar_lea.vmem %s2, 1
    %v1883 = vld [vmem:[%s1882] sm:$0x1]
    %v1884 = vsel %vm64, %v1878, 0.0
    %1885 = vadd.xlane.f32.xlu0 %v1884
    %v1886 = vpop.xlane.xlu0 %1885
    %v1887 = vsel %vm64, %v1879, 0.0
    %1888 = vadd.xlane.f32.xlu0 %v1887
    %v1889 = vpop.xlane.xlu0 %1888
    %v1890 = vmul.f32 %v1886, %v71
    %v1891 = vmul.f32 %v1889, %v71
    %v1892 = vsub.f32 %v1878, %v1890
    %v1893 = vsub.f32 %v1879, %v1891
    %v1894 = vmul.f32 %v1892, %v1892
    %v1895 = vmul.f32 %v1893, %v1893
    %v1896 = vsel %vm64, %v1894, 0.0
    %1897 = vadd.xlane.f32.xlu0 %v1896
    %v1898 = vpop.xlane.xlu0 %1897
    %v1899 = vsel %vm64, %v1895, 0.0
    %1900 = vadd.xlane.f32.xlu0 %v1899
    %v1901 = vpop.xlane.xlu0 %1900
    %v1902 = vmul.f32 %v1898, %v71
    %v1903 = vmul.f32 %v1901, %v71
    %v1904 = vadd.f32 %v1902, 1e-05
    %v1905 = vadd.f32 %v1903, 1e-05
    %v1906 = vrsqrt.pop %v1904
    %v1907 = vrsqrt.pop %v1905
    %v1908 = vmul.f32 %v1892, %v1906
    %v1909 = vmul.f32 %v1893, %v1907
    %v1911 = vlaneseq
    %v1912 = vshrl.u32 %v1911, 7
    %v1913 = vsub.s32 0, %v1912
    %v1914 = vrot.slane %v1881, %v1913
    %v1916 = vmul.f32 %v1908, %v1914
    %v1917 = vmul.f32 %v1909, %v1914
    %v1919 = vlaneseq
    %v1920 = vshrl.u32 %v1919, 7
    %v1921 = vsub.s32 0, %v1920
    %v1922 = vrot.slane %v1883, %v1921
    %v1924 = vadd.f32 %v1916, %v1922
    %v1925 = vadd.f32 %v1917, %v1922
    %s1926 = scalar_lea.vmem %s3, 32
    %v1927 = vld [vmem:[%s1926] sm:$0xff]
    %v1928 = vld [vmem:[%s1926 + $0x8] sm:$0xff]
    %v1929 = vld [vmem:[%s1926 + $0x10] sm:$0xff]
    %v1930 = vld [vmem:[%s1926 + $0x18] sm:$0xff]
    %v1932 = vsel %vm64, %v1924, 0
    %v1935 = vsel %vm64, %v1925, 0
    %1937 = vmatprep.subr.mxu0 0.0
    %1938 = vmatpush1.msra.mxu0 %v1927
    %1939 = vmatprep.subr.mxu0 0.0
    %1940 = vmatpush1.msra.mxu0 %v1928
    %1941 = vmatprep.subr.mxu0 0.0
    %1942 = vmatpush1.msra.mxu0 %v1929
    %1943 = vmatprep.subr.mxu0 0.0
    %1944 = vmatpush1.msra.mxu0 %v1930
    %1945 = vmatprep.subr.mxu0 0.0
    %1946 = vmatpush1.msra.mxu0 0.0
    %1947 = vmatprep.subr.mxu0 0.0
    %1948 = vmatpush1.msra.mxu0 0.0
    %1949 = vmatprep.subr.mxu0 0.0
    %1950 = vmatpush1.msra.mxu0 0.0
    %1951 = vmatprep.subr.mxu0 0.0
    %1952 = vmatpush1.msra.mxu0 0.0
    %1953 = vmatprep.subr.mxu0 0.0
    %1954 = vmatpush1.msra.mxu0 0.0
    %1955 = vmatprep.subr.mxu0 0.0
    %1956 = vmatpush1.msra.mxu0 0.0
    %1957 = vmatprep.subr.mxu0 0.0
    %1958 = vmatpush1.msra.mxu0 0.0
    %1959 = vmatprep.subr.mxu0 0.0
    %1960 = vmatpush1.msra.mxu0 0.0
    %1961 = vmatprep.subr.mxu0 0.0
    %1962 = vmatpush1.msra.mxu0 0.0
    %1963 = vmatprep.subr.mxu0 0.0
    %1964 = vmatpush1.msra.mxu0 0.0
    %1965 = vmatprep.subr.mxu0 0.0
    %1966 = vmatpush1.msra.mxu0 0.0
    %1967 = vmatprep.subr.mxu0 0.0
    %1968 = vmatpush1.msra.mxu0 0.0
    %1969 = vmatprep.subr.mxu0 0.0
    %1970 = vmatpush1.msra.mxu0 0.0
    %1971 = vmatprep.subr.mxu0 0.0
    %1972 = vmatpush1.msra.mxu0 0.0
    %1973 = vmatprep.subr.mxu0 0.0
    %1974 = vmatpush1.msra.mxu0 0.0
    %1975 = vmatprep.subr.mxu0 0.0
    %1976 = vmatpush1.msra.mxu0 0.0
    %1977 = vmatprep.subr.mxu0 0.0
    %1978 = vmatpush1.msra.mxu0 0.0
    %1979 = vmatprep.subr.mxu0 0.0
    %1980 = vmatpush1.msra.mxu0 0.0
    %1981 = vmatprep.subr.mxu0 0.0
    %1982 = vmatpush1.msra.mxu0 0.0
    %1983 = vmatprep.subr.mxu0 0.0
    %1984 = vmatpush1.msra.mxu0 0.0
    %1985 = vmatprep.subr.mxu0 0.0
    %1986 = vmatpush1.msra.mxu0 0.0
    %1987 = vmatprep.subr.mxu0 0.0
    %1988 = vmatpush1.msra.mxu0 0.0
    %1989 = vmatprep.subr.mxu0 0.0
    %1990 = vmatpush1.msra.mxu0 0.0
    %1991 = vmatprep.subr.mxu0 0.0
    %1992 = vmatpush1.msra.mxu0 0.0
    %1993 = vmatprep.subr.mxu0 0.0
    %1994 = vmatpush1.msra.mxu0 0.0
    %1995 = vmatprep.subr.mxu0 0.0
    %1996 = vmatpush1.msra.mxu0 0.0
    %1997 = vmatprep.subr.mxu0 0.0
    %1998 = vmatpush1.msra.mxu0 0.0
    %1999 = vmatprep.subr.mxu0 0.0
    %2000 = vmatpush1.msra.mxu0 0.0
    %2001 = vmatprep.mubr.f32.mxu0 0.0
    %2002 = vmatmul.mubr.f32.gmra.mrb[0].mxu0 %v1932
    %v2003 = vpop.f32.mrb[0].mxu0
    %v2004 = vadd.f32 0.0, %v2003
    %v2005 = vpop.f32.mrb[0].mxu0
    %2006 = vmatprep.mubr.f32.mxu0 0.0
    %2007 = vmatmul.mubr.f32.gmra.mrb[0].mxu0 %v1935
    %v2008 = vpop.f32.mrb[0].mxu0
    %v2009 = vadd.f32 0.0, %v2008
    %v2010 = vpop.f32.mrb[0].mxu0
    %2011 = vdwg.mxu0
    %2013 = vrot.lane.b32.xlu0 %v2004, 96
    %v2014 = vpop.permute.xlu0 %2013
    %v2015 = vsel %vm196, %v2004, 0
    %v2017 = vsel %vm196, %v2014, 0
    %2019 = vmatprep.subr.mxu0 0.0
    %2020 = vmatpush1.xpose.msra.mxu0 %v2017
    %2021 = vmatprep.subr.mxu0 0.0
    %2022 = vmatpush1.xpose.msra.mxu0 0.0
    %2023 = vmatprep.subr.mxu0 0.0
    %2024 = vmatpush1.xpose.msra.mxu0 0.0
    %2025 = vmatprep.subr.mxu0 0.0
    %2026 = vmatpush1.xpose.msra.mxu0 0.0
    %2027 = vmatprep.subr.mxu0 0.0
    %2028 = vmatpush1.xpose.msra.mxu0 0.0
    %2029 = vmatprep.subr.mxu0 0.0
    %2030 = vmatpush1.xpose.msra.mxu0 0.0
    %2031 = vmatprep.subr.mxu0 0.0
    %2032 = vmatpush1.xpose.msra.mxu0 0.0
    %2033 = vmatprep.subr.mxu0 0.0
    %2034 = vmatpush1.xpose.msra.mxu0 0.0
    %2035 = vmatprep.subr.mxu0 0.0
    %2036 = vmatpush1.xpose.msra.mxu0 0.0
    %2037 = vmatprep.subr.mxu0 0.0
    %2038 = vmatpush1.xpose.msra.mxu0 0.0
    %2039 = vmatprep.subr.mxu0 0.0
    %2040 = vmatpush1.xpose.msra.mxu0 0.0
    %2041 = vmatprep.subr.mxu0 0.0
    %2042 = vmatpush1.xpose.msra.mxu0 0.0
    %2043 = vmatprep.subr.mxu0 0.0
    %2044 = vmatpush1.xpose.msra.mxu0 0.0
    %2045 = vmatprep.subr.mxu0 0.0
    %2046 = vmatpush1.xpose.msra.mxu0 0.0
    %2047 = vmatprep.subr.mxu0 0.0
    %2048 = vmatpush1.xpose.msra.mxu0 0.0
    %2049 = vmatprep.subr.mxu0 0.0
    %2050 = vmatpush1.xpose.msra.mxu0 0.0
    %2051 = vmatprep.subr.mxu0 0.0
    %2052 = vmatpush1.xpose.msra.mxu0 0.0
    %2053 = vmatprep.subr.mxu0 0.0
    %2054 = vmatpush1.xpose.msra.mxu0 0.0
    %2055 = vmatprep.subr.mxu0 0.0
    %2056 = vmatpush1.xpose.msra.mxu0 0.0
    %2057 = vmatprep.subr.mxu0 0.0
    %2058 = vmatpush1.xpose.msra.mxu0 0.0
    %2059 = vmatprep.subr.mxu0 0.0
    %2060 = vmatpush1.xpose.msra.mxu0 0.0
    %2061 = vmatprep.subr.mxu0 0.0
    %2062 = vmatpush1.xpose.msra.mxu0 0.0
    %2063 = vmatprep.subr.mxu0 0.0
    %2064 = vmatpush1.xpose.msra.mxu0 0.0
    %2065 = vmatprep.subr.mxu0 0.0
    %2066 = vmatpush1.xpose.msra.mxu0 0.0
    %2067 = vmatprep.subr.mxu0 0.0
    %2068 = vmatpush1.xpose.msra.mxu0 0.0
    %2069 = vmatprep.subr.mxu0 0.0
    %2070 = vmatpush1.xpose.msra.mxu0 0.0
    %2071 = vmatprep.subr.mxu0 0.0
    %2072 = vmatpush1.xpose.msra.mxu0 0.0
    %2073 = vmatprep.subr.mxu0 0.0
    %2074 = vmatpush1.xpose.msra.mxu0 0.0
    %2075 = vmatprep.subr.mxu0 0.0
    %2076 = vmatpush1.xpose.msra.mxu0 0.0
    %2077 = vmatprep.subr.mxu0 0.0
    %2078 = vmatpush1.xpose.msra.mxu0 0.0
    %2079 = vmatprep.subr.mxu0 0.0
    %2080 = vmatpush1.xpose.msra.mxu0 0.0
    %2081 = vmatprep.subr.mxu0 0.0
    %2082 = vmatpush1.xpose.msra.mxu0 0.0
    %2083 = vmatprep.mubr.f32.mxu0 0.0
    %2084 = vmatmul.mubr.f32.gmra.mrb[0].mxu0 %v2015
    %v2085 = vpop.f32.mrb[0].mxu0
    %v2086 = vadd.f32 %v59, %v2085
    %v2087 = vpop.f32.mrb[0].mxu0
    %2088 = vdwg.mxu0
    %2090 = vrot.lane.b32.xlu0 %v2009, 96
    %v2091 = vpop.permute.xlu0 %2090
    %v2092 = vsel %vm196, %v2009, 0
    %v2094 = vsel %vm196, %v2091, 0
    %2096 = vmatprep.subr.mxu0 0.0
    %2097 = vmatpush1.xpose.msra.mxu0 %v2094
    %2098 = vmatprep.subr.mxu0 0.0
    %2099 = vmatpush1.xpose.msra.mxu0 0.0
    %2100 = vmatprep.subr.mxu0 0.0
    %2101 = vmatpush1.xpose.msra.mxu0 0.0
    %2102 = vmatprep.subr.mxu0 0.0
    %2103 = vmatpush1.xpose.msra.mxu0 0.0
    %2104 = vmatprep.subr.mxu0 0.0
    %2105 = vmatpush1.xpose.msra.mxu0 0.0
    %2106 = vmatprep.subr.mxu0 0.0
    %2107 = vmatpush1.xpose.msra.mxu0 0.0
    %2108 = vmatprep.subr.mxu0 0.0
    %2109 = vmatpush1.xpose.msra.mxu0 0.0
    %2110 = vmatprep.subr.mxu0 0.0
    %2111 = vmatpush1.xpose.msra.mxu0 0.0
    %2112 = vmatprep.subr.mxu0 0.0
    %2113 = vmatpush1.xpose.msra.mxu0 0.0
    %2114 = vmatprep.subr.mxu0 0.0
    %2115 = vmatpush1.xpose.msra.mxu0 0.0
    %2116 = vmatprep.subr.mxu0 0.0
    %2117 = vmatpush1.xpose.msra.mxu0 0.0
    %2118 = vmatprep.subr.mxu0 0.0
    %2119 = vmatpush1.xpose.msra.mxu0 0.0
    %2120 = vmatprep.subr.mxu0 0.0
    %2121 = vmatpush1.xpose.msra.mxu0 0.0
    %2122 = vmatprep.subr.mxu0 0.0
    %2123 = vmatpush1.xpose.msra.mxu0 0.0
    %2124 = vmatprep.subr.mxu0 0.0
    %2125 = vmatpush1.xpose.msra.mxu0 0.0
    %2126 = vmatprep.subr.mxu0 0.0
    %2127 = vmatpush1.xpose.msra.mxu0 0.0
    %2128 = vmatprep.subr.mxu0 0.0
    %2129 = vmatpush1.xpose.msra.mxu0 0.0
    %2130 = vmatprep.subr.mxu0 0.0
    %2131 = vmatpush1.xpose.msra.mxu0 0.0
    %2132 = vmatprep.subr.mxu0 0.0
    %2133 = vmatpush1.xpose.msra.mxu0 0.0
    %2134 = vmatprep.subr.mxu0 0.0
    %2135 = vmatpush1.xpose.msra.mxu0 0.0
    %2136 = vmatprep.subr.mxu0 0.0
    %2137 = vmatpush1.xpose.msra.mxu0 0.0
    %2138 = vmatprep.subr.mxu0 0.0
    %2139 = vmatpush1.xpose.msra.mxu0 0.0
    %2140 = vmatprep.subr.mxu0 0.0
    %2141 = vmatpush1.xpose.msra.mxu0 0.0
    %2142 = vmatprep.subr.mxu0 0.0
    %2143 = vmatpush1.xpose.msra.mxu0 0.0
    %2144 = vmatprep.subr.mxu0 0.0
    %2145 = vmatpush1.xpose.msra.mxu0 0.0
    %2146 = vmatprep.subr.mxu0 0.0
    %2147 = vmatpush1.xpose.msra.mxu0 0.0
    %2148 = vmatprep.subr.mxu0 0.0
    %2149 = vmatpush1.xpose.msra.mxu0 0.0
    %2150 = vmatprep.subr.mxu0 0.0
    %2151 = vmatpush1.xpose.msra.mxu0 0.0
    %2152 = vmatprep.subr.mxu0 0.0
    %2153 = vmatpush1.xpose.msra.mxu0 0.0
    %2154 = vmatprep.subr.mxu0 0.0
    %2155 = vmatpush1.xpose.msra.mxu0 0.0
    %2156 = vmatprep.subr.mxu0 0.0
    %2157 = vmatpush1.xpose.msra.mxu0 0.0
    %2158 = vmatprep.subr.mxu0 0.0
    %2159 = vmatpush1.xpose.msra.mxu0 0.0
    %2160 = vmatprep.mubr.f32.mxu0 0.0
    %2161 = vmatmul.mubr.f32.gmra.mrb[0].mxu0 %v2092
    %v2162 = vpop.f32.mrb[0].mxu0
    %v2163 = vadd.f32 %v59, %v2162
    %v2164 = vpop.f32.mrb[0].mxu0
    %2165 = vdwg.mxu0
    %v2166 = vsel %vm196, %v2086, -inf
    %2167 = vmax.xlane.f32.xlu0 %v2166
    %v2168 = vpop.xlane.xlu0 %2167
    %v2169 = vsel %vm196, %v2163, -inf
    %2170 = vmax.xlane.f32.xlu0 %v2169
    %v2171 = vpop.xlane.xlu0 %2170
    %v2172 = vsub.f32 %v2086, %v2168
    %v2173 = vsub.f32 %v2163, %v2171
    %v2174 = vmul.f32 %v2172, 1.442695
    %v2175 = vpow.pop %v2174
    %v2176 = vmul.f32 %v2173, 1.442695
    %v2177 = vpow.pop %v2176
    %v2178 = vsel %vm196, %v2175, 0.0
    %2179 = vadd.xlane.f32.xlu0 %v2178
    %v2180 = vpop.xlane.xlu0 %2179
    %v2181 = vsel %vm196, %v2177, 0.0
    %2182 = vadd.xlane.f32.xlu0 %v2181
    %v2183 = vpop.xlane.xlu0 %2182
    %v2184 = vrcp.pop %v2180
    %v2185 = vrcp.pop %v2183
    %v2186 = vmul.f32 %v2175, %v2184
    %v2187 = vmul.f32 %v2177, %v2185
    %2188 = vrot.lane.b32.xlu0 %v2004, 64
    %v2189 = vpop.permute.xlu0 %2188
    %v2192 = vsel %vm196, %v2186, 0
    %2194 = vmatprep.subr.mxu0 0.0
    %2195 = vmatpush1.msra.mxu0 %v2189
    %2196 = vmatprep.subr.mxu0 0.0
    %2197 = vmatpush1.msra.mxu0 0.0
    %2198 = vmatprep.subr.mxu0 0.0
    %2199 = vmatpush1.msra.mxu0 0.0
    %2200 = vmatprep.subr.mxu0 0.0
    %2201 = vmatpush1.msra.mxu0 0.0
    %2202 = vmatprep.subr.mxu0 0.0
    %2203 = vmatpush1.msra.mxu0 0.0
    %2204 = vmatprep.subr.mxu0 0.0
    %2205 = vmatpush1.msra.mxu0 0.0
    %2206 = vmatprep.subr.mxu0 0.0
    %2207 = vmatpush1.msra.mxu0 0.0
    %2208 = vmatprep.subr.mxu0 0.0
    %2209 = vmatpush1.msra.mxu0 0.0
    %2210 = vmatprep.subr.mxu0 0.0
    %2211 = vmatpush1.msra.mxu0 0.0
    %2212 = vmatprep.subr.mxu0 0.0
    %2213 = vmatpush1.msra.mxu0 0.0
    %2214 = vmatprep.subr.mxu0 0.0
    %2215 = vmatpush1.msra.mxu0 0.0
    %2216 = vmatprep.subr.mxu0 0.0
    %2217 = vmatpush1.msra.mxu0 0.0
    %2218 = vmatprep.subr.mxu0 0.0
    %2219 = vmatpush1.msra.mxu0 0.0
    %2220 = vmatprep.subr.mxu0 0.0
    %2221 = vmatpush1.msra.mxu0 0.0
    %2222 = vmatprep.subr.mxu0 0.0
    %2223 = vmatpush1.msra.mxu0 0.0
    %2224 = vmatprep.subr.mxu0 0.0
    %2225 = vmatpush1.msra.mxu0 0.0
    %2226 = vmatprep.subr.mxu0 0.0
    %2227 = vmatpush1.msra.mxu0 0.0
    %2228 = vmatprep.subr.mxu0 0.0
    %2229 = vmatpush1.msra.mxu0 0.0
    %2230 = vmatprep.subr.mxu0 0.0
    %2231 = vmatpush1.msra.mxu0 0.0
    %2232 = vmatprep.subr.mxu0 0.0
    %2233 = vmatpush1.msra.mxu0 0.0
    %2234 = vmatprep.subr.mxu0 0.0
    %2235 = vmatpush1.msra.mxu0 0.0
    %2236 = vmatprep.subr.mxu0 0.0
    %2237 = vmatpush1.msra.mxu0 0.0
    %2238 = vmatprep.subr.mxu0 0.0
    %2239 = vmatpush1.msra.mxu0 0.0
    %2240 = vmatprep.subr.mxu0 0.0
    %2241 = vmatpush1.msra.mxu0 0.0
    %2242 = vmatprep.subr.mxu0 0.0
    %2243 = vmatpush1.msra.mxu0 0.0
    %2244 = vmatprep.subr.mxu0 0.0
    %2245 = vmatpush1.msra.mxu0 0.0
    %2246 = vmatprep.subr.mxu0 0.0
    %2247 = vmatpush1.msra.mxu0 0.0
    %2248 = vmatprep.subr.mxu0 0.0
    %2249 = vmatpush1.msra.mxu0 0.0
    %2250 = vmatprep.subr.mxu0 0.0
    %2251 = vmatpush1.msra.mxu0 0.0
    %2252 = vmatprep.subr.mxu0 0.0
    %2253 = vmatpush1.msra.mxu0 0.0
    %2254 = vmatprep.subr.mxu0 0.0
    %2255 = vmatpush1.msra.mxu0 0.0
    %2256 = vmatprep.subr.mxu0 0.0
    %2257 = vmatpush1.msra.mxu0 0.0
    %2258 = vmatprep.mubr.f32.mxu0 0.0
    %2259 = vmatmul.mubr.f32.gmra.mrb[0].mxu0 %v2192
    %v2260 = vpop.f32.mrb[0].mxu0
    %v2261 = vadd.f32 0.0, %v2260
    %v2262 = vpop.f32.mrb[0].mxu0
    %2263 = vdwg.mxu0
    %2264 = vrot.lane.b32.xlu0 %v2009, 64
    %v2265 = vpop.permute.xlu0 %2264
    %v2268 = vsel %vm196, %v2187, 0
    %2270 = vmatprep.subr.mxu0 0.0
    %2271 = vmatpush1.msra.mxu0 %v2265
    %2272 = vmatprep.subr.mxu0 0.0
    %2273 = vmatpush1.msra.mxu0 0.0
    %2274 = vmatprep.subr.mxu0 0.0
    %2275 = vmatpush1.msra.mxu0 0.0
    %2276 = vmatprep.subr.mxu0 0.0
    %2277 = vmatpush1.msra.mxu0 0.0
    %2278 = vmatprep.subr.mxu0 0.0
    %2279 = vmatpush1.msra.mxu0 0.0
    %2280 = vmatprep.subr.mxu0 0.0
    %2281 = vmatpush1.msra.mxu0 0.0
    %2282 = vmatprep.subr.mxu0 0.0
    %2283 = vmatpush1.msra.mxu0 0.0
    %2284 = vmatprep.subr.mxu0 0.0
    %2285 = vmatpush1.msra.mxu0 0.0
    %2286 = vmatprep.subr.mxu0 0.0
    %2287 = vmatpush1.msra.mxu0 0.0
    %2288 = vmatprep.subr.mxu0 0.0
    %2289 = vmatpush1.msra.mxu0 0.0
    %2290 = vmatprep.subr.mxu0 0.0
    %2291 = vmatpush1.msra.mxu0 0.0
    %2292 = vmatprep.subr.mxu0 0.0
    %2293 = vmatpush1.msra.mxu0 0.0
    %2294 = vmatprep.subr.mxu0 0.0
    %2295 = vmatpush1.msra.mxu0 0.0
    %2296 = vmatprep.subr.mxu0 0.0
    %2297 = vmatpush1.msra.mxu0 0.0
    %2298 = vmatprep.subr.mxu0 0.0
    %2299 = vmatpush1.msra.mxu0 0.0
    %2300 = vmatprep.subr.mxu0 0.0
    %2301 = vmatpush1.msra.mxu0 0.0
    %2302 = vmatprep.subr.mxu0 0.0
    %2303 = vmatpush1.msra.mxu0 0.0
    %2304 = vmatprep.subr.mxu0 0.0
    %2305 = vmatpush1.msra.mxu0 0.0
    %2306 = vmatprep.subr.mxu0 0.0
    %2307 = vmatpush1.msra.mxu0 0.0
    %2308 = vmatprep.subr.mxu0 0.0
    %2309 = vmatpush1.msra.mxu0 0.0
    %2310 = vmatprep.subr.mxu0 0.0
    %2311 = vmatpush1.msra.mxu0 0.0
    %2312 = vmatprep.subr.mxu0 0.0
    %2313 = vmatpush1.msra.mxu0 0.0
    %2314 = vmatprep.subr.mxu0 0.0
    %2315 = vmatpush1.msra.mxu0 0.0
    %2316 = vmatprep.subr.mxu0 0.0
    %2317 = vmatpush1.msra.mxu0 0.0
    %2318 = vmatprep.subr.mxu0 0.0
    %2319 = vmatpush1.msra.mxu0 0.0
    %2320 = vmatprep.subr.mxu0 0.0
    %2321 = vmatpush1.msra.mxu0 0.0
    %2322 = vmatprep.subr.mxu0 0.0
    %2323 = vmatpush1.msra.mxu0 0.0
    %2324 = vmatprep.subr.mxu0 0.0
    %2325 = vmatpush1.msra.mxu0 0.0
    %2326 = vmatprep.subr.mxu0 0.0
    %2327 = vmatpush1.msra.mxu0 0.0
    %2328 = vmatprep.subr.mxu0 0.0
    %2329 = vmatpush1.msra.mxu0 0.0
    %2330 = vmatprep.subr.mxu0 0.0
    %2331 = vmatpush1.msra.mxu0 0.0
    %2332 = vmatprep.subr.mxu0 0.0
    %2333 = vmatpush1.msra.mxu0 0.0
    %2334 = vmatprep.mubr.f32.mxu0 0.0
    %2335 = vmatmul.mubr.f32.gmra.mrb[0].mxu0 %v2268
    %v2336 = vpop.f32.mrb[0].mxu0
    %v2337 = vadd.f32 0.0, %v2336
    %v2338 = vpop.f32.mrb[0].mxu0
    %2339 = vdwg.mxu0
    %2340 = vrot.lane.b32.xlu0 %v2004, 120
    %v2341 = vpop.permute.xlu0 %2340
    %2342 = vrot.lane.b32.xlu0 %v2004, 88
    %v2343 = vpop.permute.xlu0 %2342
    %v2344 = vsel %vm196, %v2341, 0
    %v2346 = vsel %vm196, %v2343, 0
    %2348 = vmatprep.subr.mxu0 0.0
    %2349 = vmatpush1.xpose.msra.mxu0 %v2346
    %2350 = vmatprep.subr.mxu0 0.0
    %2351 = vmatpush1.xpose.msra.mxu0 0.0
    %2352 = vmatprep.subr.mxu0 0.0
    %2353 = vmatpush1.xpose.msra.mxu0 0.0
    %2354 = vmatprep.subr.mxu0 0.0
    %2355 = vmatpush1.xpose.msra.mxu0 0.0
    %2356 = vmatprep.subr.mxu0 0.0
    %2357 = vmatpush1.xpose.msra.mxu0 0.0
    %2358 = vmatprep.subr.mxu0 0.0
    %2359 = vmatpush1.xpose.msra.mxu0 0.0
    %2360 = vmatprep.subr.mxu0 0.0
    %2361 = vmatpush1.xpose.msra.mxu0 0.0
    %2362 = vmatprep.subr.mxu0 0.0
    %2363 = vmatpush1.xpose.msra.mxu0 0.0
    %2364 = vmatprep.subr.mxu0 0.0
    %2365 = vmatpush1.xpose.msra.mxu0 0.0
    %2366 = vmatprep.subr.mxu0 0.0
    %2367 = vmatpush1.xpose.msra.mxu0 0.0
    %2368 = vmatprep.subr.mxu0 0.0
    %2369 = vmatpush1.xpose.msra.mxu0 0.0
    %2370 = vmatprep.subr.mxu0 0.0
    %2371 = vmatpush1.xpose.msra.mxu0 0.0
    %2372 = vmatprep.subr.mxu0 0.0
    %2373 = vmatpush1.xpose.msra.mxu0 0.0
    %2374 = vmatprep.subr.mxu0 0.0
    %2375 = vmatpush1.xpose.msra.mxu0 0.0
    %2376 = vmatprep.subr.mxu0 0.0
    %2377 = vmatpush1.xpose.msra.mxu0 0.0
    %2378 = vmatprep.subr.mxu0 0.0
    %2379 = vmatpush1.xpose.msra.mxu0 0.0
    %2380 = vmatprep.subr.mxu0 0.0
    %2381 = vmatpush1.xpose.msra.mxu0 0.0
    %2382 = vmatprep.subr.mxu0 0.0
    %2383 = vmatpush1.xpose.msra.mxu0 0.0
    %2384 = vmatprep.subr.mxu0 0.0
    %2385 = vmatpush1.xpose.msra.mxu0 0.0
    %2386 = vmatprep.subr.mxu0 0.0
    %2387 = vmatpush1.xpose.msra.mxu0 0.0
    %2388 = vmatprep.subr.mxu0 0.0
    %2389 = vmatpush1.xpose.msra.mxu0 0.0
    %2390 = vmatprep.subr.mxu0 0.0
    %2391 = vmatpush1.xpose.msra.mxu0 0.0
    %2392 = vmatprep.subr.mxu0 0.0
    %2393 = vmatpush1.xpose.msra.mxu0 0.0
    %2394 = vmatprep.subr.mxu0 0.0
    %2395 = vmatpush1.xpose.msra.mxu0 0.0
    %2396 = vmatprep.subr.mxu0 0.0
    %2397 = vmatpush1.xpose.msra.mxu0 0.0
    %2398 = vmatprep.subr.mxu0 0.0
    %2399 = vmatpush1.xpose.msra.mxu0 0.0
    %2400 = vmatprep.subr.mxu0 0.0
    %2401 = vmatpush1.xpose.msra.mxu0 0.0
    %2402 = vmatprep.subr.mxu0 0.0
    %2403 = vmatpush1.xpose.msra.mxu0 0.0
    %2404 = vmatprep.subr.mxu0 0.0
    %2405 = vmatpush1.xpose.msra.mxu0 0.0
    %2406 = vmatprep.subr.mxu0 0.0
    %2407 = vmatpush1.xpose.msra.mxu0 0.0
    %2408 = vmatprep.subr.mxu0 0.0
    %2409 = vmatpush1.xpose.msra.mxu0 0.0
    %2410 = vmatprep.subr.mxu0 0.0
    %2411 = vmatpush1.xpose.msra.mxu0 0.0
    %2412 = vmatprep.mubr.f32.mxu0 0.0
    %2413 = vmatmul.mubr.f32.gmra.mrb[0].mxu0 %v2344
    %v2414 = vpop.f32.mrb[0].mxu0
    %v2415 = vadd.f32 %v59, %v2414
    %v2416 = vpop.f32.mrb[0].mxu0
    %2417 = vdwg.mxu0
    %2418 = vrot.lane.b32.xlu0 %v2009, 120
    %v2419 = vpop.permute.xlu0 %2418
    %2420 = vrot.lane.b32.xlu0 %v2009, 88
    %v2421 = vpop.permute.xlu0 %2420
    %v2422 = vsel %vm196, %v2419, 0
    %v2424 = vsel %vm196, %v2421, 0
    %2426 = vmatprep.subr.mxu0 0.0
    %2427 = vmatpush1.xpose.msra.mxu0 %v2424
    %2428 = vmatprep.subr.mxu0 0.0
    %2429 = vmatpush1.xpose.msra.mxu0 0.0
    %2430 = vmatprep.subr.mxu0 0.0
    %2431 = vmatpush1.xpose.msra.mxu0 0.0
    %2432 = vmatprep.subr.mxu0 0.0
    %2433 = vmatpush1.xpose.msra.mxu0 0.0
    %2434 = vmatprep.subr.mxu0 0.0
    %2435 = vmatpush1.xpose.msra.mxu0 0.0
    %2436 = vmatprep.subr.mxu0 0.0
    %2437 = vmatpush1.xpose.msra.mxu0 0.0
    %2438 = vmatprep.subr.mxu0 0.0
    %2439 = vmatpush1.xpose.msra.mxu0 0.0
    %2440 = vmatprep.subr.mxu0 0.0
    %2441 = vmatpush1.xpose.msra.mxu0 0.0
    %2442 = vmatprep.subr.mxu0 0.0
    %2443 = vmatpush1.xpose.msra.mxu0 0.0
    %2444 = vmatprep.subr.mxu0 0.0
    %2445 = vmatpush1.xpose.msra.mxu0 0.0
    %2446 = vmatprep.subr.mxu0 0.0
    %2447 = vmatpush1.xpose.msra.mxu0 0.0
    %2448 = vmatprep.subr.mxu0 0.0
    %2449 = vmatpush1.xpose.msra.mxu0 0.0
    %2450 = vmatprep.subr.mxu0 0.0
    %2451 = vmatpush1.xpose.msra.mxu0 0.0
    %2452 = vmatprep.subr.mxu0 0.0
    %2453 = vmatpush1.xpose.msra.mxu0 0.0
    %2454 = vmatprep.subr.mxu0 0.0
    %2455 = vmatpush1.xpose.msra.mxu0 0.0
    %2456 = vmatprep.subr.mxu0 0.0
    %2457 = vmatpush1.xpose.msra.mxu0 0.0
    %2458 = vmatprep.subr.mxu0 0.0
    %2459 = vmatpush1.xpose.msra.mxu0 0.0
    %2460 = vmatprep.subr.mxu0 0.0
    %2461 = vmatpush1.xpose.msra.mxu0 0.0
    %2462 = vmatprep.subr.mxu0 0.0
    %2463 = vmatpush1.xpose.msra.mxu0 0.0
    %2464 = vmatprep.subr.mxu0 0.0
    %2465 = vmatpush1.xpose.msra.mxu0 0.0
    %2466 = vmatprep.subr.mxu0 0.0
    %2467 = vmatpush1.xpose.msra.mxu0 0.0
    %2468 = vmatprep.subr.mxu0 0.0
    %2469 = vmatpush1.xpose.msra.mxu0 0.0
    %2470 = vmatprep.subr.mxu0 0.0
    %2471 = vmatpush1.xpose.msra.mxu0 0.0
    %2472 = vmatprep.subr.mxu0 0.0
    %2473 = vmatpush1.xpose.msra.mxu0 0.0
    %2474 = vmatprep.subr.mxu0 0.0
    %2475 = vmatpush1.xpose.msra.mxu0 0.0
    %2476 = vmatprep.subr.mxu0 0.0
    %2477 = vmatpush1.xpose.msra.mxu0 0.0
    %2478 = vmatprep.subr.mxu0 0.0
    %2479 = vmatpush1.xpose.msra.mxu0 0.0
    %2480 = vmatprep.subr.mxu0 0.0
    %2481 = vmatpush1.xpose.msra.mxu0 0.0
    %2482 = vmatprep.subr.mxu0 0.0
    %2483 = vmatpush1.xpose.msra.mxu0 0.0
    %2484 = vmatprep.subr.mxu0 0.0
    %2485 = vmatpush1.xpose.msra.mxu0 0.0
    %2486 = vmatprep.subr.mxu0 0.0
    %2487 = vmatpush1.xpose.msra.mxu0 0.0
    %2488 = vmatprep.subr.mxu0 0.0
    %2489 = vmatpush1.xpose.msra.mxu0 0.0
    %2490 = vmatprep.mubr.f32.mxu0 0.0
    %2491 = vmatmul.mubr.f32.gmra.mrb[0].mxu0 %v2422
    %v2492 = vpop.f32.mrb[0].mxu0
    %v2493 = vadd.f32 %v59, %v2492
    %v2494 = vpop.f32.mrb[0].mxu0
    %2495 = vdwg.mxu0
    %v2496 = vsel %vm196, %v2415, -inf
    %2497 = vmax.xlane.f32.xlu0 %v2496
    %v2498 = vpop.xlane.xlu0 %2497
    %v2499 = vsel %vm196, %v2493, -inf
    %2500 = vmax.xlane.f32.xlu0 %v2499
    %v2501 = vpop.xlane.xlu0 %2500
    %v2502 = vsub.f32 %v2415, %v2498
    %v2503 = vsub.f32 %v2493, %v2501
    %v2504 = vmul.f32 %v2502, 1.442695
    %v2505 = vpow.pop %v2504
    %v2506 = vmul.f32 %v2503, 1.442695
    %v2507 = vpow.pop %v2506
    %v2508 = vsel %vm196, %v2505, 0.0
    %2509 = vadd.xlane.f32.xlu0 %v2508
    %v2510 = vpop.xlane.xlu0 %2509
    %v2511 = vsel %vm196, %v2507, 0.0
    %2512 = vadd.xlane.f32.xlu0 %v2511
    %v2513 = vpop.xlane.xlu0 %2512
    %v2514 = vrcp.pop %v2510
    %v2515 = vrcp.pop %v2513
    %v2516 = vmul.f32 %v2505, %v2514
    %v2517 = vmul.f32 %v2507, %v2515
    %2518 = vrot.lane.b32.xlu0 %v2004, 56
    %v2519 = vpop.permute.xlu0 %2518
    %v2522 = vsel %vm196, %v2516, 0
    %2524 = vmatprep.subr.mxu0 0.0
    %2525 = vmatpush1.msra.mxu0 %v2519
    %2526 = vmatprep.subr.mxu0 0.0
    %2527 = vmatpush1.msra.mxu0 0.0
    %2528 = vmatprep.subr.mxu0 0.0
    %2529 = vmatpush1.msra.mxu0 0.0
    %2530 = vmatprep.subr.mxu0 0.0
    %2531 = vmatpush1.msra.mxu0 0.0
    %2532 = vmatprep.subr.mxu0 0.0
    %2533 = vmatpush1.msra.mxu0 0.0
    %2534 = vmatprep.subr.mxu0 0.0
    %2535 = vmatpush1.msra.mxu0 0.0
    %2536 = vmatprep.subr.mxu0 0.0
    %2537 = vmatpush1.msra.mxu0 0.0
    %2538 = vmatprep.subr.mxu0 0.0
    %2539 = vmatpush1.msra.mxu0 0.0
    %2540 = vmatprep.subr.mxu0 0.0
    %2541 = vmatpush1.msra.mxu0 0.0
    %2542 = vmatprep.subr.mxu0 0.0
    %2543 = vmatpush1.msra.mxu0 0.0
    %2544 = vmatprep.subr.mxu0 0.0
    %2545 = vmatpush1.msra.mxu0 0.0
    %2546 = vmatprep.subr.mxu0 0.0
    %2547 = vmatpush1.msra.mxu0 0.0
    %2548 = vmatprep.subr.mxu0 0.0
    %2549 = vmatpush1.msra.mxu0 0.0
    %2550 = vmatprep.subr.mxu0 0.0
    %2551 = vmatpush1.msra.mxu0 0.0
    %2552 = vmatprep.subr.mxu0 0.0
    %2553 = vmatpush1.msra.mxu0 0.0
    %2554 = vmatprep.subr.mxu0 0.0
    %2555 = vmatpush1.msra.mxu0 0.0
    %2556 = vmatprep.subr.mxu0 0.0
    %2557 = vmatpush1.msra.mxu0 0.0
    %2558 = vmatprep.subr.mxu0 0.0
    %2559 = vmatpush1.msra.mxu0 0.0
    %2560 = vmatprep.subr.mxu0 0.0
    %2561 = vmatpush1.msra.mxu0 0.0
    %2562 = vmatprep.subr.mxu0 0.0
    %2563 = vmatpush1.msra.mxu0 0.0
    %2564 = vmatprep.subr.mxu0 0.0
    %2565 = vmatpush1.msra.mxu0 0.0
    %2566 = vmatprep.subr.mxu0 0.0
    %2567 = vmatpush1.msra.mxu0 0.0
    %2568 = vmatprep.subr.mxu0 0.0
    %2569 = vmatpush1.msra.mxu0 0.0
    %2570 = vmatprep.subr.mxu0 0.0
    %2571 = vmatpush1.msra.mxu0 0.0
    %2572 = vmatprep.subr.mxu0 0.0
    %2573 = vmatpush1.msra.mxu0 0.0
    %2574 = vmatprep.subr.mxu0 0.0
    %2575 = vmatpush1.msra.mxu0 0.0
    %2576 = vmatprep.subr.mxu0 0.0
    %2577 = vmatpush1.msra.mxu0 0.0
    %2578 = vmatprep.subr.mxu0 0.0
    %2579 = vmatpush1.msra.mxu0 0.0
    %2580 = vmatprep.subr.mxu0 0.0
    %2581 = vmatpush1.msra.mxu0 0.0
    %2582 = vmatprep.subr.mxu0 0.0
    %2583 = vmatpush1.msra.mxu0 0.0
    %2584 = vmatprep.subr.mxu0 0.0
    %2585 = vmatpush1.msra.mxu0 0.0
    %2586 = vmatprep.subr.mxu0 0.0
    %2587 = vmatpush1.msra.mxu0 0.0
    %2588 = vmatprep.mubr.f32.mxu0 0.0
    %2589 = vmatmul.mubr.f32.gmra.mrb[0].mxu0 %v2522
    %v2590 = vpop.f32.mrb[0].mxu0
    %v2591 = vadd.f32 0.0, %v2590
    %v2592 = vpop.f32.mrb[0].mxu0
    %2593 = vdwg.mxu0
    %2594 = vrot.lane.b32.xlu0 %v2009, 56
    %v2595 = vpop.permute.xlu0 %2594
    %v2598 = vsel %vm196, %v2517, 0
    %2600 = vmatprep.subr.mxu0 0.0
    %2601 = vmatpush1.msra.mxu0 %v2595
    %2602 = vmatprep.subr.mxu0 0.0
    %2603 = vmatpush1.msra.mxu0 0.0
    %2604 = vmatprep.subr.mxu0 0.0
    %2605 = vmatpush1.msra.mxu0 0.0
    %2606 = vmatprep.subr.mxu0 0.0
    %2607 = vmatpush1.msra.mxu0 0.0
    %2608 = vmatprep.subr.mxu0 0.0
    %2609 = vmatpush1.msra.mxu0 0.0
    %2610 = vmatprep.subr.mxu0 0.0
    %2611 = vmatpush1.msra.mxu0 0.0
    %2612 = vmatprep.subr.mxu0 0.0
    %2613 = vmatpush1.msra.mxu0 0.0
    %2614 = vmatprep.subr.mxu0 0.0
    %2615 = vmatpush1.msra.mxu0 0.0
    %2616 = vmatprep.subr.mxu0 0.0
    %2617 = vmatpush1.msra.mxu0 0.0
    %2618 = vmatprep.subr.mxu0 0.0
    %2619 = vmatpush1.msra.mxu0 0.0
    %2620 = vmatprep.subr.mxu0 0.0
    %2621 = vmatpush1.msra.mxu0 0.0
    %2622 = vmatprep.subr.mxu0 0.0
    %2623 = vmatpush1.msra.mxu0 0.0
    %2624 = vmatprep.subr.mxu0 0.0
    %2625 = vmatpush1.msra.mxu0 0.0
    %2626 = vmatprep.subr.mxu0 0.0
    %2627 = vmatpush1.msra.mxu0 0.0
    %2628 = vmatprep.subr.mxu0 0.0
    %2629 = vmatpush1.msra.mxu0 0.0
    %2630 = vmatprep.subr.mxu0 0.0
    %2631 = vmatpush1.msra.mxu0 0.0
    %2632 = vmatprep.subr.mxu0 0.0
    %2633 = vmatpush1.msra.mxu0 0.0
    %2634 = vmatprep.subr.mxu0 0.0
    %2635 = vmatpush1.msra.mxu0 0.0
    %2636 = vmatprep.subr.mxu0 0.0
    %2637 = vmatpush1.msra.mxu0 0.0
    %2638 = vmatprep.subr.mxu0 0.0
    %2639 = vmatpush1.msra.mxu0 0.0
    %2640 = vmatprep.subr.mxu0 0.0
    %2641 = vmatpush1.msra.mxu0 0.0
    %2642 = vmatprep.subr.mxu0 0.0
    %2643 = vmatpush1.msra.mxu0 0.0
    %2644 = vmatprep.subr.mxu0 0.0
    %2645 = vmatpush1.msra.mxu0 0.0
    %2646 = vmatprep.subr.mxu0 0.0
    %2647 = vmatpush1.msra.mxu0 0.0
    %2648 = vmatprep.subr.mxu0 0.0
    %2649 = vmatpush1.msra.mxu0 0.0
    %2650 = vmatprep.subr.mxu0 0.0
    %2651 = vmatpush1.msra.mxu0 0.0
    %2652 = vmatprep.subr.mxu0 0.0
    %2653 = vmatpush1.msra.mxu0 0.0
    %2654 = vmatprep.subr.mxu0 0.0
    %2655 = vmatpush1.msra.mxu0 0.0
    %2656 = vmatprep.subr.mxu0 0.0
    %2657 = vmatpush1.msra.mxu0 0.0
    %2658 = vmatprep.subr.mxu0 0.0
    %2659 = vmatpush1.msra.mxu0 0.0
    %2660 = vmatprep.subr.mxu0 0.0
    %2661 = vmatpush1.msra.mxu0 0.0
    %2662 = vmatprep.subr.mxu0 0.0
    %2663 = vmatpush1.msra.mxu0 0.0
    %2664 = vmatprep.mubr.f32.mxu0 0.0
    %2665 = vmatmul.mubr.f32.gmra.mrb[0].mxu0 %v2598
    %v2666 = vpop.f32.mrb[0].mxu0
    %v2667 = vadd.f32 0.0, %v2666
    %v2668 = vpop.f32.mrb[0].mxu0
    %2669 = vdwg.mxu0
    %2670 = vrot.lane.b32.xlu0 %v2004, 112
    %v2671 = vpop.permute.xlu0 %2670
    %2672 = vrot.lane.b32.xlu0 %v2004, 80
    %v2673 = vpop.permute.xlu0 %2672
    %v2674 = vsel %vm196, %v2671, 0
    %v2676 = vsel %vm196, %v2673, 0
    %2678 = vmatprep.subr.mxu0 0.0
    %2679 = vmatpush1.xpose.msra.mxu0 %v2676
    %2680 = vmatprep.subr.mxu0 0.0
    %2681 = vmatpush1.xpose.msra.mxu0 0.0
    %2682 = vmatprep.subr.mxu0 0.0
    %2683 = vmatpush1.xpose.msra.mxu0 0.0
    %2684 = vmatprep.subr.mxu0 0.0
    %2685 = vmatpush1.xpose.msra.mxu0 0.0
    %2686 = vmatprep.subr.mxu0 0.0
    %2687 = vmatpush1.xpose.msra.mxu0 0.0
    %2688 = vmatprep.subr.mxu0 0.0
    %2689 = vmatpush1.xpose.msra.mxu0 0.0
    %2690 = vmatprep.subr.mxu0 0.0
    %2691 = vmatpush1.xpose.msra.mxu0 0.0
    %2692 = vmatprep.subr.mxu0 0.0
    %2693 = vmatpush1.xpose.msra.mxu0 0.0
    %2694 = vmatprep.subr.mxu0 0.0
    %2695 = vmatpush1.xpose.msra.mxu0 0.0
    %2696 = vmatprep.subr.mxu0 0.0
    %2697 = vmatpush1.xpose.msra.mxu0 0.0
    %2698 = vmatprep.subr.mxu0 0.0
    %2699 = vmatpush1.xpose.msra.mxu0 0.0
    %2700 = vmatprep.subr.mxu0 0.0
    %2701 = vmatpush1.xpose.msra.mxu0 0.0
    %2702 = vmatprep.subr.mxu0 0.0
    %2703 = vmatpush1.xpose.msra.mxu0 0.0
    %2704 = vmatprep.subr.mxu0 0.0
    %2705 = vmatpush1.xpose.msra.mxu0 0.0
    %2706 = vmatprep.subr.mxu0 0.0
    %2707 = vmatpush1.xpose.msra.mxu0 0.0
    %2708 = vmatprep.subr.mxu0 0.0
    %2709 = vmatpush1.xpose.msra.mxu0 0.0
    %2710 = vmatprep.subr.mxu0 0.0
    %2711 = vmatpush1.xpose.msra.mxu0 0.0
    %2712 = vmatprep.subr.mxu0 0.0
    %2713 = vmatpush1.xpose.msra.mxu0 0.0
    %2714 = vmatprep.subr.mxu0 0.0
    %2715 = vmatpush1.xpose.msra.mxu0 0.0
    %2716 = vmatprep.subr.mxu0 0.0
    %2717 = vmatpush1.xpose.msra.mxu0 0.0
    %2718 = vmatprep.subr.mxu0 0.0
    %2719 = vmatpush1.xpose.msra.mxu0 0.0
    %2720 = vmatprep.subr.mxu0 0.0
    %2721 = vmatpush1.xpose.msra.mxu0 0.0
    %2722 = vmatprep.subr.mxu0 0.0
    %2723 = vmatpush1.xpose.msra.mxu0 0.0
    %2724 = vmatprep.subr.mxu0 0.0
    %2725 = vmatpush1.xpose.msra.mxu0 0.0
    %2726 = vmatprep.subr.mxu0 0.0
    %2727 = vmatpush1.xpose.msra.mxu0 0.0
    %2728 = vmatprep.subr.mxu0 0.0
    %2729 = vmatpush1.xpose.msra.mxu0 0.0
    %2730 = vmatprep.subr.mxu0 0.0
    %2731 = vmatpush1.xpose.msra.mxu0 0.0
    %2732 = vmatprep.subr.mxu0 0.0
    %2733 = vmatpush1.xpose.msra.mxu0 0.0
    %2734 = vmatprep.subr.mxu0 0.0
    %2735 = vmatpush1.xpose.msra.mxu0 0.0
    %2736 = vmatprep.subr.mxu0 0.0
    %2737 = vmatpush1.xpose.msra.mxu0 0.0
    %2738 = vmatprep.subr.mxu0 0.0
    %2739 = vmatpush1.xpose.msra.mxu0 0.0
    %2740 = vmatprep.subr.mxu0 0.0
    %2741 = vmatpush1.xpose.msra.mxu0 0.0
    %2742 = vmatprep.mubr.f32.mxu0 0.0
    %2743 = vmatmul.mubr.f32.gmra.mrb[0].mxu0 %v2674
    %v2744 = vpop.f32.mrb[0].mxu0
    %v2745 = vadd.f32 %v59, %v2744
    %v2746 = vpop.f32.mrb[0].mxu0
    %2747 = vdwg.mxu0
    %2748 = vrot.lane.b32.xlu0 %v2009, 112
    %v2749 = vpop.permute.xlu0 %2748
    %2750 = vrot.lane.b32.xlu0 %v2009, 80
    %v2751 = vpop.permute.xlu0 %2750
    %v2752 = vsel %vm196, %v2749, 0
    %v2754 = vsel %vm196, %v2751, 0
    %2756 = vmatprep.subr.mxu0 0.0
    %2757 = vmatpush1.xpose.msra.mxu0 %v2754
    %2758 = vmatprep.subr.mxu0 0.0
    %2759 = vmatpush1.xpose.msra.mxu0 0.0
    %2760 = vmatprep.subr.mxu0 0.0
    %2761 = vmatpush1.xpose.msra.mxu0 0.0
    %2762 = vmatprep.subr.mxu0 0.0
    %2763 = vmatpush1.xpose.msra.mxu0 0.0
    %2764 = vmatprep.subr.mxu0 0.0
    %2765 = vmatpush1.xpose.msra.mxu0 0.0
    %2766 = vmatprep.subr.mxu0 0.0
    %2767 = vmatpush1.xpose.msra.mxu0 0.0
    %2768 = vmatprep.subr.mxu0 0.0
    %2769 = vmatpush1.xpose.msra.mxu0 0.0
    %2770 = vmatprep.subr.mxu0 0.0
    %2771 = vmatpush1.xpose.msra.mxu0 0.0
    %2772 = vmatprep.subr.mxu0 0.0
    %2773 = vmatpush1.xpose.msra.mxu0 0.0
    %2774 = vmatprep.subr.mxu0 0.0
    %2775 = vmatpush1.xpose.msra.mxu0 0.0
    %2776 = vmatprep.subr.mxu0 0.0
    %2777 = vmatpush1.xpose.msra.mxu0 0.0
    %2778 = vmatprep.subr.mxu0 0.0
    %2779 = vmatpush1.xpose.msra.mxu0 0.0
    %2780 = vmatprep.subr.mxu0 0.0
    %2781 = vmatpush1.xpose.msra.mxu0 0.0
    %2782 = vmatprep.subr.mxu0 0.0
    %2783 = vmatpush1.xpose.msra.mxu0 0.0
    %2784 = vmatprep.subr.mxu0 0.0
    %2785 = vmatpush1.xpose.msra.mxu0 0.0
    %2786 = vmatprep.subr.mxu0 0.0
    %2787 = vmatpush1.xpose.msra.mxu0 0.0
    %2788 = vmatprep.subr.mxu0 0.0
    %2789 = vmatpush1.xpose.msra.mxu0 0.0
    %2790 = vmatprep.subr.mxu0 0.0
    %2791 = vmatpush1.xpose.msra.mxu0 0.0
    %2792 = vmatprep.subr.mxu0 0.0
    %2793 = vmatpush1.xpose.msra.mxu0 0.0
    %2794 = vmatprep.subr.mxu0 0.0
    %2795 = vmatpush1.xpose.msra.mxu0 0.0
    %2796 = vmatprep.subr.mxu0 0.0
    %2797 = vmatpush1.xpose.msra.mxu0 0.0
    %2798 = vmatprep.subr.mxu0 0.0
    %2799 = vmatpush1.xpose.msra.mxu0 0.0
    %2800 = vmatprep.subr.mxu0 0.0
    %2801 = vmatpush1.xpose.msra.mxu0 0.0
    %2802 = vmatprep.subr.mxu0 0.0
    %2803 = vmatpush1.xpose.msra.mxu0 0.0
    %2804 = vmatprep.subr.mxu0 0.0
    %2805 = vmatpush1.xpose.msra.mxu0 0.0
    %2806 = vmatprep.subr.mxu0 0.0
    %2807 = vmatpush1.xpose.msra.mxu0 0.0
    %2808 = vmatprep.subr.mxu0 0.0
    %2809 = vmatpush1.xpose.msra.mxu0 0.0
    %2810 = vmatprep.subr.mxu0 0.0
    %2811 = vmatpush1.xpose.msra.mxu0 0.0
    %2812 = vmatprep.subr.mxu0 0.0
    %2813 = vmatpush1.xpose.msra.mxu0 0.0
    %2814 = vmatprep.subr.mxu0 0.0
    %2815 = vmatpush1.xpose.msra.mxu0 0.0
    %2816 = vmatprep.subr.mxu0 0.0
    %2817 = vmatpush1.xpose.msra.mxu0 0.0
    %2818 = vmatprep.subr.mxu0 0.0
    %2819 = vmatpush1.xpose.msra.mxu0 0.0
    %2820 = vmatprep.mubr.f32.mxu0 0.0
    %2821 = vmatmul.mubr.f32.gmra.mrb[0].mxu0 %v2752
    %v2822 = vpop.f32.mrb[0].mxu0
    %v2823 = vadd.f32 %v59, %v2822
    %v2824 = vpop.f32.mrb[0].mxu0
    %2825 = vdwg.mxu0
    %v2826 = vsel %vm196, %v2745, -inf
    %2827 = vmax.xlane.f32.xlu0 %v2826
    %v2828 = vpop.xlane.xlu0 %2827
    %v2829 = vsel %vm196, %v2823, -inf
    %2830 = vmax.xlane.f32.xlu0 %v2829
    %v2831 = vpop.xlane.xlu0 %2830
    %v2832 = vsub.f32 %v2745, %v2828
    %v2833 = vsub.f32 %v2823, %v2831
    %v2834 = vmul.f32 %v2832, 1.442695
    %v2835 = vpow.pop %v2834
    %v2836 = vmul.f32 %v2833, 1.442695
    %v2837 = vpow.pop %v2836
    %v2838 = vsel %vm196, %v2835, 0.0
    %2839 = vadd.xlane.f32.xlu0 %v2838
    %v2840 = vpop.xlane.xlu0 %2839
    %v2841 = vsel %vm196, %v2837, 0.0
    %2842 = vadd.xlane.f32.xlu0 %v2841
    %v2843 = vpop.xlane.xlu0 %2842
    %v2844 = vrcp.pop %v2840
    %v2845 = vrcp.pop %v2843
    %v2846 = vmul.f32 %v2835, %v2844
    %v2847 = vmul.f32 %v2837, %v2845
    %2848 = vrot.lane.b32.xlu0 %v2004, 48
    %v2849 = vpop.permute.xlu0 %2848
    %v2852 = vsel %vm196, %v2846, 0
    %2854 = vmatprep.subr.mxu0 0.0
    %2855 = vmatpush1.msra.mxu0 %v2849
    %2856 = vmatprep.subr.mxu0 0.0
    %2857 = vmatpush1.msra.mxu0 0.0
    %2858 = vmatprep.subr.mxu0 0.0
    %2859 = vmatpush1.msra.mxu0 0.0
    %2860 = vmatprep.subr.mxu0 0.0
    %2861 = vmatpush1.msra.mxu0 0.0
    %2862 = vmatprep.subr.mxu0 0.0
    %2863 = vmatpush1.msra.mxu0 0.0
    %2864 = vmatprep.subr.mxu0 0.0
    %2865 = vmatpush1.msra.mxu0 0.0
    %2866 = vmatprep.subr.mxu0 0.0
    %2867 = vmatpush1.msra.mxu0 0.0
    %2868 = vmatprep.subr.mxu0 0.0
    %2869 = vmatpush1.msra.mxu0 0.0
    %2870 = vmatprep.subr.mxu0 0.0
    %2871 = vmatpush1.msra.mxu0 0.0
    %2872 = vmatprep.subr.mxu0 0.0
    %2873 = vmatpush1.msra.mxu0 0.0
    %2874 = vmatprep.subr.mxu0 0.0
    %2875 = vmatpush1.msra.mxu0 0.0
    %2876 = vmatprep.subr.mxu0 0.0
    %2877 = vmatpush1.msra.mxu0 0.0
    %2878 = vmatprep.subr.mxu0 0.0
    %2879 = vmatpush1.msra.mxu0 0.0
    %2880 = vmatprep.subr.mxu0 0.0
    %2881 = vmatpush1.msra.mxu0 0.0
    %2882 = vmatprep.subr.mxu0 0.0
    %2883 = vmatpush1.msra.mxu0 0.0
    %2884 = vmatprep.subr.mxu0 0.0
    %2885 = vmatpush1.msra.mxu0 0.0
    %2886 = vmatprep.subr.mxu0 0.0
    %2887 = vmatpush1.msra.mxu0 0.0
    %2888 = vmatprep.subr.mxu0 0.0
    %2889 = vmatpush1.msra.mxu0 0.0
    %2890 = vmatprep.subr.mxu0 0.0
    %2891 = vmatpush1.msra.mxu0 0.0
    %2892 = vmatprep.subr.mxu0 0.0
    %2893 = vmatpush1.msra.mxu0 0.0
    %2894 = vmatprep.subr.mxu0 0.0
    %2895 = vmatpush1.msra.mxu0 0.0
    %2896 = vmatprep.subr.mxu0 0.0
    %2897 = vmatpush1.msra.mxu0 0.0
    %2898 = vmatprep.subr.mxu0 0.0
    %2899 = vmatpush1.msra.mxu0 0.0
    %2900 = vmatprep.subr.mxu0 0.0
    %2901 = vmatpush1.msra.mxu0 0.0
    %2902 = vmatprep.subr.mxu0 0.0
    %2903 = vmatpush1.msra.mxu0 0.0
    %2904 = vmatprep.subr.mxu0 0.0
    %2905 = vmatpush1.msra.mxu0 0.0
    %2906 = vmatprep.subr.mxu0 0.0
    %2907 = vmatpush1.msra.mxu0 0.0
    %2908 = vmatprep.subr.mxu0 0.0
    %2909 = vmatpush1.msra.mxu0 0.0
    %2910 = vmatprep.subr.mxu0 0.0
    %2911 = vmatpush1.msra.mxu0 0.0
    %2912 = vmatprep.subr.mxu0 0.0
    %2913 = vmatpush1.msra.mxu0 0.0
    %2914 = vmatprep.subr.mxu0 0.0
    %2915 = vmatpush1.msra.mxu0 0.0
    %2916 = vmatprep.subr.mxu0 0.0
    %2917 = vmatpush1.msra.mxu0 0.0
    %2918 = vmatprep.mubr.f32.mxu0 0.0
    %2919 = vmatmul.mubr.f32.gmra.mrb[0].mxu0 %v2852
    %v2920 = vpop.f32.mrb[0].mxu0
    %v2921 = vadd.f32 0.0, %v2920
    %v2922 = vpop.f32.mrb[0].mxu0
    %2923 = vdwg.mxu0
    %2924 = vrot.lane.b32.xlu0 %v2009, 48
    %v2925 = vpop.permute.xlu0 %2924
    %v2928 = vsel %vm196, %v2847, 0
    %2930 = vmatprep.subr.mxu0 0.0
    %2931 = vmatpush1.msra.mxu0 %v2925
    %2932 = vmatprep.subr.mxu0 0.0
    %2933 = vmatpush1.msra.mxu0 0.0
    %2934 = vmatprep.subr.mxu0 0.0
    %2935 = vmatpush1.msra.mxu0 0.0
    %2936 = vmatprep.subr.mxu0 0.0
    %2937 = vmatpush1.msra.mxu0 0.0
    %2938 = vmatprep.subr.mxu0 0.0
    %2939 = vmatpush1.msra.mxu0 0.0
    %2940 = vmatprep.subr.mxu0 0.0
    %2941 = vmatpush1.msra.mxu0 0.0
    %2942 = vmatprep.subr.mxu0 0.0
    %2943 = vmatpush1.msra.mxu0 0.0
    %2944 = vmatprep.subr.mxu0 0.0
    %2945 = vmatpush1.msra.mxu0 0.0
    %2946 = vmatprep.subr.mxu0 0.0
    %2947 = vmatpush1.msra.mxu0 0.0
    %2948 = vmatprep.subr.mxu0 0.0
    %2949 = vmatpush1.msra.mxu0 0.0
    %2950 = vmatprep.subr.mxu0 0.0
    %2951 = vmatpush1.msra.mxu0 0.0
    %2952 = vmatprep.subr.mxu0 0.0
    %2953 = vmatpush1.msra.mxu0 0.0
    %2954 = vmatprep.subr.mxu0 0.0
    %2955 = vmatpush1.msra.mxu0 0.0
    %2956 = vmatprep.subr.mxu0 0.0
    %2957 = vmatpush1.msra.mxu0 0.0
    %2958 = vmatprep.subr.mxu0 0.0
    %2959 = vmatpush1.msra.mxu0 0.0
    %2960 = vmatprep.subr.mxu0 0.0
    %2961 = vmatpush1.msra.mxu0 0.0
    %2962 = vmatprep.subr.mxu0 0.0
    %2963 = vmatpush1.msra.mxu0 0.0
    %2964 = vmatprep.subr.mxu0 0.0
    %2965 = vmatpush1.msra.mxu0 0.0
    %2966 = vmatprep.subr.mxu0 0.0
    %2967 = vmatpush1.msra.mxu0 0.0
    %2968 = vmatprep.subr.mxu0 0.0
    %2969 = vmatpush1.msra.mxu0 0.0
    %2970 = vmatprep.subr.mxu0 0.0
    %2971 = vmatpush1.msra.mxu0 0.0
    %2972 = vmatprep.subr.mxu0 0.0
    %2973 = vmatpush1.msra.mxu0 0.0
    %2974 = vmatprep.subr.mxu0 0.0
    %2975 = vmatpush1.msra.mxu0 0.0
    %2976 = vmatprep.subr.mxu0 0.0
    %2977 = vmatpush1.msra.mxu0 0.0
    %2978 = vmatprep.subr.mxu0 0.0
    %2979 = vmatpush1.msra.mxu0 0.0
    %2980 = vmatprep.subr.mxu0 0.0
    %2981 = vmatpush1.msra.mxu0 0.0
    %2982 = vmatprep.subr.mxu0 0.0
    %2983 = vmatpush1.msra.mxu0 0.0
    %2984 = vmatprep.subr.mxu0 0.0
    %2985 = vmatpush1.msra.mxu0 0.0
    %2986 = vmatprep.subr.mxu0 0.0
    %2987 = vmatpush1.msra.mxu0 0.0
    %2988 = vmatprep.subr.mxu0 0.0
    %2989 = vmatpush1.msra.mxu0 0.0
    %2990 = vmatprep.subr.mxu0 0.0
    %2991 = vmatpush1.msra.mxu0 0.0
    %2992 = vmatprep.subr.mxu0 0.0
    %2993 = vmatpush1.msra.mxu0 0.0
    %2994 = vmatprep.mubr.f32.mxu0 0.0
    %2995 = vmatmul.mubr.f32.gmra.mrb[0].mxu0 %v2928
    %v2996 = vpop.f32.mrb[0].mxu0
    %v2997 = vadd.f32 0.0, %v2996
    %v2998 = vpop.f32.mrb[0].mxu0
    %2999 = vdwg.mxu0
    %3000 = vrot.lane.b32.xlu0 %v2004, 104
    %v3001 = vpop.permute.xlu0 %3000
    %3002 = vrot.lane.b32.xlu0 %v2004, 72
    %v3003 = vpop.permute.xlu0 %3002
    %v3004 = vsel %vm196, %v3001, 0
    %v3006 = vsel %vm196, %v3003, 0
    %3008 = vmatprep.subr.mxu0 0.0
    %3009 = vmatpush1.xpose.msra.mxu0 %v3006
    %3010 = vmatprep.subr.mxu0 0.0
    %3011 = vmatpush1.xpose.msra.mxu0 0.0
    %3012 = vmatprep.subr.mxu0 0.0
    %3013 = vmatpush1.xpose.msra.mxu0 0.0
    %3014 = vmatprep.subr.mxu0 0.0
    %3015 = vmatpush1.xpose.msra.mxu0 0.0
    %3016 = vmatprep.subr.mxu0 0.0
    %3017 = vmatpush1.xpose.msra.mxu0 0.0
    %3018 = vmatprep.subr.mxu0 0.0
    %3019 = vmatpush1.xpose.msra.mxu0 0.0
    %3020 = vmatprep.subr.mxu0 0.0
    %3021 = vmatpush1.xpose.msra.mxu0 0.0
    %3022 = vmatprep.subr.mxu0 0.0
    %3023 = vmatpush1.xpose.msra.mxu0 0.0
    %3024 = vmatprep.subr.mxu0 0.0
    %3025 = vmatpush1.xpose.msra.mxu0 0.0
    %3026 = vmatprep.subr.mxu0 0.0
    %3027 = vmatpush1.xpose.msra.mxu0 0.0
    %3028 = vmatprep.subr.mxu0 0.0
    %3029 = vmatpush1.xpose.msra.mxu0 0.0
    %3030 = vmatprep.subr.mxu0 0.0
    %3031 = vmatpush1.xpose.msra.mxu0 0.0
    %3032 = vmatprep.subr.mxu0 0.0
    %3033 = vmatpush1.xpose.msra.mxu0 0.0
    %3034 = vmatprep.subr.mxu0 0.0
    %3035 = vmatpush1.xpose.msra.mxu0 0.0
    %3036 = vmatprep.subr.mxu0 0.0
    %3037 = vmatpush1.xpose.msra.mxu0 0.0
    %3038 = vmatprep.subr.mxu0 0.0
    %3039 = vmatpush1.xpose.msra.mxu0 0.0
    %3040 = vmatprep.subr.mxu0 0.0
    %3041 = vmatpush1.xpose.msra.mxu0 0.0
    %3042 = vmatprep.subr.mxu0 0.0
    %3043 = vmatpush1.xpose.msra.mxu0 0.0
    %3044 = vmatprep.subr.mxu0 0.0
    %3045 = vmatpush1.xpose.msra.mxu0 0.0
    %3046 = vmatprep.subr.mxu0 0.0
    %3047 = vmatpush1.xpose.msra.mxu0 0.0
    %3048 = vmatprep.subr.mxu0 0.0
    %3049 = vmatpush1.xpose.msra.mxu0 0.0
    %3050 = vmatprep.subr.mxu0 0.0
    %3051 = vmatpush1.xpose.msra.mxu0 0.0
    %3052 = vmatprep.subr.mxu0 0.0
    %3053 = vmatpush1.xpose.msra.mxu0 0.0
    %3054 = vmatprep.subr.mxu0 0.0
    %3055 = vmatpush1.xpose.msra.mxu0 0.0
    %3056 = vmatprep.subr.mxu0 0.0
    %3057 = vmatpush1.xpose.msra.mxu0 0.0
    %3058 = vmatprep.subr.mxu0 0.0
    %3059 = vmatpush1.xpose.msra.mxu0 0.0
    %3060 = vmatprep.subr.mxu0 0.0
    %3061 = vmatpush1.xpose.msra.mxu0 0.0
    %3062 = vmatprep.subr.mxu0 0.0
    %3063 = vmatpush1.xpose.msra.mxu0 0.0
    %3064 = vmatprep.subr.mxu0 0.0
    %3065 = vmatpush1.xpose.msra.mxu0 0.0
    %3066 = vmatprep.subr.mxu0 0.0
    %3067 = vmatpush1.xpose.msra.mxu0 0.0
    %3068 = vmatprep.subr.mxu0 0.0
    %3069 = vmatpush1.xpose.msra.mxu0 0.0
    %3070 = vmatprep.subr.mxu0 0.0
    %3071 = vmatpush1.xpose.msra.mxu0 0.0
    %3072 = vmatprep.mubr.f32.mxu0 0.0
    %3073 = vmatmul.mubr.f32.gmra.mrb[0].mxu0 %v3004
    %v3074 = vpop.f32.mrb[0].mxu0
    %v3075 = vadd.f32 %v59, %v3074
    %v3076 = vpop.f32.mrb[0].mxu0
    %3077 = vdwg.mxu0
    %3078 = vrot.lane.b32.xlu0 %v2009, 104
    %v3079 = vpop.permute.xlu0 %3078
    %3080 = vrot.lane.b32.xlu0 %v2009, 72
    %v3081 = vpop.permute.xlu0 %3080
    %v3082 = vsel %vm196, %v3079, 0
    %v3084 = vsel %vm196, %v3081, 0
    %3086 = vmatprep.subr.mxu0 0.0
    %3087 = vmatpush1.xpose.msra.mxu0 %v3084
    %3088 = vmatprep.subr.mxu0 0.0
    %3089 = vmatpush1.xpose.msra.mxu0 0.0
    %3090 = vmatprep.subr.mxu0 0.0
    %3091 = vmatpush1.xpose.msra.mxu0 0.0
    %3092 = vmatprep.subr.mxu0 0.0
    %3093 = vmatpush1.xpose.msra.mxu0 0.0
    %3094 = vmatprep.subr.mxu0 0.0
    %3095 = vmatpush1.xpose.msra.mxu0 0.0
    %3096 = vmatprep.subr.mxu0 0.0
    %3097 = vmatpush1.xpose.msra.mxu0 0.0
    %3098 = vmatprep.subr.mxu0 0.0
    %3099 = vmatpush1.xpose.msra.mxu0 0.0
    %3100 = vmatprep.subr.mxu0 0.0
    %3101 = vmatpush1.xpose.msra.mxu0 0.0
    %3102 = vmatprep.subr.mxu0 0.0
    %3103 = vmatpush1.xpose.msra.mxu0 0.0
    %3104 = vmatprep.subr.mxu0 0.0
    %3105 = vmatpush1.xpose.msra.mxu0 0.0
    %3106 = vmatprep.subr.mxu0 0.0
    %3107 = vmatpush1.xpose.msra.mxu0 0.0
    %3108 = vmatprep.subr.mxu0 0.0
    %3109 = vmatpush1.xpose.msra.mxu0 0.0
    %3110 = vmatprep.subr.mxu0 0.0
    %3111 = vmatpush1.xpose.msra.mxu0 0.0
    %3112 = vmatprep.subr.mxu0 0.0
    %3113 = vmatpush1.xpose.msra.mxu0 0.0
    %3114 = vmatprep.subr.mxu0 0.0
    %3115 = vmatpush1.xpose.msra.mxu0 0.0
    %3116 = vmatprep.subr.mxu0 0.0
    %3117 = vmatpush1.xpose.msra.mxu0 0.0
    %3118 = vmatprep.subr.mxu0 0.0
    %3119 = vmatpush1.xpose.msra.mxu0 0.0
    %3120 = vmatprep.subr.mxu0 0.0
    %3121 = vmatpush1.xpose.msra.mxu0 0.0
    %3122 = vmatprep.subr.mxu0 0.0
    %3123 = vmatpush1.xpose.msra.mxu0 0.0
    %3124 = vmatprep.subr.mxu0 0.0
    %3125 = vmatpush1.xpose.msra.mxu0 0.0
    %3126 = vmatprep.subr.mxu0 0.0
    %3127 = vmatpush1.xpose.msra.mxu0 0.0
    %3128 = vmatprep.subr.mxu0 0.0
    %3129 = vmatpush1.xpose.msra.mxu0 0.0
    %3130 = vmatprep.subr.mxu0 0.0
    %3131 = vmatpush1.xpose.msra.mxu0 0.0
    %3132 = vmatprep.subr.mxu0 0.0
    %3133 = vmatpush1.xpose.msra.mxu0 0.0
    %3134 = vmatprep.subr.mxu0 0.0
    %3135 = vmatpush1.xpose.msra.mxu0 0.0
    %3136 = vmatprep.subr.mxu0 0.0
    %3137 = vmatpush1.xpose.msra.mxu0 0.0
    %3138 = vmatprep.subr.mxu0 0.0
    %3139 = vmatpush1.xpose.msra.mxu0 0.0
    %3140 = vmatprep.subr.mxu0 0.0
    %3141 = vmatpush1.xpose.msra.mxu0 0.0
    %3142 = vmatprep.subr.mxu0 0.0
    %3143 = vmatpush1.xpose.msra.mxu0 0.0
    %3144 = vmatprep.subr.mxu0 0.0
    %3145 = vmatpush1.xpose.msra.mxu0 0.0
    %3146 = vmatprep.subr.mxu0 0.0
    %3147 = vmatpush1.xpose.msra.mxu0 0.0
    %3148 = vmatprep.subr.mxu0 0.0
    %3149 = vmatpush1.xpose.msra.mxu0 0.0
    %3150 = vmatprep.mubr.f32.mxu0 0.0
    %3151 = vmatmul.mubr.f32.gmra.mrb[0].mxu0 %v3082
    %v3152 = vpop.f32.mrb[0].mxu0
    %v3153 = vadd.f32 %v59, %v3152
    %v3154 = vpop.f32.mrb[0].mxu0
    %3155 = vdwg.mxu0
    %v3156 = vsel %vm196, %v3075, -inf
    %3157 = vmax.xlane.f32.xlu0 %v3156
    %v3158 = vpop.xlane.xlu0 %3157
    %v3159 = vsel %vm196, %v3153, -inf
    %3160 = vmax.xlane.f32.xlu0 %v3159
    %v3161 = vpop.xlane.xlu0 %3160
    %v3162 = vsub.f32 %v3075, %v3158
    %v3163 = vsub.f32 %v3153, %v3161
    %v3164 = vmul.f32 %v3162, 1.442695
    %v3165 = vpow.pop %v3164
    %v3166 = vmul.f32 %v3163, 1.442695
    %v3167 = vpow.pop %v3166
    %v3168 = vsel %vm196, %v3165, 0.0
    %3169 = vadd.xlane.f32.xlu0 %v3168
    %v3170 = vpop.xlane.xlu0 %3169
    %v3171 = vsel %vm196, %v3167, 0.0
    %3172 = vadd.xlane.f32.xlu0 %v3171
    %v3173 = vpop.xlane.xlu0 %3172
    %v3174 = vrcp.pop %v3170
    %v3175 = vrcp.pop %v3173
    %v3176 = vmul.f32 %v3165, %v3174
    %v3177 = vmul.f32 %v3167, %v3175
    %3178 = vrot.lane.b32.xlu0 %v2004, 40
    %v3179 = vpop.permute.xlu0 %3178
    %v3182 = vsel %vm196, %v3176, 0
    %3184 = vmatprep.subr.mxu0 0.0
    %3185 = vmatpush1.msra.mxu0 %v3179
    %3186 = vmatprep.subr.mxu0 0.0
    %3187 = vmatpush1.msra.mxu0 0.0
    %3188 = vmatprep.subr.mxu0 0.0
    %3189 = vmatpush1.msra.mxu0 0.0
    %3190 = vmatprep.subr.mxu0 0.0
    %3191 = vmatpush1.msra.mxu0 0.0
    %3192 = vmatprep.subr.mxu0 0.0
    %3193 = vmatpush1.msra.mxu0 0.0
    %3194 = vmatprep.subr.mxu0 0.0
    %3195 = vmatpush1.msra.mxu0 0.0
    %3196 = vmatprep.subr.mxu0 0.0
    %3197 = vmatpush1.msra.mxu0 0.0
    %3198 = vmatprep.subr.mxu0 0.0
    %3199 = vmatpush1.msra.mxu0 0.0
    %3200 = vmatprep.subr.mxu0 0.0
    %3201 = vmatpush1.msra.mxu0 0.0
    %3202 = vmatprep.subr.mxu0 0.0
    %3203 = vmatpush1.msra.mxu0 0.0
    %3204 = vmatprep.subr.mxu0 0.0
    %3205 = vmatpush1.msra.mxu0 0.0
    %3206 = vmatprep.subr.mxu0 0.0
    %3207 = vmatpush1.msra.mxu0 0.0
    %3208 = vmatprep.subr.mxu0 0.0
    %3209 = vmatpush1.msra.mxu0 0.0
    %3210 = vmatprep.subr.mxu0 0.0
    %3211 = vmatpush1.msra.mxu0 0.0
    %3212 = vmatprep.subr.mxu0 0.0
    %3213 = vmatpush1.msra.mxu0 0.0
    %3214 = vmatprep.subr.mxu0 0.0
    %3215 = vmatpush1.msra.mxu0 0.0
    %3216 = vmatprep.subr.mxu0 0.0
    %3217 = vmatpush1.msra.mxu0 0.0
    %3218 = vmatprep.subr.mxu0 0.0
    %3219 = vmatpush1.msra.mxu0 0.0
    %3220 = vmatprep.subr.mxu0 0.0
    %3221 = vmatpush1.msra.mxu0 0.0
    %3222 = vmatprep.subr.mxu0 0.0
    %3223 = vmatpush1.msra.mxu0 0.0
    %3224 = vmatprep.subr.mxu0 0.0
    %3225 = vmatpush1.msra.mxu0 0.0
    %3226 = vmatprep.subr.mxu0 0.0
    %3227 = vmatpush1.msra.mxu0 0.0
    %3228 = vmatprep.subr.mxu0 0.0
    %3229 = vmatpush1.msra.mxu0 0.0
    %3230 = vmatprep.subr.mxu0 0.0
    %3231 = vmatpush1.msra.mxu0 0.0
    %3232 = vmatprep.subr.mxu0 0.0
    %3233 = vmatpush1.msra.mxu0 0.0
    %3234 = vmatprep.subr.mxu0 0.0
    %3235 = vmatpush1.msra.mxu0 0.0
    %3236 = vmatprep.subr.mxu0 0.0
    %3237 = vmatpush1.msra.mxu0 0.0
    %3238 = vmatprep.subr.mxu0 0.0
    %3239 = vmatpush1.msra.mxu0 0.0
    %3240 = vmatprep.subr.mxu0 0.0
    %3241 = vmatpush1.msra.mxu0 0.0
    %3242 = vmatprep.subr.mxu0 0.0
    %3243 = vmatpush1.msra.mxu0 0.0
    %3244 = vmatprep.subr.mxu0 0.0
    %3245 = vmatpush1.msra.mxu0 0.0
    %3246 = vmatprep.subr.mxu0 0.0
    %3247 = vmatpush1.msra.mxu0 0.0
    %3248 = vmatprep.mubr.f32.mxu0 0.0
    %3249 = vmatmul.mubr.f32.gmra.mrb[0].mxu0 %v3182
    %v3250 = vpop.f32.mrb[0].mxu0
    %v3251 = vadd.f32 0.0, %v3250
    %v3252 = vpop.f32.mrb[0].mxu0
    %3253 = vdwg.mxu0
    %3254 = vrot.lane.b32.xlu0 %v2009, 40
    %v3255 = vpop.permute.xlu0 %3254
    %v3258 = vsel %vm196, %v3177, 0
    %3260 = vmatprep.subr.mxu0 0.0
    %3261 = vmatpush1.msra.mxu0 %v3255
    %3262 = vmatprep.subr.mxu0 0.0
    %3263 = vmatpush1.msra.mxu0 0.0
    %3264 = vmatprep.subr.mxu0 0.0
    %3265 = vmatpush1.msra.mxu0 0.0
    %3266 = vmatprep.subr.mxu0 0.0
    %3267 = vmatpush1.msra.mxu0 0.0
    %3268 = vmatprep.subr.mxu0 0.0
    %3269 = vmatpush1.msra.mxu0 0.0
    %3270 = vmatprep.subr.mxu0 0.0
    %3271 = vmatpush1.msra.mxu0 0.0
    %3272 = vmatprep.subr.mxu0 0.0
    %3273 = vmatpush1.msra.mxu0 0.0
    %3274 = vmatprep.subr.mxu0 0.0
    %3275 = vmatpush1.msra.mxu0 0.0
    %3276 = vmatprep.subr.mxu0 0.0
    %3277 = vmatpush1.msra.mxu0 0.0
    %3278 = vmatprep.subr.mxu0 0.0
    %3279 = vmatpush1.msra.mxu0 0.0
    %3280 = vmatprep.subr.mxu0 0.0
    %3281 = vmatpush1.msra.mxu0 0.0
    %3282 = vmatprep.subr.mxu0 0.0
    %3283 = vmatpush1.msra.mxu0 0.0
    %3284 = vmatprep.subr.mxu0 0.0
    %3285 = vmatpush1.msra.mxu0 0.0
    %3286 = vmatprep.subr.mxu0 0.0
    %3287 = vmatpush1.msra.mxu0 0.0
    %3288 = vmatprep.subr.mxu0 0.0
    %3289 = vmatpush1.msra.mxu0 0.0
    %3290 = vmatprep.subr.mxu0 0.0
    %3291 = vmatpush1.msra.mxu0 0.0
    %3292 = vmatprep.subr.mxu0 0.0
    %3293 = vmatpush1.msra.mxu0 0.0
    %3294 = vmatprep.subr.mxu0 0.0
    %3295 = vmatpush1.msra.mxu0 0.0
    %3296 = vmatprep.subr.mxu0 0.0
    %3297 = vmatpush1.msra.mxu0 0.0
    %3298 = vmatprep.subr.mxu0 0.0
    %3299 = vmatpush1.msra.mxu0 0.0
    %3300 = vmatprep.subr.mxu0 0.0
    %3301 = vmatpush1.msra.mxu0 0.0
    %3302 = vmatprep.subr.mxu0 0.0
    %3303 = vmatpush1.msra.mxu0 0.0
    %3304 = vmatprep.subr.mxu0 0.0
    %3305 = vmatpush1.msra.mxu0 0.0
    %3306 = vmatprep.subr.mxu0 0.0
    %3307 = vmatpush1.msra.mxu0 0.0
    %3308 = vmatprep.subr.mxu0 0.0
    %3309 = vmatpush1.msra.mxu0 0.0
    %3310 = vmatprep.subr.mxu0 0.0
    %3311 = vmatpush1.msra.mxu0 0.0
    %3312 = vmatprep.subr.mxu0 0.0
    %3313 = vmatpush1.msra.mxu0 0.0
    %3314 = vmatprep.subr.mxu0 0.0
    %3315 = vmatpush1.msra.mxu0 0.0
    %3316 = vmatprep.subr.mxu0 0.0
    %3317 = vmatpush1.msra.mxu0 0.0
    %3318 = vmatprep.subr.mxu0 0.0
    %3319 = vmatpush1.msra.mxu0 0.0
    %3320 = vmatprep.subr.mxu0 0.0
    %3321 = vmatpush1.msra.mxu0 0.0
    %3322 = vmatprep.subr.mxu0 0.0
    %3323 = vmatpush1.msra.mxu0 0.0
    %3324 = vmatprep.mubr.f32.mxu0 0.0
    %3325 = vmatmul.mubr.f32.gmra.mrb[0].mxu0 %v3258
    %v3326 = vpop.f32.mrb[0].mxu0
    %v3327 = vadd.f32 0.0, %v3326
    %v3328 = vpop.f32.mrb[0].mxu0
    %3329 = vdwg.mxu0
    %3332 = vrot.lane.b32.xlu0 %v2591, 8
    %v3333 = vpop.permute.xlu0 %3332
    %3334 = vrot.lane.b32.xlu0 %v2667, 8
    %v3335 = vpop.permute.xlu0 %3334
    %3340 = vrot.lane.b32.xlu0 %v2921, 16
    %v3341 = vpop.permute.xlu0 %3340
    %3342 = vrot.lane.b32.xlu0 %v2997, 16
    %v3343 = vpop.permute.xlu0 %3342
    %3348 = vrot.lane.b32.xlu0 %v3251, 24
    %v3349 = vpop.permute.xlu0 %3348
    %3350 = vrot.lane.b32.xlu0 %v3327, 24
    %v3351 = vpop.permute.xlu0 %3350
    %v3354 = vsel %vm196, %v2261, %v3333
    %v3355 = vsel %vm196, %v2337, %v3335
    %v3356 = vsel %vm1538, %v3354, %v3341
    %v3357 = vsel %vm1538, %v3355, %v3343
    %v3358 = vsel %vm1541, %v3356, %v3349
    %v3359 = vsel %vm1541, %v3357, %v3351
    %s3360 = scalar_lea.vmem %s4, 32
    %v3361 = vld [vmem:[%s3360] sm:$0xff]
    %v3362 = vld [vmem:[%s3360 + $0x8] sm:$0xff]
    %v3363 = vld [vmem:[%s3360 + $0x10] sm:$0xff]
    %v3364 = vld [vmem:[%s3360 + $0x18] sm:$0xff]
    %v3366 = vsel %vm64, %v3358, 0
    %v3369 = vsel %vm64, %v3359, 0
    %3371 = vmatprep.subr.mxu0 0.0
    %3372 = vmatpush1.msra.mxu0 %v3361
    %3373 = vmatprep.subr.mxu0 0.0
    %3374 = vmatpush1.msra.mxu0 %v3362
    %3375 = vmatprep.subr.mxu0 0.0
    %3376 = vmatpush1.msra.mxu0 %v3363
    %3377 = vmatprep.subr.mxu0 0.0
    %3378 = vmatpush1.msra.mxu0 %v3364
    %3379 = vmatprep.subr.mxu0 0.0
    %3380 = vmatpush1.msra.mxu0 0.0
    %3381 = vmatprep.subr.mxu0 0.0
    %3382 = vmatpush1.msra.mxu0 0.0
    %3383 = vmatprep.subr.mxu0 0.0
    %3384 = vmatpush1.msra.mxu0 0.0
    %3385 = vmatprep.subr.mxu0 0.0
    %3386 = vmatpush1.msra.mxu0 0.0
    %3387 = vmatprep.subr.mxu0 0.0
    %3388 = vmatpush1.msra.mxu0 0.0
    %3389 = vmatprep.subr.mxu0 0.0
    %3390 = vmatpush1.msra.mxu0 0.0
    %3391 = vmatprep.subr.mxu0 0.0
    %3392 = vmatpush1.msra.mxu0 0.0
    %3393 = vmatprep.subr.mxu0 0.0
    %3394 = vmatpush1.msra.mxu0 0.0
    %3395 = vmatprep.subr.mxu0 0.0
    %3396 = vmatpush1.msra.mxu0 0.0
    %3397 = vmatprep.subr.mxu0 0.0
    %3398 = vmatpush1.msra.mxu0 0.0
    %3399 = vmatprep.subr.mxu0 0.0
    %3400 = vmatpush1.msra.mxu0 0.0
    %3401 = vmatprep.subr.mxu0 0.0
    %3402 = vmatpush1.msra.mxu0 0.0
    %3403 = vmatprep.subr.mxu0 0.0
    %3404 = vmatpush1.msra.mxu0 0.0
    %3405 = vmatprep.subr.mxu0 0.0
    %3406 = vmatpush1.msra.mxu0 0.0
    %3407 = vmatprep.subr.mxu0 0.0
    %3408 = vmatpush1.msra.mxu0 0.0
    %3409 = vmatprep.subr.mxu0 0.0
    %3410 = vmatpush1.msra.mxu0 0.0
    %3411 = vmatprep.subr.mxu0 0.0
    %3412 = vmatpush1.msra.mxu0 0.0
    %3413 = vmatprep.subr.mxu0 0.0
    %3414 = vmatpush1.msra.mxu0 0.0
    %3415 = vmatprep.subr.mxu0 0.0
    %3416 = vmatpush1.msra.mxu0 0.0
    %3417 = vmatprep.subr.mxu0 0.0
    %3418 = vmatpush1.msra.mxu0 0.0
    %3419 = vmatprep.subr.mxu0 0.0
    %3420 = vmatpush1.msra.mxu0 0.0
    %3421 = vmatprep.subr.mxu0 0.0
    %3422 = vmatpush1.msra.mxu0 0.0
    %3423 = vmatprep.subr.mxu0 0.0
    %3424 = vmatpush1.msra.mxu0 0.0
    %3425 = vmatprep.subr.mxu0 0.0
    %3426 = vmatpush1.msra.mxu0 0.0
    %3427 = vmatprep.subr.mxu0 0.0
    %3428 = vmatpush1.msra.mxu0 0.0
    %3429 = vmatprep.subr.mxu0 0.0
    %3430 = vmatpush1.msra.mxu0 0.0
    %3431 = vmatprep.subr.mxu0 0.0
    %3432 = vmatpush1.msra.mxu0 0.0
    %3433 = vmatprep.subr.mxu0 0.0
    %3434 = vmatpush1.msra.mxu0 0.0
    %3435 = vmatprep.mubr.f32.mxu0 0.0
    %3436 = vmatmul.mubr.f32.gmra.mrb[0].mxu0 %v3366
    %v3437 = vpop.f32.mrb[0].mxu0
    %v3438 = vadd.f32 0.0, %v3437
    %v3439 = vpop.f32.mrb[0].mxu0
    %3440 = vmatprep.mubr.f32.mxu0 0.0
    %3441 = vmatmul.mubr.f32.gmra.mrb[0].mxu0 %v3369
    %v3442 = vpop.f32.mrb[0].mxu0
    %v3443 = vadd.f32 0.0, %v3442
    %v3444 = vpop.f32.mrb[0].mxu0
    %3445 = vdwg.mxu0
    %v3446 = vadd.f32 %v1878, %v3438
    %v3447 = vadd.f32 %v1879, %v3443
    %s3448 = scalar_lea.vmem %s5, 1
    %v3449 = vld [vmem:[%s3448] sm:$0x1]
    %v3451 = vlaneseq
    %v3452 = vshrl.u32 %v3451, 7
    %v3453 = vsub.s32 0, %v3452
    %v3454 = vrot.slane %v3449, %v3453
    %v3456 = vadd.f32 %v3446, %v3454
    %v3457 = vadd.f32 %v3447, %v3454
    %s3458 = scalar_lea.vmem %s6, 1
    %v3459 = vld [vmem:[%s3458] sm:$0x1]
    %s3460 = scalar_lea.vmem %s7, 1
    %v3461 = vld [vmem:[%s3460] sm:$0x1]
    %v3462 = vsel %vm64, %v3456, 0.0
    %3463 = vadd.xlane.f32.xlu0 %v3462
    %v3464 = vpop.xlane.xlu0 %3463
    %v3465 = vsel %vm64, %v3457, 0.0
    %3466 = vadd.xlane.f32.xlu0 %v3465
    %v3467 = vpop.xlane.xlu0 %3466
    %v3468 = vmul.f32 %v3464, %v71
    %v3469 = vmul.f32 %v3467, %v71
    %v3470 = vsub.f32 %v3456, %v3468
    %v3471 = vsub.f32 %v3457, %v3469
    %v3472 = vmul.f32 %v3470, %v3470
    %v3473 = vmul.f32 %v3471, %v3471
    %v3474 = vsel %vm64, %v3472, 0.0
    %3475 = vadd.xlane.f32.xlu0 %v3474
    %v3476 = vpop.xlane.xlu0 %3475
    %v3477 = vsel %vm64, %v3473, 0.0
    %3478 = vadd.xlane.f32.xlu0 %v3477
    %v3479 = vpop.xlane.xlu0 %3478
    %v3480 = vmul.f32 %v3476, %v71
    %v3481 = vmul.f32 %v3479, %v71
    %v3482 = vadd.f32 %v3480, 1e-05
    %v3483 = vadd.f32 %v3481, 1e-05
    %v3484 = vrsqrt.pop %v3482
    %v3485 = vrsqrt.pop %v3483
    %v3486 = vmul.f32 %v3470, %v3484
    %v3487 = vmul.f32 %v3471, %v3485
    %v3489 = vlaneseq
    %v3490 = vshrl.u32 %v3489, 7
    %v3491 = vsub.s32 0, %v3490
    %v3492 = vrot.slane %v3459, %v3491
    %v3494 = vmul.f32 %v3486, %v3492
    %v3495 = vmul.f32 %v3487, %v3492
    %v3497 = vlaneseq
    %v3498 = vshrl.u32 %v3497, 7
    %v3499 = vsub.s32 0, %v3498
    %v3500 = vrot.slane %v3461, %v3499
    %v3502 = vadd.f32 %v3494, %v3500
    %v3503 = vadd.f32 %v3495, %v3500
    %s3504 = scalar_lea.vmem %s8, 32
    %v3505 = vld [vmem:[%s3504] sm:$0xff]
    %v3506 = vld [vmem:[%s3504 + $0x8] sm:$0xff]
    %v3507 = vld [vmem:[%s3504 + $0x10] sm:$0xff]
    %v3508 = vld [vmem:[%s3504 + $0x18] sm:$0xff]
    %s3509 = scalar_lea.vmem %s9, 1
    %v3510 = vld [vmem:[%s3509] sm:$0x1]
    %v3512 = vlaneseq
    %v3513 = vshrl.u32 %v3512, 7
    %v3514 = vsub.s32 0, %v3513
    %v3515 = vrot.slane %v3510, %v3514
    %v3518 = vsel %vm64, %v3502, 0
    %v3521 = vsel %vm64, %v3503, 0
    %3523 = vmatprep.subr.mxu0 0.0
    %3524 = vmatpush1.msra.mxu0 %v3505
    %3525 = vmatprep.subr.mxu0 0.0
    %3526 = vmatpush1.msra.mxu0 %v3506
    %3527 = vmatprep.subr.mxu0 0.0
    %3528 = vmatpush1.msra.mxu0 %v3507
    %3529 = vmatprep.subr.mxu0 0.0
    %3530 = vmatpush1.msra.mxu0 %v3508
    %3531 = vmatprep.subr.mxu0 0.0
    %3532 = vmatpush1.msra.mxu0 0.0
    %3533 = vmatprep.subr.mxu0 0.0
    %3534 = vmatpush1.msra.mxu0 0.0
    %3535 = vmatprep.subr.mxu0 0.0
    %3536 = vmatpush1.msra.mxu0 0.0
    %3537 = vmatprep.subr.mxu0 0.0
    %3538 = vmatpush1.msra.mxu0 0.0
    %3539 = vmatprep.subr.mxu0 0.0
    %3540 = vmatpush1.msra.mxu0 0.0
    %3541 = vmatprep.subr.mxu0 0.0
    %3542 = vmatpush1.msra.mxu0 0.0
    %3543 = vmatprep.subr.mxu0 0.0
    %3544 = vmatpush1.msra.mxu0 0.0
    %3545 = vmatprep.subr.mxu0 0.0
    %3546 = vmatpush1.msra.mxu0 0.0
    %3547 = vmatprep.subr.mxu0 0.0
    %3548 = vmatpush1.msra.mxu0 0.0
    %3549 = vmatprep.subr.mxu0 0.0
    %3550 = vmatpush1.msra.mxu0 0.0
    %3551 = vmatprep.subr.mxu0 0.0
    %3552 = vmatpush1.msra.mxu0 0.0
    %3553 = vmatprep.subr.mxu0 0.0
    %3554 = vmatpush1.msra.mxu0 0.0
    %3555 = vmatprep.subr.mxu0 0.0
    %3556 = vmatpush1.msra.mxu0 0.0
    %3557 = vmatprep.subr.mxu0 0.0
    %3558 = vmatpush1.msra.mxu0 0.0
    %3559 = vmatprep.subr.mxu0 0.0
    %3560 = vmatpush1.msra.mxu0 0.0
    %3561 = vmatprep.subr.mxu0 0.0
    %3562 = vmatpush1.msra.mxu0 0.0
    %3563 = vmatprep.subr.mxu0 0.0
    %3564 = vmatpush1.msra.mxu0 0.0
    %3565 = vmatprep.subr.mxu0 0.0
    %3566 = vmatpush1.msra.mxu0 0.0
    %3567 = vmatprep.subr.mxu0 0.0
    %3568 = vmatpush1.msra.mxu0 0.0
    %3569 = vmatprep.subr.mxu0 0.0
    %3570 = vmatpush1.msra.mxu0 0.0
    %3571 = vmatprep.subr.mxu0 0.0
    %3572 = vmatpush1.msra.mxu0 0.0
    %3573 = vmatprep.subr.mxu0 0.0
    %3574 = vmatpush1.msra.mxu0 0.0
    %3575 = vmatprep.subr.mxu0 0.0
    %3576 = vmatpush1.msra.mxu0 0.0
    %3577 = vmatprep.subr.mxu0 0.0
    %3578 = vmatpush1.msra.mxu0 0.0
    %3579 = vmatprep.subr.mxu0 0.0
    %3580 = vmatpush1.msra.mxu0 0.0
    %3581 = vmatprep.subr.mxu0 0.0
    %3582 = vmatpush1.msra.mxu0 0.0
    %3583 = vmatprep.subr.mxu0 0.0
    %3584 = vmatpush1.msra.mxu0 0.0
    %3585 = vmatprep.subr.mxu0 0.0
    %3586 = vmatpush1.msra.mxu0 0.0
    %3587 = vmatprep.mubr.f32.mxu0 0.0
    %3588 = vmatmul.mubr.f32.gmra.mrb[0].mxu0 %v3518
    %v3589 = vpop.f32.mrb[0].mxu0
    %v3590 = vadd.f32 %v3515, %v3589
    %v3591 = vpop.f32.mrb[0].mxu0
    %3592 = vmatprep.mubr.f32.mxu0 0.0
    %3593 = vmatmul.mubr.f32.gmra.mrb[0].mxu0 %v3521
    %v3594 = vpop.f32.mrb[0].mxu0
    %v3595 = vadd.f32 %v3515, %v3594
    %v3596 = vpop.f32.mrb[0].mxu0
    %3597 = vdwg.mxu0
    %v3598 = vmax.f32 %v3590, 0.0
    %v3599 = vmax.f32 %v3595, 0.0
    %s3600 = scalar_lea.vmem %s10, 128
    %v3601 = vld [vmem:[%s3600] sm:$0xff]
    %v3602 = vld [vmem:[%s3600 + $0x8] sm:$0xff]
    %v3603 = vld [vmem:[%s3600 + $0x10] sm:$0xff]
    %v3604 = vld [vmem:[%s3600 + $0x18] sm:$0xff]
    %v3605 = vld [vmem:[%s3600 + $0x20] sm:$0xff]
    %v3606 = vld [vmem:[%s3600 + $0x28] sm:$0xff]
    %v3607 = vld [vmem:[%s3600 + $0x30] sm:$0xff]
    %v3608 = vld [vmem:[%s3600 + $0x38] sm:$0xff]
    %v3609 = vld [vmem:[%s3600 + $0x40] sm:$0xff]
    %v3610 = vld [vmem:[%s3600 + $0x48] sm:$0xff]
    %v3611 = vld [vmem:[%s3600 + $0x50] sm:$0xff]
    %v3612 = vld [vmem:[%s3600 + $0x58] sm:$0xff]
    %v3613 = vld [vmem:[%s3600 + $0x60] sm:$0xff]
    %v3614 = vld [vmem:[%s3600 + $0x68] sm:$0xff]
    %v3615 = vld [vmem:[%s3600 + $0x70] sm:$0xff]
    %v3616 = vld [vmem:[%s3600 + $0x78] sm:$0xff]
    %3617 = vmatprep.subr.mxu0 0.0
    %3618 = vmatpush1.msra.mxu0 %v3601
    %3619 = vmatprep.subr.mxu0 0.0
    %3620 = vmatpush1.msra.mxu0 %v3602
    %3621 = vmatprep.subr.mxu0 0.0
    %3622 = vmatpush1.msra.mxu0 %v3603
    %3623 = vmatprep.subr.mxu0 0.0
    %3624 = vmatpush1.msra.mxu0 %v3604
    %3625 = vmatprep.subr.mxu0 0.0
    %3626 = vmatpush1.msra.mxu0 %v3605
    %3627 = vmatprep.subr.mxu0 0.0
    %3628 = vmatpush1.msra.mxu0 %v3606
    %3629 = vmatprep.subr.mxu0 0.0
    %3630 = vmatpush1.msra.mxu0 %v3607
    %3631 = vmatprep.subr.mxu0 0.0
    %3632 = vmatpush1.msra.mxu0 %v3608
    %3633 = vmatprep.subr.mxu0 0.0
    %3634 = vmatpush1.msra.mxu0 %v3609
    %3635 = vmatprep.subr.mxu0 0.0
    %3636 = vmatpush1.msra.mxu0 %v3610
    %3637 = vmatprep.subr.mxu0 0.0
    %3638 = vmatpush1.msra.mxu0 %v3611
    %3639 = vmatprep.subr.mxu0 0.0
    %3640 = vmatpush1.msra.mxu0 %v3612
    %3641 = vmatprep.subr.mxu0 0.0
    %3642 = vmatpush1.msra.mxu0 %v3613
    %3643 = vmatprep.subr.mxu0 0.0
    %3644 = vmatpush1.msra.mxu0 %v3614
    %3645 = vmatprep.subr.mxu0 0.0
    %3646 = vmatpush1.msra.mxu0 %v3615
    %3647 = vmatprep.subr.mxu0 0.0
    %3648 = vmatpush1.msra.mxu0 %v3616
    %3649 = vmatprep.subr.mxu0 0.0
    %3650 = vmatpush1.msra.mxu0 0.0
    %3651 = vmatprep.subr.mxu0 0.0
    %3652 = vmatpush1.msra.mxu0 0.0
    %3653 = vmatprep.subr.mxu0 0.0
    %3654 = vmatpush1.msra.mxu0 0.0
    %3655 = vmatprep.subr.mxu0 0.0
    %3656 = vmatpush1.msra.mxu0 0.0
    %3657 = vmatprep.subr.mxu0 0.0
    %3658 = vmatpush1.msra.mxu0 0.0
    %3659 = vmatprep.subr.mxu0 0.0
    %3660 = vmatpush1.msra.mxu0 0.0
    %3661 = vmatprep.subr.mxu0 0.0
    %3662 = vmatpush1.msra.mxu0 0.0
    %3663 = vmatprep.subr.mxu0 0.0
    %3664 = vmatpush1.msra.mxu0 0.0
    %3665 = vmatprep.subr.mxu0 0.0
    %3666 = vmatpush1.msra.mxu0 0.0
    %3667 = vmatprep.subr.mxu0 0.0
    %3668 = vmatpush1.msra.mxu0 0.0
    %3669 = vmatprep.subr.mxu0 0.0
    %3670 = vmatpush1.msra.mxu0 0.0
    %3671 = vmatprep.subr.mxu0 0.0
    %3672 = vmatpush1.msra.mxu0 0.0
    %3673 = vmatprep.subr.mxu0 0.0
    %3674 = vmatpush1.msra.mxu0 0.0
    %3675 = vmatprep.subr.mxu0 0.0
    %3676 = vmatpush1.msra.mxu0 0.0
    %3677 = vmatprep.subr.mxu0 0.0
    %3678 = vmatpush1.msra.mxu0 0.0
    %3679 = vmatprep.subr.mxu0 0.0
    %3680 = vmatpush1.msra.mxu0 0.0
    %3681 = vmatprep.mubr.f32.mxu0 0.0
    %3682 = vmatmul.mubr.f32.gmra.mrb[0].mxu0 %v3598
    %v3683 = vpop.f32.mrb[0].mxu0
    %v3684 = vadd.f32 0.0, %v3683
    %v3685 = vpop.f32.mrb[0].mxu0
    %3686 = vmatprep.mubr.f32.mxu0 0.0
    %3687 = vmatmul.mubr.f32.gmra.mrb[0].mxu0 %v3599
    %v3688 = vpop.f32.mrb[0].mxu0
    %v3689 = vadd.f32 0.0, %v3688
    %v3690 = vpop.f32.mrb[0].mxu0
    %3691 = vdwg.mxu0
    %v3692 = vadd.f32 %v3456, %v3684
    %v3693 = vadd.f32 %v3457, %v3689
    %s3694 = scalar_lea.vmem %s11, 1
    %v3695 = vld [vmem:[%s3694] sm:$0x1]
    %v3697 = vlaneseq
    %v3698 = vshrl.u32 %v3697, 7
    %v3699 = vsub.s32 0, %v3698
    %v3700 = vrot.slane %v3695, %v3699
    %v3702 = vadd.f32 %v3692, %v3700
    %v3703 = vadd.f32 %v3693, %v3700
    %s3704 = scalar_lea.vmem %s1, 2
    %v3705 = vld [vmem:[%s3704] sm:$0x1]
    %s3706 = scalar_lea.vmem %s2, 2
    %v3707 = vld [vmem:[%s3706] sm:$0x1]
    %v3708 = vsel %vm64, %v3702, 0.0
    %3709 = vadd.xlane.f32.xlu0 %v3708
    %v3710 = vpop.xlane.xlu0 %3709
    %v3711 = vsel %vm64, %v3703, 0.0
    %3712 = vadd.xlane.f32.xlu0 %v3711
    %v3713 = vpop.xlane.xlu0 %3712
    %v3714 = vmul.f32 %v3710, %v71
    %v3715 = vmul.f32 %v3713, %v71
    %v3716 = vsub.f32 %v3702, %v3714
    %v3717 = vsub.f32 %v3703, %v3715
    %v3718 = vmul.f32 %v3716, %v3716
    %v3719 = vmul.f32 %v3717, %v3717
    %v3720 = vsel %vm64, %v3718, 0.0
    %3721 = vadd.xlane.f32.xlu0 %v3720
    %v3722 = vpop.xlane.xlu0 %3721
    %v3723 = vsel %vm64, %v3719, 0.0
    %3724 = vadd.xlane.f32.xlu0 %v3723
    %v3725 = vpop.xlane.xlu0 %3724
    %v3726 = vmul.f32 %v3722, %v71
    %v3727 = vmul.f32 %v3725, %v71
    %v3728 = vadd.f32 %v3726, 1e-05
    %v3729 = vadd.f32 %v3727, 1e-05
    %v3730 = vrsqrt.pop %v3728
    %v3731 = vrsqrt.pop %v3729
    %v3732 = vmul.f32 %v3716, %v3730
    %v3733 = vmul.f32 %v3717, %v3731
    %v3735 = vlaneseq
    %v3736 = vshrl.u32 %v3735, 7
    %v3737 = vsub.s32 0, %v3736
    %v3738 = vrot.slane %v3705, %v3737
    %v3740 = vmul.f32 %v3732, %v3738
    %v3741 = vmul.f32 %v3733, %v3738
    %v3743 = vlaneseq
    %v3744 = vshrl.u32 %v3743, 7
    %v3745 = vsub.s32 0, %v3744
    %v3746 = vrot.slane %v3707, %v3745
    %v3748 = vadd.f32 %v3740, %v3746
    %v3749 = vadd.f32 %v3741, %v3746
    %s3750 = scalar_lea.vmem %s3, 64
    %v3751 = vld [vmem:[%s3750] sm:$0xff]
    %v3752 = vld [vmem:[%s3750 + $0x8] sm:$0xff]
    %v3753 = vld [vmem:[%s3750 + $0x10] sm:$0xff]
    %v3754 = vld [vmem:[%s3750 + $0x18] sm:$0xff]
    %v3756 = vsel %vm64, %v3748, 0
    %v3759 = vsel %vm64, %v3749, 0
    %3761 = vmatprep.subr.mxu0 0.0
    %3762 = vmatpush1.msra.mxu0 %v3751
    %3763 = vmatprep.subr.mxu0 0.0
    %3764 = vmatpush1.msra.mxu0 %v3752
    %3765 = vmatprep.subr.mxu0 0.0
    %3766 = vmatpush1.msra.mxu0 %v3753
    %3767 = vmatprep.subr.mxu0 0.0
    %3768 = vmatpush1.msra.mxu0 %v3754
    %3769 = vmatprep.subr.mxu0 0.0
    %3770 = vmatpush1.msra.mxu0 0.0
    %3771 = vmatprep.subr.mxu0 0.0
    %3772 = vmatpush1.msra.mxu0 0.0
    %3773 = vmatprep.subr.mxu0 0.0
    %3774 = vmatpush1.msra.mxu0 0.0
    %3775 = vmatprep.subr.mxu0 0.0
    %3776 = vmatpush1.msra.mxu0 0.0
    %3777 = vmatprep.subr.mxu0 0.0
    %3778 = vmatpush1.msra.mxu0 0.0
    %3779 = vmatprep.subr.mxu0 0.0
    %3780 = vmatpush1.msra.mxu0 0.0
    %3781 = vmatprep.subr.mxu0 0.0
    %3782 = vmatpush1.msra.mxu0 0.0
    %3783 = vmatprep.subr.mxu0 0.0
    %3784 = vmatpush1.msra.mxu0 0.0
    %3785 = vmatprep.subr.mxu0 0.0
    %3786 = vmatpush1.msra.mxu0 0.0
    %3787 = vmatprep.subr.mxu0 0.0
    %3788 = vmatpush1.msra.mxu0 0.0
    %3789 = vmatprep.subr.mxu0 0.0
    %3790 = vmatpush1.msra.mxu0 0.0
    %3791 = vmatprep.subr.mxu0 0.0
    %3792 = vmatpush1.msra.mxu0 0.0
    %3793 = vmatprep.subr.mxu0 0.0
    %3794 = vmatpush1.msra.mxu0 0.0
    %3795 = vmatprep.subr.mxu0 0.0
    %3796 = vmatpush1.msra.mxu0 0.0
    %3797 = vmatprep.subr.mxu0 0.0
    %3798 = vmatpush1.msra.mxu0 0.0
    %3799 = vmatprep.subr.mxu0 0.0
    %3800 = vmatpush1.msra.mxu0 0.0
    %3801 = vmatprep.subr.mxu0 0.0
    %3802 = vmatpush1.msra.mxu0 0.0
    %3803 = vmatprep.subr.mxu0 0.0
    %3804 = vmatpush1.msra.mxu0 0.0
    %3805 = vmatprep.subr.mxu0 0.0
    %3806 = vmatpush1.msra.mxu0 0.0
    %3807 = vmatprep.subr.mxu0 0.0
    %3808 = vmatpush1.msra.mxu0 0.0
    %3809 = vmatprep.subr.mxu0 0.0
    %3810 = vmatpush1.msra.mxu0 0.0
    %3811 = vmatprep.subr.mxu0 0.0
    %3812 = vmatpush1.msra.mxu0 0.0
    %3813 = vmatprep.subr.mxu0 0.0
    %3814 = vmatpush1.msra.mxu0 0.0
    %3815 = vmatprep.subr.mxu0 0.0
    %3816 = vmatpush1.msra.mxu0 0.0
    %3817 = vmatprep.subr.mxu0 0.0
    %3818 = vmatpush1.msra.mxu0 0.0
    %3819 = vmatprep.subr.mxu0 0.0
    %3820 = vmatpush1.msra.mxu0 0.0
    %3821 = vmatprep.subr.mxu0 0.0
    %3822 = vmatpush1.msra.mxu0 0.0
    %3823 = vmatprep.subr.mxu0 0.0
    %3824 = vmatpush1.msra.mxu0 0.0
    %3825 = vmatprep.mubr.f32.mxu0 0.0
    %3826 = vmatmul.mubr.f32.gmra.mrb[0].mxu0 %v3756
    %v3827 = vpop.f32.mrb[0].mxu0
    %v3828 = vadd.f32 0.0, %v3827
    %v3829 = vpop.f32.mrb[0].mxu0
    %3830 = vmatprep.mubr.f32.mxu0 0.0
    %3831 = vmatmul.mubr.f32.gmra.mrb[0].mxu0 %v3759
    %v3832 = vpop.f32.mrb[0].mxu0
    %v3833 = vadd.f32 0.0, %v3832
    %v3834 = vpop.f32.mrb[0].mxu0
    %3835 = vdwg.mxu0
    %3837 = vrot.lane.b32.xlu0 %v3828, 96
    %v3838 = vpop.permute.xlu0 %3837
    %v3839 = vsel %vm196, %v3828, 0
    %v3841 = vsel %vm196, %v3838, 0
    %3843 = vmatprep.subr.mxu0 0.0
    %3844 = vmatpush1.xpose.msra.mxu0 %v3841
    %3845 = vmatprep.subr.mxu0 0.0
    %3846 = vmatpush1.xpose.msra.mxu0 0.0
    %3847 = vmatprep.subr.mxu0 0.0
    %3848 = vmatpush1.xpose.msra.mxu0 0.0
    %3849 = vmatprep.subr.mxu0 0.0
    %3850 = vmatpush1.xpose.msra.mxu0 0.0
    %3851 = vmatprep.subr.mxu0 0.0
    %3852 = vmatpush1.xpose.msra.mxu0 0.0
    %3853 = vmatprep.subr.mxu0 0.0
    %3854 = vmatpush1.xpose.msra.mxu0 0.0
    %3855 = vmatprep.subr.mxu0 0.0
    %3856 = vmatpush1.xpose.msra.mxu0 0.0
    %3857 = vmatprep.subr.mxu0 0.0
    %3858 = vmatpush1.xpose.msra.mxu0 0.0
    %3859 = vmatprep.subr.mxu0 0.0
    %3860 = vmatpush1.xpose.msra.mxu0 0.0
    %3861 = vmatprep.subr.mxu0 0.0
    %3862 = vmatpush1.xpose.msra.mxu0 0.0
    %3863 = vmatprep.subr.mxu0 0.0
    %3864 = vmatpush1.xpose.msra.mxu0 0.0
    %3865 = vmatprep.subr.mxu0 0.0
    %3866 = vmatpush1.xpose.msra.mxu0 0.0
    %3867 = vmatprep.subr.mxu0 0.0
    %3868 = vmatpush1.xpose.msra.mxu0 0.0
    %3869 = vmatprep.subr.mxu0 0.0
    %3870 = vmatpush1.xpose.msra.mxu0 0.0
    %3871 = vmatprep.subr.mxu0 0.0
    %3872 = vmatpush1.xpose.msra.mxu0 0.0
    %3873 = vmatprep.subr.mxu0 0.0
    %3874 = vmatpush1.xpose.msra.mxu0 0.0
    %3875 = vmatprep.subr.mxu0 0.0
    %3876 = vmatpush1.xpose.msra.mxu0 0.0
    %3877 = vmatprep.subr.mxu0 0.0
    %3878 = vmatpush1.xpose.msra.mxu0 0.0
    %3879 = vmatprep.subr.mxu0 0.0
    %3880 = vmatpush1.xpose.msra.mxu0 0.0
    %3881 = vmatprep.subr.mxu0 0.0
    %3882 = vmatpush1.xpose.msra.mxu0 0.0
    %3883 = vmatprep.subr.mxu0 0.0
    %3884 = vmatpush1.xpose.msra.mxu0 0.0
    %3885 = vmatprep.subr.mxu0 0.0
    %3886 = vmatpush1.xpose.msra.mxu0 0.0
    %3887 = vmatprep.subr.mxu0 0.0
    %3888 = vmatpush1.xpose.msra.mxu0 0.0
    %3889 = vmatprep.subr.mxu0 0.0
    %3890 = vmatpush1.xpose.msra.mxu0 0.0
    %3891 = vmatprep.subr.mxu0 0.0
    %3892 = vmatpush1.xpose.msra.mxu0 0.0
    %3893 = vmatprep.subr.mxu0 0.0
    %3894 = vmatpush1.xpose.msra.mxu0 0.0
    %3895 = vmatprep.subr.mxu0 0.0
    %3896 = vmatpush1.xpose.msra.mxu0 0.0
    %3897 = vmatprep.subr.mxu0 0.0
    %3898 = vmatpush1.xpose.msra.mxu0 0.0
    %3899 = vmatprep.subr.mxu0 0.0
    %3900 = vmatpush1.xpose.msra.mxu0 0.0
    %3901 = vmatprep.subr.mxu0 0.0
    %3902 = vmatpush1.xpose.msra.mxu0 0.0
    %3903 = vmatprep.subr.mxu0 0.0
    %3904 = vmatpush1.xpose.msra.mxu0 0.0
    %3905 = vmatprep.subr.mxu0 0.0
    %3906 = vmatpush1.xpose.msra.mxu0 0.0
    %3907 = vmatprep.mubr.f32.mxu0 0.0
    %3908 = vmatmul.mubr.f32.gmra.mrb[0].mxu0 %v3839
    %v3909 = vpop.f32.mrb[0].mxu0
    %v3910 = vadd.f32 %v59, %v3909
    %v3911 = vpop.f32.mrb[0].mxu0
    %3912 = vdwg.mxu0
    %3914 = vrot.lane.b32.xlu0 %v3833, 96
    %v3915 = vpop.permute.xlu0 %3914
    %v3916 = vsel %vm196, %v3833, 0
    %v3918 = vsel %vm196, %v3915, 0
    %3920 = vmatprep.subr.mxu0 0.0
    %3921 = vmatpush1.xpose.msra.mxu0 %v3918
    %3922 = vmatprep.subr.mxu0 0.0
    %3923 = vmatpush1.xpose.msra.mxu0 0.0
    %3924 = vmatprep.subr.mxu0 0.0
    %3925 = vmatpush1.xpose.msra.mxu0 0.0
    %3926 = vmatprep.subr.mxu0 0.0
    %3927 = vmatpush1.xpose.msra.mxu0 0.0
    %3928 = vmatprep.subr.mxu0 0.0
    %3929 = vmatpush1.xpose.msra.mxu0 0.0
    %3930 = vmatprep.subr.mxu0 0.0
    %3931 = vmatpush1.xpose.msra.mxu0 0.0
    %3932 = vmatprep.subr.mxu0 0.0
    %3933 = vmatpush1.xpose.msra.mxu0 0.0
    %3934 = vmatprep.subr.mxu0 0.0
    %3935 = vmatpush1.xpose.msra.mxu0 0.0
    %3936 = vmatprep.subr.mxu0 0.0
    %3937 = vmatpush1.xpose.msra.mxu0 0.0
    %3938 = vmatprep.subr.mxu0 0.0
    %3939 = vmatpush1.xpose.msra.mxu0 0.0
    %3940 = vmatprep.subr.mxu0 0.0
    %3941 = vmatpush1.xpose.msra.mxu0 0.0
    %3942 = vmatprep.subr.mxu0 0.0
    %3943 = vmatpush1.xpose.msra.mxu0 0.0
    %3944 = vmatprep.subr.mxu0 0.0
    %3945 = vmatpush1.xpose.msra.mxu0 0.0
    %3946 = vmatprep.subr.mxu0 0.0
    %3947 = vmatpush1.xpose.msra.mxu0 0.0
    %3948 = vmatprep.subr.mxu0 0.0
    %3949 = vmatpush1.xpose.msra.mxu0 0.0
    %3950 = vmatprep.subr.mxu0 0.0
    %3951 = vmatpush1.xpose.msra.mxu0 0.0
    %3952 = vmatprep.subr.mxu0 0.0
    %3953 = vmatpush1.xpose.msra.mxu0 0.0
    %3954 = vmatprep.subr.mxu0 0.0
    %3955 = vmatpush1.xpose.msra.mxu0 0.0
    %3956 = vmatprep.subr.mxu0 0.0
    %3957 = vmatpush1.xpose.msra.mxu0 0.0
    %3958 = vmatprep.subr.mxu0 0.0
    %3959 = vmatpush1.xpose.msra.mxu0 0.0
    %3960 = vmatprep.subr.mxu0 0.0
    %3961 = vmatpush1.xpose.msra.mxu0 0.0
    %3962 = vmatprep.subr.mxu0 0.0
    %3963 = vmatpush1.xpose.msra.mxu0 0.0
    %3964 = vmatprep.subr.mxu0 0.0
    %3965 = vmatpush1.xpose.msra.mxu0 0.0
    %3966 = vmatprep.subr.mxu0 0.0
    %3967 = vmatpush1.xpose.msra.mxu0 0.0
    %3968 = vmatprep.subr.mxu0 0.0
    %3969 = vmatpush1.xpose.msra.mxu0 0.0
    %3970 = vmatprep.subr.mxu0 0.0
    %3971 = vmatpush1.xpose.msra.mxu0 0.0
    %3972 = vmatprep.subr.mxu0 0.0
    %3973 = vmatpush1.xpose.msra.mxu0 0.0
    %3974 = vmatprep.subr.mxu0 0.0
    %3975 = vmatpush1.xpose.msra.mxu0 0.0
    %3976 = vmatprep.subr.mxu0 0.0
    %3977 = vmatpush1.xpose.msra.mxu0 0.0
    %3978 = vmatprep.subr.mxu0 0.0
    %3979 = vmatpush1.xpose.msra.mxu0 0.0
    %3980 = vmatprep.subr.mxu0 0.0
    %3981 = vmatpush1.xpose.msra.mxu0 0.0
    %3982 = vmatprep.subr.mxu0 0.0
    %3983 = vmatpush1.xpose.msra.mxu0 0.0
    %3984 = vmatprep.mubr.f32.mxu0 0.0
    %3985 = vmatmul.mubr.f32.gmra.mrb[0].mxu0 %v3916
    %v3986 = vpop.f32.mrb[0].mxu0
    %v3987 = vadd.f32 %v59, %v3986
    %v3988 = vpop.f32.mrb[0].mxu0
    %3989 = vdwg.mxu0
    %v3990 = vsel %vm196, %v3910, -inf
    %3991 = vmax.xlane.f32.xlu0 %v3990
    %v3992 = vpop.xlane.xlu0 %3991
    %v3993 = vsel %vm196, %v3987, -inf
    %3994 = vmax.xlane.f32.xlu0 %v3993
    %v3995 = vpop.xlane.xlu0 %3994
    %v3996 = vsub.f32 %v3910, %v3992
    %v3997 = vsub.f32 %v3987, %v3995
    %v3998 = vmul.f32 %v3996, 1.442695
    %v3999 = vpow.pop %v3998
    %v4000 = vmul.f32 %v3997, 1.442695
    %v4001 = vpow.pop %v4000
    %v4002 = vsel %vm196, %v3999, 0.0
    %4003 = vadd.xlane.f32.xlu0 %v4002
    %v4004 = vpop.xlane.xlu0 %4003
    %v4005 = vsel %vm196, %v4001, 0.0
    %4006 = vadd.xlane.f32.xlu0 %v4005
    %v4007 = vpop.xlane.xlu0 %4006
    %v4008 = vrcp.pop %v4004
    %v4009 = vrcp.pop %v4007
    %v4010 = vmul.f32 %v3999, %v4008
    %v4011 = vmul.f32 %v4001, %v4009
    %4012 = vrot.lane.b32.xlu0 %v3828, 64
    %v4013 = vpop.permute.xlu0 %4012
    %v4016 = vsel %vm196, %v4010, 0
    %4018 = vmatprep.subr.mxu0 0.0
    %4019 = vmatpush1.msra.mxu0 %v4013
    %4020 = vmatprep.subr.mxu0 0.0
    %4021 = vmatpush1.msra.mxu0 0.0
    %4022 = vmatprep.subr.mxu0 0.0
    %4023 = vmatpush1.msra.mxu0 0.0
    %4024 = vmatprep.subr.mxu0 0.0
    %4025 = vmatpush1.msra.mxu0 0.0
    %4026 = vmatprep.subr.mxu0 0.0
    %4027 = vmatpush1.msra.mxu0 0.0
    %4028 = vmatprep.subr.mxu0 0.0
    %4029 = vmatpush1.msra.mxu0 0.0
    %4030 = vmatprep.subr.mxu0 0.0
    %4031 = vmatpush1.msra.mxu0 0.0
    %4032 = vmatprep.subr.mxu0 0.0
    %4033 = vmatpush1.msra.mxu0 0.0
    %4034 = vmatprep.subr.mxu0 0.0
    %4035 = vmatpush1.msra.mxu0 0.0
    %4036 = vmatprep.subr.mxu0 0.0
    %4037 = vmatpush1.msra.mxu0 0.0
    %4038 = vmatprep.subr.mxu0 0.0
    %4039 = vmatpush1.msra.mxu0 0.0
    %4040 = vmatprep.subr.mxu0 0.0
    %4041 = vmatpush1.msra.mxu0 0.0
    %4042 = vmatprep.subr.mxu0 0.0
    %4043 = vmatpush1.msra.mxu0 0.0
    %4044 = vmatprep.subr.mxu0 0.0
    %4045 = vmatpush1.msra.mxu0 0.0
    %4046 = vmatprep.subr.mxu0 0.0
    %4047 = vmatpush1.msra.mxu0 0.0
    %4048 = vmatprep.subr.mxu0 0.0
    %4049 = vmatpush1.msra.mxu0 0.0
    %4050 = vmatprep.subr.mxu0 0.0
    %4051 = vmatpush1.msra.mxu0 0.0
    %4052 = vmatprep.subr.mxu0 0.0
    %4053 = vmatpush1.msra.mxu0 0.0
    %4054 = vmatprep.subr.mxu0 0.0
    %4055 = vmatpush1.msra.mxu0 0.0
    %4056 = vmatprep.subr.mxu0 0.0
    %4057 = vmatpush1.msra.mxu0 0.0
    %4058 = vmatprep.subr.mxu0 0.0
    %4059 = vmatpush1.msra.mxu0 0.0
    %4060 = vmatprep.subr.mxu0 0.0
    %4061 = vmatpush1.msra.mxu0 0.0
    %4062 = vmatprep.subr.mxu0 0.0
    %4063 = vmatpush1.msra.mxu0 0.0
    %4064 = vmatprep.subr.mxu0 0.0
    %4065 = vmatpush1.msra.mxu0 0.0
    %4066 = vmatprep.subr.mxu0 0.0
    %4067 = vmatpush1.msra.mxu0 0.0
    %4068 = vmatprep.subr.mxu0 0.0
    %4069 = vmatpush1.msra.mxu0 0.0
    %4070 = vmatprep.subr.mxu0 0.0
    %4071 = vmatpush1.msra.mxu0 0.0
    %4072 = vmatprep.subr.mxu0 0.0
    %4073 = vmatpush1.msra.mxu0 0.0
    %4074 = vmatprep.subr.mxu0 0.0
    %4075 = vmatpush1.msra.mxu0 0.0
    %4076 = vmatprep.subr.mxu0 0.0
    %4077 = vmatpush1.msra.mxu0 0.0
    %4078 = vmatprep.subr.mxu0 0.0
    %4079 = vmatpush1.msra.mxu0 0.0
    %4080 = vmatprep.subr.mxu0 0.0
    %4081 = vmatpush1.msra.mxu0 0.0
    %4082 = vmatprep.mubr.f32.mxu0 0.0
    %4083 = vmatmul.mubr.f32.gmra.mrb[0].mxu0 %v4016
    %v4084 = vpop.f32.mrb[0].mxu0
    %v4085 = vadd.f32 0.0, %v4084
    %v4086 = vpop.f32.mrb[0].mxu0
    %4087 = vdwg.mxu0
    %4088 = vrot.lane.b32.xlu0 %v3833, 64
    %v4089 = vpop.permute.xlu0 %4088
    %v4092 = vsel %vm196, %v4011, 0
    %4094 = vmatprep.subr.mxu0 0.0
    %4095 = vmatpush1.msra.mxu0 %v4089
    %4096 = vmatprep.subr.mxu0 0.0
    %4097 = vmatpush1.msra.mxu0 0.0
    %4098 = vmatprep.subr.mxu0 0.0
    %4099 = vmatpush1.msra.mxu0 0.0
    %4100 = vmatprep.subr.mxu0 0.0
    %4101 = vmatpush1.msra.mxu0 0.0
    %4102 = vmatprep.subr.mxu0 0.0
    %4103 = vmatpush1.msra.mxu0 0.0
    %4104 = vmatprep.subr.mxu0 0.0
    %4105 = vmatpush1.msra.mxu0 0.0
    %4106 = vmatprep.subr.mxu0 0.0
    %4107 = vmatpush1.msra.mxu0 0.0
    %4108 = vmatprep.subr.mxu0 0.0
    %4109 = vmatpush1.msra.mxu0 0.0
    %4110 = vmatprep.subr.mxu0 0.0
    %4111 = vmatpush1.msra.mxu0 0.0
    %4112 = vmatprep.subr.mxu0 0.0
    %4113 = vmatpush1.msra.mxu0 0.0
    %4114 = vmatprep.subr.mxu0 0.0
    %4115 = vmatpush1.msra.mxu0 0.0
    %4116 = vmatprep.subr.mxu0 0.0
    %4117 = vmatpush1.msra.mxu0 0.0
    %4118 = vmatprep.subr.mxu0 0.0
    %4119 = vmatpush1.msra.mxu0 0.0
    %4120 = vmatprep.subr.mxu0 0.0
    %4121 = vmatpush1.msra.mxu0 0.0
    %4122 = vmatprep.subr.mxu0 0.0
    %4123 = vmatpush1.msra.mxu0 0.0
    %4124 = vmatprep.subr.mxu0 0.0
    %4125 = vmatpush1.msra.mxu0 0.0
    %4126 = vmatprep.subr.mxu0 0.0
    %4127 = vmatpush1.msra.mxu0 0.0
    %4128 = vmatprep.subr.mxu0 0.0
    %4129 = vmatpush1.msra.mxu0 0.0
    %4130 = vmatprep.subr.mxu0 0.0
    %4131 = vmatpush1.msra.mxu0 0.0
    %4132 = vmatprep.subr.mxu0 0.0
    %4133 = vmatpush1.msra.mxu0 0.0
    %4134 = vmatprep.subr.mxu0 0.0
    %4135 = vmatpush1.msra.mxu0 0.0
    %4136 = vmatprep.subr.mxu0 0.0
    %4137 = vmatpush1.msra.mxu0 0.0
    %4138 = vmatprep.subr.mxu0 0.0
    %4139 = vmatpush1.msra.mxu0 0.0
    %4140 = vmatprep.subr.mxu0 0.0
    %4141 = vmatpush1.msra.mxu0 0.0
    %4142 = vmatprep.subr.mxu0 0.0
    %4143 = vmatpush1.msra.mxu0 0.0
    %4144 = vmatprep.subr.mxu0 0.0
    %4145 = vmatpush1.msra.mxu0 0.0
    %4146 = vmatprep.subr.mxu0 0.0
    %4147 = vmatpush1.msra.mxu0 0.0
    %4148 = vmatprep.subr.mxu0 0.0
    %4149 = vmatpush1.msra.mxu0 0.0
    %4150 = vmatprep.subr.mxu0 0.0
    %4151 = vmatpush1.msra.mxu0 0.0
    %4152 = vmatprep.subr.mxu0 0.0
    %4153 = vmatpush1.msra.mxu0 0.0
    %4154 = vmatprep.subr.mxu0 0.0
    %4155 = vmatpush1.msra.mxu0 0.0
    %4156 = vmatprep.subr.mxu0 0.0
    %4157 = vmatpush1.msra.mxu0 0.0
    %4158 = vmatprep.mubr.f32.mxu0 0.0
    %4159 = vmatmul.mubr.f32.gmra.mrb[0].mxu0 %v4092
    %v4160 = vpop.f32.mrb[0].mxu0
    %v4161 = vadd.f32 0.0, %v4160
    %v4162 = vpop.f32.mrb[0].mxu0
    %4163 = vdwg.mxu0
    %4164 = vrot.lane.b32.xlu0 %v3828, 120
    %v4165 = vpop.permute.xlu0 %4164
    %4166 = vrot.lane.b32.xlu0 %v3828, 88
    %v4167 = vpop.permute.xlu0 %4166
    %v4168 = vsel %vm196, %v4165, 0
    %v4170 = vsel %vm196, %v4167, 0
    %4172 = vmatprep.subr.mxu0 0.0
    %4173 = vmatpush1.xpose.msra.mxu0 %v4170
    %4174 = vmatprep.subr.mxu0 0.0
    %4175 = vmatpush1.xpose.msra.mxu0 0.0
    %4176 = vmatprep.subr.mxu0 0.0
    %4177 = vmatpush1.xpose.msra.mxu0 0.0
    %4178 = vmatprep.subr.mxu0 0.0
    %4179 = vmatpush1.xpose.msra.mxu0 0.0
    %4180 = vmatprep.subr.mxu0 0.0
    %4181 = vmatpush1.xpose.msra.mxu0 0.0
    %4182 = vmatprep.subr.mxu0 0.0
    %4183 = vmatpush1.xpose.msra.mxu0 0.0
    %4184 = vmatprep.subr.mxu0 0.0
    %4185 = vmatpush1.xpose.msra.mxu0 0.0
    %4186 = vmatprep.subr.mxu0 0.0
    %4187 = vmatpush1.xpose.msra.mxu0 0.0
    %4188 = vmatprep.subr.mxu0 0.0
    %4189 = vmatpush1.xpose.msra.mxu0 0.0
    %4190 = vmatprep.subr.mxu0 0.0
    %4191 = vmatpush1.xpose.msra.mxu0 0.0
    %4192 = vmatprep.subr.mxu0 0.0
    %4193 = vmatpush1.xpose.msra.mxu0 0.0
    %4194 = vmatprep.subr.mxu0 0.0
    %4195 = vmatpush1.xpose.msra.mxu0 0.0
    %4196 = vmatprep.subr.mxu0 0.0
    %4197 = vmatpush1.xpose.msra.mxu0 0.0
    %4198 = vmatprep.subr.mxu0 0.0
    %4199 = vmatpush1.xpose.msra.mxu0 0.0
    %4200 = vmatprep.subr.mxu0 0.0
    %4201 = vmatpush1.xpose.msra.mxu0 0.0
    %4202 = vmatprep.subr.mxu0 0.0
    %4203 = vmatpush1.xpose.msra.mxu0 0.0
    %4204 = vmatprep.subr.mxu0 0.0
    %4205 = vmatpush1.xpose.msra.mxu0 0.0
    %4206 = vmatprep.subr.mxu0 0.0
    %4207 = vmatpush1.xpose.msra.mxu0 0.0
    %4208 = vmatprep.subr.mxu0 0.0
    %4209 = vmatpush1.xpose.msra.mxu0 0.0
    %4210 = vmatprep.subr.mxu0 0.0
    %4211 = vmatpush1.xpose.msra.mxu0 0.0
    %4212 = vmatprep.subr.mxu0 0.0
    %4213 = vmatpush1.xpose.msra.mxu0 0.0
    %4214 = vmatprep.subr.mxu0 0.0
    %4215 = vmatpush1.xpose.msra.mxu0 0.0
    %4216 = vmatprep.subr.mxu0 0.0
    %4217 = vmatpush1.xpose.msra.mxu0 0.0
    %4218 = vmatprep.subr.mxu0 0.0
    %4219 = vmatpush1.xpose.msra.mxu0 0.0
    %4220 = vmatprep.subr.mxu0 0.0
    %4221 = vmatpush1.xpose.msra.mxu0 0.0
    %4222 = vmatprep.subr.mxu0 0.0
    %4223 = vmatpush1.xpose.msra.mxu0 0.0
    %4224 = vmatprep.subr.mxu0 0.0
    %4225 = vmatpush1.xpose.msra.mxu0 0.0
    %4226 = vmatprep.subr.mxu0 0.0
    %4227 = vmatpush1.xpose.msra.mxu0 0.0
    %4228 = vmatprep.subr.mxu0 0.0
    %4229 = vmatpush1.xpose.msra.mxu0 0.0
    %4230 = vmatprep.subr.mxu0 0.0
    %4231 = vmatpush1.xpose.msra.mxu0 0.0
    %4232 = vmatprep.subr.mxu0 0.0
    %4233 = vmatpush1.xpose.msra.mxu0 0.0
    %4234 = vmatprep.subr.mxu0 0.0
    %4235 = vmatpush1.xpose.msra.mxu0 0.0
    %4236 = vmatprep.mubr.f32.mxu0 0.0
    %4237 = vmatmul.mubr.f32.gmra.mrb[0].mxu0 %v4168
    %v4238 = vpop.f32.mrb[0].mxu0
    %v4239 = vadd.f32 %v59, %v4238
    %v4240 = vpop.f32.mrb[0].mxu0
    %4241 = vdwg.mxu0
    %4242 = vrot.lane.b32.xlu0 %v3833, 120
    %v4243 = vpop.permute.xlu0 %4242
    %4244 = vrot.lane.b32.xlu0 %v3833, 88
    %v4245 = vpop.permute.xlu0 %4244
    %v4246 = vsel %vm196, %v4243, 0
    %v4248 = vsel %vm196, %v4245, 0
    %4250 = vmatprep.subr.mxu0 0.0
    %4251 = vmatpush1.xpose.msra.mxu0 %v4248
    %4252 = vmatprep.subr.mxu0 0.0
    %4253 = vmatpush1.xpose.msra.mxu0 0.0
    %4254 = vmatprep.subr.mxu0 0.0
    %4255 = vmatpush1.xpose.msra.mxu0 0.0
    %4256 = vmatprep.subr.mxu0 0.0
    %4257 = vmatpush1.xpose.msra.mxu0 0.0
    %4258 = vmatprep.subr.mxu0 0.0
    %4259 = vmatpush1.xpose.msra.mxu0 0.0
    %4260 = vmatprep.subr.mxu0 0.0
    %4261 = vmatpush1.xpose.msra.mxu0 0.0
    %4262 = vmatprep.subr.mxu0 0.0
    %4263 = vmatpush1.xpose.msra.mxu0 0.0
    %4264 = vmatprep.subr.mxu0 0.0
    %4265 = vmatpush1.xpose.msra.mxu0 0.0
    %4266 = vmatprep.subr.mxu0 0.0
    %4267 = vmatpush1.xpose.msra.mxu0 0.0
    %4268 = vmatprep.subr.mxu0 0.0
    %4269 = vmatpush1.xpose.msra.mxu0 0.0
    %4270 = vmatprep.subr.mxu0 0.0
    %4271 = vmatpush1.xpose.msra.mxu0 0.0
    %4272 = vmatprep.subr.mxu0 0.0
    %4273 = vmatpush1.xpose.msra.mxu0 0.0
    %4274 = vmatprep.subr.mxu0 0.0
    %4275 = vmatpush1.xpose.msra.mxu0 0.0
    %4276 = vmatprep.subr.mxu0 0.0
    %4277 = vmatpush1.xpose.msra.mxu0 0.0
    %4278 = vmatprep.subr.mxu0 0.0
    %4279 = vmatpush1.xpose.msra.mxu0 0.0
    %4280 = vmatprep.subr.mxu0 0.0
    %4281 = vmatpush1.xpose.msra.mxu0 0.0
    %4282 = vmatprep.subr.mxu0 0.0
    %4283 = vmatpush1.xpose.msra.mxu0 0.0
    %4284 = vmatprep.subr.mxu0 0.0
    %4285 = vmatpush1.xpose.msra.mxu0 0.0
    %4286 = vmatprep.subr.mxu0 0.0
    %4287 = vmatpush1.xpose.msra.mxu0 0.0
    %4288 = vmatprep.subr.mxu0 0.0
    %4289 = vmatpush1.xpose.msra.mxu0 0.0
    %4290 = vmatprep.subr.mxu0 0.0
    %4291 = vmatpush1.xpose.msra.mxu0 0.0
    %4292 = vmatprep.subr.mxu0 0.0
    %4293 = vmatpush1.xpose.msra.mxu0 0.0
    %4294 = vmatprep.subr.mxu0 0.0
    %4295 = vmatpush1.xpose.msra.mxu0 0.0
    %4296 = vmatprep.subr.mxu0 0.0
    %4297 = vmatpush1.xpose.msra.mxu0 0.0
    %4298 = vmatprep.subr.mxu0 0.0
    %4299 = vmatpush1.xpose.msra.mxu0 0.0
    %4300 = vmatprep.subr.mxu0 0.0
    %4301 = vmatpush1.xpose.msra.mxu0 0.0
    %4302 = vmatprep.subr.mxu0 0.0
    %4303 = vmatpush1.xpose.msra.mxu0 0.0
    %4304 = vmatprep.subr.mxu0 0.0
    %4305 = vmatpush1.xpose.msra.mxu0 0.0
    %4306 = vmatprep.subr.mxu0 0.0
    %4307 = vmatpush1.xpose.msra.mxu0 0.0
    %4308 = vmatprep.subr.mxu0 0.0
    %4309 = vmatpush1.xpose.msra.mxu0 0.0
    %4310 = vmatprep.subr.mxu0 0.0
    %4311 = vmatpush1.xpose.msra.mxu0 0.0
    %4312 = vmatprep.subr.mxu0 0.0
    %4313 = vmatpush1.xpose.msra.mxu0 0.0
    %4314 = vmatprep.mubr.f32.mxu0 0.0
    %4315 = vmatmul.mubr.f32.gmra.mrb[0].mxu0 %v4246
    %v4316 = vpop.f32.mrb[0].mxu0
    %v4317 = vadd.f32 %v59, %v4316
    %v4318 = vpop.f32.mrb[0].mxu0
    %4319 = vdwg.mxu0
    %v4320 = vsel %vm196, %v4239, -inf
    %4321 = vmax.xlane.f32.xlu0 %v4320
    %v4322 = vpop.xlane.xlu0 %4321
    %v4323 = vsel %vm196, %v4317, -inf
    %4324 = vmax.xlane.f32.xlu0 %v4323
    %v4325 = vpop.xlane.xlu0 %4324
    %v4326 = vsub.f32 %v4239, %v4322
    %v4327 = vsub.f32 %v4317, %v4325
    %v4328 = vmul.f32 %v4326, 1.442695
    %v4329 = vpow.pop %v4328
    %v4330 = vmul.f32 %v4327, 1.442695
    %v4331 = vpow.pop %v4330
    %v4332 = vsel %vm196, %v4329, 0.0
    %4333 = vadd.xlane.f32.xlu0 %v4332
    %v4334 = vpop.xlane.xlu0 %4333
    %v4335 = vsel %vm196, %v4331, 0.0
    %4336 = vadd.xlane.f32.xlu0 %v4335
    %v4337 = vpop.xlane.xlu0 %4336
    %v4338 = vrcp.pop %v4334
    %v4339 = vrcp.pop %v4337
    %v4340 = vmul.f32 %v4329, %v4338
    %v4341 = vmul.f32 %v4331, %v4339
    %4342 = vrot.lane.b32.xlu0 %v3828, 56
    %v4343 = vpop.permute.xlu0 %4342
    %v4346 = vsel %vm196, %v4340, 0
    %4348 = vmatprep.subr.mxu0 0.0
    %4349 = vmatpush1.msra.mxu0 %v4343
    %4350 = vmatprep.subr.mxu0 0.0
    %4351 = vmatpush1.msra.mxu0 0.0
    %4352 = vmatprep.subr.mxu0 0.0
    %4353 = vmatpush1.msra.mxu0 0.0
    %4354 = vmatprep.subr.mxu0 0.0
    %4355 = vmatpush1.msra.mxu0 0.0
    %4356 = vmatprep.subr.mxu0 0.0
    %4357 = vmatpush1.msra.mxu0 0.0
    %4358 = vmatprep.subr.mxu0 0.0
    %4359 = vmatpush1.msra.mxu0 0.0
    %4360 = vmatprep.subr.mxu0 0.0
    %4361 = vmatpush1.msra.mxu0 0.0
    %4362 = vmatprep.subr.mxu0 0.0
    %4363 = vmatpush1.msra.mxu0 0.0
    %4364 = vmatprep.subr.mxu0 0.0
    %4365 = vmatpush1.msra.mxu0 0.0
    %4366 = vmatprep.subr.mxu0 0.0
    %4367 = vmatpush1.msra.mxu0 0.0
    %4368 = vmatprep.subr.mxu0 0.0
    %4369 = vmatpush1.msra.mxu0 0.0
    %4370 = vmatprep.subr.mxu0 0.0
    %4371 = vmatpush1.msra.mxu0 0.0
    %4372 = vmatprep.subr.mxu0 0.0
    %4373 = vmatpush1.msra.mxu0 0.0
    %4374 = vmatprep.subr.mxu0 0.0
    %4375 = vmatpush1.msra.mxu0 0.0
    %4376 = vmatprep.subr.mxu0 0.0
    %4377 = vmatpush1.msra.mxu0 0.0
    %4378 = vmatprep.subr.mxu0 0.0
    %4379 = vmatpush1.msra.mxu0 0.0
    %4380 = vmatprep.subr.mxu0 0.0
    %4381 = vmatpush1.msra.mxu0 0.0
    %4382 = vmatprep.subr.mxu0 0.0
    %4383 = vmatpush1.msra.mxu0 0.0
    %4384 = vmatprep.subr.mxu0 0.0
    %4385 = vmatpush1.msra.mxu0 0.0
    %4386 = vmatprep.subr.mxu0 0.0
    %4387 = vmatpush1.msra.mxu0 0.0
    %4388 = vmatprep.subr.mxu0 0.0
    %4389 = vmatpush1.msra.mxu0 0.0
    %4390 = vmatprep.subr.mxu0 0.0
    %4391 = vmatpush1.msra.mxu0 0.0
    %4392 = vmatprep.subr.mxu0 0.0
    %4393 = vmatpush1.msra.mxu0 0.0
    %4394 = vmatprep.subr.mxu0 0.0
    %4395 = vmatpush1.msra.mxu0 0.0
    %4396 = vmatprep.subr.mxu0 0.0
    %4397 = vmatpush1.msra.mxu0 0.0
    %4398 = vmatprep.subr.mxu0 0.0
    %4399 = vmatpush1.msra.mxu0 0.0
    %4400 = vmatprep.subr.mxu0 0.0
    %4401 = vmatpush1.msra.mxu0 0.0
    %4402 = vmatprep.subr.mxu0 0.0
    %4403 = vmatpush1.msra.mxu0 0.0
    %4404 = vmatprep.subr.mxu0 0.0
    %4405 = vmatpush1.msra.mxu0 0.0
    %4406 = vmatprep.subr.mxu0 0.0
    %4407 = vmatpush1.msra.mxu0 0.0
    %4408 = vmatprep.subr.mxu0 0.0
    %4409 = vmatpush1.msra.mxu0 0.0
    %4410 = vmatprep.subr.mxu0 0.0
    %4411 = vmatpush1.msra.mxu0 0.0
    %4412 = vmatprep.mubr.f32.mxu0 0.0
    %4413 = vmatmul.mubr.f32.gmra.mrb[0].mxu0 %v4346
    %v4414 = vpop.f32.mrb[0].mxu0
    %v4415 = vadd.f32 0.0, %v4414
    %v4416 = vpop.f32.mrb[0].mxu0
    %4417 = vdwg.mxu0
    %4418 = vrot.lane.b32.xlu0 %v3833, 56
    %v4419 = vpop.permute.xlu0 %4418
    %v4422 = vsel %vm196, %v4341, 0
    %4424 = vmatprep.subr.mxu0 0.0
    %4425 = vmatpush1.msra.mxu0 %v4419
    %4426 = vmatprep.subr.mxu0 0.0
    %4427 = vmatpush1.msra.mxu0 0.0
    %4428 = vmatprep.subr.mxu0 0.0
    %4429 = vmatpush1.msra.mxu0 0.0
    %4430 = vmatprep.subr.mxu0 0.0
    %4431 = vmatpush1.msra.mxu0 0.0
    %4432 = vmatprep.subr.mxu0 0.0
    %4433 = vmatpush1.msra.mxu0 0.0
    %4434 = vmatprep.subr.mxu0 0.0
    %4435 = vmatpush1.msra.mxu0 0.0
    %4436 = vmatprep.subr.mxu0 0.0
    %4437 = vmatpush1.msra.mxu0 0.0
    %4438 = vmatprep.subr.mxu0 0.0
    %4439 = vmatpush1.msra.mxu0 0.0
    %4440 = vmatprep.subr.mxu0 0.0
    %4441 = vmatpush1.msra.mxu0 0.0
    %4442 = vmatprep.subr.mxu0 0.0
    %4443 = vmatpush1.msra.mxu0 0.0
    %4444 = vmatprep.subr.mxu0 0.0
    %4445 = vmatpush1.msra.mxu0 0.0
    %4446 = vmatprep.subr.mxu0 0.0
    %4447 = vmatpush1.msra.mxu0 0.0
    %4448 = vmatprep.subr.mxu0 0.0
    %4449 = vmatpush1.msra.mxu0 0.0
    %4450 = vmatprep.subr.mxu0 0.0
    %4451 = vmatpush1.msra.mxu0 0.0
    %4452 = vmatprep.subr.mxu0 0.0
    %4453 = vmatpush1.msra.mxu0 0.0
    %4454 = vmatprep.subr.mxu0 0.0
    %4455 = vmatpush1.msra.mxu0 0.0
    %4456 = vmatprep.subr.mxu0 0.0
    %4457 = vmatpush1.msra.mxu0 0.0
    %4458 = vmatprep.subr.mxu0 0.0
    %4459 = vmatpush1.msra.mxu0 0.0
    %4460 = vmatprep.subr.mxu0 0.0
    %4461 = vmatpush1.msra.mxu0 0.0
    %4462 = vmatprep.subr.mxu0 0.0
    %4463 = vmatpush1.msra.mxu0 0.0
    %4464 = vmatprep.subr.mxu0 0.0
    %4465 = vmatpush1.msra.mxu0 0.0
    %4466 = vmatprep.subr.mxu0 0.0
    %4467 = vmatpush1.msra.mxu0 0.0
    %4468 = vmatprep.subr.mxu0 0.0
    %4469 = vmatpush1.msra.mxu0 0.0
    %4470 = vmatprep.subr.mxu0 0.0
    %4471 = vmatpush1.msra.mxu0 0.0
    %4472 = vmatprep.subr.mxu0 0.0
    %4473 = vmatpush1.msra.mxu0 0.0
    %4474 = vmatprep.subr.mxu0 0.0
    %4475 = vmatpush1.msra.mxu0 0.0
    %4476 = vmatprep.subr.mxu0 0.0
    %4477 = vmatpush1.msra.mxu0 0.0
    %4478 = vmatprep.subr.mxu0 0.0
    %4479 = vmatpush1.msra.mxu0 0.0
    %4480 = vmatprep.subr.mxu0 0.0
    %4481 = vmatpush1.msra.mxu0 0.0
    %4482 = vmatprep.subr.mxu0 0.0
    %4483 = vmatpush1.msra.mxu0 0.0
    %4484 = vmatprep.subr.mxu0 0.0
    %4485 = vmatpush1.msra.mxu0 0.0
    %4486 = vmatprep.subr.mxu0 0.0
    %4487 = vmatpush1.msra.mxu0 0.0
    %4488 = vmatprep.mubr.f32.mxu0 0.0
    %4489 = vmatmul.mubr.f32.gmra.mrb[0].mxu0 %v4422
    %v4490 = vpop.f32.mrb[0].mxu0
    %v4491 = vadd.f32 0.0, %v4490
    %v4492 = vpop.f32.mrb[0].mxu0
    %4493 = vdwg.mxu0
    %4494 = vrot.lane.b32.xlu0 %v3828, 112
    %v4495 = vpop.permute.xlu0 %4494
    %4496 = vrot.lane.b32.xlu0 %v3828, 80
    %v4497 = vpop.permute.xlu0 %4496
    %v4498 = vsel %vm196, %v4495, 0
    %v4500 = vsel %vm196, %v4497, 0
    %4502 = vmatprep.subr.mxu0 0.0
    %4503 = vmatpush1.xpose.msra.mxu0 %v4500
    %4504 = vmatprep.subr.mxu0 0.0
    %4505 = vmatpush1.xpose.msra.mxu0 0.0
    %4506 = vmatprep.subr.mxu0 0.0
    %4507 = vmatpush1.xpose.msra.mxu0 0.0
    %4508 = vmatprep.subr.mxu0 0.0
    %4509 = vmatpush1.xpose.msra.mxu0 0.0
    %4510 = vmatprep.subr.mxu0 0.0
    %4511 = vmatpush1.xpose.msra.mxu0 0.0
    %4512 = vmatprep.subr.mxu0 0.0
    %4513 = vmatpush1.xpose.msra.mxu0 0.0
    %4514 = vmatprep.subr.mxu0 0.0
    %4515 = vmatpush1.xpose.msra.mxu0 0.0
    %4516 = vmatprep.subr.mxu0 0.0
    %4517 = vmatpush1.xpose.msra.mxu0 0.0
    %4518 = vmatprep.subr.mxu0 0.0
    %4519 = vmatpush1.xpose.msra.mxu0 0.0
    %4520 = vmatprep.subr.mxu0 0.0
    %4521 = vmatpush1.xpose.msra.mxu0 0.0
    %4522 = vmatprep.subr.mxu0 0.0
    %4523 = vmatpush1.xpose.msra.mxu0 0.0
    %4524 = vmatprep.subr.mxu0 0.0
    %4525 = vmatpush1.xpose.msra.mxu0 0.0
    %4526 = vmatprep.subr.mxu0 0.0
    %4527 = vmatpush1.xpose.msra.mxu0 0.0
    %4528 = vmatprep.subr.mxu0 0.0
    %4529 = vmatpush1.xpose.msra.mxu0 0.0
    %4530 = vmatprep.subr.mxu0 0.0
    %4531 = vmatpush1.xpose.msra.mxu0 0.0
    %4532 = vmatprep.subr.mxu0 0.0
    %4533 = vmatpush1.xpose.msra.mxu0 0.0
    %4534 = vmatprep.subr.mxu0 0.0
    %4535 = vmatpush1.xpose.msra.mxu0 0.0
    %4536 = vmatprep.subr.mxu0 0.0
    %4537 = vmatpush1.xpose.msra.mxu0 0.0
    %4538 = vmatprep.subr.mxu0 0.0
    %4539 = vmatpush1.xpose.msra.mxu0 0.0
    %4540 = vmatprep.subr.mxu0 0.0
    %4541 = vmatpush1.xpose.msra.mxu0 0.0
    %4542 = vmatprep.subr.mxu0 0.0
    %4543 = vmatpush1.xpose.msra.mxu0 0.0
    %4544 = vmatprep.subr.mxu0 0.0
    %4545 = vmatpush1.xpose.msra.mxu0 0.0
    %4546 = vmatprep.subr.mxu0 0.0
    %4547 = vmatpush1.xpose.msra.mxu0 0.0
    %4548 = vmatprep.subr.mxu0 0.0
    %4549 = vmatpush1.xpose.msra.mxu0 0.0
    %4550 = vmatprep.subr.mxu0 0.0
    %4551 = vmatpush1.xpose.msra.mxu0 0.0
    %4552 = vmatprep.subr.mxu0 0.0
    %4553 = vmatpush1.xpose.msra.mxu0 0.0
    %4554 = vmatprep.subr.mxu0 0.0
    %4555 = vmatpush1.xpose.msra.mxu0 0.0
    %4556 = vmatprep.subr.mxu0 0.0
    %4557 = vmatpush1.xpose.msra.mxu0 0.0
    %4558 = vmatprep.subr.mxu0 0.0
    %4559 = vmatpush1.xpose.msra.mxu0 0.0
    %4560 = vmatprep.subr.mxu0 0.0
    %4561 = vmatpush1.xpose.msra.mxu0 0.0
    %4562 = vmatprep.subr.mxu0 0.0
    %4563 = vmatpush1.xpose.msra.mxu0 0.0
    %4564 = vmatprep.subr.mxu0 0.0
    %4565 = vmatpush1.xpose.msra.mxu0 0.0
    %4566 = vmatprep.mubr.f32.mxu0 0.0
    %4567 = vmatmul.mubr.f32.gmra.mrb[0].mxu0 %v4498
    %v4568 = vpop.f32.mrb[0].mxu0
    %v4569 = vadd.f32 %v59, %v4568
    %v4570 = vpop.f32.mrb[0].mxu0
    %4571 = vdwg.mxu0
    %4572 = vrot.lane.b32.xlu0 %v3833, 112
    %v4573 = vpop.permute.xlu0 %4572
    %4574 = vrot.lane.b32.xlu0 %v3833, 80
    %v4575 = vpop.permute.xlu0 %4574
    %v4576 = vsel %vm196, %v4573, 0
    %v4578 = vsel %vm196, %v4575, 0
    %4580 = vmatprep.subr.mxu0 0.0
    %4581 = vmatpush1.xpose.msra.mxu0 %v4578
    %4582 = vmatprep.subr.mxu0 0.0
    %4583 = vmatpush1.xpose.msra.mxu0 0.0
    %4584 = vmatprep.subr.mxu0 0.0
    %4585 = vmatpush1.xpose.msra.mxu0 0.0
    %4586 = vmatprep.subr.mxu0 0.0
    %4587 = vmatpush1.xpose.msra.mxu0 0.0
    %4588 = vmatprep.subr.mxu0 0.0
    %4589 = vmatpush1.xpose.msra.mxu0 0.0
    %4590 = vmatprep.subr.mxu0 0.0
    %4591 = vmatpush1.xpose.msra.mxu0 0.0
    %4592 = vmatprep.subr.mxu0 0.0
    %4593 = vmatpush1.xpose.msra.mxu0 0.0
    %4594 = vmatprep.subr.mxu0 0.0
    %4595 = vmatpush1.xpose.msra.mxu0 0.0
    %4596 = vmatprep.subr.mxu0 0.0
    %4597 = vmatpush1.xpose.msra.mxu0 0.0
    %4598 = vmatprep.subr.mxu0 0.0
    %4599 = vmatpush1.xpose.msra.mxu0 0.0
    %4600 = vmatprep.subr.mxu0 0.0
    %4601 = vmatpush1.xpose.msra.mxu0 0.0
    %4602 = vmatprep.subr.mxu0 0.0
    %4603 = vmatpush1.xpose.msra.mxu0 0.0
    %4604 = vmatprep.subr.mxu0 0.0
    %4605 = vmatpush1.xpose.msra.mxu0 0.0
    %4606 = vmatprep.subr.mxu0 0.0
    %4607 = vmatpush1.xpose.msra.mxu0 0.0
    %4608 = vmatprep.subr.mxu0 0.0
    %4609 = vmatpush1.xpose.msra.mxu0 0.0
    %4610 = vmatprep.subr.mxu0 0.0
    %4611 = vmatpush1.xpose.msra.mxu0 0.0
    %4612 = vmatprep.subr.mxu0 0.0
    %4613 = vmatpush1.xpose.msra.mxu0 0.0
    %4614 = vmatprep.subr.mxu0 0.0
    %4615 = vmatpush1.xpose.msra.mxu0 0.0
    %4616 = vmatprep.subr.mxu0 0.0
    %4617 = vmatpush1.xpose.msra.mxu0 0.0
    %4618 = vmatprep.subr.mxu0 0.0
    %4619 = vmatpush1.xpose.msra.mxu0 0.0
    %4620 = vmatprep.subr.mxu0 0.0
    %4621 = vmatpush1.xpose.msra.mxu0 0.0
    %4622 = vmatprep.subr.mxu0 0.0
    %4623 = vmatpush1.xpose.msra.mxu0 0.0
    %4624 = vmatprep.subr.mxu0 0.0
    %4625 = vmatpush1.xpose.msra.mxu0 0.0
    %4626 = vmatprep.subr.mxu0 0.0
    %4627 = vmatpush1.xpose.msra.mxu0 0.0
    %4628 = vmatprep.subr.mxu0 0.0
    %4629 = vmatpush1.xpose.msra.mxu0 0.0
    %4630 = vmatprep.subr.mxu0 0.0
    %4631 = vmatpush1.xpose.msra.mxu0 0.0
    %4632 = vmatprep.subr.mxu0 0.0
    %4633 = vmatpush1.xpose.msra.mxu0 0.0
    %4634 = vmatprep.subr.mxu0 0.0
    %4635 = vmatpush1.xpose.msra.mxu0 0.0
    %4636 = vmatprep.subr.mxu0 0.0
    %4637 = vmatpush1.xpose.msra.mxu0 0.0
    %4638 = vmatprep.subr.mxu0 0.0
    %4639 = vmatpush1.xpose.msra.mxu0 0.0
    %4640 = vmatprep.subr.mxu0 0.0
    %4641 = vmatpush1.xpose.msra.mxu0 0.0
    %4642 = vmatprep.subr.mxu0 0.0
    %4643 = vmatpush1.xpose.msra.mxu0 0.0
    %4644 = vmatprep.mubr.f32.mxu0 0.0
    %4645 = vmatmul.mubr.f32.gmra.mrb[0].mxu0 %v4576
    %v4646 = vpop.f32.mrb[0].mxu0
    %v4647 = vadd.f32 %v59, %v4646
    %v4648 = vpop.f32.mrb[0].mxu0
    %4649 = vdwg.mxu0
    %v4650 = vsel %vm196, %v4569, -inf
    %4651 = vmax.xlane.f32.xlu0 %v4650
    %v4652 = vpop.xlane.xlu0 %4651
    %v4653 = vsel %vm196, %v4647, -inf
    %4654 = vmax.xlane.f32.xlu0 %v4653
    %v4655 = vpop.xlane.xlu0 %4654
    %v4656 = vsub.f32 %v4569, %v4652
    %v4657 = vsub.f32 %v4647, %v4655
    %v4658 = vmul.f32 %v4656, 1.442695
    %v4659 = vpow.pop %v4658
    %v4660 = vmul.f32 %v4657, 1.442695
    %v4661 = vpow.pop %v4660
    %v4662 = vsel %vm196, %v4659, 0.0
    %4663 = vadd.xlane.f32.xlu0 %v4662
    %v4664 = vpop.xlane.xlu0 %4663
    %v4665 = vsel %vm196, %v4661, 0.0
    %4666 = vadd.xlane.f32.xlu0 %v4665
    %v4667 = vpop.xlane.xlu0 %4666
    %v4668 = vrcp.pop %v4664
    %v4669 = vrcp.pop %v4667
    %v4670 = vmul.f32 %v4659, %v4668
    %v4671 = vmul.f32 %v4661, %v4669
    %4672 = vrot.lane.b32.xlu0 %v3828, 48
    %v4673 = vpop.permute.xlu0 %4672
    %v4676 = vsel %vm196, %v4670, 0
    %4678 = vmatprep.subr.mxu0 0.0
    %4679 = vmatpush1.msra.mxu0 %v4673
    %4680 = vmatprep.subr.mxu0 0.0
    %4681 = vmatpush1.msra.mxu0 0.0
    %4682 = vmatprep.subr.mxu0 0.0
    %4683 = vmatpush1.msra.mxu0 0.0
    %4684 = vmatprep.subr.mxu0 0.0
    %4685 = vmatpush1.msra.mxu0 0.0
    %4686 = vmatprep.subr.mxu0 0.0
    %4687 = vmatpush1.msra.mxu0 0.0
    %4688 = vmatprep.subr.mxu0 0.0
    %4689 = vmatpush1.msra.mxu0 0.0
    %4690 = vmatprep.subr.mxu0 0.0
    %4691 = vmatpush1.msra.mxu0 0.0
    %4692 = vmatprep.subr.mxu0 0.0
    %4693 = vmatpush1.msra.mxu0 0.0
    %4694 = vmatprep.subr.mxu0 0.0
    %4695 = vmatpush1.msra.mxu0 0.0
    %4696 = vmatprep.subr.mxu0 0.0
    %4697 = vmatpush1.msra.mxu0 0.0
    %4698 = vmatprep.subr.mxu0 0.0
    %4699 = vmatpush1.msra.mxu0 0.0
    %4700 = vmatprep.subr.mxu0 0.0
    %4701 = vmatpush1.msra.mxu0 0.0
    %4702 = vmatprep.subr.mxu0 0.0
    %4703 = vmatpush1.msra.mxu0 0.0
    %4704 = vmatprep.subr.mxu0 0.0
    %4705 = vmatpush1.msra.mxu0 0.0
    %4706 = vmatprep.subr.mxu0 0.0
    %4707 = vmatpush1.msra.mxu0 0.0
    %4708 = vmatprep.subr.mxu0 0.0
    %4709 = vmatpush1.msra.mxu0 0.0
    %4710 = vmatprep.subr.mxu0 0.0
    %4711 = vmatpush1.msra.mxu0 0.0
    %4712 = vmatprep.subr.mxu0 0.0
    %4713 = vmatpush1.msra.mxu0 0.0
    %4714 = vmatprep.subr.mxu0 0.0
    %4715 = vmatpush1.msra.mxu0 0.0
    %4716 = vmatprep.subr.mxu0 0.0
    %4717 = vmatpush1.msra.mxu0 0.0
    %4718 = vmatprep.subr.mxu0 0.0
    %4719 = vmatpush1.msra.mxu0 0.0
    %4720 = vmatprep.subr.mxu0 0.0
    %4721 = vmatpush1.msra.mxu0 0.0
    %4722 = vmatprep.subr.mxu0 0.0
    %4723 = vmatpush1.msra.mxu0 0.0
    %4724 = vmatprep.subr.mxu0 0.0
    %4725 = vmatpush1.msra.mxu0 0.0
    %4726 = vmatprep.subr.mxu0 0.0
    %4727 = vmatpush1.msra.mxu0 0.0
    %4728 = vmatprep.subr.mxu0 0.0
    %4729 = vmatpush1.msra.mxu0 0.0
    %4730 = vmatprep.subr.mxu0 0.0
    %4731 = vmatpush1.msra.mxu0 0.0
    %4732 = vmatprep.subr.mxu0 0.0
    %4733 = vmatpush1.msra.mxu0 0.0
    %4734 = vmatprep.subr.mxu0 0.0
    %4735 = vmatpush1.msra.mxu0 0.0
    %4736 = vmatprep.subr.mxu0 0.0
    %4737 = vmatpush1.msra.mxu0 0.0
    %4738 = vmatprep.subr.mxu0 0.0
    %4739 = vmatpush1.msra.mxu0 0.0
    %4740 = vmatprep.subr.mxu0 0.0
    %4741 = vmatpush1.msra.mxu0 0.0
    %4742 = vmatprep.mubr.f32.mxu0 0.0
    %4743 = vmatmul.mubr.f32.gmra.mrb[0].mxu0 %v4676
    %v4744 = vpop.f32.mrb[0].mxu0
    %v4745 = vadd.f32 0.0, %v4744
    %v4746 = vpop.f32.mrb[0].mxu0
    %4747 = vdwg.mxu0
    %4748 = vrot.lane.b32.xlu0 %v3833, 48
    %v4749 = vpop.permute.xlu0 %4748
    %v4752 = vsel %vm196, %v4671, 0
    %4754 = vmatprep.subr.mxu0 0.0
    %4755 = vmatpush1.msra.mxu0 %v4749
    %4756 = vmatprep.subr.mxu0 0.0
    %4757 = vmatpush1.msra.mxu0 0.0
    %4758 = vmatprep.subr.mxu0 0.0
    %4759 = vmatpush1.msra.mxu0 0.0
    %4760 = vmatprep.subr.mxu0 0.0
    %4761 = vmatpush1.msra.mxu0 0.0
    %4762 = vmatprep.subr.mxu0 0.0
    %4763 = vmatpush1.msra.mxu0 0.0
    %4764 = vmatprep.subr.mxu0 0.0
    %4765 = vmatpush1.msra.mxu0 0.0
    %4766 = vmatprep.subr.mxu0 0.0
    %4767 = vmatpush1.msra.mxu0 0.0
    %4768 = vmatprep.subr.mxu0 0.0
    %4769 = vmatpush1.msra.mxu0 0.0
    %4770 = vmatprep.subr.mxu0 0.0
    %4771 = vmatpush1.msra.mxu0 0.0
    %4772 = vmatprep.subr.mxu0 0.0
    %4773 = vmatpush1.msra.mxu0 0.0
    %4774 = vmatprep.subr.mxu0 0.0
    %4775 = vmatpush1.msra.mxu0 0.0
    %4776 = vmatprep.subr.mxu0 0.0
    %4777 = vmatpush1.msra.mxu0 0.0
    %4778 = vmatprep.subr.mxu0 0.0
    %4779 = vmatpush1.msra.mxu0 0.0
    %4780 = vmatprep.subr.mxu0 0.0
    %4781 = vmatpush1.msra.mxu0 0.0
    %4782 = vmatprep.subr.mxu0 0.0
    %4783 = vmatpush1.msra.mxu0 0.0
    %4784 = vmatprep.subr.mxu0 0.0
    %4785 = vmatpush1.msra.mxu0 0.0
    %4786 = vmatprep.subr.mxu0 0.0
    %4787 = vmatpush1.msra.mxu0 0.0
    %4788 = vmatprep.subr.mxu0 0.0
    %4789 = vmatpush1.msra.mxu0 0.0
    %4790 = vmatprep.subr.mxu0 0.0
    %4791 = vmatpush1.msra.mxu0 0.0
    %4792 = vmatprep.subr.mxu0 0.0
    %4793 = vmatpush1.msra.mxu0 0.0
    %4794 = vmatprep.subr.mxu0 0.0
    %4795 = vmatpush1.msra.mxu0 0.0
    %4796 = vmatprep.subr.mxu0 0.0
    %4797 = vmatpush1.msra.mxu0 0.0
    %4798 = vmatprep.subr.mxu0 0.0
    %4799 = vmatpush1.msra.mxu0 0.0
    %4800 = vmatprep.subr.mxu0 0.0
    %4801 = vmatpush1.msra.mxu0 0.0
    %4802 = vmatprep.subr.mxu0 0.0
    %4803 = vmatpush1.msra.mxu0 0.0
    %4804 = vmatprep.subr.mxu0 0.0
    %4805 = vmatpush1.msra.mxu0 0.0
    %4806 = vmatprep.subr.mxu0 0.0
    %4807 = vmatpush1.msra.mxu0 0.0
    %4808 = vmatprep.subr.mxu0 0.0
    %4809 = vmatpush1.msra.mxu0 0.0
    %4810 = vmatprep.subr.mxu0 0.0
    %4811 = vmatpush1.msra.mxu0 0.0
    %4812 = vmatprep.subr.mxu0 0.0
    %4813 = vmatpush1.msra.mxu0 0.0
    %4814 = vmatprep.subr.mxu0 0.0
    %4815 = vmatpush1.msra.mxu0 0.0
    %4816 = vmatprep.subr.mxu0 0.0
    %4817 = vmatpush1.msra.mxu0 0.0
    %4818 = vmatprep.mubr.f32.mxu0 0.0
    %4819 = vmatmul.mubr.f32.gmra.mrb[0].mxu0 %v4752
    %v4820 = vpop.f32.mrb[0].mxu0
    %v4821 = vadd.f32 0.0, %v4820
    %v4822 = vpop.f32.mrb[0].mxu0
    %4823 = vdwg.mxu0
    %4824 = vrot.lane.b32.xlu0 %v3828, 104
    %v4825 = vpop.permute.xlu0 %4824
    %4826 = vrot.lane.b32.xlu0 %v3828, 72
    %v4827 = vpop.permute.xlu0 %4826
    %v4828 = vsel %vm196, %v4825, 0
    %v4830 = vsel %vm196, %v4827, 0
    %4832 = vmatprep.subr.mxu0 0.0
    %4833 = vmatpush1.xpose.msra.mxu0 %v4830
    %4834 = vmatprep.subr.mxu0 0.0
    %4835 = vmatpush1.xpose.msra.mxu0 0.0
    %4836 = vmatprep.subr.mxu0 0.0
    %4837 = vmatpush1.xpose.msra.mxu0 0.0
    %4838 = vmatprep.subr.mxu0 0.0
    %4839 = vmatpush1.xpose.msra.mxu0 0.0
    %4840 = vmatprep.subr.mxu0 0.0
    %4841 = vmatpush1.xpose.msra.mxu0 0.0
    %4842 = vmatprep.subr.mxu0 0.0
    %4843 = vmatpush1.xpose.msra.mxu0 0.0
    %4844 = vmatprep.subr.mxu0 0.0
    %4845 = vmatpush1.xpose.msra.mxu0 0.0
    %4846 = vmatprep.subr.mxu0 0.0
    %4847 = vmatpush1.xpose.msra.mxu0 0.0
    %4848 = vmatprep.subr.mxu0 0.0
    %4849 = vmatpush1.xpose.msra.mxu0 0.0
    %4850 = vmatprep.subr.mxu0 0.0
    %4851 = vmatpush1.xpose.msra.mxu0 0.0
    %4852 = vmatprep.subr.mxu0 0.0
    %4853 = vmatpush1.xpose.msra.mxu0 0.0
    %4854 = vmatprep.subr.mxu0 0.0
    %4855 = vmatpush1.xpose.msra.mxu0 0.0
    %4856 = vmatprep.subr.mxu0 0.0
    %4857 = vmatpush1.xpose.msra.mxu0 0.0
    %4858 = vmatprep.subr.mxu0 0.0
    %4859 = vmatpush1.xpose.msra.mxu0 0.0
    %4860 = vmatprep.subr.mxu0 0.0
    %4861 = vmatpush1.xpose.msra.mxu0 0.0
    %4862 = vmatprep.subr.mxu0 0.0
    %4863 = vmatpush1.xpose.msra.mxu0 0.0
    %4864 = vmatprep.subr.mxu0 0.0
    %4865 = vmatpush1.xpose.msra.mxu0 0.0
    %4866 = vmatprep.subr.mxu0 0.0
    %4867 = vmatpush1.xpose.msra.mxu0 0.0
    %4868 = vmatprep.subr.mxu0 0.0
    %4869 = vmatpush1.xpose.msra.mxu0 0.0
    %4870 = vmatprep.subr.mxu0 0.0
    %4871 = vmatpush1.xpose.msra.mxu0 0.0
    %4872 = vmatprep.subr.mxu0 0.0
    %4873 = vmatpush1.xpose.msra.mxu0 0.0
    %4874 = vmatprep.subr.mxu0 0.0
    %4875 = vmatpush1.xpose.msra.mxu0 0.0
    %4876 = vmatprep.subr.mxu0 0.0
    %4877 = vmatpush1.xpose.msra.mxu0 0.0
    %4878 = vmatprep.subr.mxu0 0.0
    %4879 = vmatpush1.xpose.msra.mxu0 0.0
    %4880 = vmatprep.subr.mxu0 0.0
    %4881 = vmatpush1.xpose.msra.mxu0 0.0
    %4882 = vmatprep.subr.mxu0 0.0
    %4883 = vmatpush1.xpose.msra.mxu0 0.0
    %4884 = vmatprep.subr.mxu0 0.0
    %4885 = vmatpush1.xpose.msra.mxu0 0.0
    %4886 = vmatprep.subr.mxu0 0.0
    %4887 = vmatpush1.xpose.msra.mxu0 0.0
    %4888 = vmatprep.subr.mxu0 0.0
    %4889 = vmatpush1.xpose.msra.mxu0 0.0
    %4890 = vmatprep.subr.mxu0 0.0
    %4891 = vmatpush1.xpose.msra.mxu0 0.0
    %4892 = vmatprep.subr.mxu0 0.0
    %4893 = vmatpush1.xpose.msra.mxu0 0.0
    %4894 = vmatprep.subr.mxu0 0.0
    %4895 = vmatpush1.xpose.msra.mxu0 0.0
    %4896 = vmatprep.mubr.f32.mxu0 0.0
    %4897 = vmatmul.mubr.f32.gmra.mrb[0].mxu0 %v4828
    %v4898 = vpop.f32.mrb[0].mxu0
    %v4899 = vadd.f32 %v59, %v4898
    %v4900 = vpop.f32.mrb[0].mxu0
    %4901 = vdwg.mxu0
    %4902 = vrot.lane.b32.xlu0 %v3833, 104
    %v4903 = vpop.permute.xlu0 %4902
    %4904 = vrot.lane.b32.xlu0 %v3833, 72
    %v4905 = vpop.permute.xlu0 %4904
    %v4906 = vsel %vm196, %v4903, 0
    %v4908 = vsel %vm196, %v4905, 0
    %4910 = vmatprep.subr.mxu0 0.0
    %4911 = vmatpush1.xpose.msra.mxu0 %v4908
    %4912 = vmatprep.subr.mxu0 0.0
    %4913 = vmatpush1.xpose.msra.mxu0 0.0
    %4914 = vmatprep.subr.mxu0 0.0
    %4915 = vmatpush1.xpose.msra.mxu0 0.0
    %4916 = vmatprep.subr.mxu0 0.0
    %4917 = vmatpush1.xpose.msra.mxu0 0.0
    %4918 = vmatprep.subr.mxu0 0.0
    %4919 = vmatpush1.xpose.msra.mxu0 0.0
    %4920 = vmatprep.subr.mxu0 0.0
    %4921 = vmatpush1.xpose.msra.mxu0 0.0
    %4922 = vmatprep.subr.mxu0 0.0
    %4923 = vmatpush1.xpose.msra.mxu0 0.0
    %4924 = vmatprep.subr.mxu0 0.0
    %4925 = vmatpush1.xpose.msra.mxu0 0.0
    %4926 = vmatprep.subr.mxu0 0.0
    %4927 = vmatpush1.xpose.msra.mxu0 0.0
    %4928 = vmatprep.subr.mxu0 0.0
    %4929 = vmatpush1.xpose.msra.mxu0 0.0
    %4930 = vmatprep.subr.mxu0 0.0
    %4931 = vmatpush1.xpose.msra.mxu0 0.0
    %4932 = vmatprep.subr.mxu0 0.0
    %4933 = vmatpush1.xpose.msra.mxu0 0.0
    %4934 = vmatprep.subr.mxu0 0.0
    %4935 = vmatpush1.xpose.msra.mxu0 0.0
    %4936 = vmatprep.subr.mxu0 0.0
    %4937 = vmatpush1.xpose.msra.mxu0 0.0
    %4938 = vmatprep.subr.mxu0 0.0
    %4939 = vmatpush1.xpose.msra.mxu0 0.0
    %4940 = vmatprep.subr.mxu0 0.0
    %4941 = vmatpush1.xpose.msra.mxu0 0.0
    %4942 = vmatprep.subr.mxu0 0.0
    %4943 = vmatpush1.xpose.msra.mxu0 0.0
    %4944 = vmatprep.subr.mxu0 0.0
    %4945 = vmatpush1.xpose.msra.mxu0 0.0
    %4946 = vmatprep.subr.mxu0 0.0
    %4947 = vmatpush1.xpose.msra.mxu0 0.0
    %4948 = vmatprep.subr.mxu0 0.0
    %4949 = vmatpush1.xpose.msra.mxu0 0.0
    %4950 = vmatprep.subr.mxu0 0.0
    %4951 = vmatpush1.xpose.msra.mxu0 0.0
    %4952 = vmatprep.subr.mxu0 0.0
    %4953 = vmatpush1.xpose.msra.mxu0 0.0
    %4954 = vmatprep.subr.mxu0 0.0
    %4955 = vmatpush1.xpose.msra.mxu0 0.0
    %4956 = vmatprep.subr.mxu0 0.0
    %4957 = vmatpush1.xpose.msra.mxu0 0.0
    %4958 = vmatprep.subr.mxu0 0.0
    %4959 = vmatpush1.xpose.msra.mxu0 0.0
    %4960 = vmatprep.subr.mxu0 0.0
    %4961 = vmatpush1.xpose.msra.mxu0 0.0
    %4962 = vmatprep.subr.mxu0 0.0
    %4963 = vmatpush1.xpose.msra.mxu0 0.0
    %4964 = vmatprep.subr.mxu0 0.0
    %4965 = vmatpush1.xpose.msra.mxu0 0.0
    %4966 = vmatprep.subr.mxu0 0.0
    %4967 = vmatpush1.xpose.msra.mxu0 0.0
    %4968 = vmatprep.subr.mxu0 0.0
    %4969 = vmatpush1.xpose.msra.mxu0 0.0
    %4970 = vmatprep.subr.mxu0 0.0
    %4971 = vmatpush1.xpose.msra.mxu0 0.0
    %4972 = vmatprep.subr.mxu0 0.0
    %4973 = vmatpush1.xpose.msra.mxu0 0.0
    %4974 = vmatprep.mubr.f32.mxu0 0.0
    %4975 = vmatmul.mubr.f32.gmra.mrb[0].mxu0 %v4906
    %v4976 = vpop.f32.mrb[0].mxu0
    %v4977 = vadd.f32 %v59, %v4976
    %v4978 = vpop.f32.mrb[0].mxu0
    %4979 = vdwg.mxu0
    %v4980 = vsel %vm196, %v4899, -inf
    %4981 = vmax.xlane.f32.xlu0 %v4980
    %v4982 = vpop.xlane.xlu0 %4981
    %v4983 = vsel %vm196, %v4977, -inf
    %4984 = vmax.xlane.f32.xlu0 %v4983
    %v4985 = vpop.xlane.xlu0 %4984
    %v4986 = vsub.f32 %v4899, %v4982
    %v4987 = vsub.f32 %v4977, %v4985
    %v4988 = vmul.f32 %v4986, 1.442695
    %v4989 = vpow.pop %v4988
    %v4990 = vmul.f32 %v4987, 1.442695
    %v4991 = vpow.pop %v4990
    %v4992 = vsel %vm196, %v4989, 0.0
    %4993 = vadd.xlane.f32.xlu0 %v4992
    %v4994 = vpop.xlane.xlu0 %4993
    %v4995 = vsel %vm196, %v4991, 0.0
    %4996 = vadd.xlane.f32.xlu0 %v4995
    %v4997 = vpop.xlane.xlu0 %4996
    %v4998 = vrcp.pop %v4994
    %v4999 = vrcp.pop %v4997
    %v5000 = vmul.f32 %v4989, %v4998
    %v5001 = vmul.f32 %v4991, %v4999
    %5002 = vrot.lane.b32.xlu0 %v3828, 40
    %v5003 = vpop.permute.xlu0 %5002
    %v5006 = vsel %vm196, %v5000, 0
    %5008 = vmatprep.subr.mxu0 0.0
    %5009 = vmatpush1.msra.mxu0 %v5003
    %5010 = vmatprep.subr.mxu0 0.0
    %5011 = vmatpush1.msra.mxu0 0.0
    %5012 = vmatprep.subr.mxu0 0.0
    %5013 = vmatpush1.msra.mxu0 0.0
    %5014 = vmatprep.subr.mxu0 0.0
    %5015 = vmatpush1.msra.mxu0 0.0
    %5016 = vmatprep.subr.mxu0 0.0
    %5017 = vmatpush1.msra.mxu0 0.0
    %5018 = vmatprep.subr.mxu0 0.0
    %5019 = vmatpush1.msra.mxu0 0.0
    %5020 = vmatprep.subr.mxu0 0.0
    %5021 = vmatpush1.msra.mxu0 0.0
    %5022 = vmatprep.subr.mxu0 0.0
    %5023 = vmatpush1.msra.mxu0 0.0
    %5024 = vmatprep.subr.mxu0 0.0
    %5025 = vmatpush1.msra.mxu0 0.0
    %5026 = vmatprep.subr.mxu0 0.0
    %5027 = vmatpush1.msra.mxu0 0.0
    %5028 = vmatprep.subr.mxu0 0.0
    %5029 = vmatpush1.msra.mxu0 0.0
    %5030 = vmatprep.subr.mxu0 0.0
    %5031 = vmatpush1.msra.mxu0 0.0
    %5032 = vmatprep.subr.mxu0 0.0
    %5033 = vmatpush1.msra.mxu0 0.0
    %5034 = vmatprep.subr.mxu0 0.0
    %5035 = vmatpush1.msra.mxu0 0.0
    %5036 = vmatprep.subr.mxu0 0.0
    %5037 = vmatpush1.msra.mxu0 0.0
    %5038 = vmatprep.subr.mxu0 0.0
    %5039 = vmatpush1.msra.mxu0 0.0
    %5040 = vmatprep.subr.mxu0 0.0
    %5041 = vmatpush1.msra.mxu0 0.0
    %5042 = vmatprep.subr.mxu0 0.0
    %5043 = vmatpush1.msra.mxu0 0.0
    %5044 = vmatprep.subr.mxu0 0.0
    %5045 = vmatpush1.msra.mxu0 0.0
    %5046 = vmatprep.subr.mxu0 0.0
    %5047 = vmatpush1.msra.mxu0 0.0
    %5048 = vmatprep.subr.mxu0 0.0
    %5049 = vmatpush1.msra.mxu0 0.0
    %5050 = vmatprep.subr.mxu0 0.0
    %5051 = vmatpush1.msra.mxu0 0.0
    %5052 = vmatprep.subr.mxu0 0.0
    %5053 = vmatpush1.msra.mxu0 0.0
    %5054 = vmatprep.subr.mxu0 0.0
    %5055 = vmatpush1.msra.mxu0 0.0
    %5056 = vmatprep.subr.mxu0 0.0
    %5057 = vmatpush1.msra.mxu0 0.0
    %5058 = vmatprep.subr.mxu0 0.0
    %5059 = vmatpush1.msra.mxu0 0.0
    %5060 = vmatprep.subr.mxu0 0.0
    %5061 = vmatpush1.msra.mxu0 0.0
    %5062 = vmatprep.subr.mxu0 0.0
    %5063 = vmatpush1.msra.mxu0 0.0
    %5064 = vmatprep.subr.mxu0 0.0
    %5065 = vmatpush1.msra.mxu0 0.0
    %5066 = vmatprep.subr.mxu0 0.0
    %5067 = vmatpush1.msra.mxu0 0.0
    %5068 = vmatprep.subr.mxu0 0.0
    %5069 = vmatpush1.msra.mxu0 0.0
    %5070 = vmatprep.subr.mxu0 0.0
    %5071 = vmatpush1.msra.mxu0 0.0
    %5072 = vmatprep.mubr.f32.mxu0 0.0
    %5073 = vmatmul.mubr.f32.gmra.mrb[0].mxu0 %v5006
    %v5074 = vpop.f32.mrb[0].mxu0
    %v5075 = vadd.f32 0.0, %v5074
    %v5076 = vpop.f32.mrb[0].mxu0
    %5077 = vdwg.mxu0
    %5078 = vrot.lane.b32.xlu0 %v3833, 40
    %v5079 = vpop.permute.xlu0 %5078
    %v5082 = vsel %vm196, %v5001, 0
    %5084 = vmatprep.subr.mxu0 0.0
    %5085 = vmatpush1.msra.mxu0 %v5079
    %5086 = vmatprep.subr.mxu0 0.0
    %5087 = vmatpush1.msra.mxu0 0.0
    %5088 = vmatprep.subr.mxu0 0.0
    %5089 = vmatpush1.msra.mxu0 0.0
    %5090 = vmatprep.subr.mxu0 0.0
    %5091 = vmatpush1.msra.mxu0 0.0
    %5092 = vmatprep.subr.mxu0 0.0
    %5093 = vmatpush1.msra.mxu0 0.0
    %5094 = vmatprep.subr.mxu0 0.0
    %5095 = vmatpush1.msra.mxu0 0.0
    %5096 = vmatprep.subr.mxu0 0.0
    %5097 = vmatpush1.msra.mxu0 0.0
    %5098 = vmatprep.subr.mxu0 0.0
    %5099 = vmatpush1.msra.mxu0 0.0
    %5100 = vmatprep.subr.mxu0 0.0
    %5101 = vmatpush1.msra.mxu0 0.0
    %5102 = vmatprep.subr.mxu0 0.0
    %5103 = vmatpush1.msra.mxu0 0.0
    %5104 = vmatprep.subr.mxu0 0.0
    %5105 = vmatpush1.msra.mxu0 0.0
    %5106 = vmatprep.subr.mxu0 0.0
    %5107 = vmatpush1.msra.mxu0 0.0
    %5108 = vmatprep.subr.mxu0 0.0
    %5109 = vmatpush1.msra.mxu0 0.0
    %5110 = vmatprep.subr.mxu0 0.0
    %5111 = vmatpush1.msra.mxu0 0.0
    %5112 = vmatprep.subr.mxu0 0.0
    %5113 = vmatpush1.msra.mxu0 0.0
    %5114 = vmatprep.subr.mxu0 0.0
    %5115 = vmatpush1.msra.mxu0 0.0
    %5116 = vmatprep.subr.mxu0 0.0
    %5117 = vmatpush1.msra.mxu0 0.0
    %5118 = vmatprep.subr.mxu0 0.0
    %5119 = vmatpush1.msra.mxu0 0.0
    %5120 = vmatprep.subr.mxu0 0.0
    %5121 = vmatpush1.msra.mxu0 0.0
    %5122 = vmatprep.subr.mxu0 0.0
    %5123 = vmatpush1.msra.mxu0 0.0
    %5124 = vmatprep.subr.mxu0 0.0
    %5125 = vmatpush1.msra.mxu0 0.0
    %5126 = vmatprep.subr.mxu0 0.0
    %5127 = vmatpush1.msra.mxu0 0.0
    %5128 = vmatprep.subr.mxu0 0.0
    %5129 = vmatpush1.msra.mxu0 0.0
    %5130 = vmatprep.subr.mxu0 0.0
    %5131 = vmatpush1.msra.mxu0 0.0
    %5132 = vmatprep.subr.mxu0 0.0
    %5133 = vmatpush1.msra.mxu0 0.0
    %5134 = vmatprep.subr.mxu0 0.0
    %5135 = vmatpush1.msra.mxu0 0.0
    %5136 = vmatprep.subr.mxu0 0.0
    %5137 = vmatpush1.msra.mxu0 0.0
    %5138 = vmatprep.subr.mxu0 0.0
    %5139 = vmatpush1.msra.mxu0 0.0
    %5140 = vmatprep.subr.mxu0 0.0
    %5141 = vmatpush1.msra.mxu0 0.0
    %5142 = vmatprep.subr.mxu0 0.0
    %5143 = vmatpush1.msra.mxu0 0.0
    %5144 = vmatprep.subr.mxu0 0.0
    %5145 = vmatpush1.msra.mxu0 0.0
    %5146 = vmatprep.subr.mxu0 0.0
    %5147 = vmatpush1.msra.mxu0 0.0
    %5148 = vmatprep.mubr.f32.mxu0 0.0
    %5149 = vmatmul.mubr.f32.gmra.mrb[0].mxu0 %v5082
    %v5150 = vpop.f32.mrb[0].mxu0
    %v5151 = vadd.f32 0.0, %v5150
    %v5152 = vpop.f32.mrb[0].mxu0
    %5153 = vdwg.mxu0
    %5156 = vrot.lane.b32.xlu0 %v4415, 8
    %v5157 = vpop.permute.xlu0 %5156
    %5158 = vrot.lane.b32.xlu0 %v4491, 8
    %v5159 = vpop.permute.xlu0 %5158
    %5164 = vrot.lane.b32.xlu0 %v4745, 16
    %v5165 = vpop.permute.xlu0 %5164
    %5166 = vrot.lane.b32.xlu0 %v4821, 16
    %v5167 = vpop.permute.xlu0 %5166
    %5172 = vrot.lane.b32.xlu0 %v5075, 24
    %v5173 = vpop.permute.xlu0 %5172
    %5174 = vrot.lane.b32.xlu0 %v5151, 24
    %v5175 = vpop.permute.xlu0 %5174
    %v5178 = vsel %vm196, %v4085, %v5157
    %v5179 = vsel %vm196, %v4161, %v5159
    %v5180 = vsel %vm1538, %v5178, %v5165
    %v5181 = vsel %vm1538, %v5179, %v5167
    %v5182 = vsel %vm1541, %v5180, %v5173
    %v5183 = vsel %vm1541, %v5181, %v5175
    %s5184 = scalar_lea.vmem %s4, 64
    %v5185 = vld [vmem:[%s5184] sm:$0xff]
    %v5186 = vld [vmem:[%s5184 + $0x8] sm:$0xff]
    %v5187 = vld [vmem:[%s5184 + $0x10] sm:$0xff]
    %v5188 = vld [vmem:[%s5184 + $0x18] sm:$0xff]
    %v5190 = vsel %vm64, %v5182, 0
    %v5193 = vsel %vm64, %v5183, 0
    %5195 = vmatprep.subr.mxu0 0.0
    %5196 = vmatpush1.msra.mxu0 %v5185
    %5197 = vmatprep.subr.mxu0 0.0
    %5198 = vmatpush1.msra.mxu0 %v5186
    %5199 = vmatprep.subr.mxu0 0.0
    %5200 = vmatpush1.msra.mxu0 %v5187
    %5201 = vmatprep.subr.mxu0 0.0
    %5202 = vmatpush1.msra.mxu0 %v5188
    %5203 = vmatprep.subr.mxu0 0.0
    %5204 = vmatpush1.msra.mxu0 0.0
    %5205 = vmatprep.subr.mxu0 0.0
    %5206 = vmatpush1.msra.mxu0 0.0
    %5207 = vmatprep.subr.mxu0 0.0
    %5208 = vmatpush1.msra.mxu0 0.0
    %5209 = vmatprep.subr.mxu0 0.0
    %5210 = vmatpush1.msra.mxu0 0.0
    %5211 = vmatprep.subr.mxu0 0.0
    %5212 = vmatpush1.msra.mxu0 0.0
    %5213 = vmatprep.subr.mxu0 0.0
    %5214 = vmatpush1.msra.mxu0 0.0
    %5215 = vmatprep.subr.mxu0 0.0
    %5216 = vmatpush1.msra.mxu0 0.0
    %5217 = vmatprep.subr.mxu0 0.0
    %5218 = vmatpush1.msra.mxu0 0.0
    %5219 = vmatprep.subr.mxu0 0.0
    %5220 = vmatpush1.msra.mxu0 0.0
    %5221 = vmatprep.subr.mxu0 0.0
    %5222 = vmatpush1.msra.mxu0 0.0
    %5223 = vmatprep.subr.mxu0 0.0
    %5224 = vmatpush1.msra.mxu0 0.0
    %5225 = vmatprep.subr.mxu0 0.0
    %5226 = vmatpush1.msra.mxu0 0.0
    %5227 = vmatprep.subr.mxu0 0.0
    %5228 = vmatpush1.msra.mxu0 0.0
    %5229 = vmatprep.subr.mxu0 0.0
    %5230 = vmatpush1.msra.mxu0 0.0
    %5231 = vmatprep.subr.mxu0 0.0
    %5232 = vmatpush1.msra.mxu0 0.0
    %5233 = vmatprep.subr.mxu0 0.0
    %5234 = vmatpush1.msra.mxu0 0.0
    %5235 = vmatprep.subr.mxu0 0.0
    %5236 = vmatpush1.msra.mxu0 0.0
    %5237 = vmatprep.subr.mxu0 0.0
    %5238 = vmatpush1.msra.mxu0 0.0
    %5239 = vmatprep.subr.mxu0 0.0
    %5240 = vmatpush1.msra.mxu0 0.0
    %5241 = vmatprep.subr.mxu0 0.0
    %5242 = vmatpush1.msra.mxu0 0.0
    %5243 = vmatprep.subr.mxu0 0.0
    %5244 = vmatpush1.msra.mxu0 0.0
    %5245 = vmatprep.subr.mxu0 0.0
    %5246 = vmatpush1.msra.mxu0 0.0
    %5247 = vmatprep.subr.mxu0 0.0
    %5248 = vmatpush1.msra.mxu0 0.0
    %5249 = vmatprep.subr.mxu0 0.0
    %5250 = vmatpush1.msra.mxu0 0.0
    %5251 = vmatprep.subr.mxu0 0.0
    %5252 = vmatpush1.msra.mxu0 0.0
    %5253 = vmatprep.subr.mxu0 0.0
    %5254 = vmatpush1.msra.mxu0 0.0
    %5255 = vmatprep.subr.mxu0 0.0
    %5256 = vmatpush1.msra.mxu0 0.0
    %5257 = vmatprep.subr.mxu0 0.0
    %5258 = vmatpush1.msra.mxu0 0.0
    %5259 = vmatprep.mubr.f32.mxu0 0.0
    %5260 = vmatmul.mubr.f32.gmra.mrb[0].mxu0 %v5190
    %v5261 = vpop.f32.mrb[0].mxu0
    %v5262 = vadd.f32 0.0, %v5261
    %v5263 = vpop.f32.mrb[0].mxu0
    %5264 = vmatprep.mubr.f32.mxu0 0.0
    %5265 = vmatmul.mubr.f32.gmra.mrb[0].mxu0 %v5193
    %v5266 = vpop.f32.mrb[0].mxu0
    %v5267 = vadd.f32 0.0, %v5266
    %v5268 = vpop.f32.mrb[0].mxu0
    %5269 = vdwg.mxu0
    %v5270 = vadd.f32 %v3702, %v5262
    %v5271 = vadd.f32 %v3703, %v5267
    %s5272 = scalar_lea.vmem %s5, 2
    %v5273 = vld [vmem:[%s5272] sm:$0x1]
    %v5275 = vlaneseq
    %v5276 = vshrl.u32 %v5275, 7
    %v5277 = vsub.s32 0, %v5276
    %v5278 = vrot.slane %v5273, %v5277
    %v5280 = vadd.f32 %v5270, %v5278
    %v5281 = vadd.f32 %v5271, %v5278
    %s5282 = scalar_lea.vmem %s6, 2
    %v5283 = vld [vmem:[%s5282] sm:$0x1]
    %s5284 = scalar_lea.vmem %s7, 2
    %v5285 = vld [vmem:[%s5284] sm:$0x1]
    %v5286 = vsel %vm64, %v5280, 0.0
    %5287 = vadd.xlane.f32.xlu0 %v5286
    %v5288 = vpop.xlane.xlu0 %5287
    %v5289 = vsel %vm64, %v5281, 0.0
    %5290 = vadd.xlane.f32.xlu0 %v5289
    %v5291 = vpop.xlane.xlu0 %5290
    %v5292 = vmul.f32 %v5288, %v71
    %v5293 = vmul.f32 %v5291, %v71
    %v5294 = vsub.f32 %v5280, %v5292
    %v5295 = vsub.f32 %v5281, %v5293
    %v5296 = vmul.f32 %v5294, %v5294
    %v5297 = vmul.f32 %v5295, %v5295
    %v5298 = vsel %vm64, %v5296, 0.0
    %5299 = vadd.xlane.f32.xlu0 %v5298
    %v5300 = vpop.xlane.xlu0 %5299
    %v5301 = vsel %vm64, %v5297, 0.0
    %5302 = vadd.xlane.f32.xlu0 %v5301
    %v5303 = vpop.xlane.xlu0 %5302
    %v5304 = vmul.f32 %v5300, %v71
    %v5305 = vmul.f32 %v5303, %v71
    %v5306 = vadd.f32 %v5304, 1e-05
    %v5307 = vadd.f32 %v5305, 1e-05
    %v5308 = vrsqrt.pop %v5306
    %v5309 = vrsqrt.pop %v5307
    %v5310 = vmul.f32 %v5294, %v5308
    %v5311 = vmul.f32 %v5295, %v5309
    %v5313 = vlaneseq
    %v5314 = vshrl.u32 %v5313, 7
    %v5315 = vsub.s32 0, %v5314
    %v5316 = vrot.slane %v5283, %v5315
    %v5318 = vmul.f32 %v5310, %v5316
    %v5319 = vmul.f32 %v5311, %v5316
    %v5321 = vlaneseq
    %v5322 = vshrl.u32 %v5321, 7
    %v5323 = vsub.s32 0, %v5322
    %v5324 = vrot.slane %v5285, %v5323
    %v5326 = vadd.f32 %v5318, %v5324
    %v5327 = vadd.f32 %v5319, %v5324
    %s5328 = scalar_lea.vmem %s8, 64
    %v5329 = vld [vmem:[%s5328] sm:$0xff]
    %v5330 = vld [vmem:[%s5328 + $0x8] sm:$0xff]
    %v5331 = vld [vmem:[%s5328 + $0x10] sm:$0xff]
    %v5332 = vld [vmem:[%s5328 + $0x18] sm:$0xff]
    %s5333 = scalar_lea.vmem %s9, 2
    %v5334 = vld [vmem:[%s5333] sm:$0x1]
    %v5336 = vlaneseq
    %v5337 = vshrl.u32 %v5336, 7
    %v5338 = vsub.s32 0, %v5337
    %v5339 = vrot.slane %v5334, %v5338
    %v5342 = vsel %vm64, %v5326, 0
    %v5345 = vsel %vm64, %v5327, 0
    %5347 = vmatprep.subr.mxu0 0.0
    %5348 = vmatpush1.msra.mxu0 %v5329
    %5349 = vmatprep.subr.mxu0 0.0
    %5350 = vmatpush1.msra.mxu0 %v5330
    %5351 = vmatprep.subr.mxu0 0.0
    %5352 = vmatpush1.msra.mxu0 %v5331
    %5353 = vmatprep.subr.mxu0 0.0
    %5354 = vmatpush1.msra.mxu0 %v5332
    %5355 = vmatprep.subr.mxu0 0.0
    %5356 = vmatpush1.msra.mxu0 0.0
    %5357 = vmatprep.subr.mxu0 0.0
    %5358 = vmatpush1.msra.mxu0 0.0
    %5359 = vmatprep.subr.mxu0 0.0
    %5360 = vmatpush1.msra.mxu0 0.0
    %5361 = vmatprep.subr.mxu0 0.0
    %5362 = vmatpush1.msra.mxu0 0.0
    %5363 = vmatprep.subr.mxu0 0.0
    %5364 = vmatpush1.msra.mxu0 0.0
    %5365 = vmatprep.subr.mxu0 0.0
    %5366 = vmatpush1.msra.mxu0 0.0
    %5367 = vmatprep.subr.mxu0 0.0
    %5368 = vmatpush1.msra.mxu0 0.0
    %5369 = vmatprep.subr.mxu0 0.0
    %5370 = vmatpush1.msra.mxu0 0.0
    %5371 = vmatprep.subr.mxu0 0.0
    %5372 = vmatpush1.msra.mxu0 0.0
    %5373 = vmatprep.subr.mxu0 0.0
    %5374 = vmatpush1.msra.mxu0 0.0
    %5375 = vmatprep.subr.mxu0 0.0
    %5376 = vmatpush1.msra.mxu0 0.0
    %5377 = vmatprep.subr.mxu0 0.0
    %5378 = vmatpush1.msra.mxu0 0.0
    %5379 = vmatprep.subr.mxu0 0.0
    %5380 = vmatpush1.msra.mxu0 0.0
    %5381 = vmatprep.subr.mxu0 0.0
    %5382 = vmatpush1.msra.mxu0 0.0
    %5383 = vmatprep.subr.mxu0 0.0
    %5384 = vmatpush1.msra.mxu0 0.0
    %5385 = vmatprep.subr.mxu0 0.0
    %5386 = vmatpush1.msra.mxu0 0.0
    %5387 = vmatprep.subr.mxu0 0.0
    %5388 = vmatpush1.msra.mxu0 0.0
    %5389 = vmatprep.subr.mxu0 0.0
    %5390 = vmatpush1.msra.mxu0 0.0
    %5391 = vmatprep.subr.mxu0 0.0
    %5392 = vmatpush1.msra.mxu0 0.0
    %5393 = vmatprep.subr.mxu0 0.0
    %5394 = vmatpush1.msra.mxu0 0.0
    %5395 = vmatprep.subr.mxu0 0.0
    %5396 = vmatpush1.msra.mxu0 0.0
    %5397 = vmatprep.subr.mxu0 0.0
    %5398 = vmatpush1.msra.mxu0 0.0
    %5399 = vmatprep.subr.mxu0 0.0
    %5400 = vmatpush1.msra.mxu0 0.0
    %5401 = vmatprep.subr.mxu0 0.0
    %5402 = vmatpush1.msra.mxu0 0.0
    %5403 = vmatprep.subr.mxu0 0.0
    %5404 = vmatpush1.msra.mxu0 0.0
    %5405 = vmatprep.subr.mxu0 0.0
    %5406 = vmatpush1.msra.mxu0 0.0
    %5407 = vmatprep.subr.mxu0 0.0
    %5408 = vmatpush1.msra.mxu0 0.0
    %5409 = vmatprep.subr.mxu0 0.0
    %5410 = vmatpush1.msra.mxu0 0.0
    %5411 = vmatprep.mubr.f32.mxu0 0.0
    %5412 = vmatmul.mubr.f32.gmra.mrb[0].mxu0 %v5342
    %v5413 = vpop.f32.mrb[0].mxu0
    %v5414 = vadd.f32 %v5339, %v5413
    %v5415 = vpop.f32.mrb[0].mxu0
    %5416 = vmatprep.mubr.f32.mxu0 0.0
    %5417 = vmatmul.mubr.f32.gmra.mrb[0].mxu0 %v5345
    %v5418 = vpop.f32.mrb[0].mxu0
    %v5419 = vadd.f32 %v5339, %v5418
    %v5420 = vpop.f32.mrb[0].mxu0
    %5421 = vdwg.mxu0
    %v5422 = vmax.f32 %v5414, 0.0
    %v5423 = vmax.f32 %v5419, 0.0
    %s5424 = scalar_lea.vmem %s10, 256
    %v5425 = vld [vmem:[%s5424] sm:$0xff]
    %v5426 = vld [vmem:[%s5424 + $0x8] sm:$0xff]
    %v5427 = vld [vmem:[%s5424 + $0x10] sm:$0xff]
    %v5428 = vld [vmem:[%s5424 + $0x18] sm:$0xff]
    %v5429 = vld [vmem:[%s5424 + $0x20] sm:$0xff]
    %v5430 = vld [vmem:[%s5424 + $0x28] sm:$0xff]
    %v5431 = vld [vmem:[%s5424 + $0x30] sm:$0xff]
    %v5432 = vld [vmem:[%s5424 + $0x38] sm:$0xff]
    %v5433 = vld [vmem:[%s5424 + $0x40] sm:$0xff]
    %v5434 = vld [vmem:[%s5424 + $0x48] sm:$0xff]
    %v5435 = vld [vmem:[%s5424 + $0x50] sm:$0xff]
    %v5436 = vld [vmem:[%s5424 + $0x58] sm:$0xff]
    %v5437 = vld [vmem:[%s5424 + $0x60] sm:$0xff]
    %v5438 = vld [vmem:[%s5424 + $0x68] sm:$0xff]
    %v5439 = vld [vmem:[%s5424 + $0x70] sm:$0xff]
    %v5440 = vld [vmem:[%s5424 + $0x78] sm:$0xff]
    %5441 = vmatprep.subr.mxu0 0.0
    %5442 = vmatpush1.msra.mxu0 %v5425
    %5443 = vmatprep.subr.mxu0 0.0
    %5444 = vmatpush1.msra.mxu0 %v5426
    %5445 = vmatprep.subr.mxu0 0.0
    %5446 = vmatpush1.msra.mxu0 %v5427
    %5447 = vmatprep.subr.mxu0 0.0
    %5448 = vmatpush1.msra.mxu0 %v5428
    %5449 = vmatprep.subr.mxu0 0.0
    %5450 = vmatpush1.msra.mxu0 %v5429
    %5451 = vmatprep.subr.mxu0 0.0
    %5452 = vmatpush1.msra.mxu0 %v5430
    %5453 = vmatprep.subr.mxu0 0.0
    %5454 = vmatpush1.msra.mxu0 %v5431
    %5455 = vmatprep.subr.mxu0 0.0
    %5456 = vmatpush1.msra.mxu0 %v5432
    %5457 = vmatprep.subr.mxu0 0.0
    %5458 = vmatpush1.msra.mxu0 %v5433
    %5459 = vmatprep.subr.mxu0 0.0
    %5460 = vmatpush1.msra.mxu0 %v5434
    %5461 = vmatprep.subr.mxu0 0.0
    %5462 = vmatpush1.msra.mxu0 %v5435
    %5463 = vmatprep.subr.mxu0 0.0
    %5464 = vmatpush1.msra.mxu0 %v5436
    %5465 = vmatprep.subr.mxu0 0.0
    %5466 = vmatpush1.msra.mxu0 %v5437
    %5467 = vmatprep.subr.mxu0 0.0
    %5468 = vmatpush1.msra.mxu0 %v5438
    %5469 = vmatprep.subr.mxu0 0.0
    %5470 = vmatpush1.msra.mxu0 %v5439
    %5471 = vmatprep.subr.mxu0 0.0
    %5472 = vmatpush1.msra.mxu0 %v5440
    %5473 = vmatprep.subr.mxu0 0.0
    %5474 = vmatpush1.msra.mxu0 0.0
    %5475 = vmatprep.subr.mxu0 0.0
    %5476 = vmatpush1.msra.mxu0 0.0
    %5477 = vmatprep.subr.mxu0 0.0
    %5478 = vmatpush1.msra.mxu0 0.0
    %5479 = vmatprep.subr.mxu0 0.0
    %5480 = vmatpush1.msra.mxu0 0.0
    %5481 = vmatprep.subr.mxu0 0.0
    %5482 = vmatpush1.msra.mxu0 0.0
    %5483 = vmatprep.subr.mxu0 0.0
    %5484 = vmatpush1.msra.mxu0 0.0
    %5485 = vmatprep.subr.mxu0 0.0
    %5486 = vmatpush1.msra.mxu0 0.0
    %5487 = vmatprep.subr.mxu0 0.0
    %5488 = vmatpush1.msra.mxu0 0.0
    %5489 = vmatprep.subr.mxu0 0.0
    %5490 = vmatpush1.msra.mxu0 0.0
    %5491 = vmatprep.subr.mxu0 0.0
    %5492 = vmatpush1.msra.mxu0 0.0
    %5493 = vmatprep.subr.mxu0 0.0
    %5494 = vmatpush1.msra.mxu0 0.0
    %5495 = vmatprep.subr.mxu0 0.0
    %5496 = vmatpush1.msra.mxu0 0.0
    %5497 = vmatprep.subr.mxu0 0.0
    %5498 = vmatpush1.msra.mxu0 0.0
    %5499 = vmatprep.subr.mxu0 0.0
    %5500 = vmatpush1.msra.mxu0 0.0
    %5501 = vmatprep.subr.mxu0 0.0
    %5502 = vmatpush1.msra.mxu0 0.0
    %5503 = vmatprep.subr.mxu0 0.0
    %5504 = vmatpush1.msra.mxu0 0.0
    %5505 = vmatprep.mubr.f32.mxu0 0.0
    %5506 = vmatmul.mubr.f32.gmra.mrb[0].mxu0 %v5422
    %v5507 = vpop.f32.mrb[0].mxu0
    %v5508 = vadd.f32 0.0, %v5507
    %v5509 = vpop.f32.mrb[0].mxu0
    %5510 = vmatprep.mubr.f32.mxu0 0.0
    %5511 = vmatmul.mubr.f32.gmra.mrb[0].mxu0 %v5423
    %v5512 = vpop.f32.mrb[0].mxu0
    %v5513 = vadd.f32 0.0, %v5512
    %v5514 = vpop.f32.mrb[0].mxu0
    %5515 = vdwg.mxu0
    %v5516 = vadd.f32 %v5280, %v5508
    %v5517 = vadd.f32 %v5281, %v5513
    %s5518 = scalar_lea.vmem %s11, 2
    %v5519 = vld [vmem:[%s5518] sm:$0x1]
    %v5521 = vlaneseq
    %v5522 = vshrl.u32 %v5521, 7
    %v5523 = vsub.s32 0, %v5522
    %v5524 = vrot.slane %v5519, %v5523
    %v5526 = vadd.f32 %v5516, %v5524
    %v5527 = vadd.f32 %v5517, %v5524
    %s5528 = scalar_lea.vmem %s1, 3
    %v5529 = vld [vmem:[%s5528] sm:$0x1]
    %s5530 = scalar_lea.vmem %s2, 3
    %v5531 = vld [vmem:[%s5530] sm:$0x1]
    %v5532 = vsel %vm64, %v5526, 0.0
    %5533 = vadd.xlane.f32.xlu0 %v5532
    %v5534 = vpop.xlane.xlu0 %5533
    %v5535 = vsel %vm64, %v5527, 0.0
    %5536 = vadd.xlane.f32.xlu0 %v5535
    %v5537 = vpop.xlane.xlu0 %5536
    %v5538 = vmul.f32 %v5534, %v71
    %v5539 = vmul.f32 %v5537, %v71
    %v5540 = vsub.f32 %v5526, %v5538
    %v5541 = vsub.f32 %v5527, %v5539
    %v5542 = vmul.f32 %v5540, %v5540
    %v5543 = vmul.f32 %v5541, %v5541
    %v5544 = vsel %vm64, %v5542, 0.0
    %5545 = vadd.xlane.f32.xlu0 %v5544
    %v5546 = vpop.xlane.xlu0 %5545
    %v5547 = vsel %vm64, %v5543, 0.0
    %5548 = vadd.xlane.f32.xlu0 %v5547
    %v5549 = vpop.xlane.xlu0 %5548
    %v5550 = vmul.f32 %v5546, %v71
    %v5551 = vmul.f32 %v5549, %v71
    %v5552 = vadd.f32 %v5550, 1e-05
    %v5553 = vadd.f32 %v5551, 1e-05
    %v5554 = vrsqrt.pop %v5552
    %v5555 = vrsqrt.pop %v5553
    %v5556 = vmul.f32 %v5540, %v5554
    %v5557 = vmul.f32 %v5541, %v5555
    %v5559 = vlaneseq
    %v5560 = vshrl.u32 %v5559, 7
    %v5561 = vsub.s32 0, %v5560
    %v5562 = vrot.slane %v5529, %v5561
    %v5564 = vmul.f32 %v5556, %v5562
    %v5565 = vmul.f32 %v5557, %v5562
    %v5567 = vlaneseq
    %v5568 = vshrl.u32 %v5567, 7
    %v5569 = vsub.s32 0, %v5568
    %v5570 = vrot.slane %v5531, %v5569
    %v5572 = vadd.f32 %v5564, %v5570
    %v5573 = vadd.f32 %v5565, %v5570
    %s5574 = scalar_lea.vmem %s3, 96
    %v5575 = vld [vmem:[%s5574] sm:$0xff]
    %v5576 = vld [vmem:[%s5574 + $0x8] sm:$0xff]
    %v5577 = vld [vmem:[%s5574 + $0x10] sm:$0xff]
    %v5578 = vld [vmem:[%s5574 + $0x18] sm:$0xff]
    %v5580 = vsel %vm64, %v5572, 0
    %v5583 = vsel %vm64, %v5573, 0
    %5585 = vmatprep.subr.mxu0 0.0
    %5586 = vmatpush1.msra.mxu0 %v5575
    %5587 = vmatprep.subr.mxu0 0.0
    %5588 = vmatpush1.msra.mxu0 %v5576
    %5589 = vmatprep.subr.mxu0 0.0
    %5590 = vmatpush1.msra.mxu0 %v5577
    %5591 = vmatprep.subr.mxu0 0.0
    %5592 = vmatpush1.msra.mxu0 %v5578
    %5593 = vmatprep.subr.mxu0 0.0
    %5594 = vmatpush1.msra.mxu0 0.0
    %5595 = vmatprep.subr.mxu0 0.0
    %5596 = vmatpush1.msra.mxu0 0.0
    %5597 = vmatprep.subr.mxu0 0.0
    %5598 = vmatpush1.msra.mxu0 0.0
    %5599 = vmatprep.subr.mxu0 0.0
    %5600 = vmatpush1.msra.mxu0 0.0
    %5601 = vmatprep.subr.mxu0 0.0
    %5602 = vmatpush1.msra.mxu0 0.0
    %5603 = vmatprep.subr.mxu0 0.0
    %5604 = vmatpush1.msra.mxu0 0.0
    %5605 = vmatprep.subr.mxu0 0.0
    %5606 = vmatpush1.msra.mxu0 0.0
    %5607 = vmatprep.subr.mxu0 0.0
    %5608 = vmatpush1.msra.mxu0 0.0
    %5609 = vmatprep.subr.mxu0 0.0
    %5610 = vmatpush1.msra.mxu0 0.0
    %5611 = vmatprep.subr.mxu0 0.0
    %5612 = vmatpush1.msra.mxu0 0.0
    %5613 = vmatprep.subr.mxu0 0.0
    %5614 = vmatpush1.msra.mxu0 0.0
    %5615 = vmatprep.subr.mxu0 0.0
    %5616 = vmatpush1.msra.mxu0 0.0
    %5617 = vmatprep.subr.mxu0 0.0
    %5618 = vmatpush1.msra.mxu0 0.0
    %5619 = vmatprep.subr.mxu0 0.0
    %5620 = vmatpush1.msra.mxu0 0.0
    %5621 = vmatprep.subr.mxu0 0.0
    %5622 = vmatpush1.msra.mxu0 0.0
    %5623 = vmatprep.subr.mxu0 0.0
    %5624 = vmatpush1.msra.mxu0 0.0
    %5625 = vmatprep.subr.mxu0 0.0
    %5626 = vmatpush1.msra.mxu0 0.0
    %5627 = vmatprep.subr.mxu0 0.0
    %5628 = vmatpush1.msra.mxu0 0.0
    %5629 = vmatprep.subr.mxu0 0.0
    %5630 = vmatpush1.msra.mxu0 0.0
    %5631 = vmatprep.subr.mxu0 0.0
    %5632 = vmatpush1.msra.mxu0 0.0
    %5633 = vmatprep.subr.mxu0 0.0
    %5634 = vmatpush1.msra.mxu0 0.0
    %5635 = vmatprep.subr.mxu0 0.0
    %5636 = vmatpush1.msra.mxu0 0.0
    %5637 = vmatprep.subr.mxu0 0.0
    %5638 = vmatpush1.msra.mxu0 0.0
    %5639 = vmatprep.subr.mxu0 0.0
    %5640 = vmatpush1.msra.mxu0 0.0
    %5641 = vmatprep.subr.mxu0 0.0
    %5642 = vmatpush1.msra.mxu0 0.0
    %5643 = vmatprep.subr.mxu0 0.0
    %5644 = vmatpush1.msra.mxu0 0.0
    %5645 = vmatprep.subr.mxu0 0.0
    %5646 = vmatpush1.msra.mxu0 0.0
    %5647 = vmatprep.subr.mxu0 0.0
    %5648 = vmatpush1.msra.mxu0 0.0
    %5649 = vmatprep.mubr.f32.mxu0 0.0
    %5650 = vmatmul.mubr.f32.gmra.mrb[0].mxu0 %v5580
    %v5651 = vpop.f32.mrb[0].mxu0
    %v5652 = vadd.f32 0.0, %v5651
    %v5653 = vpop.f32.mrb[0].mxu0
    %5654 = vmatprep.mubr.f32.mxu0 0.0
    %5655 = vmatmul.mubr.f32.gmra.mrb[0].mxu0 %v5583
    %v5656 = vpop.f32.mrb[0].mxu0
    %v5657 = vadd.f32 0.0, %v5656
    %v5658 = vpop.f32.mrb[0].mxu0
    %5659 = vdwg.mxu0
    %5661 = vrot.lane.b32.xlu0 %v5652, 96
    %v5662 = vpop.permute.xlu0 %5661
    %v5663 = vsel %vm196, %v5652, 0
    %v5665 = vsel %vm196, %v5662, 0
    %5667 = vmatprep.subr.mxu0 0.0
    %5668 = vmatpush1.xpose.msra.mxu0 %v5665
    %5669 = vmatprep.subr.mxu0 0.0
    %5670 = vmatpush1.xpose.msra.mxu0 0.0
    %5671 = vmatprep.subr.mxu0 0.0
    %5672 = vmatpush1.xpose.msra.mxu0 0.0
    %5673 = vmatprep.subr.mxu0 0.0
    %5674 = vmatpush1.xpose.msra.mxu0 0.0
    %5675 = vmatprep.subr.mxu0 0.0
    %5676 = vmatpush1.xpose.msra.mxu0 0.0
    %5677 = vmatprep.subr.mxu0 0.0
    %5678 = vmatpush1.xpose.msra.mxu0 0.0
    %5679 = vmatprep.subr.mxu0 0.0
    %5680 = vmatpush1.xpose.msra.mxu0 0.0
    %5681 = vmatprep.subr.mxu0 0.0
    %5682 = vmatpush1.xpose.msra.mxu0 0.0
    %5683 = vmatprep.subr.mxu0 0.0
    %5684 = vmatpush1.xpose.msra.mxu0 0.0
    %5685 = vmatprep.subr.mxu0 0.0
    %5686 = vmatpush1.xpose.msra.mxu0 0.0
    %5687 = vmatprep.subr.mxu0 0.0
    %5688 = vmatpush1.xpose.msra.mxu0 0.0
    %5689 = vmatprep.subr.mxu0 0.0
    %5690 = vmatpush1.xpose.msra.mxu0 0.0
    %5691 = vmatprep.subr.mxu0 0.0
    %5692 = vmatpush1.xpose.msra.mxu0 0.0
    %5693 = vmatprep.subr.mxu0 0.0
    %5694 = vmatpush1.xpose.msra.mxu0 0.0
    %5695 = vmatprep.subr.mxu0 0.0
    %5696 = vmatpush1.xpose.msra.mxu0 0.0
    %5697 = vmatprep.subr.mxu0 0.0
    %5698 = vmatpush1.xpose.msra.mxu0 0.0
    %5699 = vmatprep.subr.mxu0 0.0
    %5700 = vmatpush1.xpose.msra.mxu0 0.0
    %5701 = vmatprep.subr.mxu0 0.0
    %5702 = vmatpush1.xpose.msra.mxu0 0.0
    %5703 = vmatprep.subr.mxu0 0.0
    %5704 = vmatpush1.xpose.msra.mxu0 0.0
    %5705 = vmatprep.subr.mxu0 0.0
    %5706 = vmatpush1.xpose.msra.mxu0 0.0
    %5707 = vmatprep.subr.mxu0 0.0
    %5708 = vmatpush1.xpose.msra.mxu0 0.0
    %5709 = vmatprep.subr.mxu0 0.0
    %5710 = vmatpush1.xpose.msra.mxu0 0.0
    %5711 = vmatprep.subr.mxu0 0.0
    %5712 = vmatpush1.xpose.msra.mxu0 0.0
    %5713 = vmatprep.subr.mxu0 0.0
    %5714 = vmatpush1.xpose.msra.mxu0 0.0
    %5715 = vmatprep.subr.mxu0 0.0
    %5716 = vmatpush1.xpose.msra.mxu0 0.0
    %5717 = vmatprep.subr.mxu0 0.0
    %5718 = vmatpush1.xpose.msra.mxu0 0.0
    %5719 = vmatprep.subr.mxu0 0.0
    %5720 = vmatpush1.xpose.msra.mxu0 0.0
    %5721 = vmatprep.subr.mxu0 0.0
    %5722 = vmatpush1.xpose.msra.mxu0 0.0
    %5723 = vmatprep.subr.mxu0 0.0
    %5724 = vmatpush1.xpose.msra.mxu0 0.0
    %5725 = vmatprep.subr.mxu0 0.0
    %5726 = vmatpush1.xpose.msra.mxu0 0.0
    %5727 = vmatprep.subr.mxu0 0.0
    %5728 = vmatpush1.xpose.msra.mxu0 0.0
    %5729 = vmatprep.subr.mxu0 0.0
    %5730 = vmatpush1.xpose.msra.mxu0 0.0
    %5731 = vmatprep.mubr.f32.mxu0 0.0
    %5732 = vmatmul.mubr.f32.gmra.mrb[0].mxu0 %v5663
    %v5733 = vpop.f32.mrb[0].mxu0
    %v5734 = vadd.f32 %v59, %v5733
    %v5735 = vpop.f32.mrb[0].mxu0
    %5736 = vdwg.mxu0
    %5738 = vrot.lane.b32.xlu0 %v5657, 96
    %v5739 = vpop.permute.xlu0 %5738
    %v5740 = vsel %vm196, %v5657, 0
    %v5742 = vsel %vm196, %v5739, 0
    %5744 = vmatprep.subr.mxu0 0.0
    %5745 = vmatpush1.xpose.msra.mxu0 %v5742
    %5746 = vmatprep.subr.mxu0 0.0
    %5747 = vmatpush1.xpose.msra.mxu0 0.0
    %5748 = vmatprep.subr.mxu0 0.0
    %5749 = vmatpush1.xpose.msra.mxu0 0.0
    %5750 = vmatprep.subr.mxu0 0.0
    %5751 = vmatpush1.xpose.msra.mxu0 0.0
    %5752 = vmatprep.subr.mxu0 0.0
    %5753 = vmatpush1.xpose.msra.mxu0 0.0
    %5754 = vmatprep.subr.mxu0 0.0
    %5755 = vmatpush1.xpose.msra.mxu0 0.0
    %5756 = vmatprep.subr.mxu0 0.0
    %5757 = vmatpush1.xpose.msra.mxu0 0.0
    %5758 = vmatprep.subr.mxu0 0.0
    %5759 = vmatpush1.xpose.msra.mxu0 0.0
    %5760 = vmatprep.subr.mxu0 0.0
    %5761 = vmatpush1.xpose.msra.mxu0 0.0
    %5762 = vmatprep.subr.mxu0 0.0
    %5763 = vmatpush1.xpose.msra.mxu0 0.0
    %5764 = vmatprep.subr.mxu0 0.0
    %5765 = vmatpush1.xpose.msra.mxu0 0.0
    %5766 = vmatprep.subr.mxu0 0.0
    %5767 = vmatpush1.xpose.msra.mxu0 0.0
    %5768 = vmatprep.subr.mxu0 0.0
    %5769 = vmatpush1.xpose.msra.mxu0 0.0
    %5770 = vmatprep.subr.mxu0 0.0
    %5771 = vmatpush1.xpose.msra.mxu0 0.0
    %5772 = vmatprep.subr.mxu0 0.0
    %5773 = vmatpush1.xpose.msra.mxu0 0.0
    %5774 = vmatprep.subr.mxu0 0.0
    %5775 = vmatpush1.xpose.msra.mxu0 0.0
    %5776 = vmatprep.subr.mxu0 0.0
    %5777 = vmatpush1.xpose.msra.mxu0 0.0
    %5778 = vmatprep.subr.mxu0 0.0
    %5779 = vmatpush1.xpose.msra.mxu0 0.0
    %5780 = vmatprep.subr.mxu0 0.0
    %5781 = vmatpush1.xpose.msra.mxu0 0.0
    %5782 = vmatprep.subr.mxu0 0.0
    %5783 = vmatpush1.xpose.msra.mxu0 0.0
    %5784 = vmatprep.subr.mxu0 0.0
    %5785 = vmatpush1.xpose.msra.mxu0 0.0
    %5786 = vmatprep.subr.mxu0 0.0
    %5787 = vmatpush1.xpose.msra.mxu0 0.0
    %5788 = vmatprep.subr.mxu0 0.0
    %5789 = vmatpush1.xpose.msra.mxu0 0.0
    %5790 = vmatprep.subr.mxu0 0.0
    %5791 = vmatpush1.xpose.msra.mxu0 0.0
    %5792 = vmatprep.subr.mxu0 0.0
    %5793 = vmatpush1.xpose.msra.mxu0 0.0
    %5794 = vmatprep.subr.mxu0 0.0
    %5795 = vmatpush1.xpose.msra.mxu0 0.0
    %5796 = vmatprep.subr.mxu0 0.0
    %5797 = vmatpush1.xpose.msra.mxu0 0.0
    %5798 = vmatprep.subr.mxu0 0.0
    %5799 = vmatpush1.xpose.msra.mxu0 0.0
    %5800 = vmatprep.subr.mxu0 0.0
    %5801 = vmatpush1.xpose.msra.mxu0 0.0
    %5802 = vmatprep.subr.mxu0 0.0
    %5803 = vmatpush1.xpose.msra.mxu0 0.0
    %5804 = vmatprep.subr.mxu0 0.0
    %5805 = vmatpush1.xpose.msra.mxu0 0.0
    %5806 = vmatprep.subr.mxu0 0.0
    %5807 = vmatpush1.xpose.msra.mxu0 0.0
    %5808 = vmatprep.mubr.f32.mxu0 0.0
    %5809 = vmatmul.mubr.f32.gmra.mrb[0].mxu0 %v5740
    %v5810 = vpop.f32.mrb[0].mxu0
    %v5811 = vadd.f32 %v59, %v5810
    %v5812 = vpop.f32.mrb[0].mxu0
    %5813 = vdwg.mxu0
    %v5814 = vsel %vm196, %v5734, -inf
    %5815 = vmax.xlane.f32.xlu0 %v5814
    %v5816 = vpop.xlane.xlu0 %5815
    %v5817 = vsel %vm196, %v5811, -inf
    %5818 = vmax.xlane.f32.xlu0 %v5817
    %v5819 = vpop.xlane.xlu0 %5818
    %v5820 = vsub.f32 %v5734, %v5816
    %v5821 = vsub.f32 %v5811, %v5819
    %v5822 = vmul.f32 %v5820, 1.442695
    %v5823 = vpow.pop %v5822
    %v5824 = vmul.f32 %v5821, 1.442695
    %v5825 = vpow.pop %v5824
    %v5826 = vsel %vm196, %v5823, 0.0
    %5827 = vadd.xlane.f32.xlu0 %v5826
    %v5828 = vpop.xlane.xlu0 %5827
    %v5829 = vsel %vm196, %v5825, 0.0
    %5830 = vadd.xlane.f32.xlu0 %v5829
    %v5831 = vpop.xlane.xlu0 %5830
    %v5832 = vrcp.pop %v5828
    %v5833 = vrcp.pop %v5831
    %v5834 = vmul.f32 %v5823, %v5832
    %v5835 = vmul.f32 %v5825, %v5833
    %5836 = vrot.lane.b32.xlu0 %v5652, 64
    %v5837 = vpop.permute.xlu0 %5836
    %v5840 = vsel %vm196, %v5834, 0
    %5842 = vmatprep.subr.mxu0 0.0
    %5843 = vmatpush1.msra.mxu0 %v5837
    %5844 = vmatprep.subr.mxu0 0.0
    %5845 = vmatpush1.msra.mxu0 0.0
    %5846 = vmatprep.subr.mxu0 0.0
    %5847 = vmatpush1.msra.mxu0 0.0
    %5848 = vmatprep.subr.mxu0 0.0
    %5849 = vmatpush1.msra.mxu0 0.0
    %5850 = vmatprep.subr.mxu0 0.0
    %5851 = vmatpush1.msra.mxu0 0.0
    %5852 = vmatprep.subr.mxu0 0.0
    %5853 = vmatpush1.msra.mxu0 0.0
    %5854 = vmatprep.subr.mxu0 0.0
    %5855 = vmatpush1.msra.mxu0 0.0
    %5856 = vmatprep.subr.mxu0 0.0
    %5857 = vmatpush1.msra.mxu0 0.0
    %5858 = vmatprep.subr.mxu0 0.0
    %5859 = vmatpush1.msra.mxu0 0.0
    %5860 = vmatprep.subr.mxu0 0.0
    %5861 = vmatpush1.msra.mxu0 0.0
    %5862 = vmatprep.subr.mxu0 0.0
    %5863 = vmatpush1.msra.mxu0 0.0
    %5864 = vmatprep.subr.mxu0 0.0
    %5865 = vmatpush1.msra.mxu0 0.0
    %5866 = vmatprep.subr.mxu0 0.0
    %5867 = vmatpush1.msra.mxu0 0.0
    %5868 = vmatprep.subr.mxu0 0.0
    %5869 = vmatpush1.msra.mxu0 0.0
    %5870 = vmatprep.subr.mxu0 0.0
    %5871 = vmatpush1.msra.mxu0 0.0
    %5872 = vmatprep.subr.mxu0 0.0
    %5873 = vmatpush1.msra.mxu0 0.0
    %5874 = vmatprep.subr.mxu0 0.0
    %5875 = vmatpush1.msra.mxu0 0.0
    %5876 = vmatprep.subr.mxu0 0.0
    %5877 = vmatpush1.msra.mxu0 0.0
    %5878 = vmatprep.subr.mxu0 0.0
    %5879 = vmatpush1.msra.mxu0 0.0
    %5880 = vmatprep.subr.mxu0 0.0
    %5881 = vmatpush1.msra.mxu0 0.0
    %5882 = vmatprep.subr.mxu0 0.0
    %5883 = vmatpush1.msra.mxu0 0.0
    %5884 = vmatprep.subr.mxu0 0.0
    %5885 = vmatpush1.msra.mxu0 0.0
    %5886 = vmatprep.subr.mxu0 0.0
    %5887 = vmatpush1.msra.mxu0 0.0
    %5888 = vmatprep.subr.mxu0 0.0
    %5889 = vmatpush1.msra.mxu0 0.0
    %5890 = vmatprep.subr.mxu0 0.0
    %5891 = vmatpush1.msra.mxu0 0.0
    %5892 = vmatprep.subr.mxu0 0.0
    %5893 = vmatpush1.msra.mxu0 0.0
    %5894 = vmatprep.subr.mxu0 0.0
    %5895 = vmatpush1.msra.mxu0 0.0
    %5896 = vmatprep.subr.mxu0 0.0
    %5897 = vmatpush1.msra.mxu0 0.0
    %5898 = vmatprep.subr.mxu0 0.0
    %5899 = vmatpush1.msra.mxu0 0.0
    %5900 = vmatprep.subr.mxu0 0.0
    %5901 = vmatpush1.msra.mxu0 0.0
    %5902 = vmatprep.subr.mxu0 0.0
    %5903 = vmatpush1.msra.mxu0 0.0
    %5904 = vmatprep.subr.mxu0 0.0
    %5905 = vmatpush1.msra.mxu0 0.0
    %5906 = vmatprep.mubr.f32.mxu0 0.0
    %5907 = vmatmul.mubr.f32.gmra.mrb[0].mxu0 %v5840
    %v5908 = vpop.f32.mrb[0].mxu0
    %v5909 = vadd.f32 0.0, %v5908
    %v5910 = vpop.f32.mrb[0].mxu0
    %5911 = vdwg.mxu0
    %5912 = vrot.lane.b32.xlu0 %v5657, 64
    %v5913 = vpop.permute.xlu0 %5912
    %v5916 = vsel %vm196, %v5835, 0
    %5918 = vmatprep.subr.mxu0 0.0
    %5919 = vmatpush1.msra.mxu0 %v5913
    %5920 = vmatprep.subr.mxu0 0.0
    %5921 = vmatpush1.msra.mxu0 0.0
    %5922 = vmatprep.subr.mxu0 0.0
    %5923 = vmatpush1.msra.mxu0 0.0
    %5924 = vmatprep.subr.mxu0 0.0
    %5925 = vmatpush1.msra.mxu0 0.0
    %5926 = vmatprep.subr.mxu0 0.0
    %5927 = vmatpush1.msra.mxu0 0.0
    %5928 = vmatprep.subr.mxu0 0.0
    %5929 = vmatpush1.msra.mxu0 0.0
    %5930 = vmatprep.subr.mxu0 0.0
    %5931 = vmatpush1.msra.mxu0 0.0
    %5932 = vmatprep.subr.mxu0 0.0
    %5933 = vmatpush1.msra.mxu0 0.0
    %5934 = vmatprep.subr.mxu0 0.0
    %5935 = vmatpush1.msra.mxu0 0.0
    %5936 = vmatprep.subr.mxu0 0.0
    %5937 = vmatpush1.msra.mxu0 0.0
    %5938 = vmatprep.subr.mxu0 0.0
    %5939 = vmatpush1.msra.mxu0 0.0
    %5940 = vmatprep.subr.mxu0 0.0
    %5941 = vmatpush1.msra.mxu0 0.0
    %5942 = vmatprep.subr.mxu0 0.0
    %5943 = vmatpush1.msra.mxu0 0.0
    %5944 = vmatprep.subr.mxu0 0.0
    %5945 = vmatpush1.msra.mxu0 0.0
    %5946 = vmatprep.subr.mxu0 0.0
    %5947 = vmatpush1.msra.mxu0 0.0
    %5948 = vmatprep.subr.mxu0 0.0
    %5949 = vmatpush1.msra.mxu0 0.0
    %5950 = vmatprep.subr.mxu0 0.0
    %5951 = vmatpush1.msra.mxu0 0.0
    %5952 = vmatprep.subr.mxu0 0.0
    %5953 = vmatpush1.msra.mxu0 0.0
    %5954 = vmatprep.subr.mxu0 0.0
    %5955 = vmatpush1.msra.mxu0 0.0
    %5956 = vmatprep.subr.mxu0 0.0
    %5957 = vmatpush1.msra.mxu0 0.0
    %5958 = vmatprep.subr.mxu0 0.0
    %5959 = vmatpush1.msra.mxu0 0.0
    %5960 = vmatprep.subr.mxu0 0.0
    %5961 = vmatpush1.msra.mxu0 0.0
    %5962 = vmatprep.subr.mxu0 0.0
    %5963 = vmatpush1.msra.mxu0 0.0
    %5964 = vmatprep.subr.mxu0 0.0
    %5965 = vmatpush1.msra.mxu0 0.0
    %5966 = vmatprep.subr.mxu0 0.0
    %5967 = vmatpush1.msra.mxu0 0.0
    %5968 = vmatprep.subr.mxu0 0.0
    %5969 = vmatpush1.msra.mxu0 0.0
    %5970 = vmatprep.subr.mxu0 0.0
    %5971 = vmatpush1.msra.mxu0 0.0
    %5972 = vmatprep.subr.mxu0 0.0
    %5973 = vmatpush1.msra.mxu0 0.0
    %5974 = vmatprep.subr.mxu0 0.0
    %5975 = vmatpush1.msra.mxu0 0.0
    %5976 = vmatprep.subr.mxu0 0.0
    %5977 = vmatpush1.msra.mxu0 0.0
    %5978 = vmatprep.subr.mxu0 0.0
    %5979 = vmatpush1.msra.mxu0 0.0
    %5980 = vmatprep.subr.mxu0 0.0
    %5981 = vmatpush1.msra.mxu0 0.0
    %5982 = vmatprep.mubr.f32.mxu0 0.0
    %5983 = vmatmul.mubr.f32.gmra.mrb[0].mxu0 %v5916
    %v5984 = vpop.f32.mrb[0].mxu0
    %v5985 = vadd.f32 0.0, %v5984
    %v5986 = vpop.f32.mrb[0].mxu0
    %5987 = vdwg.mxu0
    %5988 = vrot.lane.b32.xlu0 %v5652, 120
    %v5989 = vpop.permute.xlu0 %5988
    %5990 = vrot.lane.b32.xlu0 %v5652, 88
    %v5991 = vpop.permute.xlu0 %5990
    %v5992 = vsel %vm196, %v5989, 0
    %v5994 = vsel %vm196, %v5991, 0
    %5996 = vmatprep.subr.mxu0 0.0
    %5997 = vmatpush1.xpose.msra.mxu0 %v5994
    %5998 = vmatprep.subr.mxu0 0.0
    %5999 = vmatpush1.xpose.msra.mxu0 0.0
    %6000 = vmatprep.subr.mxu0 0.0
    %6001 = vmatpush1.xpose.msra.mxu0 0.0
    %6002 = vmatprep.subr.mxu0 0.0
    %6003 = vmatpush1.xpose.msra.mxu0 0.0
    %6004 = vmatprep.subr.mxu0 0.0
    %6005 = vmatpush1.xpose.msra.mxu0 0.0
    %6006 = vmatprep.subr.mxu0 0.0
    %6007 = vmatpush1.xpose.msra.mxu0 0.0
    %6008 = vmatprep.subr.mxu0 0.0
    %6009 = vmatpush1.xpose.msra.mxu0 0.0
    %6010 = vmatprep.subr.mxu0 0.0
    %6011 = vmatpush1.xpose.msra.mxu0 0.0
    %6012 = vmatprep.subr.mxu0 0.0
    %6013 = vmatpush1.xpose.msra.mxu0 0.0
    %6014 = vmatprep.subr.mxu0 0.0
    %6015 = vmatpush1.xpose.msra.mxu0 0.0
    %6016 = vmatprep.subr.mxu0 0.0
    %6017 = vmatpush1.xpose.msra.mxu0 0.0
    %6018 = vmatprep.subr.mxu0 0.0
    %6019 = vmatpush1.xpose.msra.mxu0 0.0
    %6020 = vmatprep.subr.mxu0 0.0
    %6021 = vmatpush1.xpose.msra.mxu0 0.0
    %6022 = vmatprep.subr.mxu0 0.0
    %6023 = vmatpush1.xpose.msra.mxu0 0.0
    %6024 = vmatprep.subr.mxu0 0.0
    %6025 = vmatpush1.xpose.msra.mxu0 0.0
    %6026 = vmatprep.subr.mxu0 0.0
    %6027 = vmatpush1.xpose.msra.mxu0 0.0
    %6028 = vmatprep.subr.mxu0 0.0
    %6029 = vmatpush1.xpose.msra.mxu0 0.0
    %6030 = vmatprep.subr.mxu0 0.0
    %6031 = vmatpush1.xpose.msra.mxu0 0.0
    %6032 = vmatprep.subr.mxu0 0.0
    %6033 = vmatpush1.xpose.msra.mxu0 0.0
    %6034 = vmatprep.subr.mxu0 0.0
    %6035 = vmatpush1.xpose.msra.mxu0 0.0
    %6036 = vmatprep.subr.mxu0 0.0
    %6037 = vmatpush1.xpose.msra.mxu0 0.0
    %6038 = vmatprep.subr.mxu0 0.0
    %6039 = vmatpush1.xpose.msra.mxu0 0.0
    %6040 = vmatprep.subr.mxu0 0.0
    %6041 = vmatpush1.xpose.msra.mxu0 0.0
    %6042 = vmatprep.subr.mxu0 0.0
    %6043 = vmatpush1.xpose.msra.mxu0 0.0
    %6044 = vmatprep.subr.mxu0 0.0
    %6045 = vmatpush1.xpose.msra.mxu0 0.0
    %6046 = vmatprep.subr.mxu0 0.0
    %6047 = vmatpush1.xpose.msra.mxu0 0.0
    %6048 = vmatprep.subr.mxu0 0.0
    %6049 = vmatpush1.xpose.msra.mxu0 0.0
    %6050 = vmatprep.subr.mxu0 0.0
    %6051 = vmatpush1.xpose.msra.mxu0 0.0
    %6052 = vmatprep.subr.mxu0 0.0
    %6053 = vmatpush1.xpose.msra.mxu0 0.0
    %6054 = vmatprep.subr.mxu0 0.0
    %6055 = vmatpush1.xpose.msra.mxu0 0.0
    %6056 = vmatprep.subr.mxu0 0.0
    %6057 = vmatpush1.xpose.msra.mxu0 0.0
    %6058 = vmatprep.subr.mxu0 0.0
    %6059 = vmatpush1.xpose.msra.mxu0 0.0
    %6060 = vmatprep.mubr.f32.mxu0 0.0
    %6061 = vmatmul.mubr.f32.gmra.mrb[0].mxu0 %v5992
    %v6062 = vpop.f32.mrb[0].mxu0
    %v6063 = vadd.f32 %v59, %v6062
    %v6064 = vpop.f32.mrb[0].mxu0
    %6065 = vdwg.mxu0
    %6066 = vrot.lane.b32.xlu0 %v5657, 120
    %v6067 = vpop.permute.xlu0 %6066
    %6068 = vrot.lane.b32.xlu0 %v5657, 88
    %v6069 = vpop.permute.xlu0 %6068
    %v6070 = vsel %vm196, %v6067, 0
    %v6072 = vsel %vm196, %v6069, 0
    %6074 = vmatprep.subr.mxu0 0.0
    %6075 = vmatpush1.xpose.msra.mxu0 %v6072
    %6076 = vmatprep.subr.mxu0 0.0
    %6077 = vmatpush1.xpose.msra.mxu0 0.0
    %6078 = vmatprep.subr.mxu0 0.0
    %6079 = vmatpush1.xpose.msra.mxu0 0.0
    %6080 = vmatprep.subr.mxu0 0.0
    %6081 = vmatpush1.xpose.msra.mxu0 0.0
    %6082 = vmatprep.subr.mxu0 0.0
    %6083 = vmatpush1.xpose.msra.mxu0 0.0
    %6084 = vmatprep.subr.mxu0 0.0
    %6085 = vmatpush1.xpose.msra.mxu0 0.0
    %6086 = vmatprep.subr.mxu0 0.0
    %6087 = vmatpush1.xpose.msra.mxu0 0.0
    %6088 = vmatprep.subr.mxu0 0.0
    %6089 = vmatpush1.xpose.msra.mxu0 0.0
    %6090 = vmatprep.subr.mxu0 0.0
    %6091 = vmatpush1.xpose.msra.mxu0 0.0
    %6092 = vmatprep.subr.mxu0 0.0
    %6093 = vmatpush1.xpose.msra.mxu0 0.0
    %6094 = vmatprep.subr.mxu0 0.0
    %6095 = vmatpush1.xpose.msra.mxu0 0.0
    %6096 = vmatprep.subr.mxu0 0.0
    %6097 = vmatpush1.xpose.msra.mxu0 0.0
    %6098 = vmatprep.subr.mxu0 0.0
    %6099 = vmatpush1.xpose.msra.mxu0 0.0
    %6100 = vmatprep.subr.mxu0 0.0
    %6101 = vmatpush1.xpose.msra.mxu0 0.0
    %6102 = vmatprep.subr.mxu0 0.0
    %6103 = vmatpush1.xpose.msra.mxu0 0.0
    %6104 = vmatprep.subr.mxu0 0.0
    %6105 = vmatpush1.xpose.msra.mxu0 0.0
    %6106 = vmatprep.subr.mxu0 0.0
    %6107 = vmatpush1.xpose.msra.mxu0 0.0
    %6108 = vmatprep.subr.mxu0 0.0
    %6109 = vmatpush1.xpose.msra.mxu0 0.0
    %6110 = vmatprep.subr.mxu0 0.0
    %6111 = vmatpush1.xpose.msra.mxu0 0.0
    %6112 = vmatprep.subr.mxu0 0.0
    %6113 = vmatpush1.xpose.msra.mxu0 0.0
    %6114 = vmatprep.subr.mxu0 0.0
    %6115 = vmatpush1.xpose.msra.mxu0 0.0
    %6116 = vmatprep.subr.mxu0 0.0
    %6117 = vmatpush1.xpose.msra.mxu0 0.0
    %6118 = vmatprep.subr.mxu0 0.0
    %6119 = vmatpush1.xpose.msra.mxu0 0.0
    %6120 = vmatprep.subr.mxu0 0.0
    %6121 = vmatpush1.xpose.msra.mxu0 0.0
    %6122 = vmatprep.subr.mxu0 0.0
    %6123 = vmatpush1.xpose.msra.mxu0 0.0
    %6124 = vmatprep.subr.mxu0 0.0
    %6125 = vmatpush1.xpose.msra.mxu0 0.0
    %6126 = vmatprep.subr.mxu0 0.0
    %6127 = vmatpush1.xpose.msra.mxu0 0.0
    %6128 = vmatprep.subr.mxu0 0.0
    %6129 = vmatpush1.xpose.msra.mxu0 0.0
    %6130 = vmatprep.subr.mxu0 0.0
    %6131 = vmatpush1.xpose.msra.mxu0 0.0
    %6132 = vmatprep.subr.mxu0 0.0
    %6133 = vmatpush1.xpose.msra.mxu0 0.0
    %6134 = vmatprep.subr.mxu0 0.0
    %6135 = vmatpush1.xpose.msra.mxu0 0.0
    %6136 = vmatprep.subr.mxu0 0.0
    %6137 = vmatpush1.xpose.msra.mxu0 0.0
    %6138 = vmatprep.mubr.f32.mxu0 0.0
    %6139 = vmatmul.mubr.f32.gmra.mrb[0].mxu0 %v6070
    %v6140 = vpop.f32.mrb[0].mxu0
    %v6141 = vadd.f32 %v59, %v6140
    %v6142 = vpop.f32.mrb[0].mxu0
    %6143 = vdwg.mxu0
    %v6144 = vsel %vm196, %v6063, -inf
    %6145 = vmax.xlane.f32.xlu0 %v6144
    %v6146 = vpop.xlane.xlu0 %6145
    %v6147 = vsel %vm196, %v6141, -inf
    %6148 = vmax.xlane.f32.xlu0 %v6147
    %v6149 = vpop.xlane.xlu0 %6148
    %v6150 = vsub.f32 %v6063, %v6146
    %v6151 = vsub.f32 %v6141, %v6149
    %v6152 = vmul.f32 %v6150, 1.442695
    %v6153 = vpow.pop %v6152
    %v6154 = vmul.f32 %v6151, 1.442695
    %v6155 = vpow.pop %v6154
    %v6156 = vsel %vm196, %v6153, 0.0
    %6157 = vadd.xlane.f32.xlu0 %v6156
    %v6158 = vpop.xlane.xlu0 %6157
    %v6159 = vsel %vm196, %v6155, 0.0
    %6160 = vadd.xlane.f32.xlu0 %v6159
    %v6161 = vpop.xlane.xlu0 %6160
    %v6162 = vrcp.pop %v6158
    %v6163 = vrcp.pop %v6161
    %v6164 = vmul.f32 %v6153, %v6162
    %v6165 = vmul.f32 %v6155, %v6163
    %6166 = vrot.lane.b32.xlu0 %v5652, 56
    %v6167 = vpop.permute.xlu0 %6166
    %v6170 = vsel %vm196, %v6164, 0
    %6172 = vmatprep.subr.mxu0 0.0
    %6173 = vmatpush1.msra.mxu0 %v6167
    %6174 = vmatprep.subr.mxu0 0.0
    %6175 = vmatpush1.msra.mxu0 0.0
    %6176 = vmatprep.subr.mxu0 0.0
    %6177 = vmatpush1.msra.mxu0 0.0
    %6178 = vmatprep.subr.mxu0 0.0
    %6179 = vmatpush1.msra.mxu0 0.0
    %6180 = vmatprep.subr.mxu0 0.0
    %6181 = vmatpush1.msra.mxu0 0.0
    %6182 = vmatprep.subr.mxu0 0.0
    %6183 = vmatpush1.msra.mxu0 0.0
    %6184 = vmatprep.subr.mxu0 0.0
    %6185 = vmatpush1.msra.mxu0 0.0
    %6186 = vmatprep.subr.mxu0 0.0
    %6187 = vmatpush1.msra.mxu0 0.0
    %6188 = vmatprep.subr.mxu0 0.0
    %6189 = vmatpush1.msra.mxu0 0.0
    %6190 = vmatprep.subr.mxu0 0.0
    %6191 = vmatpush1.msra.mxu0 0.0
    %6192 = vmatprep.subr.mxu0 0.0
    %6193 = vmatpush1.msra.mxu0 0.0
    %6194 = vmatprep.subr.mxu0 0.0
    %6195 = vmatpush1.msra.mxu0 0.0
    %6196 = vmatprep.subr.mxu0 0.0
    %6197 = vmatpush1.msra.mxu0 0.0
    %6198 = vmatprep.subr.mxu0 0.0
    %6199 = vmatpush1.msra.mxu0 0.0
    %6200 = vmatprep.subr.mxu0 0.0
    %6201 = vmatpush1.msra.mxu0 0.0
    %6202 = vmatprep.subr.mxu0 0.0
    %6203 = vmatpush1.msra.mxu0 0.0
    %6204 = vmatprep.subr.mxu0 0.0
    %6205 = vmatpush1.msra.mxu0 0.0
    %6206 = vmatprep.subr.mxu0 0.0
    %6207 = vmatpush1.msra.mxu0 0.0
    %6208 = vmatprep.subr.mxu0 0.0
    %6209 = vmatpush1.msra.mxu0 0.0
    %6210 = vmatprep.subr.mxu0 0.0
    %6211 = vmatpush1.msra.mxu0 0.0
    %6212 = vmatprep.subr.mxu0 0.0
    %6213 = vmatpush1.msra.mxu0 0.0
    %6214 = vmatprep.subr.mxu0 0.0
    %6215 = vmatpush1.msra.mxu0 0.0
    %6216 = vmatprep.subr.mxu0 0.0
    %6217 = vmatpush1.msra.mxu0 0.0
    %6218 = vmatprep.subr.mxu0 0.0
    %6219 = vmatpush1.msra.mxu0 0.0
    %6220 = vmatprep.subr.mxu0 0.0
    %6221 = vmatpush1.msra.mxu0 0.0
    %6222 = vmatprep.subr.mxu0 0.0
    %6223 = vmatpush1.msra.mxu0 0.0
    %6224 = vmatprep.subr.mxu0 0.0
    %6225 = vmatpush1.msra.mxu0 0.0
    %6226 = vmatprep.subr.mxu0 0.0
    %6227 = vmatpush1.msra.mxu0 0.0
    %6228 = vmatprep.subr.mxu0 0.0
    %6229 = vmatpush1.msra.mxu0 0.0
    %6230 = vmatprep.subr.mxu0 0.0
    %6231 = vmatpush1.msra.mxu0 0.0
    %6232 = vmatprep.subr.mxu0 0.0
    %6233 = vmatpush1.msra.mxu0 0.0
    %6234 = vmatprep.subr.mxu0 0.0
    %6235 = vmatpush1.msra.mxu0 0.0
    %6236 = vmatprep.mubr.f32.mxu0 0.0
    %6237 = vmatmul.mubr.f32.gmra.mrb[0].mxu0 %v6170
    %v6238 = vpop.f32.mrb[0].mxu0
    %v6239 = vadd.f32 0.0, %v6238
    %v6240 = vpop.f32.mrb[0].mxu0
    %6241 = vdwg.mxu0
    %6242 = vrot.lane.b32.xlu0 %v5657, 56
    %v6243 = vpop.permute.xlu0 %6242
    %v6246 = vsel %vm196, %v6165, 0
    %6248 = vmatprep.subr.mxu0 0.0
    %6249 = vmatpush1.msra.mxu0 %v6243
    %6250 = vmatprep.subr.mxu0 0.0
    %6251 = vmatpush1.msra.mxu0 0.0
    %6252 = vmatprep.subr.mxu0 0.0
    %6253 = vmatpush1.msra.mxu0 0.0
    %6254 = vmatprep.subr.mxu0 0.0
    %6255 = vmatpush1.msra.mxu0 0.0
    %6256 = vmatprep.subr.mxu0 0.0
    %6257 = vmatpush1.msra.mxu0 0.0
    %6258 = vmatprep.subr.mxu0 0.0
    %6259 = vmatpush1.msra.mxu0 0.0
    %6260 = vmatprep.subr.mxu0 0.0
    %6261 = vmatpush1.msra.mxu0 0.0
    %6262 = vmatprep.subr.mxu0 0.0
    %6263 = vmatpush1.msra.mxu0 0.0
    %6264 = vmatprep.subr.mxu0 0.0
    %6265 = vmatpush1.msra.mxu0 0.0
    %6266 = vmatprep.subr.mxu0 0.0
    %6267 = vmatpush1.msra.mxu0 0.0
    %6268 = vmatprep.subr.mxu0 0.0
    %6269 = vmatpush1.msra.mxu0 0.0
    %6270 = vmatprep.subr.mxu0 0.0
    %6271 = vmatpush1.msra.mxu0 0.0
    %6272 = vmatprep.subr.mxu0 0.0
    %6273 = vmatpush1.msra.mxu0 0.0
    %6274 = vmatprep.subr.mxu0 0.0
    %6275 = vmatpush1.msra.mxu0 0.0
    %6276 = vmatprep.subr.mxu0 0.0
    %6277 = vmatpush1.msra.mxu0 0.0
    %6278 = vmatprep.subr.mxu0 0.0
    %6279 = vmatpush1.msra.mxu0 0.0
    %6280 = vmatprep.subr.mxu0 0.0
    %6281 = vmatpush1.msra.mxu0 0.0
    %6282 = vmatprep.subr.mxu0 0.0
    %6283 = vmatpush1.msra.mxu0 0.0
    %6284 = vmatprep.subr.mxu0 0.0
    %6285 = vmatpush1.msra.mxu0 0.0
    %6286 = vmatprep.subr.mxu0 0.0
    %6287 = vmatpush1.msra.mxu0 0.0
    %6288 = vmatprep.subr.mxu0 0.0
    %6289 = vmatpush1.msra.mxu0 0.0
    %6290 = vmatprep.subr.mxu0 0.0
    %6291 = vmatpush1.msra.mxu0 0.0
    %6292 = vmatprep.subr.mxu0 0.0
    %6293 = vmatpush1.msra.mxu0 0.0
    %6294 = vmatprep.subr.mxu0 0.0
    %6295 = vmatpush1.msra.mxu0 0.0
    %6296 = vmatprep.subr.mxu0 0.0
    %6297 = vmatpush1.msra.mxu0 0.0
    %6298 = vmatprep.subr.mxu0 0.0
    %6299 = vmatpush1.msra.mxu0 0.0
    %6300 = vmatprep.subr.mxu0 0.0
    %6301 = vmatpush1.msra.mxu0 0.0
    %6302 = vmatprep.subr.mxu0 0.0
    %6303 = vmatpush1.msra.mxu0 0.0
    %6304 = vmatprep.subr.mxu0 0.0
    %6305 = vmatpush1.msra.mxu0 0.0
    %6306 = vmatprep.subr.mxu0 0.0
    %6307 = vmatpush1.msra.mxu0 0.0
    %6308 = vmatprep.subr.mxu0 0.0
    %6309 = vmatpush1.msra.mxu0 0.0
    %6310 = vmatprep.subr.mxu0 0.0
    %6311 = vmatpush1.msra.mxu0 0.0
    %6312 = vmatprep.mubr.f32.mxu0 0.0
    %6313 = vmatmul.mubr.f32.gmra.mrb[0].mxu0 %v6246
    %v6314 = vpop.f32.mrb[0].mxu0
    %v6315 = vadd.f32 0.0, %v6314
    %v6316 = vpop.f32.mrb[0].mxu0
    %6317 = vdwg.mxu0
    %6318 = vrot.lane.b32.xlu0 %v5652, 112
    %v6319 = vpop.permute.xlu0 %6318
    %6320 = vrot.lane.b32.xlu0 %v5652, 80
    %v6321 = vpop.permute.xlu0 %6320
    %v6322 = vsel %vm196, %v6319, 0
    %v6324 = vsel %vm196, %v6321, 0
    %6326 = vmatprep.subr.mxu0 0.0
    %6327 = vmatpush1.xpose.msra.mxu0 %v6324
    %6328 = vmatprep.subr.mxu0 0.0
    %6329 = vmatpush1.xpose.msra.mxu0 0.0
    %6330 = vmatprep.subr.mxu0 0.0
    %6331 = vmatpush1.xpose.msra.mxu0 0.0
    %6332 = vmatprep.subr.mxu0 0.0
    %6333 = vmatpush1.xpose.msra.mxu0 0.0
    %6334 = vmatprep.subr.mxu0 0.0
    %6335 = vmatpush1.xpose.msra.mxu0 0.0
    %6336 = vmatprep.subr.mxu0 0.0
    %6337 = vmatpush1.xpose.msra.mxu0 0.0
    %6338 = vmatprep.subr.mxu0 0.0
    %6339 = vmatpush1.xpose.msra.mxu0 0.0
    %6340 = vmatprep.subr.mxu0 0.0
    %6341 = vmatpush1.xpose.msra.mxu0 0.0
    %6342 = vmatprep.subr.mxu0 0.0
    %6343 = vmatpush1.xpose.msra.mxu0 0.0
    %6344 = vmatprep.subr.mxu0 0.0
    %6345 = vmatpush1.xpose.msra.mxu0 0.0
    %6346 = vmatprep.subr.mxu0 0.0
    %6347 = vmatpush1.xpose.msra.mxu0 0.0
    %6348 = vmatprep.subr.mxu0 0.0
    %6349 = vmatpush1.xpose.msra.mxu0 0.0
    %6350 = vmatprep.subr.mxu0 0.0
    %6351 = vmatpush1.xpose.msra.mxu0 0.0
    %6352 = vmatprep.subr.mxu0 0.0
    %6353 = vmatpush1.xpose.msra.mxu0 0.0
    %6354 = vmatprep.subr.mxu0 0.0
    %6355 = vmatpush1.xpose.msra.mxu0 0.0
    %6356 = vmatprep.subr.mxu0 0.0
    %6357 = vmatpush1.xpose.msra.mxu0 0.0
    %6358 = vmatprep.subr.mxu0 0.0
    %6359 = vmatpush1.xpose.msra.mxu0 0.0
    %6360 = vmatprep.subr.mxu0 0.0
    %6361 = vmatpush1.xpose.msra.mxu0 0.0
    %6362 = vmatprep.subr.mxu0 0.0
    %6363 = vmatpush1.xpose.msra.mxu0 0.0
    %6364 = vmatprep.subr.mxu0 0.0
    %6365 = vmatpush1.xpose.msra.mxu0 0.0
    %6366 = vmatprep.subr.mxu0 0.0
    %6367 = vmatpush1.xpose.msra.mxu0 0.0
    %6368 = vmatprep.subr.mxu0 0.0
    %6369 = vmatpush1.xpose.msra.mxu0 0.0
    %6370 = vmatprep.subr.mxu0 0.0
    %6371 = vmatpush1.xpose.msra.mxu0 0.0
    %6372 = vmatprep.subr.mxu0 0.0
    %6373 = vmatpush1.xpose.msra.mxu0 0.0
    %6374 = vmatprep.subr.mxu0 0.0
    %6375 = vmatpush1.xpose.msra.mxu0 0.0
    %6376 = vmatprep.subr.mxu0 0.0
    %6377 = vmatpush1.xpose.msra.mxu0 0.0
    %6378 = vmatprep.subr.mxu0 0.0
    %6379 = vmatpush1.xpose.msra.mxu0 0.0
    %6380 = vmatprep.subr.mxu0 0.0
    %6381 = vmatpush1.xpose.msra.mxu0 0.0
    %6382 = vmatprep.subr.mxu0 0.0
    %6383 = vmatpush1.xpose.msra.mxu0 0.0
    %6384 = vmatprep.subr.mxu0 0.0
    %6385 = vmatpush1.xpose.msra.mxu0 0.0
    %6386 = vmatprep.subr.mxu0 0.0
    %6387 = vmatpush1.xpose.msra.mxu0 0.0
    %6388 = vmatprep.subr.mxu0 0.0
    %6389 = vmatpush1.xpose.msra.mxu0 0.0
    %6390 = vmatprep.mubr.f32.mxu0 0.0
    %6391 = vmatmul.mubr.f32.gmra.mrb[0].mxu0 %v6322
    %v6392 = vpop.f32.mrb[0].mxu0
    %v6393 = vadd.f32 %v59, %v6392
    %v6394 = vpop.f32.mrb[0].mxu0
    %6395 = vdwg.mxu0
    %6396 = vrot.lane.b32.xlu0 %v5657, 112
    %v6397 = vpop.permute.xlu0 %6396
    %6398 = vrot.lane.b32.xlu0 %v5657, 80
    %v6399 = vpop.permute.xlu0 %6398
    %v6400 = vsel %vm196, %v6397, 0
    %v6402 = vsel %vm196, %v6399, 0
    %6404 = vmatprep.subr.mxu0 0.0
    %6405 = vmatpush1.xpose.msra.mxu0 %v6402
    %6406 = vmatprep.subr.mxu0 0.0
    %6407 = vmatpush1.xpose.msra.mxu0 0.0
    %6408 = vmatprep.subr.mxu0 0.0
    %6409 = vmatpush1.xpose.msra.mxu0 0.0
    %6410 = vmatprep.subr.mxu0 0.0
    %6411 = vmatpush1.xpose.msra.mxu0 0.0
    %6412 = vmatprep.subr.mxu0 0.0
    %6413 = vmatpush1.xpose.msra.mxu0 0.0
    %6414 = vmatprep.subr.mxu0 0.0
    %6415 = vmatpush1.xpose.msra.mxu0 0.0
    %6416 = vmatprep.subr.mxu0 0.0
    %6417 = vmatpush1.xpose.msra.mxu0 0.0
    %6418 = vmatprep.subr.mxu0 0.0
    %6419 = vmatpush1.xpose.msra.mxu0 0.0
    %6420 = vmatprep.subr.mxu0 0.0
    %6421 = vmatpush1.xpose.msra.mxu0 0.0
    %6422 = vmatprep.subr.mxu0 0.0
    %6423 = vmatpush1.xpose.msra.mxu0 0.0
    %6424 = vmatprep.subr.mxu0 0.0
    %6425 = vmatpush1.xpose.msra.mxu0 0.0
    %6426 = vmatprep.subr.mxu0 0.0
    %6427 = vmatpush1.xpose.msra.mxu0 0.0
    %6428 = vmatprep.subr.mxu0 0.0
    %6429 = vmatpush1.xpose.msra.mxu0 0.0
    %6430 = vmatprep.subr.mxu0 0.0
    %6431 = vmatpush1.xpose.msra.mxu0 0.0
    %6432 = vmatprep.subr.mxu0 0.0
    %6433 = vmatpush1.xpose.msra.mxu0 0.0
    %6434 = vmatprep.subr.mxu0 0.0
    %6435 = vmatpush1.xpose.msra.mxu0 0.0
    %6436 = vmatprep.subr.mxu0 0.0
    %6437 = vmatpush1.xpose.msra.mxu0 0.0
    %6438 = vmatprep.subr.mxu0 0.0
    %6439 = vmatpush1.xpose.msra.mxu0 0.0
    %6440 = vmatprep.subr.mxu0 0.0
    %6441 = vmatpush1.xpose.msra.mxu0 0.0
    %6442 = vmatprep.subr.mxu0 0.0
    %6443 = vmatpush1.xpose.msra.mxu0 0.0
    %6444 = vmatprep.subr.mxu0 0.0
    %6445 = vmatpush1.xpose.msra.mxu0 0.0
    %6446 = vmatprep.subr.mxu0 0.0
    %6447 = vmatpush1.xpose.msra.mxu0 0.0
    %6448 = vmatprep.subr.mxu0 0.0
    %6449 = vmatpush1.xpose.msra.mxu0 0.0
    %6450 = vmatprep.subr.mxu0 0.0
    %6451 = vmatpush1.xpose.msra.mxu0 0.0
    %6452 = vmatprep.subr.mxu0 0.0
    %6453 = vmatpush1.xpose.msra.mxu0 0.0
    %6454 = vmatprep.subr.mxu0 0.0
    %6455 = vmatpush1.xpose.msra.mxu0 0.0
    %6456 = vmatprep.subr.mxu0 0.0
    %6457 = vmatpush1.xpose.msra.mxu0 0.0
    %6458 = vmatprep.subr.mxu0 0.0
    %6459 = vmatpush1.xpose.msra.mxu0 0.0
    %6460 = vmatprep.subr.mxu0 0.0
    %6461 = vmatpush1.xpose.msra.mxu0 0.0
    %6462 = vmatprep.subr.mxu0 0.0
    %6463 = vmatpush1.xpose.msra.mxu0 0.0
    %6464 = vmatprep.subr.mxu0 0.0
    %6465 = vmatpush1.xpose.msra.mxu0 0.0
    %6466 = vmatprep.subr.mxu0 0.0
    %6467 = vmatpush1.xpose.msra.mxu0 0.0
    %6468 = vmatprep.mubr.f32.mxu0 0.0
    %6469 = vmatmul.mubr.f32.gmra.mrb[0].mxu0 %v6400
    %v6470 = vpop.f32.mrb[0].mxu0
    %v6471 = vadd.f32 %v59, %v6470
    %v6472 = vpop.f32.mrb[0].mxu0
    %6473 = vdwg.mxu0
    %v6474 = vsel %vm196, %v6393, -inf
    %6475 = vmax.xlane.f32.xlu0 %v6474
    %v6476 = vpop.xlane.xlu0 %6475
    %v6477 = vsel %vm196, %v6471, -inf
    %6478 = vmax.xlane.f32.xlu0 %v6477
    %v6479 = vpop.xlane.xlu0 %6478
    %v6480 = vsub.f32 %v6393, %v6476
    %v6481 = vsub.f32 %v6471, %v6479
    %v6482 = vmul.f32 %v6480, 1.442695
    %v6483 = vpow.pop %v6482
    %v6484 = vmul.f32 %v6481, 1.442695
    %v6485 = vpow.pop %v6484
    %v6486 = vsel %vm196, %v6483, 0.0
    %6487 = vadd.xlane.f32.xlu0 %v6486
    %v6488 = vpop.xlane.xlu0 %6487
    %v6489 = vsel %vm196, %v6485, 0.0
    %6490 = vadd.xlane.f32.xlu0 %v6489
    %v6491 = vpop.xlane.xlu0 %6490
    %v6492 = vrcp.pop %v6488
    %v6493 = vrcp.pop %v6491
    %v6494 = vmul.f32 %v6483, %v6492
    %v6495 = vmul.f32 %v6485, %v6493
    %6496 = vrot.lane.b32.xlu0 %v5652, 48
    %v6497 = vpop.permute.xlu0 %6496
    %v6500 = vsel %vm196, %v6494, 0
    %6502 = vmatprep.subr.mxu0 0.0
    %6503 = vmatpush1.msra.mxu0 %v6497
    %6504 = vmatprep.subr.mxu0 0.0
    %6505 = vmatpush1.msra.mxu0 0.0
    %6506 = vmatprep.subr.mxu0 0.0
    %6507 = vmatpush1.msra.mxu0 0.0
    %6508 = vmatprep.subr.mxu0 0.0
    %6509 = vmatpush1.msra.mxu0 0.0
    %6510 = vmatprep.subr.mxu0 0.0
    %6511 = vmatpush1.msra.mxu0 0.0
    %6512 = vmatprep.subr.mxu0 0.0
    %6513 = vmatpush1.msra.mxu0 0.0
    %6514 = vmatprep.subr.mxu0 0.0
    %6515 = vmatpush1.msra.mxu0 0.0
    %6516 = vmatprep.subr.mxu0 0.0
    %6517 = vmatpush1.msra.mxu0 0.0
    %6518 = vmatprep.subr.mxu0 0.0
    %6519 = vmatpush1.msra.mxu0 0.0
    %6520 = vmatprep.subr.mxu0 0.0
    %6521 = vmatpush1.msra.mxu0 0.0
    %6522 = vmatprep.subr.mxu0 0.0
    %6523 = vmatpush1.msra.mxu0 0.0
    %6524 = vmatprep.subr.mxu0 0.0
    %6525 = vmatpush1.msra.mxu0 0.0
    %6526 = vmatprep.subr.mxu0 0.0
    %6527 = vmatpush1.msra.mxu0 0.0
    %6528 = vmatprep.subr.mxu0 0.0
    %6529 = vmatpush1.msra.mxu0 0.0
    %6530 = vmatprep.subr.mxu0 0.0
    %6531 = vmatpush1.msra.mxu0 0.0
    %6532 = vmatprep.subr.mxu0 0.0
    %6533 = vmatpush1.msra.mxu0 0.0
    %6534 = vmatprep.subr.mxu0 0.0
    %6535 = vmatpush1.msra.mxu0 0.0
    %6536 = vmatprep.subr.mxu0 0.0
    %6537 = vmatpush1.msra.mxu0 0.0
    %6538 = vmatprep.subr.mxu0 0.0
    %6539 = vmatpush1.msra.mxu0 0.0
    %6540 = vmatprep.subr.mxu0 0.0
    %6541 = vmatpush1.msra.mxu0 0.0
    %6542 = vmatprep.subr.mxu0 0.0
    %6543 = vmatpush1.msra.mxu0 0.0
    %6544 = vmatprep.subr.mxu0 0.0
    %6545 = vmatpush1.msra.mxu0 0.0
    %6546 = vmatprep.subr.mxu0 0.0
    %6547 = vmatpush1.msra.mxu0 0.0
    %6548 = vmatprep.subr.mxu0 0.0
    %6549 = vmatpush1.msra.mxu0 0.0
    %6550 = vmatprep.subr.mxu0 0.0
    %6551 = vmatpush1.msra.mxu0 0.0
    %6552 = vmatprep.subr.mxu0 0.0
    %6553 = vmatpush1.msra.mxu0 0.0
    %6554 = vmatprep.subr.mxu0 0.0
    %6555 = vmatpush1.msra.mxu0 0.0
    %6556 = vmatprep.subr.mxu0 0.0
    %6557 = vmatpush1.msra.mxu0 0.0
    %6558 = vmatprep.subr.mxu0 0.0
    %6559 = vmatpush1.msra.mxu0 0.0
    %6560 = vmatprep.subr.mxu0 0.0
    %6561 = vmatpush1.msra.mxu0 0.0
    %6562 = vmatprep.subr.mxu0 0.0
    %6563 = vmatpush1.msra.mxu0 0.0
    %6564 = vmatprep.subr.mxu0 0.0
    %6565 = vmatpush1.msra.mxu0 0.0
    %6566 = vmatprep.mubr.f32.mxu0 0.0
    %6567 = vmatmul.mubr.f32.gmra.mrb[0].mxu0 %v6500
    %v6568 = vpop.f32.mrb[0].mxu0
    %v6569 = vadd.f32 0.0, %v6568
    %v6570 = vpop.f32.mrb[0].mxu0
    %6571 = vdwg.mxu0
    %6572 = vrot.lane.b32.xlu0 %v5657, 48
    %v6573 = vpop.permute.xlu0 %6572
    %v6576 = vsel %vm196, %v6495, 0
    %6578 = vmatprep.subr.mxu0 0.0
    %6579 = vmatpush1.msra.mxu0 %v6573
    %6580 = vmatprep.subr.mxu0 0.0
    %6581 = vmatpush1.msra.mxu0 0.0
    %6582 = vmatprep.subr.mxu0 0.0
    %6583 = vmatpush1.msra.mxu0 0.0
    %6584 = vmatprep.subr.mxu0 0.0
    %6585 = vmatpush1.msra.mxu0 0.0
    %6586 = vmatprep.subr.mxu0 0.0
    %6587 = vmatpush1.msra.mxu0 0.0
    %6588 = vmatprep.subr.mxu0 0.0
    %6589 = vmatpush1.msra.mxu0 0.0
    %6590 = vmatprep.subr.mxu0 0.0
    %6591 = vmatpush1.msra.mxu0 0.0
    %6592 = vmatprep.subr.mxu0 0.0
    %6593 = vmatpush1.msra.mxu0 0.0
    %6594 = vmatprep.subr.mxu0 0.0
    %6595 = vmatpush1.msra.mxu0 0.0
    %6596 = vmatprep.subr.mxu0 0.0
    %6597 = vmatpush1.msra.mxu0 0.0
    %6598 = vmatprep.subr.mxu0 0.0
    %6599 = vmatpush1.msra.mxu0 0.0
    %6600 = vmatprep.subr.mxu0 0.0
    %6601 = vmatpush1.msra.mxu0 0.0
    %6602 = vmatprep.subr.mxu0 0.0
    %6603 = vmatpush1.msra.mxu0 0.0
    %6604 = vmatprep.subr.mxu0 0.0
    %6605 = vmatpush1.msra.mxu0 0.0
    %6606 = vmatprep.subr.mxu0 0.0
    %6607 = vmatpush1.msra.mxu0 0.0
    %6608 = vmatprep.subr.mxu0 0.0
    %6609 = vmatpush1.msra.mxu0 0.0
    %6610 = vmatprep.subr.mxu0 0.0
    %6611 = vmatpush1.msra.mxu0 0.0
    %6612 = vmatprep.subr.mxu0 0.0
    %6613 = vmatpush1.msra.mxu0 0.0
    %6614 = vmatprep.subr.mxu0 0.0
    %6615 = vmatpush1.msra.mxu0 0.0
    %6616 = vmatprep.subr.mxu0 0.0
    %6617 = vmatpush1.msra.mxu0 0.0
    %6618 = vmatprep.subr.mxu0 0.0
    %6619 = vmatpush1.msra.mxu0 0.0
    %6620 = vmatprep.subr.mxu0 0.0
    %6621 = vmatpush1.msra.mxu0 0.0
    %6622 = vmatprep.subr.mxu0 0.0
    %6623 = vmatpush1.msra.mxu0 0.0
    %6624 = vmatprep.subr.mxu0 0.0
    %6625 = vmatpush1.msra.mxu0 0.0
    %6626 = vmatprep.subr.mxu0 0.0
    %6627 = vmatpush1.msra.mxu0 0.0
    %6628 = vmatprep.subr.mxu0 0.0
    %6629 = vmatpush1.msra.mxu0 0.0
    %6630 = vmatprep.subr.mxu0 0.0
    %6631 = vmatpush1.msra.mxu0 0.0
    %6632 = vmatprep.subr.mxu0 0.0
    %6633 = vmatpush1.msra.mxu0 0.0
    %6634 = vmatprep.subr.mxu0 0.0
    %6635 = vmatpush1.msra.mxu0 0.0
    %6636 = vmatprep.subr.mxu0 0.0
    %6637 = vmatpush1.msra.mxu0 0.0
    %6638 = vmatprep.subr.mxu0 0.0
    %6639 = vmatpush1.msra.mxu0 0.0
    %6640 = vmatprep.subr.mxu0 0.0
    %6641 = vmatpush1.msra.mxu0 0.0
    %6642 = vmatprep.mubr.f32.mxu0 0.0
    %6643 = vmatmul.mubr.f32.gmra.mrb[0].mxu0 %v6576
    %v6644 = vpop.f32.mrb[0].mxu0
    %v6645 = vadd.f32 0.0, %v6644
    %v6646 = vpop.f32.mrb[0].mxu0
    %6647 = vdwg.mxu0
    %6648 = vrot.lane.b32.xlu0 %v5652, 104
    %v6649 = vpop.permute.xlu0 %6648
    %6650 = vrot.lane.b32.xlu0 %v5652, 72
    %v6651 = vpop.permute.xlu0 %6650
    %v6652 = vsel %vm196, %v6649, 0
    %v6654 = vsel %vm196, %v6651, 0
    %6656 = vmatprep.subr.mxu0 0.0
    %6657 = vmatpush1.xpose.msra.mxu0 %v6654
    %6658 = vmatprep.subr.mxu0 0.0
    %6659 = vmatpush1.xpose.msra.mxu0 0.0
    %6660 = vmatprep.subr.mxu0 0.0
    %6661 = vmatpush1.xpose.msra.mxu0 0.0
    %6662 = vmatprep.subr.mxu0 0.0
    %6663 = vmatpush1.xpose.msra.mxu0 0.0
    %6664 = vmatprep.subr.mxu0 0.0
    %6665 = vmatpush1.xpose.msra.mxu0 0.0
    %6666 = vmatprep.subr.mxu0 0.0
    %6667 = vmatpush1.xpose.msra.mxu0 0.0
    %6668 = vmatprep.subr.mxu0 0.0
    %6669 = vmatpush1.xpose.msra.mxu0 0.0
    %6670 = vmatprep.subr.mxu0 0.0
    %6671 = vmatpush1.xpose.msra.mxu0 0.0
    %6672 = vmatprep.subr.mxu0 0.0
    %6673 = vmatpush1.xpose.msra.mxu0 0.0
    %6674 = vmatprep.subr.mxu0 0.0
    %6675 = vmatpush1.xpose.msra.mxu0 0.0
    %6676 = vmatprep.subr.mxu0 0.0
    %6677 = vmatpush1.xpose.msra.mxu0 0.0
    %6678 = vmatprep.subr.mxu0 0.0
    %6679 = vmatpush1.xpose.msra.mxu0 0.0
    %6680 = vmatprep.subr.mxu0 0.0
    %6681 = vmatpush1.xpose.msra.mxu0 0.0
    %6682 = vmatprep.subr.mxu0 0.0
    %6683 = vmatpush1.xpose.msra.mxu0 0.0
    %6684 = vmatprep.subr.mxu0 0.0
    %6685 = vmatpush1.xpose.msra.mxu0 0.0
    %6686 = vmatprep.subr.mxu0 0.0
    %6687 = vmatpush1.xpose.msra.mxu0 0.0
    %6688 = vmatprep.subr.mxu0 0.0
    %6689 = vmatpush1.xpose.msra.mxu0 0.0
    %6690 = vmatprep.subr.mxu0 0.0
    %6691 = vmatpush1.xpose.msra.mxu0 0.0
    %6692 = vmatprep.subr.mxu0 0.0
    %6693 = vmatpush1.xpose.msra.mxu0 0.0
    %6694 = vmatprep.subr.mxu0 0.0
    %6695 = vmatpush1.xpose.msra.mxu0 0.0
    %6696 = vmatprep.subr.mxu0 0.0
    %6697 = vmatpush1.xpose.msra.mxu0 0.0
    %6698 = vmatprep.subr.mxu0 0.0
    %6699 = vmatpush1.xpose.msra.mxu0 0.0
    %6700 = vmatprep.subr.mxu0 0.0
    %6701 = vmatpush1.xpose.msra.mxu0 0.0
    %6702 = vmatprep.subr.mxu0 0.0
    %6703 = vmatpush1.xpose.msra.mxu0 0.0
    %6704 = vmatprep.subr.mxu0 0.0
    %6705 = vmatpush1.xpose.msra.mxu0 0.0
    %6706 = vmatprep.subr.mxu0 0.0
    %6707 = vmatpush1.xpose.msra.mxu0 0.0
    %6708 = vmatprep.subr.mxu0 0.0
    %6709 = vmatpush1.xpose.msra.mxu0 0.0
    %6710 = vmatprep.subr.mxu0 0.0
    %6711 = vmatpush1.xpose.msra.mxu0 0.0
    %6712 = vmatprep.subr.mxu0 0.0
    %6713 = vmatpush1.xpose.msra.mxu0 0.0
    %6714 = vmatprep.subr.mxu0 0.0
    %6715 = vmatpush1.xpose.msra.mxu0 0.0
    %6716 = vmatprep.subr.mxu0 0.0
    %6717 = vmatpush1.xpose.msra.mxu0 0.0
    %6718 = vmatprep.subr.mxu0 0.0
    %6719 = vmatpush1.xpose.msra.mxu0 0.0
    %6720 = vmatprep.mubr.f32.mxu0 0.0
    %6721 = vmatmul.mubr.f32.gmra.mrb[0].mxu0 %v6652
    %v6722 = vpop.f32.mrb[0].mxu0
    %v6723 = vadd.f32 %v59, %v6722
    %v6724 = vpop.f32.mrb[0].mxu0
    %6725 = vdwg.mxu0
    %6726 = vrot.lane.b32.xlu0 %v5657, 104
    %v6727 = vpop.permute.xlu0 %6726
    %6728 = vrot.lane.b32.xlu0 %v5657, 72
    %v6729 = vpop.permute.xlu0 %6728
    %v6730 = vsel %vm196, %v6727, 0
    %v6732 = vsel %vm196, %v6729, 0
    %6734 = vmatprep.subr.mxu0 0.0
    %6735 = vmatpush1.xpose.msra.mxu0 %v6732
    %6736 = vmatprep.subr.mxu0 0.0
    %6737 = vmatpush1.xpose.msra.mxu0 0.0
    %6738 = vmatprep.subr.mxu0 0.0
    %6739 = vmatpush1.xpose.msra.mxu0 0.0
    %6740 = vmatprep.subr.mxu0 0.0
    %6741 = vmatpush1.xpose.msra.mxu0 0.0
    %6742 = vmatprep.subr.mxu0 0.0
    %6743 = vmatpush1.xpose.msra.mxu0 0.0
    %6744 = vmatprep.subr.mxu0 0.0
    %6745 = vmatpush1.xpose.msra.mxu0 0.0
    %6746 = vmatprep.subr.mxu0 0.0
    %6747 = vmatpush1.xpose.msra.mxu0 0.0
    %6748 = vmatprep.subr.mxu0 0.0
    %6749 = vmatpush1.xpose.msra.mxu0 0.0
    %6750 = vmatprep.subr.mxu0 0.0
    %6751 = vmatpush1.xpose.msra.mxu0 0.0
    %6752 = vmatprep.subr.mxu0 0.0
    %6753 = vmatpush1.xpose.msra.mxu0 0.0
    %6754 = vmatprep.subr.mxu0 0.0
    %6755 = vmatpush1.xpose.msra.mxu0 0.0
    %6756 = vmatprep.subr.mxu0 0.0
    %6757 = vmatpush1.xpose.msra.mxu0 0.0
    %6758 = vmatprep.subr.mxu0 0.0
    %6759 = vmatpush1.xpose.msra.mxu0 0.0
    %6760 = vmatprep.subr.mxu0 0.0
    %6761 = vmatpush1.xpose.msra.mxu0 0.0
    %6762 = vmatprep.subr.mxu0 0.0
    %6763 = vmatpush1.xpose.msra.mxu0 0.0
    %6764 = vmatprep.subr.mxu0 0.0
    %6765 = vmatpush1.xpose.msra.mxu0 0.0
    %6766 = vmatprep.subr.mxu0 0.0
    %6767 = vmatpush1.xpose.msra.mxu0 0.0
    %6768 = vmatprep.subr.mxu0 0.0
    %6769 = vmatpush1.xpose.msra.mxu0 0.0
    %6770 = vmatprep.subr.mxu0 0.0
    %6771 = vmatpush1.xpose.msra.mxu0 0.0
    %6772 = vmatprep.subr.mxu0 0.0
    %6773 = vmatpush1.xpose.msra.mxu0 0.0
    %6774 = vmatprep.subr.mxu0 0.0
    %6775 = vmatpush1.xpose.msra.mxu0 0.0
    %6776 = vmatprep.subr.mxu0 0.0
    %6777 = vmatpush1.xpose.msra.mxu0 0.0
    %6778 = vmatprep.subr.mxu0 0.0
    %6779 = vmatpush1.xpose.msra.mxu0 0.0
    %6780 = vmatprep.subr.mxu0 0.0
    %6781 = vmatpush1.xpose.msra.mxu0 0.0
    %6782 = vmatprep.subr.mxu0 0.0
    %6783 = vmatpush1.xpose.msra.mxu0 0.0
    %6784 = vmatprep.subr.mxu0 0.0
    %6785 = vmatpush1.xpose.msra.mxu0 0.0
    %6786 = vmatprep.subr.mxu0 0.0
    %6787 = vmatpush1.xpose.msra.mxu0 0.0
    %6788 = vmatprep.subr.mxu0 0.0
    %6789 = vmatpush1.xpose.msra.mxu0 0.0
    %6790 = vmatprep.subr.mxu0 0.0
    %6791 = vmatpush1.xpose.msra.mxu0 0.0
    %6792 = vmatprep.subr.mxu0 0.0
    %6793 = vmatpush1.xpose.msra.mxu0 0.0
    %6794 = vmatprep.subr.mxu0 0.0
    %6795 = vmatpush1.xpose.msra.mxu0 0.0
    %6796 = vmatprep.subr.mxu0 0.0
    %6797 = vmatpush1.xpose.msra.mxu0 0.0
    %6798 = vmatprep.mubr.f32.mxu0 0.0
    %6799 = vmatmul.mubr.f32.gmra.mrb[0].mxu0 %v6730
    %v6800 = vpop.f32.mrb[0].mxu0
    %v6801 = vadd.f32 %v59, %v6800
    %v6802 = vpop.f32.mrb[0].mxu0
    %6803 = vdwg.mxu0
    %v6804 = vsel %vm196, %v6723, -inf
    %6805 = vmax.xlane.f32.xlu0 %v6804
    %v6806 = vpop.xlane.xlu0 %6805
    %v6807 = vsel %vm196, %v6801, -inf
    %6808 = vmax.xlane.f32.xlu0 %v6807
    %v6809 = vpop.xlane.xlu0 %6808
    %v6810 = vsub.f32 %v6723, %v6806
    %v6811 = vsub.f32 %v6801, %v6809
    %v6812 = vmul.f32 %v6810, 1.442695
    %v6813 = vpow.pop %v6812
    %v6814 = vmul.f32 %v6811, 1.442695
    %v6815 = vpow.pop %v6814
    %v6816 = vsel %vm196, %v6813, 0.0
    %6817 = vadd.xlane.f32.xlu0 %v6816
    %v6818 = vpop.xlane.xlu0 %6817
    %v6819 = vsel %vm196, %v6815, 0.0
    %6820 = vadd.xlane.f32.xlu0 %v6819
    %v6821 = vpop.xlane.xlu0 %6820
    %v6822 = vrcp.pop %v6818
    %v6823 = vrcp.pop %v6821
    %v6824 = vmul.f32 %v6813, %v6822
    %v6825 = vmul.f32 %v6815, %v6823
    %6826 = vrot.lane.b32.xlu0 %v5652, 40
    %v6827 = vpop.permute.xlu0 %6826
    %v6830 = vsel %vm196, %v6824, 0
    %6832 = vmatprep.subr.mxu0 0.0
    %6833 = vmatpush1.msra.mxu0 %v6827
    %6834 = vmatprep.subr.mxu0 0.0
    %6835 = vmatpush1.msra.mxu0 0.0
    %6836 = vmatprep.subr.mxu0 0.0
    %6837 = vmatpush1.msra.mxu0 0.0
    %6838 = vmatprep.subr.mxu0 0.0
    %6839 = vmatpush1.msra.mxu0 0.0
    %6840 = vmatprep.subr.mxu0 0.0
    %6841 = vmatpush1.msra.mxu0 0.0
    %6842 = vmatprep.subr.mxu0 0.0
    %6843 = vmatpush1.msra.mxu0 0.0
    %6844 = vmatprep.subr.mxu0 0.0
    %6845 = vmatpush1.msra.mxu0 0.0
    %6846 = vmatprep.subr.mxu0 0.0
    %6847 = vmatpush1.msra.mxu0 0.0
    %6848 = vmatprep.subr.mxu0 0.0
    %6849 = vmatpush1.msra.mxu0 0.0
    %6850 = vmatprep.subr.mxu0 0.0
    %6851 = vmatpush1.msra.mxu0 0.0
    %6852 = vmatprep.subr.mxu0 0.0
    %6853 = vmatpush1.msra.mxu0 0.0
    %6854 = vmatprep.subr.mxu0 0.0
    %6855 = vmatpush1.msra.mxu0 0.0
    %6856 = vmatprep.subr.mxu0 0.0
    %6857 = vmatpush1.msra.mxu0 0.0
    %6858 = vmatprep.subr.mxu0 0.0
    %6859 = vmatpush1.msra.mxu0 0.0
    %6860 = vmatprep.subr.mxu0 0.0
    %6861 = vmatpush1.msra.mxu0 0.0
    %6862 = vmatprep.subr.mxu0 0.0
    %6863 = vmatpush1.msra.mxu0 0.0
    %6864 = vmatprep.subr.mxu0 0.0
    %6865 = vmatpush1.msra.mxu0 0.0
    %6866 = vmatprep.subr.mxu0 0.0
    %6867 = vmatpush1.msra.mxu0 0.0
    %6868 = vmatprep.subr.mxu0 0.0
    %6869 = vmatpush1.msra.mxu0 0.0
    %6870 = vmatprep.subr.mxu0 0.0
    %6871 = vmatpush1.msra.mxu0 0.0
    %6872 = vmatprep.subr.mxu0 0.0
    %6873 = vmatpush1.msra.mxu0 0.0
    %6874 = vmatprep.subr.mxu0 0.0
    %6875 = vmatpush1.msra.mxu0 0.0
    %6876 = vmatprep.subr.mxu0 0.0
    %6877 = vmatpush1.msra.mxu0 0.0
    %6878 = vmatprep.subr.mxu0 0.0
    %6879 = vmatpush1.msra.mxu0 0.0
    %6880 = vmatprep.subr.mxu0 0.0
    %6881 = vmatpush1.msra.mxu0 0.0
    %6882 = vmatprep.subr.mxu0 0.0
    %6883 = vmatpush1.msra.mxu0 0.0
    %6884 = vmatprep.subr.mxu0 0.0
    %6885 = vmatpush1.msra.mxu0 0.0
    %6886 = vmatprep.subr.mxu0 0.0
    %6887 = vmatpush1.msra.mxu0 0.0
    %6888 = vmatprep.subr.mxu0 0.0
    %6889 = vmatpush1.msra.mxu0 0.0
    %6890 = vmatprep.subr.mxu0 0.0
    %6891 = vmatpush1.msra.mxu0 0.0
    %6892 = vmatprep.subr.mxu0 0.0
    %6893 = vmatpush1.msra.mxu0 0.0
    %6894 = vmatprep.subr.mxu0 0.0
    %6895 = vmatpush1.msra.mxu0 0.0
    %6896 = vmatprep.mubr.f32.mxu0 0.0
    %6897 = vmatmul.mubr.f32.gmra.mrb[0].mxu0 %v6830
    %v6898 = vpop.f32.mrb[0].mxu0
    %v6899 = vadd.f32 0.0, %v6898
    %v6900 = vpop.f32.mrb[0].mxu0
    %6901 = vdwg.mxu0
    %6902 = vrot.lane.b32.xlu0 %v5657, 40
    %v6903 = vpop.permute.xlu0 %6902
    %v6906 = vsel %vm196, %v6825, 0
    %6908 = vmatprep.subr.mxu0 0.0
    %6909 = vmatpush1.msra.mxu0 %v6903
    %6910 = vmatprep.subr.mxu0 0.0
    %6911 = vmatpush1.msra.mxu0 0.0
    %6912 = vmatprep.subr.mxu0 0.0
    %6913 = vmatpush1.msra.mxu0 0.0
    %6914 = vmatprep.subr.mxu0 0.0
    %6915 = vmatpush1.msra.mxu0 0.0
    %6916 = vmatprep.subr.mxu0 0.0
    %6917 = vmatpush1.msra.mxu0 0.0
    %6918 = vmatprep.subr.mxu0 0.0
    %6919 = vmatpush1.msra.mxu0 0.0
    %6920 = vmatprep.subr.mxu0 0.0
    %6921 = vmatpush1.msra.mxu0 0.0
    %6922 = vmatprep.subr.mxu0 0.0
    %6923 = vmatpush1.msra.mxu0 0.0
    %6924 = vmatprep.subr.mxu0 0.0
    %6925 = vmatpush1.msra.mxu0 0.0
    %6926 = vmatprep.subr.mxu0 0.0
    %6927 = vmatpush1.msra.mxu0 0.0
    %6928 = vmatprep.subr.mxu0 0.0
    %6929 = vmatpush1.msra.mxu0 0.0
    %6930 = vmatprep.subr.mxu0 0.0
    %6931 = vmatpush1.msra.mxu0 0.0
    %6932 = vmatprep.subr.mxu0 0.0
    %6933 = vmatpush1.msra.mxu0 0.0
    %6934 = vmatprep.subr.mxu0 0.0
    %6935 = vmatpush1.msra.mxu0 0.0
    %6936 = vmatprep.subr.mxu0 0.0
    %6937 = vmatpush1.msra.mxu0 0.0
    %6938 = vmatprep.subr.mxu0 0.0
    %6939 = vmatpush1.msra.mxu0 0.0
    %6940 = vmatprep.subr.mxu0 0.0
    %6941 = vmatpush1.msra.mxu0 0.0
    %6942 = vmatprep.subr.mxu0 0.0
    %6943 = vmatpush1.msra.mxu0 0.0
    %6944 = vmatprep.subr.mxu0 0.0
    %6945 = vmatpush1.msra.mxu0 0.0
    %6946 = vmatprep.subr.mxu0 0.0
    %6947 = vmatpush1.msra.mxu0 0.0
    %6948 = vmatprep.subr.mxu0 0.0
    %6949 = vmatpush1.msra.mxu0 0.0
    %6950 = vmatprep.subr.mxu0 0.0
    %6951 = vmatpush1.msra.mxu0 0.0
    %6952 = vmatprep.subr.mxu0 0.0
    %6953 = vmatpush1.msra.mxu0 0.0
    %6954 = vmatprep.subr.mxu0 0.0
    %6955 = vmatpush1.msra.mxu0 0.0
    %6956 = vmatprep.subr.mxu0 0.0
    %6957 = vmatpush1.msra.mxu0 0.0
    %6958 = vmatprep.subr.mxu0 0.0
    %6959 = vmatpush1.msra.mxu0 0.0
    %6960 = vmatprep.subr.mxu0 0.0
    %6961 = vmatpush1.msra.mxu0 0.0
    %6962 = vmatprep.subr.mxu0 0.0
    %6963 = vmatpush1.msra.mxu0 0.0
    %6964 = vmatprep.subr.mxu0 0.0
    %6965 = vmatpush1.msra.mxu0 0.0
    %6966 = vmatprep.subr.mxu0 0.0
    %6967 = vmatpush1.msra.mxu0 0.0
    %6968 = vmatprep.subr.mxu0 0.0
    %6969 = vmatpush1.msra.mxu0 0.0
    %6970 = vmatprep.subr.mxu0 0.0
    %6971 = vmatpush1.msra.mxu0 0.0
    %6972 = vmatprep.mubr.f32.mxu0 0.0
    %6973 = vmatmul.mubr.f32.gmra.mrb[0].mxu0 %v6906
    %v6974 = vpop.f32.mrb[0].mxu0
    %v6975 = vadd.f32 0.0, %v6974
    %v6976 = vpop.f32.mrb[0].mxu0
    %6977 = vdwg.mxu0
    %6980 = vrot.lane.b32.xlu0 %v6239, 8
    %v6981 = vpop.permute.xlu0 %6980
    %6982 = vrot.lane.b32.xlu0 %v6315, 8
    %v6983 = vpop.permute.xlu0 %6982
    %6988 = vrot.lane.b32.xlu0 %v6569, 16
    %v6989 = vpop.permute.xlu0 %6988
    %6990 = vrot.lane.b32.xlu0 %v6645, 16
    %v6991 = vpop.permute.xlu0 %6990
    %6996 = vrot.lane.b32.xlu0 %v6899, 24
    %v6997 = vpop.permute.xlu0 %6996
    %6998 = vrot.lane.b32.xlu0 %v6975, 24
    %v6999 = vpop.permute.xlu0 %6998
    %v7002 = vsel %vm196, %v5909, %v6981
    %v7003 = vsel %vm196, %v5985, %v6983
    %v7004 = vsel %vm1538, %v7002, %v6989
    %v7005 = vsel %vm1538, %v7003, %v6991
    %v7006 = vsel %vm1541, %v7004, %v6997
    %v7007 = vsel %vm1541, %v7005, %v6999
    %s7008 = scalar_lea.vmem %s4, 96
    %v7009 = vld [vmem:[%s7008] sm:$0xff]
    %v7010 = vld [vmem:[%s7008 + $0x8] sm:$0xff]
    %v7011 = vld [vmem:[%s7008 + $0x10] sm:$0xff]
    %v7012 = vld [vmem:[%s7008 + $0x18] sm:$0xff]
    %v7014 = vsel %vm64, %v7006, 0
    %v7017 = vsel %vm64, %v7007, 0
    %7019 = vmatprep.subr.mxu0 0.0
    %7020 = vmatpush1.msra.mxu0 %v7009
    %7021 = vmatprep.subr.mxu0 0.0
    %7022 = vmatpush1.msra.mxu0 %v7010
    %7023 = vmatprep.subr.mxu0 0.0
    %7024 = vmatpush1.msra.mxu0 %v7011
    %7025 = vmatprep.subr.mxu0 0.0
    %7026 = vmatpush1.msra.mxu0 %v7012
    %7027 = vmatprep.subr.mxu0 0.0
    %7028 = vmatpush1.msra.mxu0 0.0
    %7029 = vmatprep.subr.mxu0 0.0
    %7030 = vmatpush1.msra.mxu0 0.0
    %7031 = vmatprep.subr.mxu0 0.0
    %7032 = vmatpush1.msra.mxu0 0.0
    %7033 = vmatprep.subr.mxu0 0.0
    %7034 = vmatpush1.msra.mxu0 0.0
    %7035 = vmatprep.subr.mxu0 0.0
    %7036 = vmatpush1.msra.mxu0 0.0
    %7037 = vmatprep.subr.mxu0 0.0
    %7038 = vmatpush1.msra.mxu0 0.0
    %7039 = vmatprep.subr.mxu0 0.0
    %7040 = vmatpush1.msra.mxu0 0.0
    %7041 = vmatprep.subr.mxu0 0.0
    %7042 = vmatpush1.msra.mxu0 0.0
    %7043 = vmatprep.subr.mxu0 0.0
    %7044 = vmatpush1.msra.mxu0 0.0
    %7045 = vmatprep.subr.mxu0 0.0
    %7046 = vmatpush1.msra.mxu0 0.0
    %7047 = vmatprep.subr.mxu0 0.0
    %7048 = vmatpush1.msra.mxu0 0.0
    %7049 = vmatprep.subr.mxu0 0.0
    %7050 = vmatpush1.msra.mxu0 0.0
    %7051 = vmatprep.subr.mxu0 0.0
    %7052 = vmatpush1.msra.mxu0 0.0
    %7053 = vmatprep.subr.mxu0 0.0
    %7054 = vmatpush1.msra.mxu0 0.0
    %7055 = vmatprep.subr.mxu0 0.0
    %7056 = vmatpush1.msra.mxu0 0.0
    %7057 = vmatprep.subr.mxu0 0.0
    %7058 = vmatpush1.msra.mxu0 0.0
    %7059 = vmatprep.subr.mxu0 0.0
    %7060 = vmatpush1.msra.mxu0 0.0
    %7061 = vmatprep.subr.mxu0 0.0
    %7062 = vmatpush1.msra.mxu0 0.0
    %7063 = vmatprep.subr.mxu0 0.0
    %7064 = vmatpush1.msra.mxu0 0.0
    %7065 = vmatprep.subr.mxu0 0.0
    %7066 = vmatpush1.msra.mxu0 0.0
    %7067 = vmatprep.subr.mxu0 0.0
    %7068 = vmatpush1.msra.mxu0 0.0
    %7069 = vmatprep.subr.mxu0 0.0
    %7070 = vmatpush1.msra.mxu0 0.0
    %7071 = vmatprep.subr.mxu0 0.0
    %7072 = vmatpush1.msra.mxu0 0.0
    %7073 = vmatprep.subr.mxu0 0.0
    %7074 = vmatpush1.msra.mxu0 0.0
    %7075 = vmatprep.subr.mxu0 0.0
    %7076 = vmatpush1.msra.mxu0 0.0
    %7077 = vmatprep.subr.mxu0 0.0
    %7078 = vmatpush1.msra.mxu0 0.0
    %7079 = vmatprep.subr.mxu0 0.0
    %7080 = vmatpush1.msra.mxu0 0.0
    %7081 = vmatprep.subr.mxu0 0.0
    %7082 = vmatpush1.msra.mxu0 0.0
    %7083 = vmatprep.mubr.f32.mxu0 0.0
    %7084 = vmatmul.mubr.f32.gmra.mrb[0].mxu0 %v7014
    %v7085 = vpop.f32.mrb[0].mxu0
    %v7086 = vadd.f32 0.0, %v7085
    %v7087 = vpop.f32.mrb[0].mxu0
    %7088 = vmatprep.mubr.f32.mxu0 0.0
    %7089 = vmatmul.mubr.f32.gmra.mrb[0].mxu0 %v7017
    %v7090 = vpop.f32.mrb[0].mxu0
    %v7091 = vadd.f32 0.0, %v7090
    %v7092 = vpop.f32.mrb[0].mxu0
    %7093 = vdwg.mxu0
    %v7094 = vadd.f32 %v5526, %v7086
    %v7095 = vadd.f32 %v5527, %v7091
    %s7096 = scalar_lea.vmem %s5, 3
    %v7097 = vld [vmem:[%s7096] sm:$0x1]
    %v7099 = vlaneseq
    %v7100 = vshrl.u32 %v7099, 7
    %v7101 = vsub.s32 0, %v7100
    %v7102 = vrot.slane %v7097, %v7101
    %v7104 = vadd.f32 %v7094, %v7102
    %v7105 = vadd.f32 %v7095, %v7102
    %s7106 = scalar_lea.vmem %s6, 3
    %v7107 = vld [vmem:[%s7106] sm:$0x1]
    %s7108 = scalar_lea.vmem %s7, 3
    %v7109 = vld [vmem:[%s7108] sm:$0x1]
    %v7110 = vsel %vm64, %v7104, 0.0
    %7111 = vadd.xlane.f32.xlu0 %v7110
    %v7112 = vpop.xlane.xlu0 %7111
    %v7113 = vsel %vm64, %v7105, 0.0
    %7114 = vadd.xlane.f32.xlu0 %v7113
    %v7115 = vpop.xlane.xlu0 %7114
    %v7116 = vmul.f32 %v7112, %v71
    %v7117 = vmul.f32 %v7115, %v71
    %v7118 = vsub.f32 %v7104, %v7116
    %v7119 = vsub.f32 %v7105, %v7117
    %v7120 = vmul.f32 %v7118, %v7118
    %v7121 = vmul.f32 %v7119, %v7119
    %v7122 = vsel %vm64, %v7120, 0.0
    %7123 = vadd.xlane.f32.xlu0 %v7122
    %v7124 = vpop.xlane.xlu0 %7123
    %v7125 = vsel %vm64, %v7121, 0.0
    %7126 = vadd.xlane.f32.xlu0 %v7125
    %v7127 = vpop.xlane.xlu0 %7126
    %v7128 = vmul.f32 %v7124, %v71
    %v7129 = vmul.f32 %v7127, %v71
    %v7130 = vadd.f32 %v7128, 1e-05
    %v7131 = vadd.f32 %v7129, 1e-05
    %v7132 = vrsqrt.pop %v7130
    %v7133 = vrsqrt.pop %v7131
    %v7134 = vmul.f32 %v7118, %v7132
    %v7135 = vmul.f32 %v7119, %v7133
    %v7137 = vlaneseq
    %v7138 = vshrl.u32 %v7137, 7
    %v7139 = vsub.s32 0, %v7138
    %v7140 = vrot.slane %v7107, %v7139
    %v7142 = vmul.f32 %v7134, %v7140
    %v7143 = vmul.f32 %v7135, %v7140
    %v7145 = vlaneseq
    %v7146 = vshrl.u32 %v7145, 7
    %v7147 = vsub.s32 0, %v7146
    %v7148 = vrot.slane %v7109, %v7147
    %v7150 = vadd.f32 %v7142, %v7148
    %v7151 = vadd.f32 %v7143, %v7148
    %s7152 = scalar_lea.vmem %s8, 96
    %v7153 = vld [vmem:[%s7152] sm:$0xff]
    %v7154 = vld [vmem:[%s7152 + $0x8] sm:$0xff]
    %v7155 = vld [vmem:[%s7152 + $0x10] sm:$0xff]
    %v7156 = vld [vmem:[%s7152 + $0x18] sm:$0xff]
    %s7157 = scalar_lea.vmem %s9, 3
    %v7158 = vld [vmem:[%s7157] sm:$0x1]
    %v7160 = vlaneseq
    %v7161 = vshrl.u32 %v7160, 7
    %v7162 = vsub.s32 0, %v7161
    %v7163 = vrot.slane %v7158, %v7162
    %v7166 = vsel %vm64, %v7150, 0
    %v7169 = vsel %vm64, %v7151, 0
    %7171 = vmatprep.subr.mxu0 0.0
    %7172 = vmatpush1.msra.mxu0 %v7153
    %7173 = vmatprep.subr.mxu0 0.0
    %7174 = vmatpush1.msra.mxu0 %v7154
    %7175 = vmatprep.subr.mxu0 0.0
    %7176 = vmatpush1.msra.mxu0 %v7155
    %7177 = vmatprep.subr.mxu0 0.0
    %7178 = vmatpush1.msra.mxu0 %v7156
    %7179 = vmatprep.subr.mxu0 0.0
    %7180 = vmatpush1.msra.mxu0 0.0
    %7181 = vmatprep.subr.mxu0 0.0
    %7182 = vmatpush1.msra.mxu0 0.0
    %7183 = vmatprep.subr.mxu0 0.0
    %7184 = vmatpush1.msra.mxu0 0.0
    %7185 = vmatprep.subr.mxu0 0.0
    %7186 = vmatpush1.msra.mxu0 0.0
    %7187 = vmatprep.subr.mxu0 0.0
    %7188 = vmatpush1.msra.mxu0 0.0
    %7189 = vmatprep.subr.mxu0 0.0
    %7190 = vmatpush1.msra.mxu0 0.0
    %7191 = vmatprep.subr.mxu0 0.0
    %7192 = vmatpush1.msra.mxu0 0.0
    %7193 = vmatprep.subr.mxu0 0.0
    %7194 = vmatpush1.msra.mxu0 0.0
    %7195 = vmatprep.subr.mxu0 0.0
    %7196 = vmatpush1.msra.mxu0 0.0
    %7197 = vmatprep.subr.mxu0 0.0
    %7198 = vmatpush1.msra.mxu0 0.0
    %7199 = vmatprep.subr.mxu0 0.0
    %7200 = vmatpush1.msra.mxu0 0.0
    %7201 = vmatprep.subr.mxu0 0.0
    %7202 = vmatpush1.msra.mxu0 0.0
    %7203 = vmatprep.subr.mxu0 0.0
    %7204 = vmatpush1.msra.mxu0 0.0
    %7205 = vmatprep.subr.mxu0 0.0
    %7206 = vmatpush1.msra.mxu0 0.0
    %7207 = vmatprep.subr.mxu0 0.0
    %7208 = vmatpush1.msra.mxu0 0.0
    %7209 = vmatprep.subr.mxu0 0.0
    %7210 = vmatpush1.msra.mxu0 0.0
    %7211 = vmatprep.subr.mxu0 0.0
    %7212 = vmatpush1.msra.mxu0 0.0
    %7213 = vmatprep.subr.mxu0 0.0
    %7214 = vmatpush1.msra.mxu0 0.0
    %7215 = vmatprep.subr.mxu0 0.0
    %7216 = vmatpush1.msra.mxu0 0.0
    %7217 = vmatprep.subr.mxu0 0.0
    %7218 = vmatpush1.msra.mxu0 0.0
    %7219 = vmatprep.subr.mxu0 0.0
    %7220 = vmatpush1.msra.mxu0 0.0
    %7221 = vmatprep.subr.mxu0 0.0
    %7222 = vmatpush1.msra.mxu0 0.0
    %7223 = vmatprep.subr.mxu0 0.0
    %7224 = vmatpush1.msra.mxu0 0.0
    %7225 = vmatprep.subr.mxu0 0.0
    %7226 = vmatpush1.msra.mxu0 0.0
    %7227 = vmatprep.subr.mxu0 0.0
    %7228 = vmatpush1.msra.mxu0 0.0
    %7229 = vmatprep.subr.mxu0 0.0
    %7230 = vmatpush1.msra.mxu0 0.0
    %7231 = vmatprep.subr.mxu0 0.0
    %7232 = vmatpush1.msra.mxu0 0.0
    %7233 = vmatprep.subr.mxu0 0.0
    %7234 = vmatpush1.msra.mxu0 0.0
    %7235 = vmatprep.mubr.f32.mxu0 0.0
    %7236 = vmatmul.mubr.f32.gmra.mrb[0].mxu0 %v7166
    %v7237 = vpop.f32.mrb[0].mxu0
    %v7238 = vadd.f32 %v7163, %v7237
    %v7239 = vpop.f32.mrb[0].mxu0
    %7240 = vmatprep.mubr.f32.mxu0 0.0
    %7241 = vmatmul.mubr.f32.gmra.mrb[0].mxu0 %v7169
    %v7242 = vpop.f32.mrb[0].mxu0
    %v7243 = vadd.f32 %v7163, %v7242
    %v7244 = vpop.f32.mrb[0].mxu0
    %7245 = vdwg.mxu0
    %v7246 = vmax.f32 %v7238, 0.0
    %v7247 = vmax.f32 %v7243, 0.0
    %s7248 = scalar_lea.vmem %s10, 384
    %v7249 = vld [vmem:[%s7248] sm:$0xff]
    %v7250 = vld [vmem:[%s7248 + $0x8] sm:$0xff]
    %v7251 = vld [vmem:[%s7248 + $0x10] sm:$0xff]
    %v7252 = vld [vmem:[%s7248 + $0x18] sm:$0xff]
    %v7253 = vld [vmem:[%s7248 + $0x20] sm:$0xff]
    %v7254 = vld [vmem:[%s7248 + $0x28] sm:$0xff]
    %v7255 = vld [vmem:[%s7248 + $0x30] sm:$0xff]
    %v7256 = vld [vmem:[%s7248 + $0x38] sm:$0xff]
    %v7257 = vld [vmem:[%s7248 + $0x40] sm:$0xff]
    %v7258 = vld [vmem:[%s7248 + $0x48] sm:$0xff]
    %v7259 = vld [vmem:[%s7248 + $0x50] sm:$0xff]
    %v7260 = vld [vmem:[%s7248 + $0x58] sm:$0xff]
    %v7261 = vld [vmem:[%s7248 + $0x60] sm:$0xff]
    %v7262 = vld [vmem:[%s7248 + $0x68] sm:$0xff]
    %v7263 = vld [vmem:[%s7248 + $0x70] sm:$0xff]
    %v7264 = vld [vmem:[%s7248 + $0x78] sm:$0xff]
    %7265 = vmatprep.subr.mxu0 0.0
    %7266 = vmatpush1.msra.mxu0 %v7249
    %7267 = vmatprep.subr.mxu0 0.0
    %7268 = vmatpush1.msra.mxu0 %v7250
    %7269 = vmatprep.subr.mxu0 0.0
    %7270 = vmatpush1.msra.mxu0 %v7251
    %7271 = vmatprep.subr.mxu0 0.0
    %7272 = vmatpush1.msra.mxu0 %v7252
    %7273 = vmatprep.subr.mxu0 0.0
    %7274 = vmatpush1.msra.mxu0 %v7253
    %7275 = vmatprep.subr.mxu0 0.0
    %7276 = vmatpush1.msra.mxu0 %v7254
    %7277 = vmatprep.subr.mxu0 0.0
    %7278 = vmatpush1.msra.mxu0 %v7255
    %7279 = vmatprep.subr.mxu0 0.0
    %7280 = vmatpush1.msra.mxu0 %v7256
    %7281 = vmatprep.subr.mxu0 0.0
    %7282 = vmatpush1.msra.mxu0 %v7257
    %7283 = vmatprep.subr.mxu0 0.0
    %7284 = vmatpush1.msra.mxu0 %v7258
    %7285 = vmatprep.subr.mxu0 0.0
    %7286 = vmatpush1.msra.mxu0 %v7259
    %7287 = vmatprep.subr.mxu0 0.0
    %7288 = vmatpush1.msra.mxu0 %v7260
    %7289 = vmatprep.subr.mxu0 0.0
    %7290 = vmatpush1.msra.mxu0 %v7261
    %7291 = vmatprep.subr.mxu0 0.0
    %7292 = vmatpush1.msra.mxu0 %v7262
    %7293 = vmatprep.subr.mxu0 0.0
    %7294 = vmatpush1.msra.mxu0 %v7263
    %7295 = vmatprep.subr.mxu0 0.0
    %7296 = vmatpush1.msra.mxu0 %v7264
    %7297 = vmatprep.subr.mxu0 0.0
    %7298 = vmatpush1.msra.mxu0 0.0
    %7299 = vmatprep.subr.mxu0 0.0
    %7300 = vmatpush1.msra.mxu0 0.0
    %7301 = vmatprep.subr.mxu0 0.0
    %7302 = vmatpush1.msra.mxu0 0.0
    %7303 = vmatprep.subr.mxu0 0.0
    %7304 = vmatpush1.msra.mxu0 0.0
    %7305 = vmatprep.subr.mxu0 0.0
    %7306 = vmatpush1.msra.mxu0 0.0
    %7307 = vmatprep.subr.mxu0 0.0
    %7308 = vmatpush1.msra.mxu0 0.0
    %7309 = vmatprep.subr.mxu0 0.0
    %7310 = vmatpush1.msra.mxu0 0.0
    %7311 = vmatprep.subr.mxu0 0.0
    %7312 = vmatpush1.msra.mxu0 0.0
    %7313 = vmatprep.subr.mxu0 0.0
    %7314 = vmatpush1.msra.mxu0 0.0
    %7315 = vmatprep.subr.mxu0 0.0
    %7316 = vmatpush1.msra.mxu0 0.0
    %7317 = vmatprep.subr.mxu0 0.0
    %7318 = vmatpush1.msra.mxu0 0.0
    %7319 = vmatprep.subr.mxu0 0.0
    %7320 = vmatpush1.msra.mxu0 0.0
    %7321 = vmatprep.subr.mxu0 0.0
    %7322 = vmatpush1.msra.mxu0 0.0
    %7323 = vmatprep.subr.mxu0 0.0
    %7324 = vmatpush1.msra.mxu0 0.0
    %7325 = vmatprep.subr.mxu0 0.0
    %7326 = vmatpush1.msra.mxu0 0.0
    %7327 = vmatprep.subr.mxu0 0.0
    %7328 = vmatpush1.msra.mxu0 0.0
    %7329 = vmatprep.mubr.f32.mxu0 0.0
    %7330 = vmatmul.mubr.f32.gmra.mrb[0].mxu0 %v7246
    %v7331 = vpop.f32.mrb[0].mxu0
    %v7332 = vadd.f32 0.0, %v7331
    %v7333 = vpop.f32.mrb[0].mxu0
    %7334 = vmatprep.mubr.f32.mxu0 0.0
    %7335 = vmatmul.mubr.f32.gmra.mrb[0].mxu0 %v7247
    %v7336 = vpop.f32.mrb[0].mxu0
    %v7337 = vadd.f32 0.0, %v7336
    %v7338 = vpop.f32.mrb[0].mxu0
    %7339 = vdwg.mxu0
    %v7340 = vadd.f32 %v7104, %v7332
    %v7341 = vadd.f32 %v7105, %v7337
    %s7342 = scalar_lea.vmem %s11, 3
    %v7343 = vld [vmem:[%s7342] sm:$0x1]
    %v7345 = vlaneseq
    %v7346 = vshrl.u32 %v7345, 7
    %v7347 = vsub.s32 0, %v7346
    %v7348 = vrot.slane %v7343, %v7347
    %v7350 = vadd.f32 %v7340, %v7348
    %v7351 = vadd.f32 %v7341, %v7348
    %v7352 = vld [vmem:[%s12] sm:$0x1]
    %v7353 = vld [vmem:[%s13] sm:$0x1]
    %v7354 = vsel %vm64, %v7350, 0.0
    %7355 = vadd.xlane.f32.xlu0 %v7354
    %v7356 = vpop.xlane.xlu0 %7355
    %v7357 = vsel %vm64, %v7351, 0.0
    %7358 = vadd.xlane.f32.xlu0 %v7357
    %v7359 = vpop.xlane.xlu0 %7358
    %v7360 = vmul.f32 %v7356, %v71
    %v7361 = vmul.f32 %v7359, %v71
    %v7362 = vsub.f32 %v7350, %v7360
    %v7363 = vsub.f32 %v7351, %v7361
    %v7364 = vmul.f32 %v7362, %v7362
    %v7365 = vmul.f32 %v7363, %v7363
    %v7366 = vsel %vm64, %v7364, 0.0
    %7367 = vadd.xlane.f32.xlu0 %v7366
    %v7368 = vpop.xlane.xlu0 %7367
    %v7369 = vsel %vm64, %v7365, 0.0
    %7370 = vadd.xlane.f32.xlu0 %v7369
    %v7371 = vpop.xlane.xlu0 %7370
    %v7372 = vmul.f32 %v7368, %v71
    %v7373 = vmul.f32 %v7371, %v71
    %v7374 = vadd.f32 %v7372, 1e-05
    %v7375 = vadd.f32 %v7373, 1e-05
    %v7376 = vrsqrt.pop %v7374
    %v7377 = vrsqrt.pop %v7375
    %v7378 = vmul.f32 %v7362, %v7376
    %v7379 = vmul.f32 %v7363, %v7377
    %v7381 = vlaneseq
    %v7382 = vshrl.u32 %v7381, 7
    %v7383 = vsub.s32 0, %v7382
    %v7384 = vrot.slane %v7352, %v7383
    %v7386 = vmul.f32 %v7378, %v7384
    %v7387 = vmul.f32 %v7379, %v7384
    %v7389 = vlaneseq
    %v7390 = vshrl.u32 %v7389, 7
    %v7391 = vsub.s32 0, %v7390
    %v7392 = vrot.slane %v7353, %v7391
    %v7394 = vadd.f32 %v7386, %v7392
    %v7395 = vadd.f32 %v7387, %v7392
    %v7396 = vld [vmem:[%s14] sm:$0xff]
    %v7397 = vld [vmem:[%s14 + $0x8] sm:$0xff]
    %v7398 = vld [vmem:[%s14 + $0x10] sm:$0xff]
    %v7399 = vld [vmem:[%s14 + $0x18] sm:$0xff]
    %v7400 = vld [vmem:[%s15] sm:$0x1]
    %v7402 = vlaneseq
    %v7403 = vshrl.u32 %v7402, 7
    %v7404 = vsub.s32 0, %v7403
    %v7405 = vrot.slane %v7400, %v7404
    %v7408 = vsel %vm64, %v7394, 0
    %v7411 = vsel %vm64, %v7395, 0
    %7413 = vmatprep.subr.mxu0 0.0
    %7414 = vmatpush1.msra.mxu0 %v7396
    %7415 = vmatprep.subr.mxu0 0.0
    %7416 = vmatpush1.msra.mxu0 %v7397
    %7417 = vmatprep.subr.mxu0 0.0
    %7418 = vmatpush1.msra.mxu0 %v7398
    %7419 = vmatprep.subr.mxu0 0.0
    %7420 = vmatpush1.msra.mxu0 %v7399
    %7421 = vmatprep.subr.mxu0 0.0
    %7422 = vmatpush1.msra.mxu0 0.0
    %7423 = vmatprep.subr.mxu0 0.0
    %7424 = vmatpush1.msra.mxu0 0.0
    %7425 = vmatprep.subr.mxu0 0.0
    %7426 = vmatpush1.msra.mxu0 0.0
    %7427 = vmatprep.subr.mxu0 0.0
    %7428 = vmatpush1.msra.mxu0 0.0
    %7429 = vmatprep.subr.mxu0 0.0
    %7430 = vmatpush1.msra.mxu0 0.0
    %7431 = vmatprep.subr.mxu0 0.0
    %7432 = vmatpush1.msra.mxu0 0.0
    %7433 = vmatprep.subr.mxu0 0.0
    %7434 = vmatpush1.msra.mxu0 0.0
    %7435 = vmatprep.subr.mxu0 0.0
    %7436 = vmatpush1.msra.mxu0 0.0
    %7437 = vmatprep.subr.mxu0 0.0
    %7438 = vmatpush1.msra.mxu0 0.0
    %7439 = vmatprep.subr.mxu0 0.0
    %7440 = vmatpush1.msra.mxu0 0.0
    %7441 = vmatprep.subr.mxu0 0.0
    %7442 = vmatpush1.msra.mxu0 0.0
    %7443 = vmatprep.subr.mxu0 0.0
    %7444 = vmatpush1.msra.mxu0 0.0
    %7445 = vmatprep.subr.mxu0 0.0
    %7446 = vmatpush1.msra.mxu0 0.0
    %7447 = vmatprep.subr.mxu0 0.0
    %7448 = vmatpush1.msra.mxu0 0.0
    %7449 = vmatprep.subr.mxu0 0.0
    %7450 = vmatpush1.msra.mxu0 0.0
    %7451 = vmatprep.subr.mxu0 0.0
    %7452 = vmatpush1.msra.mxu0 0.0
    %7453 = vmatprep.subr.mxu0 0.0
    %7454 = vmatpush1.msra.mxu0 0.0
    %7455 = vmatprep.subr.mxu0 0.0
    %7456 = vmatpush1.msra.mxu0 0.0
    %7457 = vmatprep.subr.mxu0 0.0
    %7458 = vmatpush1.msra.mxu0 0.0
    %7459 = vmatprep.subr.mxu0 0.0
    %7460 = vmatpush1.msra.mxu0 0.0
    %7461 = vmatprep.subr.mxu0 0.0
    %7462 = vmatpush1.msra.mxu0 0.0
    %7463 = vmatprep.subr.mxu0 0.0
    %7464 = vmatpush1.msra.mxu0 0.0
    %7465 = vmatprep.subr.mxu0 0.0
    %7466 = vmatpush1.msra.mxu0 0.0
    %7467 = vmatprep.subr.mxu0 0.0
    %7468 = vmatpush1.msra.mxu0 0.0
    %7469 = vmatprep.subr.mxu0 0.0
    %7470 = vmatpush1.msra.mxu0 0.0
    %7471 = vmatprep.subr.mxu0 0.0
    %7472 = vmatpush1.msra.mxu0 0.0
    %7473 = vmatprep.subr.mxu0 0.0
    %7474 = vmatpush1.msra.mxu0 0.0
    %7475 = vmatprep.subr.mxu0 0.0
    %7476 = vmatpush1.msra.mxu0 0.0
    %7477 = vmatprep.mubr.f32.mxu0 0.0
    %7478 = vmatmul.mubr.f32.gmra.mrb[0].mxu0 %v7408
    %v7479 = vpop.f32.mrb[0].mxu0
    %v7480 = vadd.f32 %v7405, %v7479
    %v7481 = vpop.f32.mrb[0].mxu0
    %7482 = vmatprep.mubr.f32.mxu0 0.0
    %7483 = vmatmul.mubr.f32.gmra.mrb[0].mxu0 %v7411
    %v7484 = vpop.f32.mrb[0].mxu0
    %v7485 = vadd.f32 %v7405, %v7484
    %v7486 = vpop.f32.mrb[0].mxu0
    %7487 = vdwg.mxu0
    %7488 = vst [vmem:[#allocation2] sm:$0xff] %v7480
    %7489 = vst [vmem:[#allocation2 + $0x8] sm:$0xff] %v7485
    // Predicated region
    $region66: #{tpu_custom_call.1} parent=1 // pred_check
      _
    $region67: #{tpu_custom_call.1} parent=1 // pred_check_branch
      %7491 = sbr.rel (0) target = $region69
    $region68: #{tpu_custom_call.1} parent=1 // pred_region
      %s7493 = ssub.s32 256, 256
      %7494 = vsyncadd [#allocation3], %s7493
      %s7495 = sshll.u32 [#allocation2], 4
      %s7496 = int_to_ptr.vmem [resolvable:$true] %s7495
      %7501 = dma.vmem_to_hbm [thread:$0]  %s7496, 256, %s16, [#allocation3], 128, 128, 8
    $region69: #{tpu_custom_call.1} parent=1 // pred_fallthru
      _
    // Predicated region
    $region70: #{tpu_custom_call.1} parent=1 // pred_check
      _
    $region71: #{tpu_custom_call.1} parent=1 // pred_check_branch
      %7503 = sbr.rel (0) target = $region73
    $region72: #{tpu_custom_call.1} parent=1 // pred_region
      %7504 = dma.done [#allocation3], 256
    $region73: #{tpu_custom_call.1} parent=1 // pred_fallthru
      _
    %7505 = vsyncpa [#allocation3], 1

</llo_original>
